<compile_context>
chip_gen: v7x
topology: tpu7x:2x2x1
jax: 0.10.0
libtpu: 0.0.40
codegen_flags: <defaults>
</compile_context>

<pallas_src>
import numpy as np
import jax
import jax.numpy as jnp
from jax import lax
from jax.experimental import pallas as pl
from jax.experimental.pallas import tpu as pltpu


# ----------------------------------------------------------------------------
# Host-side (trace-time) constant builders.
# ----------------------------------------------------------------------------
def up2_pad_matrix(n: int) -> np.ndarray:
    """(2n+2, n) matrix: PyTorch bilinear x2 upsample (align_corners=False) followed
    by a zero pad of 1 on each side.  Row 0 and row 2n+1 are zero (the conv padding);
    row 2j+1 is upsample output 2j, row 2j+2 is upsample output 2j+1."""
    u = np.zeros((2 * n + 2, n), np.float32)
    for j in range(n):
        jm, jp = max(j - 1, 0), min(j + 1, n - 1)
        u[2 * j + 1, jm] += 0.25
        u[2 * j + 1, j] += 0.75
        u[2 * j + 2, j] += 0.75
        u[2 * j + 2, jp] += 0.25
    return u


def _layer_constants(batch, s_in, w_oihw, bias):
    """Fold up2 -> pad -> conv3x3 into 3 matrix pairs for the flattened layout.

    Activation layout: (batch*S, S*C), channel innermost.  Then
        out = sum_{dy=0..2} (A_dy @ relu(act)) @ B_dy  + bias_row
    A_dy : (batch*2S, batch*S)   block-diag (over batch) row upsample+pad window
    B_dy : (S*Cin, 2S*Cout)      column upsample+pad fused with conv taps at row dy
    """
    cout, cin = int(w_oihw.shape[0]), int(w_oihw.shape[1])
    s_out = 2 * s_in
    u = up2_pad_matrix(s_in)                                          # (2S+2, S)
    a = np.stack([np.kron(np.eye(batch, dtype=np.float32), u[dy:dy + s_out, :])
                  for dy in range(3)])                                # (3, B*2S, B*S)
    u_sh = jnp.asarray(np.stack([u[dx:dx + s_out, :] for dx in range(3)]))  # (3, 2S, S)
    bmats = []
    for dy in range(3):
        w_dy = w_oihw[:, :, dy, :]                                    # (Cout, Cin, 3) = o,i,d
        m = jnp.einsum("dxw,oid->wixo", u_sh, w_dy,
                       precision=lax.Precision.HIGHEST)               # (S, Cin, 2S, Cout)
        bmats.append(m.reshape(s_in * cin, s_out * cout))
    b_stack = jnp.stack(bmats)                                        # (3, S*Cin, 2S*Cout)
    bias_row = jnp.tile(bias, s_out)[None, :]                         # (1, 2S*Cout)
    return jnp.asarray(a), b_stack, bias_row


def _bn_constants(s_out, cout):
    """Channel selector matrices for the flattened (rows, 2S*Cout) layout."""
    sel = np.tile(np.eye(cout, dtype=np.float32), (s_out, 1))         # (2S*Cout, Cout)
    return jnp.asarray(sel), jnp.asarray(sel.T)                       # reduce / broadcast


# ----------------------------------------------------------------------------
# The fused whole-network kernel.
# ----------------------------------------------------------------------------
def _make_generator_kernel(layer_cfgs):
    def kernel(*refs):
        out_ref = refs[-1]
        it = iter(refs[:-1])
        act = next(it)[...]                         # (B, d_model) == (B*1, 1*Cin)
        for cfg in layer_cfgs:                      # static unroll over 6 layers
            a_ref, b_ref, bias_ref = next(it), next(it), next(it)
            x = jnp.maximum(act, 0.0)               # ReLU
            rows, cols = a_ref.shape[1], b_ref.shape[2]
            y = jnp.zeros((rows, cols), jnp.float32)
            for dy in range(3):                     # 3 conv row taps (static unroll)
                t = jnp.dot(a_ref[dy], x, preferred_element_type=jnp.float32)
                y = y + jnp.dot(t, b_ref[dy], preferred_element_type=jnp.float32)
            y = y + bias_ref[...]
            if cfg["bn"]:                           # training-mode BatchNorm, fused
                sel_ref, selt_ref, g_ref, bt_ref = next(it), next(it), next(it), next(it)
                inv_n = 1.0 / cfg["n"]
                mean_c = jnp.dot(jnp.sum(y, axis=0, keepdims=True), sel_ref[...],
                                 preferred_element_type=jnp.float32) * inv_n      # (1, C)
                d = y - jnp.dot(mean_c, selt_ref[...],
                                preferred_element_type=jnp.float32)
                var_c = jnp.dot(jnp.sum(d * d, axis=0, keepdims=True), sel_ref[...],
                                preferred_element_type=jnp.float32) * inv_n       # (1, C)
                scale_c = g_ref[...] * lax.rsqrt(var_c + 1e-5)
                shift_c = bt_ref[...] - mean_c * scale_c
                y = (y * jnp.dot(scale_c, selt_ref[...], preferred_element_type=jnp.float32)
                     + jnp.dot(shift_c, selt_ref[...], preferred_element_type=jnp.float32))
            if cfg["tanh"]:
                y = jnp.tanh(y)                     # EUP
            act = y
        out_ref[...] = act
    return kernel


def _full_spec(shape):
    zeros = (0,) * len(shape)
    return pl.BlockSpec(shape, lambda i: zeros)     # whole array as one block


@jax.jit
def generator_forward(x, convs, bns):
    """x: (B, d_model) -> (B, 3, 64, 64) NCHW (matching PyTorch)."""
    batch = x.shape[0]
    inputs = [x]
    layer_cfgs = []
    s, out_ch = 1, None
    for i, (w, b) in enumerate(convs):
        cout = int(w.shape[0])
        a_stk, b_stk, bias_row = _layer_constants(batch, s, w, b)
        inputs += [a_stk, b_stk, bias_row]
        s_out = 2 * s
        has_bn = i < len(bns)
        if has_bn:
            sel, selt = _bn_constants(s_out, cout)
            g, bt = bns[i]
            inputs += [sel, selt, g, bt]
        layer_cfgs.append({"bn": has_bn, "tanh": not has_bn,
                           "n": float(batch * s_out * s_out)})
        s, out_ch = s_out, cout

    out_rows, out_cols = batch * s, s * out_ch          # (B*64, 64*3) lane-dense
    out2d = pl.pallas_call(
        _make_generator_kernel(layer_cfgs),
        out_shape=jax.ShapeDtypeStruct((out_rows, out_cols), jnp.float32),
        grid=(1,),
        in_specs=[_full_spec(a.shape) for a in inputs],
        out_specs=_full_spec((out_rows, out_cols)),
        compiler_params=pltpu.CompilerParams(dimension_semantics=("arbitrary",)),
    )(*inputs)
    # (B*S, S*C) -> (B, S, S, C) NHWC -> (B, C, S, S) NCHW: plain-JAX glue on 96 KiB.
    return out2d.reshape(batch, s, s, out_ch).transpose(0, 3, 1, 2)


# ----------------------------------------------------------------------------
# Parameter init (PyTorch-like uniform bounds, OIHW weights) and a plain-JAX
# reference used as a correctness check.
# ----------------------------------------------------------------------------
def init_params(key, d_model):
    specs = [(d_model, d_model // 2), (d_model // 2, d_model // 2),
             (d_model // 2, d_model // 2), (d_model // 2, d_model // 2),
             (d_model // 2, d_model // 4), (d_model // 4, 3)]
    convs = []
    for cin, cout in specs:
        key, kw, kb = jax.random.split(key, 3)
        bound = 1.0 / float(np.sqrt(cin * 9))
        w = jax.random.uniform(kw, (cout, cin, 3, 3), jnp.float32, -bound, bound)
        b = jax.random.uniform(kb, (cout,), jnp.float32, -bound, bound)
        convs.append((w, b))
    # BatchNorm2d init: weight=1, bias=0.
    bns = [(jnp.ones((1, c), jnp.float32), jnp.zeros((1, c), jnp.float32))
           for c in [d_model // 2] * 4 + [d_model // 4]]
    return convs, bns


def reference_forward(x, convs, bns):
    hp = lax.Precision.HIGHEST
    batch, d_model = x.shape
    h = x.reshape(batch, 1, 1, d_model)                      # NHWC
    for i, (w, b) in enumerate(convs):
        h = jnp.maximum(h, 0.0)
        u = jnp.asarray(up2_pad_matrix(h.shape[1]))          # bilinear x2 + zero pad
        h = jnp.einsum("ph,bhwc->bpwc", u, h, precision=hp)
        h = jnp.einsum("qw,bpwc->bpqc", u, h, precision=hp)
        w_hwio = jnp.transpose(w, (2, 3, 1, 0))
        h = lax.conv_general_dilated(h, w_hwio, (1, 1), "VALID",
                                     dimension_numbers=("NHWC", "HWIO", "NHWC"),
                                     precision=hp) + b
        if i < len(bns):                                     # training-mode BN
            g, bt = bns[i]
            mean = jnp.mean(h, axis=(0, 1, 2), keepdims=True)
            var = jnp.mean((h - mean) ** 2, axis=(0, 1, 2), keepdims=True)
            h = (h - mean) * lax.rsqrt(var + 1e-5) * g.reshape(1, 1, 1, -1) \
                + bt.reshape(1, 1, 1, -1)
        else:
            h = jnp.tanh(h)
    return jnp.transpose(h, (0, 3, 1, 2))


if __name__ == "__main__":
    # TODO(synk): BatchNorm running-stat updates (a training-mode side effect) are not
    # reproduced; they do not affect the forward output.
    d_model, batch = 32, 2
    key = jax.random.PRNGKey(0)
    k_params, k_x = jax.random.split(key)
    convs, bns = init_params(k_params, d_model)
    x = jax.random.normal(k_x, (batch, d_model), jnp.float32)

    out = jax.block_until_ready(generator_forward(x, convs, bns))

    assert out.shape == (batch, 3, 64, 64), out.shape
    assert out.dtype == jnp.float32
    assert bool(jnp.all(jnp.isfinite(out)))
    assert bool(jnp.all(jnp.abs(out) <= 1.0 + 1e-6))          # tanh range (+ fp eps)

    ref = jax.block_until_ready(reference_forward(x, convs, bns))
    max_err = float(jnp.max(jnp.abs(out - ref)))
    assert max_err < 2e-3, f"mismatch vs reference: {max_err}"

    print("KERNEL_OK")
</pallas_src>

<mosaic_0001>
module attributes {stable_mosaic.version = 11 : i64} {
  func.func @kernel(%arg0: i32, %arg1: memref<2x32xf32, #tpu.memory_space<vmem>>, %arg2: memref<3x4x2xf32, #tpu.memory_space<vmem>>, %arg3: memref<3x32x32xf32, #tpu.memory_space<vmem>>, %arg4: memref<1x32xf32, #tpu.memory_space<vmem>>, %arg5: memref<32x16xf32, #tpu.memory_space<vmem>>, %arg6: memref<16x32xf32, #tpu.memory_space<vmem>>, %arg7: memref<1x16xf32, #tpu.memory_space<vmem>>, %arg8: memref<1x16xf32, #tpu.memory_space<vmem>>, %arg9: memref<3x8x4xf32, #tpu.memory_space<vmem>>, %arg10: memref<3x32x64xf32, #tpu.memory_space<vmem>>, %arg11: memref<1x64xf32, #tpu.memory_space<vmem>>, %arg12: memref<64x16xf32, #tpu.memory_space<vmem>>, %arg13: memref<16x64xf32, #tpu.memory_space<vmem>>, %arg14: memref<1x16xf32, #tpu.memory_space<vmem>>, %arg15: memref<1x16xf32, #tpu.memory_space<vmem>>, %arg16: memref<3x16x8xf32, #tpu.memory_space<vmem>>, %arg17: memref<3x64x128xf32, #tpu.memory_space<vmem>>, %arg18: memref<1x128xf32, #tpu.memory_space<vmem>>, %arg19: memref<128x16xf32, #tpu.memory_space<vmem>>, %arg20: memref<16x128xf32, #tpu.memory_space<vmem>>, %arg21: memref<1x16xf32, #tpu.memory_space<vmem>>, %arg22: memref<1x16xf32, #tpu.memory_space<vmem>>, %arg23: memref<3x32x16xf32, #tpu.memory_space<vmem>>, %arg24: memref<3x128x256xf32, #tpu.memory_space<vmem>>, %arg25: memref<1x256xf32, #tpu.memory_space<vmem>>, %arg26: memref<256x16xf32, #tpu.memory_space<vmem>>, %arg27: memref<16x256xf32, #tpu.memory_space<vmem>>, %arg28: memref<1x16xf32, #tpu.memory_space<vmem>>, %arg29: memref<1x16xf32, #tpu.memory_space<vmem>>, %arg30: memref<3x64x32xf32, #tpu.memory_space<vmem>>, %arg31: memref<3x256x256xf32, #tpu.memory_space<vmem>>, %arg32: memref<1x256xf32, #tpu.memory_space<vmem>>, %arg33: memref<256x8xf32, #tpu.memory_space<vmem>>, %arg34: memref<8x256xf32, #tpu.memory_space<vmem>>, %arg35: memref<1x8xf32, #tpu.memory_space<vmem>>, %arg36: memref<1x8xf32, #tpu.memory_space<vmem>>, %arg37: memref<3x128x64xf32, #tpu.memory_space<vmem>>, %arg38: memref<3x256x192xf32, #tpu.memory_space<vmem>>, %arg39: memref<1x192xf32, #tpu.memory_space<vmem>>, %arg40: memref<128x192xf32, #tpu.memory_space<vmem>>) attributes {dimension_semantics = [#tpu.dimension_semantics<arbitrary>], iteration_bounds = array<i64: 1>, scalar_prefetch = 0 : i64, scratch_operands = 0 : i64, tpu.core_type = #tpu.core_type<tc>, window_params = [{pipeline_mode = #tpu.pipeline_mode<synchronous>, transform_indices = @transform_0, window_bounds = array<i64: 2, 32>}, {pipeline_mode = #tpu.pipeline_mode<synchronous>, transform_indices = @transform_1, window_bounds = array<i64: 3, 4, 2>}, {pipeline_mode = #tpu.pipeline_mode<synchronous>, transform_indices = @transform_2, window_bounds = array<i64: 3, 32, 32>}, {pipeline_mode = #tpu.pipeline_mode<synchronous>, transform_indices = @transform_3, window_bounds = array<i64: 1, 32>}, {pipeline_mode = #tpu.pipeline_mode<synchronous>, transform_indices = @transform_4, window_bounds = array<i64: 32, 16>}, {pipeline_mode = #tpu.pipeline_mode<synchronous>, transform_indices = @transform_5, window_bounds = array<i64: 16, 32>}, {pipeline_mode = #tpu.pipeline_mode<synchronous>, transform_indices = @transform_6, window_bounds = array<i64: 1, 16>}, {pipeline_mode = #tpu.pipeline_mode<synchronous>, transform_indices = @transform_7, window_bounds = array<i64: 1, 16>}, {pipeline_mode = #tpu.pipeline_mode<synchronous>, transform_indices = @transform_8, window_bounds = array<i64: 3, 8, 4>}, {pipeline_mode = #tpu.pipeline_mode<synchronous>, transform_indices = @transform_9, window_bounds = array<i64: 3, 32, 64>}, {pipeline_mode = #tpu.pipeline_mode<synchronous>, transform_indices = @transform_10, window_bounds = array<i64: 1, 64>}, {pipeline_mode = #tpu.pipeline_mode<synchronous>, transform_indices = @transform_11, window_bounds = array<i64: 64, 16>}, {pipeline_mode = #tpu.pipeline_mode<synchronous>, transform_indices = @transform_12, window_bounds = array<i64: 16, 64>}, {pipeline_mode = #tpu.pipeline_mode<synchronous>, transform_indices = @transform_13, window_bounds = array<i64: 1, 16>}, {pipeline_mode = #tpu.pipeline_mode<synchronous>, transform_indices = @transform_14, window_bounds = array<i64: 1, 16>}, {pipeline_mode = #tpu.pipeline_mode<synchronous>, transform_indices = @transform_15, window_bounds = array<i64: 3, 16, 8>}, {pipeline_mode = #tpu.pipeline_mode<synchronous>, transform_indices = @transform_16, window_bounds = array<i64: 3, 64, 128>}, {pipeline_mode = #tpu.pipeline_mode<synchronous>, transform_indices = @transform_17, window_bounds = array<i64: 1, 128>}, {pipeline_mode = #tpu.pipeline_mode<synchronous>, transform_indices = @transform_18, window_bounds = array<i64: 128, 16>}, {pipeline_mode = #tpu.pipeline_mode<synchronous>, transform_indices = @transform_19, window_bounds = array<i64: 16, 128>}, {pipeline_mode = #tpu.pipeline_mode<synchronous>, transform_indices = @transform_20, window_bounds = array<i64: 1, 16>}, {pipeline_mode = #tpu.pipeline_mode<synchronous>, transform_indices = @transform_21, window_bounds = array<i64: 1, 16>}, {pipeline_mode = #tpu.pipeline_mode<synchronous>, transform_indices = @transform_22, window_bounds = array<i64: 3, 32, 16>}, {pipeline_mode = #tpu.pipeline_mode<synchronous>, transform_indices = @transform_23, window_bounds = array<i64: 3, 128, 256>}, {pipeline_mode = #tpu.pipeline_mode<synchronous>, transform_indices = @transform_24, window_bounds = array<i64: 1, 256>}, {pipeline_mode = #tpu.pipeline_mode<synchronous>, transform_indices = @transform_25, window_bounds = array<i64: 256, 16>}, {pipeline_mode = #tpu.pipeline_mode<synchronous>, transform_indices = @transform_26, window_bounds = array<i64: 16, 256>}, {pipeline_mode = #tpu.pipeline_mode<synchronous>, transform_indices = @transform_27, window_bounds = array<i64: 1, 16>}, {pipeline_mode = #tpu.pipeline_mode<synchronous>, transform_indices = @transform_28, window_bounds = array<i64: 1, 16>}, {pipeline_mode = #tpu.pipeline_mode<synchronous>, transform_indices = @transform_29, window_bounds = array<i64: 3, 64, 32>}, {pipeline_mode = #tpu.pipeline_mode<synchronous>, transform_indices = @transform_30, window_bounds = array<i64: 3, 256, 256>}, {pipeline_mode = #tpu.pipeline_mode<synchronous>, transform_indices = @transform_31, window_bounds = array<i64: 1, 256>}, {pipeline_mode = #tpu.pipeline_mode<synchronous>, transform_indices = @transform_32, window_bounds = array<i64: 256, 8>}, {pipeline_mode = #tpu.pipeline_mode<synchronous>, transform_indices = @transform_33, window_bounds = array<i64: 8, 256>}, {pipeline_mode = #tpu.pipeline_mode<synchronous>, transform_indices = @transform_34, window_bounds = array<i64: 1, 8>}, {pipeline_mode = #tpu.pipeline_mode<synchronous>, transform_indices = @transform_35, window_bounds = array<i64: 1, 8>}, {pipeline_mode = #tpu.pipeline_mode<synchronous>, transform_indices = @transform_36, window_bounds = array<i64: 3, 128, 64>}, {pipeline_mode = #tpu.pipeline_mode<synchronous>, transform_indices = @transform_37, window_bounds = array<i64: 3, 256, 192>}, {pipeline_mode = #tpu.pipeline_mode<synchronous>, transform_indices = @transform_38, window_bounds = array<i64: 1, 192>}, {pipeline_mode = #tpu.pipeline_mode<synchronous>, transform_indices = @transform_39, window_bounds = array<i64: 128, 192>}]} {
    %c0 = arith.constant 0 : index
    %c0_0 = arith.constant 0 : index
    %0 = vector.load %arg1[%c0, %c0_0] : memref<2x32xf32, #tpu.memory_space<vmem>>, vector<2x32xf32>
    %cst = arith.constant 0.000000e+00 : f32
    %1 = vector.broadcast %cst : f32 to vector<2x32xf32>
    %2 = arith.maximumf %0, %1 : vector<2x32xf32>
    %cst_1 = arith.constant 0.000000e+00 : f32
    %3 = vector.broadcast %cst_1 : f32 to vector<4x32xf32>
    %c0_2 = arith.constant 0 : index
    %c0_3 = arith.constant 0 : index
    %c0_4 = arith.constant 0 : index
    %4 = vector.load %arg2[%c0_2, %c0_3, %c0_4] : memref<3x4x2xf32, #tpu.memory_space<vmem>>, vector<1x4x2xf32>
    %5 = vector.shape_cast %4 : vector<1x4x2xf32> to vector<4x2xf32>
    %cst_5 = arith.constant dense<0.000000e+00> : vector<4x32xf32>
    %6 = tpu.matmul %5, %2, %cst_5 {dimension_numbers = #tpu.dot_dimension_numbers<[1], [0], [0], [1], [0, 0, 1, 1], [], []>} : vector<4x2xf32>, vector<2x32xf32>, vector<4x32xf32> -> vector<4x32xf32>
    %c0_6 = arith.constant 0 : index
    %c0_7 = arith.constant 0 : index
    %c0_8 = arith.constant 0 : index
    %7 = vector.load %arg3[%c0_6, %c0_7, %c0_8] : memref<3x32x32xf32, #tpu.memory_space<vmem>>, vector<1x32x32xf32>
    %8 = vector.shape_cast %7 : vector<1x32x32xf32> to vector<32x32xf32>
    %cst_9 = arith.constant dense<0.000000e+00> : vector<4x32xf32>
    %9 = tpu.matmul %6, %8, %cst_9 {dimension_numbers = #tpu.dot_dimension_numbers<[1], [0], [0], [1], [0, 0, 1, 1], [], []>} : vector<4x32xf32>, vector<32x32xf32>, vector<4x32xf32> -> vector<4x32xf32>
    %10 = arith.addf %3, %9 : vector<4x32xf32>
    %c1 = arith.constant 1 : index
    %c0_10 = arith.constant 0 : index
    %c0_11 = arith.constant 0 : index
    %11 = vector.load %arg2[%c1, %c0_10, %c0_11] : memref<3x4x2xf32, #tpu.memory_space<vmem>>, vector<1x4x2xf32>
    %12 = vector.shape_cast %11 : vector<1x4x2xf32> to vector<4x2xf32>
    %cst_12 = arith.constant dense<0.000000e+00> : vector<4x32xf32>
    %13 = tpu.matmul %12, %2, %cst_12 {dimension_numbers = #tpu.dot_dimension_numbers<[1], [0], [0], [1], [0, 0, 1, 1], [], []>} : vector<4x2xf32>, vector<2x32xf32>, vector<4x32xf32> -> vector<4x32xf32>
    %c1_13 = arith.constant 1 : index
    %c0_14 = arith.constant 0 : index
    %c0_15 = arith.constant 0 : index
    %14 = vector.load %arg3[%c1_13, %c0_14, %c0_15] : memref<3x32x32xf32, #tpu.memory_space<vmem>>, vector<1x32x32xf32>
    %15 = vector.shape_cast %14 : vector<1x32x32xf32> to vector<32x32xf32>
    %cst_16 = arith.constant dense<0.000000e+00> : vector<4x32xf32>
    %16 = tpu.matmul %13, %15, %cst_16 {dimension_numbers = #tpu.dot_dimension_numbers<[1], [0], [0], [1], [0, 0, 1, 1], [], []>} : vector<4x32xf32>, vector<32x32xf32>, vector<4x32xf32> -> vector<4x32xf32>
    %17 = arith.addf %10, %16 : vector<4x32xf32>
    %c2 = arith.constant 2 : index
    %c0_17 = arith.constant 0 : index
    %c0_18 = arith.constant 0 : index
    %18 = vector.load %arg2[%c2, %c0_17, %c0_18] : memref<3x4x2xf32, #tpu.memory_space<vmem>>, vector<1x4x2xf32>
    %19 = vector.shape_cast %18 : vector<1x4x2xf32> to vector<4x2xf32>
    %cst_19 = arith.constant dense<0.000000e+00> : vector<4x32xf32>
    %20 = tpu.matmul %19, %2, %cst_19 {dimension_numbers = #tpu.dot_dimension_numbers<[1], [0], [0], [1], [0, 0, 1, 1], [], []>} : vector<4x2xf32>, vector<2x32xf32>, vector<4x32xf32> -> vector<4x32xf32>
    %c2_20 = arith.constant 2 : index
    %c0_21 = arith.constant 0 : index
    %c0_22 = arith.constant 0 : index
    %21 = vector.load %arg3[%c2_20, %c0_21, %c0_22] : memref<3x32x32xf32, #tpu.memory_space<vmem>>, vector<1x32x32xf32>
    %22 = vector.shape_cast %21 : vector<1x32x32xf32> to vector<32x32xf32>
    %cst_23 = arith.constant dense<0.000000e+00> : vector<4x32xf32>
    %23 = tpu.matmul %20, %22, %cst_23 {dimension_numbers = #tpu.dot_dimension_numbers<[1], [0], [0], [1], [0, 0, 1, 1], [], []>} : vector<4x32xf32>, vector<32x32xf32>, vector<4x32xf32> -> vector<4x32xf32>
    %24 = arith.addf %17, %23 : vector<4x32xf32>
    %c0_24 = arith.constant 0 : index
    %c0_25 = arith.constant 0 : index
    %25 = vector.load %arg4[%c0_24, %c0_25] : memref<1x32xf32, #tpu.memory_space<vmem>>, vector<1x32xf32>
    %26 = vector.broadcast %25 : vector<1x32xf32> to vector<4x32xf32>
    %27 = arith.addf %24, %26 : vector<4x32xf32>
    %cst_26 = arith.constant dense<0.000000e+00> : vector<32xf32>
    %28 = vector.multi_reduction <add>, %27, %cst_26 [0] : vector<4x32xf32> to vector<32xf32>
    %29 = vector.shape_cast %28 : vector<32xf32> to vector<1x32xf32>
    %c0_27 = arith.constant 0 : index
    %c0_28 = arith.constant 0 : index
    %30 = vector.load %arg5[%c0_27, %c0_28] : memref<32x16xf32, #tpu.memory_space<vmem>>, vector<32x16xf32>
    %cst_29 = arith.constant dense<0.000000e+00> : vector<1x16xf32>
    %31 = tpu.matmul %29, %30, %cst_29 {dimension_numbers = #tpu.dot_dimension_numbers<[1], [0], [0], [1], [0, 0, 1, 1], [], []>} : vector<1x32xf32>, vector<32x16xf32>, vector<1x16xf32> -> vector<1x16xf32>
    %cst_30 = arith.constant 1.250000e-01 : f32
    %32 = vector.broadcast %cst_30 : f32 to vector<1x16xf32>
    %33 = arith.mulf %31, %32 : vector<1x16xf32>
    %c0_31 = arith.constant 0 : index
    %c0_32 = arith.constant 0 : index
    %34 = vector.load %arg6[%c0_31, %c0_32] : memref<16x32xf32, #tpu.memory_space<vmem>>, vector<16x32xf32>
    %cst_33 = arith.constant dense<0.000000e+00> : vector<1x32xf32>
    %35 = tpu.matmul %33, %34, %cst_33 {dimension_numbers = #tpu.dot_dimension_numbers<[1], [0], [0], [1], [0, 0, 1, 1], [], []>} : vector<1x16xf32>, vector<16x32xf32>, vector<1x32xf32> -> vector<1x32xf32>
    %36 = vector.broadcast %35 : vector<1x32xf32> to vector<4x32xf32>
    %37 = arith.subf %27, %36 : vector<4x32xf32>
    %38 = arith.mulf %37, %37 : vector<4x32xf32>
    %cst_34 = arith.constant dense<0.000000e+00> : vector<32xf32>
    %39 = vector.multi_reduction <add>, %38, %cst_34 [0] : vector<4x32xf32> to vector<32xf32>
    %40 = vector.shape_cast %39 : vector<32xf32> to vector<1x32xf32>
    %c0_35 = arith.constant 0 : index
    %c0_36 = arith.constant 0 : index
    %41 = vector.load %arg5[%c0_35, %c0_36] : memref<32x16xf32, #tpu.memory_space<vmem>>, vector<32x16xf32>
    %cst_37 = arith.constant dense<0.000000e+00> : vector<1x16xf32>
    %42 = tpu.matmul %40, %41, %cst_37 {dimension_numbers = #tpu.dot_dimension_numbers<[1], [0], [0], [1], [0, 0, 1, 1], [], []>} : vector<1x32xf32>, vector<32x16xf32>, vector<1x16xf32> -> vector<1x16xf32>
    %cst_38 = arith.constant 1.250000e-01 : f32
    %43 = vector.broadcast %cst_38 : f32 to vector<1x16xf32>
    %44 = arith.mulf %42, %43 : vector<1x16xf32>
    %c0_39 = arith.constant 0 : index
    %c0_40 = arith.constant 0 : index
    %45 = vector.load %arg7[%c0_39, %c0_40] : memref<1x16xf32, #tpu.memory_space<vmem>>, vector<1x16xf32>
    %cst_41 = arith.constant 9.99999974E-6 : f32
    %46 = vector.broadcast %cst_41 : f32 to vector<1x16xf32>
    %47 = arith.addf %44, %46 : vector<1x16xf32>
    %48 = math.rsqrt %47 : vector<1x16xf32>
    %49 = arith.mulf %45, %48 : vector<1x16xf32>
    %c0_42 = arith.constant 0 : index
    %c0_43 = arith.constant 0 : index
    %50 = vector.load %arg8[%c0_42, %c0_43] : memref<1x16xf32, #tpu.memory_space<vmem>>, vector<1x16xf32>
    %51 = arith.mulf %33, %49 : vector<1x16xf32>
    %52 = arith.subf %50, %51 : vector<1x16xf32>
    %c0_44 = arith.constant 0 : index
    %c0_45 = arith.constant 0 : index
    %53 = vector.load %arg6[%c0_44, %c0_45] : memref<16x32xf32, #tpu.memory_space<vmem>>, vector<16x32xf32>
    %cst_46 = arith.constant dense<0.000000e+00> : vector<1x32xf32>
    %54 = tpu.matmul %49, %53, %cst_46 {dimension_numbers = #tpu.dot_dimension_numbers<[1], [0], [0], [1], [0, 0, 1, 1], [], []>} : vector<1x16xf32>, vector<16x32xf32>, vector<1x32xf32> -> vector<1x32xf32>
    %55 = vector.broadcast %54 : vector<1x32xf32> to vector<4x32xf32>
    %56 = arith.mulf %27, %55 : vector<4x32xf32>
    %c0_47 = arith.constant 0 : index
    %c0_48 = arith.constant 0 : index
    %57 = vector.load %arg6[%c0_47, %c0_48] : memref<16x32xf32, #tpu.memory_space<vmem>>, vector<16x32xf32>
    %cst_49 = arith.constant dense<0.000000e+00> : vector<1x32xf32>
    %58 = tpu.matmul %52, %57, %cst_49 {dimension_numbers = #tpu.dot_dimension_numbers<[1], [0], [0], [1], [0, 0, 1, 1], [], []>} : vector<1x16xf32>, vector<16x32xf32>, vector<1x32xf32> -> vector<1x32xf32>
    %59 = vector.broadcast %58 : vector<1x32xf32> to vector<4x32xf32>
    %60 = arith.addf %56, %59 : vector<4x32xf32>
    %cst_50 = arith.constant 0.000000e+00 : f32
    %61 = vector.broadcast %cst_50 : f32 to vector<4x32xf32>
    %62 = arith.maximumf %60, %61 : vector<4x32xf32>
    %cst_51 = arith.constant 0.000000e+00 : f32
    %63 = vector.broadcast %cst_51 : f32 to vector<8x64xf32>
    %c0_52 = arith.constant 0 : index
    %c0_53 = arith.constant 0 : index
    %c0_54 = arith.constant 0 : index
    %64 = vector.load %arg9[%c0_52, %c0_53, %c0_54] : memref<3x8x4xf32, #tpu.memory_space<vmem>>, vector<1x8x4xf32>
    %65 = vector.shape_cast %64 : vector<1x8x4xf32> to vector<8x4xf32>
    %cst_55 = arith.constant dense<0.000000e+00> : vector<8x32xf32>
    %66 = tpu.matmul %65, %62, %cst_55 {dimension_numbers = #tpu.dot_dimension_numbers<[1], [0], [0], [1], [0, 0, 1, 1], [], []>} : vector<8x4xf32>, vector<4x32xf32>, vector<8x32xf32> -> vector<8x32xf32>
    %c0_56 = arith.constant 0 : index
    %c0_57 = arith.constant 0 : index
    %c0_58 = arith.constant 0 : index
    %67 = vector.load %arg10[%c0_56, %c0_57, %c0_58] : memref<3x32x64xf32, #tpu.memory_space<vmem>>, vector<1x32x64xf32>
    %68 = vector.shape_cast %67 : vector<1x32x64xf32> to vector<32x64xf32>
    %cst_59 = arith.constant dense<0.000000e+00> : vector<8x64xf32>
    %69 = tpu.matmul %66, %68, %cst_59 {dimension_numbers = #tpu.dot_dimension_numbers<[1], [0], [0], [1], [0, 0, 1, 1], [], []>} : vector<8x32xf32>, vector<32x64xf32>, vector<8x64xf32> -> vector<8x64xf32>
    %70 = arith.addf %63, %69 : vector<8x64xf32>
    %c1_60 = arith.constant 1 : index
    %c0_61 = arith.constant 0 : index
    %c0_62 = arith.constant 0 : index
    %71 = vector.load %arg9[%c1_60, %c0_61, %c0_62] : memref<3x8x4xf32, #tpu.memory_space<vmem>>, vector<1x8x4xf32>
    %72 = vector.shape_cast %71 : vector<1x8x4xf32> to vector<8x4xf32>
    %cst_63 = arith.constant dense<0.000000e+00> : vector<8x32xf32>
    %73 = tpu.matmul %72, %62, %cst_63 {dimension_numbers = #tpu.dot_dimension_numbers<[1], [0], [0], [1], [0, 0, 1, 1], [], []>} : vector<8x4xf32>, vector<4x32xf32>, vector<8x32xf32> -> vector<8x32xf32>
    %c1_64 = arith.constant 1 : index
    %c0_65 = arith.constant 0 : index
    %c0_66 = arith.constant 0 : index
    %74 = vector.load %arg10[%c1_64, %c0_65, %c0_66] : memref<3x32x64xf32, #tpu.memory_space<vmem>>, vector<1x32x64xf32>
    %75 = vector.shape_cast %74 : vector<1x32x64xf32> to vector<32x64xf32>
    %cst_67 = arith.constant dense<0.000000e+00> : vector<8x64xf32>
    %76 = tpu.matmul %73, %75, %cst_67 {dimension_numbers = #tpu.dot_dimension_numbers<[1], [0], [0], [1], [0, 0, 1, 1], [], []>} : vector<8x32xf32>, vector<32x64xf32>, vector<8x64xf32> -> vector<8x64xf32>
    %77 = arith.addf %70, %76 : vector<8x64xf32>
    %c2_68 = arith.constant 2 : index
    %c0_69 = arith.constant 0 : index
    %c0_70 = arith.constant 0 : index
    %78 = vector.load %arg9[%c2_68, %c0_69, %c0_70] : memref<3x8x4xf32, #tpu.memory_space<vmem>>, vector<1x8x4xf32>
    %79 = vector.shape_cast %78 : vector<1x8x4xf32> to vector<8x4xf32>
    %cst_71 = arith.constant dense<0.000000e+00> : vector<8x32xf32>
    %80 = tpu.matmul %79, %62, %cst_71 {dimension_numbers = #tpu.dot_dimension_numbers<[1], [0], [0], [1], [0, 0, 1, 1], [], []>} : vector<8x4xf32>, vector<4x32xf32>, vector<8x32xf32> -> vector<8x32xf32>
    %c2_72 = arith.constant 2 : index
    %c0_73 = arith.constant 0 : index
    %c0_74 = arith.constant 0 : index
    %81 = vector.load %arg10[%c2_72, %c0_73, %c0_74] : memref<3x32x64xf32, #tpu.memory_space<vmem>>, vector<1x32x64xf32>
    %82 = vector.shape_cast %81 : vector<1x32x64xf32> to vector<32x64xf32>
    %cst_75 = arith.constant dense<0.000000e+00> : vector<8x64xf32>
    %83 = tpu.matmul %80, %82, %cst_75 {dimension_numbers = #tpu.dot_dimension_numbers<[1], [0], [0], [1], [0, 0, 1, 1], [], []>} : vector<8x32xf32>, vector<32x64xf32>, vector<8x64xf32> -> vector<8x64xf32>
    %84 = arith.addf %77, %83 : vector<8x64xf32>
    %c0_76 = arith.constant 0 : index
    %c0_77 = arith.constant 0 : index
    %85 = vector.load %arg11[%c0_76, %c0_77] : memref<1x64xf32, #tpu.memory_space<vmem>>, vector<1x64xf32>
    %86 = vector.broadcast %85 : vector<1x64xf32> to vector<8x64xf32>
    %87 = arith.addf %84, %86 : vector<8x64xf32>
    %cst_78 = arith.constant dense<0.000000e+00> : vector<64xf32>
    %88 = vector.multi_reduction <add>, %87, %cst_78 [0] : vector<8x64xf32> to vector<64xf32>
    %89 = vector.shape_cast %88 : vector<64xf32> to vector<1x64xf32>
    %c0_79 = arith.constant 0 : index
    %c0_80 = arith.constant 0 : index
    %90 = vector.load %arg12[%c0_79, %c0_80] : memref<64x16xf32, #tpu.memory_space<vmem>>, vector<64x16xf32>
    %cst_81 = arith.constant dense<0.000000e+00> : vector<1x16xf32>
    %91 = tpu.matmul %89, %90, %cst_81 {dimension_numbers = #tpu.dot_dimension_numbers<[1], [0], [0], [1], [0, 0, 1, 1], [], []>} : vector<1x64xf32>, vector<64x16xf32>, vector<1x16xf32> -> vector<1x16xf32>
    %cst_82 = arith.constant 3.125000e-02 : f32
    %92 = vector.broadcast %cst_82 : f32 to vector<1x16xf32>
    %93 = arith.mulf %91, %92 : vector<1x16xf32>
    %c0_83 = arith.constant 0 : index
    %c0_84 = arith.constant 0 : index
    %94 = vector.load %arg13[%c0_83, %c0_84] : memref<16x64xf32, #tpu.memory_space<vmem>>, vector<16x64xf32>
    %cst_85 = arith.constant dense<0.000000e+00> : vector<1x64xf32>
    %95 = tpu.matmul %93, %94, %cst_85 {dimension_numbers = #tpu.dot_dimension_numbers<[1], [0], [0], [1], [0, 0, 1, 1], [], []>} : vector<1x16xf32>, vector<16x64xf32>, vector<1x64xf32> -> vector<1x64xf32>
    %96 = vector.broadcast %95 : vector<1x64xf32> to vector<8x64xf32>
    %97 = arith.subf %87, %96 : vector<8x64xf32>
    %98 = arith.mulf %97, %97 : vector<8x64xf32>
    %cst_86 = arith.constant dense<0.000000e+00> : vector<64xf32>
    %99 = vector.multi_reduction <add>, %98, %cst_86 [0] : vector<8x64xf32> to vector<64xf32>
    %100 = vector.shape_cast %99 : vector<64xf32> to vector<1x64xf32>
    %c0_87 = arith.constant 0 : index
    %c0_88 = arith.constant 0 : index
    %101 = vector.load %arg12[%c0_87, %c0_88] : memref<64x16xf32, #tpu.memory_space<vmem>>, vector<64x16xf32>
    %cst_89 = arith.constant dense<0.000000e+00> : vector<1x16xf32>
    %102 = tpu.matmul %100, %101, %cst_89 {dimension_numbers = #tpu.dot_dimension_numbers<[1], [0], [0], [1], [0, 0, 1, 1], [], []>} : vector<1x64xf32>, vector<64x16xf32>, vector<1x16xf32> -> vector<1x16xf32>
    %cst_90 = arith.constant 3.125000e-02 : f32
    %103 = vector.broadcast %cst_90 : f32 to vector<1x16xf32>
    %104 = arith.mulf %102, %103 : vector<1x16xf32>
    %c0_91 = arith.constant 0 : index
    %c0_92 = arith.constant 0 : index
    %105 = vector.load %arg14[%c0_91, %c0_92] : memref<1x16xf32, #tpu.memory_space<vmem>>, vector<1x16xf32>
    %cst_93 = arith.constant 9.99999974E-6 : f32
    %106 = vector.broadcast %cst_93 : f32 to vector<1x16xf32>
    %107 = arith.addf %104, %106 : vector<1x16xf32>
    %108 = math.rsqrt %107 : vector<1x16xf32>
    %109 = arith.mulf %105, %108 : vector<1x16xf32>
    %c0_94 = arith.constant 0 : index
    %c0_95 = arith.constant 0 : index
    %110 = vector.load %arg15[%c0_94, %c0_95] : memref<1x16xf32, #tpu.memory_space<vmem>>, vector<1x16xf32>
    %111 = arith.mulf %93, %109 : vector<1x16xf32>
    %112 = arith.subf %110, %111 : vector<1x16xf32>
    %c0_96 = arith.constant 0 : index
    %c0_97 = arith.constant 0 : index
    %113 = vector.load %arg13[%c0_96, %c0_97] : memref<16x64xf32, #tpu.memory_space<vmem>>, vector<16x64xf32>
    %cst_98 = arith.constant dense<0.000000e+00> : vector<1x64xf32>
    %114 = tpu.matmul %109, %113, %cst_98 {dimension_numbers = #tpu.dot_dimension_numbers<[1], [0], [0], [1], [0, 0, 1, 1], [], []>} : vector<1x16xf32>, vector<16x64xf32>, vector<1x64xf32> -> vector<1x64xf32>
    %115 = vector.broadcast %114 : vector<1x64xf32> to vector<8x64xf32>
    %116 = arith.mulf %87, %115 : vector<8x64xf32>
    %c0_99 = arith.constant 0 : index
    %c0_100 = arith.constant 0 : index
    %117 = vector.load %arg13[%c0_99, %c0_100] : memref<16x64xf32, #tpu.memory_space<vmem>>, vector<16x64xf32>
    %cst_101 = arith.constant dense<0.000000e+00> : vector<1x64xf32>
    %118 = tpu.matmul %112, %117, %cst_101 {dimension_numbers = #tpu.dot_dimension_numbers<[1], [0], [0], [1], [0, 0, 1, 1], [], []>} : vector<1x16xf32>, vector<16x64xf32>, vector<1x64xf32> -> vector<1x64xf32>
    %119 = vector.broadcast %118 : vector<1x64xf32> to vector<8x64xf32>
    %120 = arith.addf %116, %119 : vector<8x64xf32>
    %cst_102 = arith.constant 0.000000e+00 : f32
    %121 = vector.broadcast %cst_102 : f32 to vector<8x64xf32>
    %122 = arith.maximumf %120, %121 : vector<8x64xf32>
    %cst_103 = arith.constant 0.000000e+00 : f32
    %123 = vector.broadcast %cst_103 : f32 to vector<16x128xf32>
    %c0_104 = arith.constant 0 : index
    %c0_105 = arith.constant 0 : index
    %c0_106 = arith.constant 0 : index
    %124 = vector.load %arg16[%c0_104, %c0_105, %c0_106] : memref<3x16x8xf32, #tpu.memory_space<vmem>>, vector<1x16x8xf32>
    %125 = vector.shape_cast %124 : vector<1x16x8xf32> to vector<16x8xf32>
    %cst_107 = arith.constant dense<0.000000e+00> : vector<16x64xf32>
    %126 = tpu.matmul %125, %122, %cst_107 {dimension_numbers = #tpu.dot_dimension_numbers<[1], [0], [0], [1], [0, 0, 1, 1], [], []>} : vector<16x8xf32>, vector<8x64xf32>, vector<16x64xf32> -> vector<16x64xf32>
    %c0_108 = arith.constant 0 : index
    %c0_109 = arith.constant 0 : index
    %c0_110 = arith.constant 0 : index
    %127 = vector.load %arg17[%c0_108, %c0_109, %c0_110] : memref<3x64x128xf32, #tpu.memory_space<vmem>>, vector<1x64x128xf32>
    %128 = vector.shape_cast %127 : vector<1x64x128xf32> to vector<64x128xf32>
    %cst_111 = arith.constant dense<0.000000e+00> : vector<16x128xf32>
    %129 = tpu.matmul %126, %128, %cst_111 {dimension_numbers = #tpu.dot_dimension_numbers<[1], [0], [0], [1], [0, 0, 1, 1], [], []>} : vector<16x64xf32>, vector<64x128xf32>, vector<16x128xf32> -> vector<16x128xf32>
    %130 = arith.addf %123, %129 : vector<16x128xf32>
    %c1_112 = arith.constant 1 : index
    %c0_113 = arith.constant 0 : index
    %c0_114 = arith.constant 0 : index
    %131 = vector.load %arg16[%c1_112, %c0_113, %c0_114] : memref<3x16x8xf32, #tpu.memory_space<vmem>>, vector<1x16x8xf32>
    %132 = vector.shape_cast %131 : vector<1x16x8xf32> to vector<16x8xf32>
    %cst_115 = arith.constant dense<0.000000e+00> : vector<16x64xf32>
    %133 = tpu.matmul %132, %122, %cst_115 {dimension_numbers = #tpu.dot_dimension_numbers<[1], [0], [0], [1], [0, 0, 1, 1], [], []>} : vector<16x8xf32>, vector<8x64xf32>, vector<16x64xf32> -> vector<16x64xf32>
    %c1_116 = arith.constant 1 : index
    %c0_117 = arith.constant 0 : index
    %c0_118 = arith.constant 0 : index
    %134 = vector.load %arg17[%c1_116, %c0_117, %c0_118] : memref<3x64x128xf32, #tpu.memory_space<vmem>>, vector<1x64x128xf32>
    %135 = vector.shape_cast %134 : vector<1x64x128xf32> to vector<64x128xf32>
    %cst_119 = arith.constant dense<0.000000e+00> : vector<16x128xf32>
    %136 = tpu.matmul %133, %135, %cst_119 {dimension_numbers = #tpu.dot_dimension_numbers<[1], [0], [0], [1], [0, 0, 1, 1], [], []>} : vector<16x64xf32>, vector<64x128xf32>, vector<16x128xf32> -> vector<16x128xf32>
    %137 = arith.addf %130, %136 : vector<16x128xf32>
    %c2_120 = arith.constant 2 : index
    %c0_121 = arith.constant 0 : index
    %c0_122 = arith.constant 0 : index
    %138 = vector.load %arg16[%c2_120, %c0_121, %c0_122] : memref<3x16x8xf32, #tpu.memory_space<vmem>>, vector<1x16x8xf32>
    %139 = vector.shape_cast %138 : vector<1x16x8xf32> to vector<16x8xf32>
    %cst_123 = arith.constant dense<0.000000e+00> : vector<16x64xf32>
    %140 = tpu.matmul %139, %122, %cst_123 {dimension_numbers = #tpu.dot_dimension_numbers<[1], [0], [0], [1], [0, 0, 1, 1], [], []>} : vector<16x8xf32>, vector<8x64xf32>, vector<16x64xf32> -> vector<16x64xf32>
    %c2_124 = arith.constant 2 : index
    %c0_125 = arith.constant 0 : index
    %c0_126 = arith.constant 0 : index
    %141 = vector.load %arg17[%c2_124, %c0_125, %c0_126] : memref<3x64x128xf32, #tpu.memory_space<vmem>>, vector<1x64x128xf32>
    %142 = vector.shape_cast %141 : vector<1x64x128xf32> to vector<64x128xf32>
    %cst_127 = arith.constant dense<0.000000e+00> : vector<16x128xf32>
    %143 = tpu.matmul %140, %142, %cst_127 {dimension_numbers = #tpu.dot_dimension_numbers<[1], [0], [0], [1], [0, 0, 1, 1], [], []>} : vector<16x64xf32>, vector<64x128xf32>, vector<16x128xf32> -> vector<16x128xf32>
    %144 = arith.addf %137, %143 : vector<16x128xf32>
    %c0_128 = arith.constant 0 : index
    %c0_129 = arith.constant 0 : index
    %145 = vector.load %arg18[%c0_128, %c0_129] : memref<1x128xf32, #tpu.memory_space<vmem>>, vector<1x128xf32>
    %146 = vector.broadcast %145 : vector<1x128xf32> to vector<16x128xf32>
    %147 = arith.addf %144, %146 : vector<16x128xf32>
    %cst_130 = arith.constant dense<0.000000e+00> : vector<128xf32>
    %148 = vector.multi_reduction <add>, %147, %cst_130 [0] : vector<16x128xf32> to vector<128xf32>
    %149 = vector.shape_cast %148 : vector<128xf32> to vector<1x128xf32>
    %c0_131 = arith.constant 0 : index
    %c0_132 = arith.constant 0 : index
    %150 = vector.load %arg19[%c0_131, %c0_132] : memref<128x16xf32, #tpu.memory_space<vmem>>, vector<128x16xf32>
    %cst_133 = arith.constant dense<0.000000e+00> : vector<1x16xf32>
    %151 = tpu.matmul %149, %150, %cst_133 {dimension_numbers = #tpu.dot_dimension_numbers<[1], [0], [0], [1], [0, 0, 1, 1], [], []>} : vector<1x128xf32>, vector<128x16xf32>, vector<1x16xf32> -> vector<1x16xf32>
    %cst_134 = arith.constant 7.812500e-03 : f32
    %152 = vector.broadcast %cst_134 : f32 to vector<1x16xf32>
    %153 = arith.mulf %151, %152 : vector<1x16xf32>
    %c0_135 = arith.constant 0 : index
    %c0_136 = arith.constant 0 : index
    %154 = vector.load %arg20[%c0_135, %c0_136] : memref<16x128xf32, #tpu.memory_space<vmem>>, vector<16x128xf32>
    %cst_137 = arith.constant dense<0.000000e+00> : vector<1x128xf32>
    %155 = tpu.matmul %153, %154, %cst_137 {dimension_numbers = #tpu.dot_dimension_numbers<[1], [0], [0], [1], [0, 0, 1, 1], [], []>} : vector<1x16xf32>, vector<16x128xf32>, vector<1x128xf32> -> vector<1x128xf32>
    %156 = vector.broadcast %155 : vector<1x128xf32> to vector<16x128xf32>
    %157 = arith.subf %147, %156 : vector<16x128xf32>
    %158 = arith.mulf %157, %157 : vector<16x128xf32>
    %cst_138 = arith.constant dense<0.000000e+00> : vector<128xf32>
    %159 = vector.multi_reduction <add>, %158, %cst_138 [0] : vector<16x128xf32> to vector<128xf32>
    %160 = vector.shape_cast %159 : vector<128xf32> to vector<1x128xf32>
    %c0_139 = arith.constant 0 : index
    %c0_140 = arith.constant 0 : index
    %161 = vector.load %arg19[%c0_139, %c0_140] : memref<128x16xf32, #tpu.memory_space<vmem>>, vector<128x16xf32>
    %cst_141 = arith.constant dense<0.000000e+00> : vector<1x16xf32>
    %162 = tpu.matmul %160, %161, %cst_141 {dimension_numbers = #tpu.dot_dimension_numbers<[1], [0], [0], [1], [0, 0, 1, 1], [], []>} : vector<1x128xf32>, vector<128x16xf32>, vector<1x16xf32> -> vector<1x16xf32>
    %cst_142 = arith.constant 7.812500e-03 : f32
    %163 = vector.broadcast %cst_142 : f32 to vector<1x16xf32>
    %164 = arith.mulf %162, %163 : vector<1x16xf32>
    %c0_143 = arith.constant 0 : index
    %c0_144 = arith.constant 0 : index
    %165 = vector.load %arg21[%c0_143, %c0_144] : memref<1x16xf32, #tpu.memory_space<vmem>>, vector<1x16xf32>
    %cst_145 = arith.constant 9.99999974E-6 : f32
    %166 = vector.broadcast %cst_145 : f32 to vector<1x16xf32>
    %167 = arith.addf %164, %166 : vector<1x16xf32>
    %168 = math.rsqrt %167 : vector<1x16xf32>
    %169 = arith.mulf %165, %168 : vector<1x16xf32>
    %c0_146 = arith.constant 0 : index
    %c0_147 = arith.constant 0 : index
    %170 = vector.load %arg22[%c0_146, %c0_147] : memref<1x16xf32, #tpu.memory_space<vmem>>, vector<1x16xf32>
    %171 = arith.mulf %153, %169 : vector<1x16xf32>
    %172 = arith.subf %170, %171 : vector<1x16xf32>
    %c0_148 = arith.constant 0 : index
    %c0_149 = arith.constant 0 : index
    %173 = vector.load %arg20[%c0_148, %c0_149] : memref<16x128xf32, #tpu.memory_space<vmem>>, vector<16x128xf32>
    %cst_150 = arith.constant dense<0.000000e+00> : vector<1x128xf32>
    %174 = tpu.matmul %169, %173, %cst_150 {dimension_numbers = #tpu.dot_dimension_numbers<[1], [0], [0], [1], [0, 0, 1, 1], [], []>} : vector<1x16xf32>, vector<16x128xf32>, vector<1x128xf32> -> vector<1x128xf32>
    %175 = vector.broadcast %174 : vector<1x128xf32> to vector<16x128xf32>
    %176 = arith.mulf %147, %175 : vector<16x128xf32>
    %c0_151 = arith.constant 0 : index
    %c0_152 = arith.constant 0 : index
    %177 = vector.load %arg20[%c0_151, %c0_152] : memref<16x128xf32, #tpu.memory_space<vmem>>, vector<16x128xf32>
    %cst_153 = arith.constant dense<0.000000e+00> : vector<1x128xf32>
    %178 = tpu.matmul %172, %177, %cst_153 {dimension_numbers = #tpu.dot_dimension_numbers<[1], [0], [0], [1], [0, 0, 1, 1], [], []>} : vector<1x16xf32>, vector<16x128xf32>, vector<1x128xf32> -> vector<1x128xf32>
    %179 = vector.broadcast %178 : vector<1x128xf32> to vector<16x128xf32>
    %180 = arith.addf %176, %179 : vector<16x128xf32>
    %cst_154 = arith.constant 0.000000e+00 : f32
    %181 = vector.broadcast %cst_154 : f32 to vector<16x128xf32>
    %182 = arith.maximumf %180, %181 : vector<16x128xf32>
    %cst_155 = arith.constant 0.000000e+00 : f32
    %183 = vector.broadcast %cst_155 : f32 to vector<32x256xf32>
    %c0_156 = arith.constant 0 : index
    %c0_157 = arith.constant 0 : index
    %c0_158 = arith.constant 0 : index
    %184 = vector.load %arg23[%c0_156, %c0_157, %c0_158] : memref<3x32x16xf32, #tpu.memory_space<vmem>>, vector<1x32x16xf32>
    %185 = vector.shape_cast %184 : vector<1x32x16xf32> to vector<32x16xf32>
    %cst_159 = arith.constant dense<0.000000e+00> : vector<32x128xf32>
    %186 = tpu.matmul %185, %182, %cst_159 {dimension_numbers = #tpu.dot_dimension_numbers<[1], [0], [0], [1], [0, 0, 1, 1], [], []>} : vector<32x16xf32>, vector<16x128xf32>, vector<32x128xf32> -> vector<32x128xf32>
    %c0_160 = arith.constant 0 : index
    %c0_161 = arith.constant 0 : index
    %c0_162 = arith.constant 0 : index
    %187 = vector.load %arg24[%c0_160, %c0_161, %c0_162] : memref<3x128x256xf32, #tpu.memory_space<vmem>>, vector<1x128x256xf32>
    %188 = vector.shape_cast %187 : vector<1x128x256xf32> to vector<128x256xf32>
    %cst_163 = arith.constant dense<0.000000e+00> : vector<32x256xf32>
    %189 = tpu.matmul %186, %188, %cst_163 {dimension_numbers = #tpu.dot_dimension_numbers<[1], [0], [0], [1], [0, 0, 1, 1], [], []>} : vector<32x128xf32>, vector<128x256xf32>, vector<32x256xf32> -> vector<32x256xf32>
    %190 = arith.addf %183, %189 : vector<32x256xf32>
    %c1_164 = arith.constant 1 : index
    %c0_165 = arith.constant 0 : index
    %c0_166 = arith.constant 0 : index
    %191 = vector.load %arg23[%c1_164, %c0_165, %c0_166] : memref<3x32x16xf32, #tpu.memory_space<vmem>>, vector<1x32x16xf32>
    %192 = vector.shape_cast %191 : vector<1x32x16xf32> to vector<32x16xf32>
    %cst_167 = arith.constant dense<0.000000e+00> : vector<32x128xf32>
    %193 = tpu.matmul %192, %182, %cst_167 {dimension_numbers = #tpu.dot_dimension_numbers<[1], [0], [0], [1], [0, 0, 1, 1], [], []>} : vector<32x16xf32>, vector<16x128xf32>, vector<32x128xf32> -> vector<32x128xf32>
    %c1_168 = arith.constant 1 : index
    %c0_169 = arith.constant 0 : index
    %c0_170 = arith.constant 0 : index
    %194 = vector.load %arg24[%c1_168, %c0_169, %c0_170] : memref<3x128x256xf32, #tpu.memory_space<vmem>>, vector<1x128x256xf32>
    %195 = vector.shape_cast %194 : vector<1x128x256xf32> to vector<128x256xf32>
    %cst_171 = arith.constant dense<0.000000e+00> : vector<32x256xf32>
    %196 = tpu.matmul %193, %195, %cst_171 {dimension_numbers = #tpu.dot_dimension_numbers<[1], [0], [0], [1], [0, 0, 1, 1], [], []>} : vector<32x128xf32>, vector<128x256xf32>, vector<32x256xf32> -> vector<32x256xf32>
    %197 = arith.addf %190, %196 : vector<32x256xf32>
    %c2_172 = arith.constant 2 : index
    %c0_173 = arith.constant 0 : index
    %c0_174 = arith.constant 0 : index
    %198 = vector.load %arg23[%c2_172, %c0_173, %c0_174] : memref<3x32x16xf32, #tpu.memory_space<vmem>>, vector<1x32x16xf32>
    %199 = vector.shape_cast %198 : vector<1x32x16xf32> to vector<32x16xf32>
    %cst_175 = arith.constant dense<0.000000e+00> : vector<32x128xf32>
    %200 = tpu.matmul %199, %182, %cst_175 {dimension_numbers = #tpu.dot_dimension_numbers<[1], [0], [0], [1], [0, 0, 1, 1], [], []>} : vector<32x16xf32>, vector<16x128xf32>, vector<32x128xf32> -> vector<32x128xf32>
    %c2_176 = arith.constant 2 : index
    %c0_177 = arith.constant 0 : index
    %c0_178 = arith.constant 0 : index
    %201 = vector.load %arg24[%c2_176, %c0_177, %c0_178] : memref<3x128x256xf32, #tpu.memory_space<vmem>>, vector<1x128x256xf32>
    %202 = vector.shape_cast %201 : vector<1x128x256xf32> to vector<128x256xf32>
    %cst_179 = arith.constant dense<0.000000e+00> : vector<32x256xf32>
    %203 = tpu.matmul %200, %202, %cst_179 {dimension_numbers = #tpu.dot_dimension_numbers<[1], [0], [0], [1], [0, 0, 1, 1], [], []>} : vector<32x128xf32>, vector<128x256xf32>, vector<32x256xf32> -> vector<32x256xf32>
    %204 = arith.addf %197, %203 : vector<32x256xf32>
    %c0_180 = arith.constant 0 : index
    %c0_181 = arith.constant 0 : index
    %205 = vector.load %arg25[%c0_180, %c0_181] : memref<1x256xf32, #tpu.memory_space<vmem>>, vector<1x256xf32>
    %206 = vector.broadcast %205 : vector<1x256xf32> to vector<32x256xf32>
    %207 = arith.addf %204, %206 : vector<32x256xf32>
    %cst_182 = arith.constant dense<0.000000e+00> : vector<256xf32>
    %208 = vector.multi_reduction <add>, %207, %cst_182 [0] : vector<32x256xf32> to vector<256xf32>
    %209 = vector.shape_cast %208 : vector<256xf32> to vector<1x256xf32>
    %c0_183 = arith.constant 0 : index
    %c0_184 = arith.constant 0 : index
    %210 = vector.load %arg26[%c0_183, %c0_184] : memref<256x16xf32, #tpu.memory_space<vmem>>, vector<256x16xf32>
    %cst_185 = arith.constant dense<0.000000e+00> : vector<1x16xf32>
    %211 = tpu.matmul %209, %210, %cst_185 {dimension_numbers = #tpu.dot_dimension_numbers<[1], [0], [0], [1], [0, 0, 1, 1], [], []>} : vector<1x256xf32>, vector<256x16xf32>, vector<1x16xf32> -> vector<1x16xf32>
    %cst_186 = arith.constant 0.001953125 : f32
    %212 = vector.broadcast %cst_186 : f32 to vector<1x16xf32>
    %213 = arith.mulf %211, %212 : vector<1x16xf32>
    %c0_187 = arith.constant 0 : index
    %c0_188 = arith.constant 0 : index
    %214 = vector.load %arg27[%c0_187, %c0_188] : memref<16x256xf32, #tpu.memory_space<vmem>>, vector<16x256xf32>
    %cst_189 = arith.constant dense<0.000000e+00> : vector<1x256xf32>
    %215 = tpu.matmul %213, %214, %cst_189 {dimension_numbers = #tpu.dot_dimension_numbers<[1], [0], [0], [1], [0, 0, 1, 1], [], []>} : vector<1x16xf32>, vector<16x256xf32>, vector<1x256xf32> -> vector<1x256xf32>
    %216 = vector.broadcast %215 : vector<1x256xf32> to vector<32x256xf32>
    %217 = arith.subf %207, %216 : vector<32x256xf32>
    %218 = arith.mulf %217, %217 : vector<32x256xf32>
    %cst_190 = arith.constant dense<0.000000e+00> : vector<256xf32>
    %219 = vector.multi_reduction <add>, %218, %cst_190 [0] : vector<32x256xf32> to vector<256xf32>
    %220 = vector.shape_cast %219 : vector<256xf32> to vector<1x256xf32>
    %c0_191 = arith.constant 0 : index
    %c0_192 = arith.constant 0 : index
    %221 = vector.load %arg26[%c0_191, %c0_192] : memref<256x16xf32, #tpu.memory_space<vmem>>, vector<256x16xf32>
    %cst_193 = arith.constant dense<0.000000e+00> : vector<1x16xf32>
    %222 = tpu.matmul %220, %221, %cst_193 {dimension_numbers = #tpu.dot_dimension_numbers<[1], [0], [0], [1], [0, 0, 1, 1], [], []>} : vector<1x256xf32>, vector<256x16xf32>, vector<1x16xf32> -> vector<1x16xf32>
    %cst_194 = arith.constant 0.001953125 : f32
    %223 = vector.broadcast %cst_194 : f32 to vector<1x16xf32>
    %224 = arith.mulf %222, %223 : vector<1x16xf32>
    %c0_195 = arith.constant 0 : index
    %c0_196 = arith.constant 0 : index
    %225 = vector.load %arg28[%c0_195, %c0_196] : memref<1x16xf32, #tpu.memory_space<vmem>>, vector<1x16xf32>
    %cst_197 = arith.constant 9.99999974E-6 : f32
    %226 = vector.broadcast %cst_197 : f32 to vector<1x16xf32>
    %227 = arith.addf %224, %226 : vector<1x16xf32>
    %228 = math.rsqrt %227 : vector<1x16xf32>
    %229 = arith.mulf %225, %228 : vector<1x16xf32>
    %c0_198 = arith.constant 0 : index
    %c0_199 = arith.constant 0 : index
    %230 = vector.load %arg29[%c0_198, %c0_199] : memref<1x16xf32, #tpu.memory_space<vmem>>, vector<1x16xf32>
    %231 = arith.mulf %213, %229 : vector<1x16xf32>
    %232 = arith.subf %230, %231 : vector<1x16xf32>
    %c0_200 = arith.constant 0 : index
    %c0_201 = arith.constant 0 : index
    %233 = vector.load %arg27[%c0_200, %c0_201] : memref<16x256xf32, #tpu.memory_space<vmem>>, vector<16x256xf32>
    %cst_202 = arith.constant dense<0.000000e+00> : vector<1x256xf32>
    %234 = tpu.matmul %229, %233, %cst_202 {dimension_numbers = #tpu.dot_dimension_numbers<[1], [0], [0], [1], [0, 0, 1, 1], [], []>} : vector<1x16xf32>, vector<16x256xf32>, vector<1x256xf32> -> vector<1x256xf32>
    %235 = vector.broadcast %234 : vector<1x256xf32> to vector<32x256xf32>
    %236 = arith.mulf %207, %235 : vector<32x256xf32>
    %c0_203 = arith.constant 0 : index
    %c0_204 = arith.constant 0 : index
    %237 = vector.load %arg27[%c0_203, %c0_204] : memref<16x256xf32, #tpu.memory_space<vmem>>, vector<16x256xf32>
    %cst_205 = arith.constant dense<0.000000e+00> : vector<1x256xf32>
    %238 = tpu.matmul %232, %237, %cst_205 {dimension_numbers = #tpu.dot_dimension_numbers<[1], [0], [0], [1], [0, 0, 1, 1], [], []>} : vector<1x16xf32>, vector<16x256xf32>, vector<1x256xf32> -> vector<1x256xf32>
    %239 = vector.broadcast %238 : vector<1x256xf32> to vector<32x256xf32>
    %240 = arith.addf %236, %239 : vector<32x256xf32>
    %cst_206 = arith.constant 0.000000e+00 : f32
    %241 = vector.broadcast %cst_206 : f32 to vector<32x256xf32>
    %242 = arith.maximumf %240, %241 : vector<32x256xf32>
    %cst_207 = arith.constant 0.000000e+00 : f32
    %243 = vector.broadcast %cst_207 : f32 to vector<64x256xf32>
    %c0_208 = arith.constant 0 : index
    %c0_209 = arith.constant 0 : index
    %c0_210 = arith.constant 0 : index
    %244 = vector.load %arg30[%c0_208, %c0_209, %c0_210] : memref<3x64x32xf32, #tpu.memory_space<vmem>>, vector<1x64x32xf32>
    %245 = vector.shape_cast %244 : vector<1x64x32xf32> to vector<64x32xf32>
    %cst_211 = arith.constant dense<0.000000e+00> : vector<64x256xf32>
    %246 = tpu.matmul %245, %242, %cst_211 {dimension_numbers = #tpu.dot_dimension_numbers<[1], [0], [0], [1], [0, 0, 1, 1], [], []>} : vector<64x32xf32>, vector<32x256xf32>, vector<64x256xf32> -> vector<64x256xf32>
    %c0_212 = arith.constant 0 : index
    %c0_213 = arith.constant 0 : index
    %c0_214 = arith.constant 0 : index
    %247 = vector.load %arg31[%c0_212, %c0_213, %c0_214] : memref<3x256x256xf32, #tpu.memory_space<vmem>>, vector<1x256x256xf32>
    %248 = vector.shape_cast %247 : vector<1x256x256xf32> to vector<256x256xf32>
    %cst_215 = arith.constant dense<0.000000e+00> : vector<64x256xf32>
    %249 = tpu.matmul %246, %248, %cst_215 {dimension_numbers = #tpu.dot_dimension_numbers<[1], [0], [0], [1], [0, 0, 1, 1], [], []>} : vector<64x256xf32>, vector<256x256xf32>, vector<64x256xf32> -> vector<64x256xf32>
    %250 = arith.addf %243, %249 : vector<64x256xf32>
    %c1_216 = arith.constant 1 : index
    %c0_217 = arith.constant 0 : index
    %c0_218 = arith.constant 0 : index
    %251 = vector.load %arg30[%c1_216, %c0_217, %c0_218] : memref<3x64x32xf32, #tpu.memory_space<vmem>>, vector<1x64x32xf32>
    %252 = vector.shape_cast %251 : vector<1x64x32xf32> to vector<64x32xf32>
    %cst_219 = arith.constant dense<0.000000e+00> : vector<64x256xf32>
    %253 = tpu.matmul %252, %242, %cst_219 {dimension_numbers = #tpu.dot_dimension_numbers<[1], [0], [0], [1], [0, 0, 1, 1], [], []>} : vector<64x32xf32>, vector<32x256xf32>, vector<64x256xf32> -> vector<64x256xf32>
    %c1_220 = arith.constant 1 : index
    %c0_221 = arith.constant 0 : index
    %c0_222 = arith.constant 0 : index
    %254 = vector.load %arg31[%c1_220, %c0_221, %c0_222] : memref<3x256x256xf32, #tpu.memory_space<vmem>>, vector<1x256x256xf32>
    %255 = vector.shape_cast %254 : vector<1x256x256xf32> to vector<256x256xf32>
    %cst_223 = arith.constant dense<0.000000e+00> : vector<64x256xf32>
    %256 = tpu.matmul %253, %255, %cst_223 {dimension_numbers = #tpu.dot_dimension_numbers<[1], [0], [0], [1], [0, 0, 1, 1], [], []>} : vector<64x256xf32>, vector<256x256xf32>, vector<64x256xf32> -> vector<64x256xf32>
    %257 = arith.addf %250, %256 : vector<64x256xf32>
    %c2_224 = arith.constant 2 : index
    %c0_225 = arith.constant 0 : index
    %c0_226 = arith.constant 0 : index
    %258 = vector.load %arg30[%c2_224, %c0_225, %c0_226] : memref<3x64x32xf32, #tpu.memory_space<vmem>>, vector<1x64x32xf32>
    %259 = vector.shape_cast %258 : vector<1x64x32xf32> to vector<64x32xf32>
    %cst_227 = arith.constant dense<0.000000e+00> : vector<64x256xf32>
    %260 = tpu.matmul %259, %242, %cst_227 {dimension_numbers = #tpu.dot_dimension_numbers<[1], [0], [0], [1], [0, 0, 1, 1], [], []>} : vector<64x32xf32>, vector<32x256xf32>, vector<64x256xf32> -> vector<64x256xf32>
    %c2_228 = arith.constant 2 : index
    %c0_229 = arith.constant 0 : index
    %c0_230 = arith.constant 0 : index
    %261 = vector.load %arg31[%c2_228, %c0_229, %c0_230] : memref<3x256x256xf32, #tpu.memory_space<vmem>>, vector<1x256x256xf32>
    %262 = vector.shape_cast %261 : vector<1x256x256xf32> to vector<256x256xf32>
    %cst_231 = arith.constant dense<0.000000e+00> : vector<64x256xf32>
    %263 = tpu.matmul %260, %262, %cst_231 {dimension_numbers = #tpu.dot_dimension_numbers<[1], [0], [0], [1], [0, 0, 1, 1], [], []>} : vector<64x256xf32>, vector<256x256xf32>, vector<64x256xf32> -> vector<64x256xf32>
    %264 = arith.addf %257, %263 : vector<64x256xf32>
    %c0_232 = arith.constant 0 : index
    %c0_233 = arith.constant 0 : index
    %265 = vector.load %arg32[%c0_232, %c0_233] : memref<1x256xf32, #tpu.memory_space<vmem>>, vector<1x256xf32>
    %266 = vector.broadcast %265 : vector<1x256xf32> to vector<64x256xf32>
    %267 = arith.addf %264, %266 : vector<64x256xf32>
    %cst_234 = arith.constant dense<0.000000e+00> : vector<256xf32>
    %268 = vector.multi_reduction <add>, %267, %cst_234 [0] : vector<64x256xf32> to vector<256xf32>
    %269 = vector.shape_cast %268 : vector<256xf32> to vector<1x256xf32>
    %c0_235 = arith.constant 0 : index
    %c0_236 = arith.constant 0 : index
    %270 = vector.load %arg33[%c0_235, %c0_236] : memref<256x8xf32, #tpu.memory_space<vmem>>, vector<256x8xf32>
    %cst_237 = arith.constant dense<0.000000e+00> : vector<1x8xf32>
    %271 = tpu.matmul %269, %270, %cst_237 {dimension_numbers = #tpu.dot_dimension_numbers<[1], [0], [0], [1], [0, 0, 1, 1], [], []>} : vector<1x256xf32>, vector<256x8xf32>, vector<1x8xf32> -> vector<1x8xf32>
    %cst_238 = arith.constant 4.8828125E-4 : f32
    %272 = vector.broadcast %cst_238 : f32 to vector<1x8xf32>
    %273 = arith.mulf %271, %272 : vector<1x8xf32>
    %c0_239 = arith.constant 0 : index
    %c0_240 = arith.constant 0 : index
    %274 = vector.load %arg34[%c0_239, %c0_240] : memref<8x256xf32, #tpu.memory_space<vmem>>, vector<8x256xf32>
    %cst_241 = arith.constant dense<0.000000e+00> : vector<1x256xf32>
    %275 = tpu.matmul %273, %274, %cst_241 {dimension_numbers = #tpu.dot_dimension_numbers<[1], [0], [0], [1], [0, 0, 1, 1], [], []>} : vector<1x8xf32>, vector<8x256xf32>, vector<1x256xf32> -> vector<1x256xf32>
    %276 = vector.broadcast %275 : vector<1x256xf32> to vector<64x256xf32>
    %277 = arith.subf %267, %276 : vector<64x256xf32>
    %278 = arith.mulf %277, %277 : vector<64x256xf32>
    %cst_242 = arith.constant dense<0.000000e+00> : vector<256xf32>
    %279 = vector.multi_reduction <add>, %278, %cst_242 [0] : vector<64x256xf32> to vector<256xf32>
    %280 = vector.shape_cast %279 : vector<256xf32> to vector<1x256xf32>
    %c0_243 = arith.constant 0 : index
    %c0_244 = arith.constant 0 : index
    %281 = vector.load %arg33[%c0_243, %c0_244] : memref<256x8xf32, #tpu.memory_space<vmem>>, vector<256x8xf32>
    %cst_245 = arith.constant dense<0.000000e+00> : vector<1x8xf32>
    %282 = tpu.matmul %280, %281, %cst_245 {dimension_numbers = #tpu.dot_dimension_numbers<[1], [0], [0], [1], [0, 0, 1, 1], [], []>} : vector<1x256xf32>, vector<256x8xf32>, vector<1x8xf32> -> vector<1x8xf32>
    %cst_246 = arith.constant 4.8828125E-4 : f32
    %283 = vector.broadcast %cst_246 : f32 to vector<1x8xf32>
    %284 = arith.mulf %282, %283 : vector<1x8xf32>
    %c0_247 = arith.constant 0 : index
    %c0_248 = arith.constant 0 : index
    %285 = vector.load %arg35[%c0_247, %c0_248] : memref<1x8xf32, #tpu.memory_space<vmem>>, vector<1x8xf32>
    %cst_249 = arith.constant 9.99999974E-6 : f32
    %286 = vector.broadcast %cst_249 : f32 to vector<1x8xf32>
    %287 = arith.addf %284, %286 : vector<1x8xf32>
    %288 = math.rsqrt %287 : vector<1x8xf32>
    %289 = arith.mulf %285, %288 : vector<1x8xf32>
    %c0_250 = arith.constant 0 : index
    %c0_251 = arith.constant 0 : index
    %290 = vector.load %arg36[%c0_250, %c0_251] : memref<1x8xf32, #tpu.memory_space<vmem>>, vector<1x8xf32>
    %291 = arith.mulf %273, %289 : vector<1x8xf32>
    %292 = arith.subf %290, %291 : vector<1x8xf32>
    %c0_252 = arith.constant 0 : index
    %c0_253 = arith.constant 0 : index
    %293 = vector.load %arg34[%c0_252, %c0_253] : memref<8x256xf32, #tpu.memory_space<vmem>>, vector<8x256xf32>
    %cst_254 = arith.constant dense<0.000000e+00> : vector<1x256xf32>
    %294 = tpu.matmul %289, %293, %cst_254 {dimension_numbers = #tpu.dot_dimension_numbers<[1], [0], [0], [1], [0, 0, 1, 1], [], []>} : vector<1x8xf32>, vector<8x256xf32>, vector<1x256xf32> -> vector<1x256xf32>
    %295 = vector.broadcast %294 : vector<1x256xf32> to vector<64x256xf32>
    %296 = arith.mulf %267, %295 : vector<64x256xf32>
    %c0_255 = arith.constant 0 : index
    %c0_256 = arith.constant 0 : index
    %297 = vector.load %arg34[%c0_255, %c0_256] : memref<8x256xf32, #tpu.memory_space<vmem>>, vector<8x256xf32>
    %cst_257 = arith.constant dense<0.000000e+00> : vector<1x256xf32>
    %298 = tpu.matmul %292, %297, %cst_257 {dimension_numbers = #tpu.dot_dimension_numbers<[1], [0], [0], [1], [0, 0, 1, 1], [], []>} : vector<1x8xf32>, vector<8x256xf32>, vector<1x256xf32> -> vector<1x256xf32>
    %299 = vector.broadcast %298 : vector<1x256xf32> to vector<64x256xf32>
    %300 = arith.addf %296, %299 : vector<64x256xf32>
    %cst_258 = arith.constant 0.000000e+00 : f32
    %301 = vector.broadcast %cst_258 : f32 to vector<64x256xf32>
    %302 = arith.maximumf %300, %301 : vector<64x256xf32>
    %cst_259 = arith.constant 0.000000e+00 : f32
    %303 = vector.broadcast %cst_259 : f32 to vector<128x192xf32>
    %c0_260 = arith.constant 0 : index
    %c0_261 = arith.constant 0 : index
    %c0_262 = arith.constant 0 : index
    %304 = vector.load %arg37[%c0_260, %c0_261, %c0_262] : memref<3x128x64xf32, #tpu.memory_space<vmem>>, vector<1x128x64xf32>
    %305 = vector.shape_cast %304 : vector<1x128x64xf32> to vector<128x64xf32>
    %cst_263 = arith.constant dense<0.000000e+00> : vector<128x256xf32>
    %306 = tpu.matmul %305, %302, %cst_263 {dimension_numbers = #tpu.dot_dimension_numbers<[1], [0], [0], [1], [0, 0, 1, 1], [], []>} : vector<128x64xf32>, vector<64x256xf32>, vector<128x256xf32> -> vector<128x256xf32>
    %c0_264 = arith.constant 0 : index
    %c0_265 = arith.constant 0 : index
    %c0_266 = arith.constant 0 : index
    %307 = vector.load %arg38[%c0_264, %c0_265, %c0_266] : memref<3x256x192xf32, #tpu.memory_space<vmem>>, vector<1x256x192xf32>
    %308 = vector.shape_cast %307 : vector<1x256x192xf32> to vector<256x192xf32>
    %cst_267 = arith.constant dense<0.000000e+00> : vector<128x192xf32>
    %309 = tpu.matmul %306, %308, %cst_267 {dimension_numbers = #tpu.dot_dimension_numbers<[1], [0], [0], [1], [0, 0, 1, 1], [], []>} : vector<128x256xf32>, vector<256x192xf32>, vector<128x192xf32> -> vector<128x192xf32>
    %310 = arith.addf %303, %309 : vector<128x192xf32>
    %c1_268 = arith.constant 1 : index
    %c0_269 = arith.constant 0 : index
    %c0_270 = arith.constant 0 : index
    %311 = vector.load %arg37[%c1_268, %c0_269, %c0_270] : memref<3x128x64xf32, #tpu.memory_space<vmem>>, vector<1x128x64xf32>
    %312 = vector.shape_cast %311 : vector<1x128x64xf32> to vector<128x64xf32>
    %cst_271 = arith.constant dense<0.000000e+00> : vector<128x256xf32>
    %313 = tpu.matmul %312, %302, %cst_271 {dimension_numbers = #tpu.dot_dimension_numbers<[1], [0], [0], [1], [0, 0, 1, 1], [], []>} : vector<128x64xf32>, vector<64x256xf32>, vector<128x256xf32> -> vector<128x256xf32>
    %c1_272 = arith.constant 1 : index
    %c0_273 = arith.constant 0 : index
    %c0_274 = arith.constant 0 : index
    %314 = vector.load %arg38[%c1_272, %c0_273, %c0_274] : memref<3x256x192xf32, #tpu.memory_space<vmem>>, vector<1x256x192xf32>
    %315 = vector.shape_cast %314 : vector<1x256x192xf32> to vector<256x192xf32>
    %cst_275 = arith.constant dense<0.000000e+00> : vector<128x192xf32>
    %316 = tpu.matmul %313, %315, %cst_275 {dimension_numbers = #tpu.dot_dimension_numbers<[1], [0], [0], [1], [0, 0, 1, 1], [], []>} : vector<128x256xf32>, vector<256x192xf32>, vector<128x192xf32> -> vector<128x192xf32>
    %317 = arith.addf %310, %316 : vector<128x192xf32>
    %c2_276 = arith.constant 2 : index
    %c0_277 = arith.constant 0 : index
    %c0_278 = arith.constant 0 : index
    %318 = vector.load %arg37[%c2_276, %c0_277, %c0_278] : memref<3x128x64xf32, #tpu.memory_space<vmem>>, vector<1x128x64xf32>
    %319 = vector.shape_cast %318 : vector<1x128x64xf32> to vector<128x64xf32>
    %cst_279 = arith.constant dense<0.000000e+00> : vector<128x256xf32>
    %320 = tpu.matmul %319, %302, %cst_279 {dimension_numbers = #tpu.dot_dimension_numbers<[1], [0], [0], [1], [0, 0, 1, 1], [], []>} : vector<128x64xf32>, vector<64x256xf32>, vector<128x256xf32> -> vector<128x256xf32>
    %c2_280 = arith.constant 2 : index
    %c0_281 = arith.constant 0 : index
    %c0_282 = arith.constant 0 : index
    %321 = vector.load %arg38[%c2_280, %c0_281, %c0_282] : memref<3x256x192xf32, #tpu.memory_space<vmem>>, vector<1x256x192xf32>
    %322 = vector.shape_cast %321 : vector<1x256x192xf32> to vector<256x192xf32>
    %cst_283 = arith.constant dense<0.000000e+00> : vector<128x192xf32>
    %323 = tpu.matmul %320, %322, %cst_283 {dimension_numbers = #tpu.dot_dimension_numbers<[1], [0], [0], [1], [0, 0, 1, 1], [], []>} : vector<128x256xf32>, vector<256x192xf32>, vector<128x192xf32> -> vector<128x192xf32>
    %324 = arith.addf %317, %323 : vector<128x192xf32>
    %c0_284 = arith.constant 0 : index
    %c0_285 = arith.constant 0 : index
    %325 = vector.load %arg39[%c0_284, %c0_285] : memref<1x192xf32, #tpu.memory_space<vmem>>, vector<1x192xf32>
    %326 = vector.broadcast %325 : vector<1x192xf32> to vector<128x192xf32>
    %327 = arith.addf %324, %326 : vector<128x192xf32>
    %328 = math.tanh %327 : vector<128x192xf32>
    %c0_286 = arith.constant 0 : index
    %c0_287 = arith.constant 0 : index
    %329 = vector.load %arg40[%c0_286, %c0_287] : memref<128x192xf32, #tpu.memory_space<vmem>>, vector<128x192xf32>
    tpu.vector_store %arg40[%c0_286, %c0_287], %328 {strides = array<i32>} : memref<128x192xf32, #tpu.memory_space<vmem>>, vector<128x192xf32>,
    return
  }
  func.func @transform_0(%arg0: i32) -> (i32, i32) {
    %c0_i32 = arith.constant 0 : i32
    %c0_i32_0 = arith.constant 0 : i32
    %c0_i32_1 = arith.constant 0 : i32
    return %c0_i32, %c0_i32_0 : i32, i32
  }
  func.func @transform_1(%arg0: i32) -> (i32, i32, i32) {
    %c0_i32 = arith.constant 0 : i32
    %c0_i32_0 = arith.constant 0 : i32
    %c0_i32_1 = arith.constant 0 : i32
    %c0_i32_2 = arith.constant 0 : i32
    return %c0_i32, %c0_i32_0, %c0_i32_1 : i32, i32, i32
  }
  func.func @transform_2(%arg0: i32) -> (i32, i32, i32) {
    %c0_i32 = arith.constant 0 : i32
    %c0_i32_0 = arith.constant 0 : i32
    %c0_i32_1 = arith.constant 0 : i32
    %c0_i32_2 = arith.constant 0 : i32
    return %c0_i32, %c0_i32_0, %c0_i32_1 : i32, i32, i32
  }
  func.func @transform_3(%arg0: i32) -> (i32, i32) {
    %c0_i32 = arith.constant 0 : i32
    %c0_i32_0 = arith.constant 0 : i32
    %c0_i32_1 = arith.constant 0 : i32
    return %c0_i32, %c0_i32_0 : i32, i32
  }
  func.func @transform_4(%arg0: i32) -> (i32, i32) {
    %c0_i32 = arith.constant 0 : i32
    %c0_i32_0 = arith.constant 0 : i32
    %c0_i32_1 = arith.constant 0 : i32
    return %c0_i32, %c0_i32_0 : i32, i32
  }
  func.func @transform_5(%arg0: i32) -> (i32, i32) {
    %c0_i32 = arith.constant 0 : i32
    %c0_i32_0 = arith.constant 0 : i32
    %c0_i32_1 = arith.constant 0 : i32
    return %c0_i32, %c0_i32_0 : i32, i32
  }
  func.func @transform_6(%arg0: i32) -> (i32, i32) {
    %c0_i32 = arith.constant 0 : i32
    %c0_i32_0 = arith.constant 0 : i32
    %c0_i32_1 = arith.constant 0 : i32
    return %c0_i32, %c0_i32_0 : i32, i32
  }
  func.func @transform_7(%arg0: i32) -> (i32, i32) {
    %c0_i32 = arith.constant 0 : i32
    %c0_i32_0 = arith.constant 0 : i32
    %c0_i32_1 = arith.constant 0 : i32
    return %c0_i32, %c0_i32_0 : i32, i32
  }
  func.func @transform_8(%arg0: i32) -> (i32, i32, i32) {
    %c0_i32 = arith.constant 0 : i32
    %c0_i32_0 = arith.constant 0 : i32
    %c0_i32_1 = arith.constant 0 : i32
    %c0_i32_2 = arith.constant 0 : i32
    return %c0_i32, %c0_i32_0, %c0_i32_1 : i32, i32, i32
  }
  func.func @transform_9(%arg0: i32) -> (i32, i32, i32) {
    %c0_i32 = arith.constant 0 : i32
    %c0_i32_0 = arith.constant 0 : i32
    %c0_i32_1 = arith.constant 0 : i32
    %c0_i32_2 = arith.constant 0 : i32
    return %c0_i32, %c0_i32_0, %c0_i32_1 : i32, i32, i32
  }
  func.func @transform_10(%arg0: i32) -> (i32, i32) {
    %c0_i32 = arith.constant 0 : i32
    %c0_i32_0 = arith.constant 0 : i32
    %c0_i32_1 = arith.constant 0 : i32
    return %c0_i32, %c0_i32_0 : i32, i32
  }
  func.func @transform_11(%arg0: i32) -> (i32, i32) {
    %c0_i32 = arith.constant 0 : i32
    %c0_i32_0 = arith.constant 0 : i32
    %c0_i32_1 = arith.constant 0 : i32
    return %c0_i32, %c0_i32_0 : i32, i32
  }
  func.func @transform_12(%arg0: i32) -> (i32, i32) {
    %c0_i32 = arith.constant 0 : i32
    %c0_i32_0 = arith.constant 0 : i32
    %c0_i32_1 = arith.constant 0 : i32
    return %c0_i32, %c0_i32_0 : i32, i32
  }
  func.func @transform_13(%arg0: i32) -> (i32, i32) {
    %c0_i32 = arith.constant 0 : i32
    %c0_i32_0 = arith.constant 0 : i32
    %c0_i32_1 = arith.constant 0 : i32
    return %c0_i32, %c0_i32_0 : i32, i32
  }
  func.func @transform_14(%arg0: i32) -> (i32, i32) {
    %c0_i32 = arith.constant 0 : i32
    %c0_i32_0 = arith.constant 0 : i32
    %c0_i32_1 = arith.constant 0 : i32
    return %c0_i32, %c0_i32_0 : i32, i32
  }
  func.func @transform_15(%arg0: i32) -> (i32, i32, i32) {
    %c0_i32 = arith.constant 0 : i32
    %c0_i32_0 = arith.constant 0 : i32
    %c0_i32_1 = arith.constant 0 : i32
    %c0_i32_2 = arith.constant 0 : i32
    return %c0_i32, %c0_i32_0, %c0_i32_1 : i32, i32, i32
  }
  func.func @transform_16(%arg0: i32) -> (i32, i32, i32) {
    %c0_i32 = arith.constant 0 : i32
    %c0_i32_0 = arith.constant 0 : i32
    %c0_i32_1 = arith.constant 0 : i32
    %c0_i32_2 = arith.constant 0 : i32
    return %c0_i32, %c0_i32_0, %c0_i32_1 : i32, i32, i32
  }
  func.func @transform_17(%arg0: i32) -> (i32, i32) {
    %c0_i32 = arith.constant 0 : i32
    %c0_i32_0 = arith.constant 0 : i32
    %c0_i32_1 = arith.constant 0 : i32
    return %c0_i32, %c0_i32_0 : i32, i32
  }
  func.func @transform_18(%arg0: i32) -> (i32, i32) {
    %c0_i32 = arith.constant 0 : i32
    %c0_i32_0 = arith.constant 0 : i32
    %c0_i32_1 = arith.constant 0 : i32
    return %c0_i32, %c0_i32_0 : i32, i32
  }
  func.func @transform_19(%arg0: i32) -> (i32, i32) {
    %c0_i32 = arith.constant 0 : i32
    %c0_i32_0 = arith.constant 0 : i32
    %c0_i32_1 = arith.constant 0 : i32
    return %c0_i32, %c0_i32_0 : i32, i32
  }
  func.func @transform_20(%arg0: i32) -> (i32, i32) {
    %c0_i32 = arith.constant 0 : i32
    %c0_i32_0 = arith.constant 0 : i32
    %c0_i32_1 = arith.constant 0 : i32
    return %c0_i32, %c0_i32_0 : i32, i32
  }
  func.func @transform_21(%arg0: i32) -> (i32, i32) {
    %c0_i32 = arith.constant 0 : i32
    %c0_i32_0 = arith.constant 0 : i32
    %c0_i32_1 = arith.constant 0 : i32
    return %c0_i32, %c0_i32_0 : i32, i32
  }
  func.func @transform_22(%arg0: i32) -> (i32, i32, i32) {
    %c0_i32 = arith.constant 0 : i32
    %c0_i32_0 = arith.constant 0 : i32
    %c0_i32_1 = arith.constant 0 : i32
    %c0_i32_2 = arith.constant 0 : i32
    return %c0_i32, %c0_i32_0, %c0_i32_1 : i32, i32, i32
  }
  func.func @transform_23(%arg0: i32) -> (i32, i32, i32) {
    %c0_i32 = arith.constant 0 : i32
    %c0_i32_0 = arith.constant 0 : i32
    %c0_i32_1 = arith.constant 0 : i32
    %c0_i32_2 = arith.constant 0 : i32
    return %c0_i32, %c0_i32_0, %c0_i32_1 : i32, i32, i32
  }
  func.func @transform_24(%arg0: i32) -> (i32, i32) {
    %c0_i32 = arith.constant 0 : i32
    %c0_i32_0 = arith.constant 0 : i32
    %c0_i32_1 = arith.constant 0 : i32
    return %c0_i32, %c0_i32_0 : i32, i32
  }
  func.func @transform_25(%arg0: i32) -> (i32, i32) {
    %c0_i32 = arith.constant 0 : i32
    %c0_i32_0 = arith.constant 0 : i32
    %c0_i32_1 = arith.constant 0 : i32
    return %c0_i32, %c0_i32_0 : i32, i32
  }
  func.func @transform_26(%arg0: i32) -> (i32, i32) {
    %c0_i32 = arith.constant 0 : i32
    %c0_i32_0 = arith.constant 0 : i32
    %c0_i32_1 = arith.constant 0 : i32
    return %c0_i32, %c0_i32_0 : i32, i32
  }
  func.func @transform_27(%arg0: i32) -> (i32, i32) {
    %c0_i32 = arith.constant 0 : i32
    %c0_i32_0 = arith.constant 0 : i32
    %c0_i32_1 = arith.constant 0 : i32
    return %c0_i32, %c0_i32_0 : i32, i32
  }
  func.func @transform_28(%arg0: i32) -> (i32, i32) {
    %c0_i32 = arith.constant 0 : i32
    %c0_i32_0 = arith.constant 0 : i32
    %c0_i32_1 = arith.constant 0 : i32
    return %c0_i32, %c0_i32_0 : i32, i32
  }
  func.func @transform_29(%arg0: i32) -> (i32, i32, i32) {
    %c0_i32 = arith.constant 0 : i32
    %c0_i32_0 = arith.constant 0 : i32
    %c0_i32_1 = arith.constant 0 : i32
    %c0_i32_2 = arith.constant 0 : i32
    return %c0_i32, %c0_i32_0, %c0_i32_1 : i32, i32, i32
  }
  func.func @transform_30(%arg0: i32) -> (i32, i32, i32) {
    %c0_i32 = arith.constant 0 : i32
    %c0_i32_0 = arith.constant 0 : i32
    %c0_i32_1 = arith.constant 0 : i32
    %c0_i32_2 = arith.constant 0 : i32
    return %c0_i32, %c0_i32_0, %c0_i32_1 : i32, i32, i32
  }
  func.func @transform_31(%arg0: i32) -> (i32, i32) {
    %c0_i32 = arith.constant 0 : i32
    %c0_i32_0 = arith.constant 0 : i32
    %c0_i32_1 = arith.constant 0 : i32
    return %c0_i32, %c0_i32_0 : i32, i32
  }
  func.func @transform_32(%arg0: i32) -> (i32, i32) {
    %c0_i32 = arith.constant 0 : i32
    %c0_i32_0 = arith.constant 0 : i32
    %c0_i32_1 = arith.constant 0 : i32
    return %c0_i32, %c0_i32_0 : i32, i32
  }
  func.func @transform_33(%arg0: i32) -> (i32, i32) {
    %c0_i32 = arith.constant 0 : i32
    %c0_i32_0 = arith.constant 0 : i32
    %c0_i32_1 = arith.constant 0 : i32
    return %c0_i32, %c0_i32_0 : i32, i32
  }
  func.func @transform_34(%arg0: i32) -> (i32, i32) {
    %c0_i32 = arith.constant 0 : i32
    %c0_i32_0 = arith.constant 0 : i32
    %c0_i32_1 = arith.constant 0 : i32
    return %c0_i32, %c0_i32_0 : i32, i32
  }
  func.func @transform_35(%arg0: i32) -> (i32, i32) {
    %c0_i32 = arith.constant 0 : i32
    %c0_i32_0 = arith.constant 0 : i32
    %c0_i32_1 = arith.constant 0 : i32
    return %c0_i32, %c0_i32_0 : i32, i32
  }
  func.func @transform_36(%arg0: i32) -> (i32, i32, i32) {
    %c0_i32 = arith.constant 0 : i32
    %c0_i32_0 = arith.constant 0 : i32
    %c0_i32_1 = arith.constant 0 : i32
    %c0_i32_2 = arith.constant 0 : i32
    return %c0_i32, %c0_i32_0, %c0_i32_1 : i32, i32, i32
  }
  func.func @transform_37(%arg0: i32) -> (i32, i32, i32) {
    %c0_i32 = arith.constant 0 : i32
    %c0_i32_0 = arith.constant 0 : i32
    %c0_i32_1 = arith.constant 0 : i32
    %c0_i32_2 = arith.constant 0 : i32
    return %c0_i32, %c0_i32_0, %c0_i32_1 : i32, i32, i32
  }
  func.func @transform_38(%arg0: i32) -> (i32, i32) {
    %c0_i32 = arith.constant 0 : i32
    %c0_i32_0 = arith.constant 0 : i32
    %c0_i32_1 = arith.constant 0 : i32
    return %c0_i32, %c0_i32_0 : i32, i32
  }
  func.func @transform_39(%arg0: i32) -> (i32, i32) {
    %c0_i32 = arith.constant 0 : i32
    %c0_i32_0 = arith.constant 0 : i32
    %c0_i32_1 = arith.constant 0 : i32
    return %c0_i32, %c0_i32_0 : i32, i32
  }
}

</mosaic_0001>

<llo_original>
// kernel: tile.58
$region0: #{tile.58}
  #allocation0 [shape = 's32[1]{0}', space=sflag, size = 0x4, scoped, tag = 'scoped memory for tile.58']
  %s0 = inlined_call_operand.vmem [shape: f32[3], index: 0, kind: input, shape index: {}]
  %s1 = inlined_call_operand.vmem [shape: f32[64,3], index: 1, kind: output, shape index: {}]
  // Predicated region
  $region2: #{tile.58} parent=0 // pred_check
    _
  $region3: #{tile.58} parent=0 // pred_check_branch
    %3 = sbr.rel (0) target = $region5
  $region4: #{tile.58} parent=0 // pred_region
    _
  $region5: #{tile.58} parent=0 // pred_fallthru
    _
  %v4 = vld [vmem:[%s0] ss:$0 sm:$0xff]
  %5 = vst [vmem:[%s1] sm:$0xff] %v4
  %s6 = scalar_lea.vmem %s1, 8
  %7 = vst [vmem:[%s6] sm:$0xff] %v4
  %s8 = scalar_lea.vmem %s1, 16
  %9 = vst [vmem:[%s8] sm:$0xff] %v4
  %s10 = scalar_lea.vmem %s1, 24
  %11 = vst [vmem:[%s10] sm:$0xff] %v4
  %s12 = scalar_lea.vmem %s1, 32
  %13 = vst [vmem:[%s12] sm:$0xff] %v4
  %s14 = scalar_lea.vmem %s1, 40
  %15 = vst [vmem:[%s14] sm:$0xff] %v4
  %s16 = scalar_lea.vmem %s1, 48
  %17 = vst [vmem:[%s16] sm:$0xff] %v4
  %s18 = scalar_lea.vmem %s1, 56
  %19 = vst [vmem:[%s18] sm:$0xff] %v4

// kernel: tile.59
$region0: #{tile.59}
  %s0 = inlined_call_operand.vmem [shape: f32[64,3], index: 0, kind: input, shape index: {}]
  %s1 = inlined_call_operand.vmem [shape: f32[1,192], index: 1, kind: output, shape index: {}]
  $region1: #{tile.59} parent=0
    #allocation0 [shape = 'u8[8192]{0}', space=vmem, size = 0x2000, scoped, tag = 'scoped mem for output reshape']
    %v2 = vld [vmem:[%s0] sm:$0x1]
    %vm3 = vcmask 23552
    %4 = vst.msk [vmem:[#allocation0] sm:$0x1] %vm3, %v2
    %s5 = scalar_lea.vmem %s0, 42
    %v6 = vld [vmem:[%s5] sm:$0x1]
    %s7 = scalar_lea.vmem %s0, 42
    %v8 = vld [vmem:[%s7] sm:$0x1]
    %vm9 = vcmask 15360
    %v10 = vsel %vm9, %v8, %v6
    %11 = vrot.lane.b32.xlu0 %v10, 126
    %v12 = vpop.permute.xlu0 %11
    %vm13 = vcmask 7168
    %s14 = scalar_lea.vmem [#allocation0], 8
    %15 = vst.msk [vmem:[%s14] sm:$0x1] %vm13, %v12
    %vm16 = vcmask 1048560
    %17 = vst.msk [vmem:[#allocation0] sm:$0x1] %vm16, %v12
    %s18 = scalar_lea.vmem %s0, 41
    %v19 = vld [vmem:[%s18] sm:$0x1]
    %20 = vrot.lane.b32.xlu0 %v19, 123
    %v21 = vpop.permute.xlu0 %20
    %vm22 = vcmask 1032152
    %23 = vst.msk [vmem:[#allocation0] sm:$0x1] %vm22, %v21
    %s24 = scalar_lea.vmem %s0, 40
    %v25 = vld [vmem:[%s24] sm:$0x1]
    %26 = vrot.lane.b32.xlu0 %v25, 120
    %v27 = vpop.permute.xlu0 %26
    %vm28 = vcmask 1007552
    %29 = vst.msk [vmem:[#allocation0] sm:$0x1] %vm28, %v27
    %s30 = scalar_lea.vmem %s0, 39
    %v31 = vld [vmem:[%s30] sm:$0x1]
    %32 = vrot.lane.b32.xlu0 %v31, 117
    %v33 = vpop.permute.xlu0 %32
    %vm34 = vcmask 982952
    %35 = vst.msk [vmem:[#allocation0] sm:$0x1] %vm34, %v33
    %s36 = scalar_lea.vmem %s0, 38
    %v37 = vld [vmem:[%s36] sm:$0x1]
    %38 = vrot.lane.b32.xlu0 %v37, 114
    %v39 = vpop.permute.xlu0 %38
    %vm40 = vcmask 958352
    %41 = vst.msk [vmem:[#allocation0] sm:$0x1] %vm40, %v39
    %s42 = scalar_lea.vmem %s0, 37
    %v43 = vld [vmem:[%s42] sm:$0x1]
    %44 = vrot.lane.b32.xlu0 %v43, 111
    %v45 = vpop.permute.xlu0 %44
    %vm46 = vcmask 933752
    %47 = vst.msk [vmem:[#allocation0] sm:$0x1] %vm46, %v45
    %s48 = scalar_lea.vmem %s0, 36
    %v49 = vld [vmem:[%s48] sm:$0x1]
    %50 = vrot.lane.b32.xlu0 %v49, 108
    %v51 = vpop.permute.xlu0 %50
    %vm52 = vcmask 909152
    %53 = vst.msk [vmem:[#allocation0] sm:$0x1] %vm52, %v51
    %s54 = scalar_lea.vmem %s0, 35
    %v55 = vld [vmem:[%s54] sm:$0x1]
    %56 = vrot.lane.b32.xlu0 %v55, 105
    %v57 = vpop.permute.xlu0 %56
    %vm58 = vcmask 884552
    %59 = vst.msk [vmem:[#allocation0] sm:$0x1] %vm58, %v57
    %s60 = scalar_lea.vmem %s0, 34
    %v61 = vld [vmem:[%s60] sm:$0x1]
    %62 = vrot.lane.b32.xlu0 %v61, 102
    %v63 = vpop.permute.xlu0 %62
    %vm64 = vcmask 859952
    %65 = vst.msk [vmem:[#allocation0] sm:$0x1] %vm64, %v63
    %s66 = scalar_lea.vmem %s0, 33
    %v67 = vld [vmem:[%s66] sm:$0x1]
    %68 = vrot.lane.b32.xlu0 %v67, 99
    %v69 = vpop.permute.xlu0 %68
    %vm70 = vcmask 835352
    %71 = vst.msk [vmem:[#allocation0] sm:$0x1] %vm70, %v69
    %s72 = scalar_lea.vmem %s0, 32
    %v73 = vld [vmem:[%s72] sm:$0x1]
    %74 = vrot.lane.b32.xlu0 %v73, 96
    %v75 = vpop.permute.xlu0 %74
    %vm76 = vcmask 810752
    %77 = vst.msk [vmem:[#allocation0] sm:$0x1] %vm76, %v75
    %s78 = scalar_lea.vmem %s0, 31
    %v79 = vld [vmem:[%s78] sm:$0x1]
    %80 = vrot.lane.b32.xlu0 %v79, 93
    %v81 = vpop.permute.xlu0 %80
    %vm82 = vcmask 786152
    %83 = vst.msk [vmem:[#allocation0] sm:$0x1] %vm82, %v81
    %s84 = scalar_lea.vmem %s0, 30
    %v85 = vld [vmem:[%s84] sm:$0x1]
    %86 = vrot.lane.b32.xlu0 %v85, 90
    %v87 = vpop.permute.xlu0 %86
    %vm88 = vcmask 761552
    %89 = vst.msk [vmem:[#allocation0] sm:$0x1] %vm88, %v87
    %s90 = scalar_lea.vmem %s0, 29
    %v91 = vld [vmem:[%s90] sm:$0x1]
    %92 = vrot.lane.b32.xlu0 %v91, 87
    %v93 = vpop.permute.xlu0 %92
    %vm94 = vcmask 736952
    %95 = vst.msk [vmem:[#allocation0] sm:$0x1] %vm94, %v93
    %s96 = scalar_lea.vmem %s0, 28
    %v97 = vld [vmem:[%s96] sm:$0x1]
    %98 = vrot.lane.b32.xlu0 %v97, 84
    %v99 = vpop.permute.xlu0 %98
    %vm100 = vcmask 712352
    %101 = vst.msk [vmem:[#allocation0] sm:$0x1] %vm100, %v99
    %s102 = scalar_lea.vmem %s0, 27
    %v103 = vld [vmem:[%s102] sm:$0x1]
    %104 = vrot.lane.b32.xlu0 %v103, 81
    %v105 = vpop.permute.xlu0 %104
    %vm106 = vcmask 687752
    %107 = vst.msk [vmem:[#allocation0] sm:$0x1] %vm106, %v105
    %s108 = scalar_lea.vmem %s0, 26
    %v109 = vld [vmem:[%s108] sm:$0x1]
    %110 = vrot.lane.b32.xlu0 %v109, 78
    %v111 = vpop.permute.xlu0 %110
    %vm112 = vcmask 663152
    %113 = vst.msk [vmem:[#allocation0] sm:$0x1] %vm112, %v111
    %s114 = scalar_lea.vmem %s0, 25
    %v115 = vld [vmem:[%s114] sm:$0x1]
    %116 = vrot.lane.b32.xlu0 %v115, 75
    %v117 = vpop.permute.xlu0 %116
    %vm118 = vcmask 638552
    %119 = vst.msk [vmem:[#allocation0] sm:$0x1] %vm118, %v117
    %s120 = scalar_lea.vmem %s0, 24
    %v121 = vld [vmem:[%s120] sm:$0x1]
    %122 = vrot.lane.b32.xlu0 %v121, 72
    %v123 = vpop.permute.xlu0 %122
    %vm124 = vcmask 613952
    %125 = vst.msk [vmem:[#allocation0] sm:$0x1] %vm124, %v123
    %s126 = scalar_lea.vmem %s0, 23
    %v127 = vld [vmem:[%s126] sm:$0x1]
    %128 = vrot.lane.b32.xlu0 %v127, 69
    %v129 = vpop.permute.xlu0 %128
    %vm130 = vcmask 589352
    %131 = vst.msk [vmem:[#allocation0] sm:$0x1] %vm130, %v129
    %s132 = scalar_lea.vmem %s0, 22
    %v133 = vld [vmem:[%s132] sm:$0x1]
    %134 = vrot.lane.b32.xlu0 %v133, 66
    %v135 = vpop.permute.xlu0 %134
    %vm136 = vcmask 564752
    %137 = vst.msk [vmem:[#allocation0] sm:$0x1] %vm136, %v135
    %s138 = scalar_lea.vmem %s0, 21
    %v139 = vld [vmem:[%s138] sm:$0x1]
    %140 = vrot.lane.b32.xlu0 %v139, 63
    %v141 = vpop.permute.xlu0 %140
    %vm142 = vcmask 540152
    %143 = vst.msk [vmem:[#allocation0] sm:$0x1] %vm142, %v141
    %s144 = scalar_lea.vmem %s0, 63
    %v145 = vld [vmem:[%s144] sm:$0x1]
    %146 = vrot.lane.b32.xlu0 %v145, 61
    %v147 = vpop.permute.xlu0 %146
    %vm148 = vcmask 523752
    %s149 = scalar_lea.vmem [#allocation0], 8
    %150 = vst.msk [vmem:[%s149] sm:$0x1] %vm148, %v147
    %s151 = scalar_lea.vmem %s0, 20
    %v152 = vld [vmem:[%s151] sm:$0x1]
    %153 = vrot.lane.b32.xlu0 %v152, 60
    %v154 = vpop.permute.xlu0 %153
    %vm155 = vcmask 515552
    %156 = vst.msk [vmem:[#allocation0] sm:$0x1] %vm155, %v154
    %s157 = scalar_lea.vmem %s0, 62
    %v158 = vld [vmem:[%s157] sm:$0x1]
    %159 = vrot.lane.b32.xlu0 %v158, 58
    %v160 = vpop.permute.xlu0 %159
    %vm161 = vcmask 499152
    %s162 = scalar_lea.vmem [#allocation0], 8
    %163 = vst.msk [vmem:[%s162] sm:$0x1] %vm161, %v160
    %s164 = scalar_lea.vmem %s0, 19
    %v165 = vld [vmem:[%s164] sm:$0x1]
    %166 = vrot.lane.b32.xlu0 %v165, 57
    %v167 = vpop.permute.xlu0 %166
    %vm168 = vcmask 490952
    %169 = vst.msk [vmem:[#allocation0] sm:$0x1] %vm168, %v167
    %s170 = scalar_lea.vmem %s0, 61
    %v171 = vld [vmem:[%s170] sm:$0x1]
    %172 = vrot.lane.b32.xlu0 %v171, 55
    %v173 = vpop.permute.xlu0 %172
    %vm174 = vcmask 474552
    %s175 = scalar_lea.vmem [#allocation0], 8
    %176 = vst.msk [vmem:[%s175] sm:$0x1] %vm174, %v173
    %s177 = scalar_lea.vmem %s0, 18
    %v178 = vld [vmem:[%s177] sm:$0x1]
    %179 = vrot.lane.b32.xlu0 %v178, 54
    %v180 = vpop.permute.xlu0 %179
    %vm181 = vcmask 466352
    %182 = vst.msk [vmem:[#allocation0] sm:$0x1] %vm181, %v180
    %s183 = scalar_lea.vmem %s0, 60
    %v184 = vld [vmem:[%s183] sm:$0x1]
    %185 = vrot.lane.b32.xlu0 %v184, 52
    %v186 = vpop.permute.xlu0 %185
    %vm187 = vcmask 449952
    %s188 = scalar_lea.vmem [#allocation0], 8
    %189 = vst.msk [vmem:[%s188] sm:$0x1] %vm187, %v186
    %s190 = scalar_lea.vmem %s0, 17
    %v191 = vld [vmem:[%s190] sm:$0x1]
    %192 = vrot.lane.b32.xlu0 %v191, 51
    %v193 = vpop.permute.xlu0 %192
    %vm194 = vcmask 441752
    %195 = vst.msk [vmem:[#allocation0] sm:$0x1] %vm194, %v193
    %s196 = scalar_lea.vmem %s0, 59
    %v197 = vld [vmem:[%s196] sm:$0x1]
    %198 = vrot.lane.b32.xlu0 %v197, 49
    %v199 = vpop.permute.xlu0 %198
    %vm200 = vcmask 425352
    %s201 = scalar_lea.vmem [#allocation0], 8
    %202 = vst.msk [vmem:[%s201] sm:$0x1] %vm200, %v199
    %s203 = scalar_lea.vmem %s0, 16
    %v204 = vld [vmem:[%s203] sm:$0x1]
    %205 = vrot.lane.b32.xlu0 %v204, 48
    %v206 = vpop.permute.xlu0 %205
    %vm207 = vcmask 417152
    %208 = vst.msk [vmem:[#allocation0] sm:$0x1] %vm207, %v206
    %s209 = scalar_lea.vmem %s0, 58
    %v210 = vld [vmem:[%s209] sm:$0x1]
    %211 = vrot.lane.b32.xlu0 %v210, 46
    %v212 = vpop.permute.xlu0 %211
    %vm213 = vcmask 400752
    %s214 = scalar_lea.vmem [#allocation0], 8
    %215 = vst.msk [vmem:[%s214] sm:$0x1] %vm213, %v212
    %s216 = scalar_lea.vmem %s0, 15
    %v217 = vld [vmem:[%s216] sm:$0x1]
    %218 = vrot.lane.b32.xlu0 %v217, 45
    %v219 = vpop.permute.xlu0 %218
    %vm220 = vcmask 392552
    %221 = vst.msk [vmem:[#allocation0] sm:$0x1] %vm220, %v219
    %s222 = scalar_lea.vmem %s0, 57
    %v223 = vld [vmem:[%s222] sm:$0x1]
    %224 = vrot.lane.b32.xlu0 %v223, 43
    %v225 = vpop.permute.xlu0 %224
    %vm226 = vcmask 376152
    %s227 = scalar_lea.vmem [#allocation0], 8
    %228 = vst.msk [vmem:[%s227] sm:$0x1] %vm226, %v225
    %s229 = scalar_lea.vmem %s0, 14
    %v230 = vld [vmem:[%s229] sm:$0x1]
    %231 = vrot.lane.b32.xlu0 %v230, 42
    %v232 = vpop.permute.xlu0 %231
    %vm233 = vcmask 367952
    %234 = vst.msk [vmem:[#allocation0] sm:$0x1] %vm233, %v232
    %s235 = scalar_lea.vmem %s0, 56
    %v236 = vld [vmem:[%s235] sm:$0x1]
    %237 = vrot.lane.b32.xlu0 %v236, 40
    %v238 = vpop.permute.xlu0 %237
    %vm239 = vcmask 351552
    %s240 = scalar_lea.vmem [#allocation0], 8
    %241 = vst.msk [vmem:[%s240] sm:$0x1] %vm239, %v238
    %s242 = scalar_lea.vmem %s0, 13
    %v243 = vld [vmem:[%s242] sm:$0x1]
    %244 = vrot.lane.b32.xlu0 %v243, 39
    %v245 = vpop.permute.xlu0 %244
    %vm246 = vcmask 343352
    %247 = vst.msk [vmem:[#allocation0] sm:$0x1] %vm246, %v245
    %s248 = scalar_lea.vmem %s0, 55
    %v249 = vld [vmem:[%s248] sm:$0x1]
    %250 = vrot.lane.b32.xlu0 %v249, 37
    %v251 = vpop.permute.xlu0 %250
    %vm252 = vcmask 326952
    %s253 = scalar_lea.vmem [#allocation0], 8
    %254 = vst.msk [vmem:[%s253] sm:$0x1] %vm252, %v251
    %s255 = scalar_lea.vmem %s0, 12
    %v256 = vld [vmem:[%s255] sm:$0x1]
    %257 = vrot.lane.b32.xlu0 %v256, 36
    %v258 = vpop.permute.xlu0 %257
    %vm259 = vcmask 318752
    %260 = vst.msk [vmem:[#allocation0] sm:$0x1] %vm259, %v258
    %s261 = scalar_lea.vmem %s0, 54
    %v262 = vld [vmem:[%s261] sm:$0x1]
    %263 = vrot.lane.b32.xlu0 %v262, 34
    %v264 = vpop.permute.xlu0 %263
    %vm265 = vcmask 302352
    %s266 = scalar_lea.vmem [#allocation0], 8
    %267 = vst.msk [vmem:[%s266] sm:$0x1] %vm265, %v264
    %s268 = scalar_lea.vmem %s0, 11
    %v269 = vld [vmem:[%s268] sm:$0x1]
    %270 = vrot.lane.b32.xlu0 %v269, 33
    %v271 = vpop.permute.xlu0 %270
    %vm272 = vcmask 294152
    %273 = vst.msk [vmem:[#allocation0] sm:$0x1] %vm272, %v271
    %s274 = scalar_lea.vmem %s0, 53
    %v275 = vld [vmem:[%s274] sm:$0x1]
    %276 = vrot.lane.b32.xlu0 %v275, 31
    %v277 = vpop.permute.xlu0 %276
    %vm278 = vcmask 277752
    %s279 = scalar_lea.vmem [#allocation0], 8
    %280 = vst.msk [vmem:[%s279] sm:$0x1] %vm278, %v277
    %s281 = scalar_lea.vmem %s0, 10
    %v282 = vld [vmem:[%s281] sm:$0x1]
    %283 = vrot.lane.b32.xlu0 %v282, 30
    %v284 = vpop.permute.xlu0 %283
    %vm285 = vcmask 269552
    %286 = vst.msk [vmem:[#allocation0] sm:$0x1] %vm285, %v284
    %s287 = scalar_lea.vmem %s0, 52
    %v288 = vld [vmem:[%s287] sm:$0x1]
    %289 = vrot.lane.b32.xlu0 %v288, 28
    %v290 = vpop.permute.xlu0 %289
    %vm291 = vcmask 253152
    %s292 = scalar_lea.vmem [#allocation0], 8
    %293 = vst.msk [vmem:[%s292] sm:$0x1] %vm291, %v290
    %s294 = scalar_lea.vmem %s0, 9
    %v295 = vld [vmem:[%s294] sm:$0x1]
    %296 = vrot.lane.b32.xlu0 %v295, 27
    %v297 = vpop.permute.xlu0 %296
    %vm298 = vcmask 244952
    %299 = vst.msk [vmem:[#allocation0] sm:$0x1] %vm298, %v297
    %s300 = scalar_lea.vmem %s0, 51
    %v301 = vld [vmem:[%s300] sm:$0x1]
    %302 = vrot.lane.b32.xlu0 %v301, 25
    %v303 = vpop.permute.xlu0 %302
    %vm304 = vcmask 228552
    %s305 = scalar_lea.vmem [#allocation0], 8
    %306 = vst.msk [vmem:[%s305] sm:$0x1] %vm304, %v303
    %s307 = scalar_lea.vmem %s0, 8
    %v308 = vld [vmem:[%s307] sm:$0x1]
    %309 = vrot.lane.b32.xlu0 %v308, 24
    %v310 = vpop.permute.xlu0 %309
    %vm311 = vcmask 220352
    %312 = vst.msk [vmem:[#allocation0] sm:$0x1] %vm311, %v310
    %s313 = scalar_lea.vmem %s0, 50
    %v314 = vld [vmem:[%s313] sm:$0x1]
    %315 = vrot.lane.b32.xlu0 %v314, 22
    %v316 = vpop.permute.xlu0 %315
    %vm317 = vcmask 203952
    %s318 = scalar_lea.vmem [#allocation0], 8
    %319 = vst.msk [vmem:[%s318] sm:$0x1] %vm317, %v316
    %s320 = scalar_lea.vmem %s0, 7
    %v321 = vld [vmem:[%s320] sm:$0x1]
    %322 = vrot.lane.b32.xlu0 %v321, 21
    %v323 = vpop.permute.xlu0 %322
    %vm324 = vcmask 195752
    %325 = vst.msk [vmem:[#allocation0] sm:$0x1] %vm324, %v323
    %s326 = scalar_lea.vmem %s0, 49
    %v327 = vld [vmem:[%s326] sm:$0x1]
    %328 = vrot.lane.b32.xlu0 %v327, 19
    %v329 = vpop.permute.xlu0 %328
    %vm330 = vcmask 179352
    %s331 = scalar_lea.vmem [#allocation0], 8
    %332 = vst.msk [vmem:[%s331] sm:$0x1] %vm330, %v329
    %s333 = scalar_lea.vmem %s0, 6
    %v334 = vld [vmem:[%s333] sm:$0x1]
    %335 = vrot.lane.b32.xlu0 %v334, 18
    %v336 = vpop.permute.xlu0 %335
    %vm337 = vcmask 171152
    %338 = vst.msk [vmem:[#allocation0] sm:$0x1] %vm337, %v336
    %s339 = scalar_lea.vmem %s0, 48
    %v340 = vld [vmem:[%s339] sm:$0x1]
    %341 = vrot.lane.b32.xlu0 %v340, 16
    %v342 = vpop.permute.xlu0 %341
    %vm343 = vcmask 154752
    %s344 = scalar_lea.vmem [#allocation0], 8
    %345 = vst.msk [vmem:[%s344] sm:$0x1] %vm343, %v342
    %s346 = scalar_lea.vmem %s0, 5
    %v347 = vld [vmem:[%s346] sm:$0x1]
    %348 = vrot.lane.b32.xlu0 %v347, 15
    %v349 = vpop.permute.xlu0 %348
    %vm350 = vcmask 146552
    %351 = vst.msk [vmem:[#allocation0] sm:$0x1] %vm350, %v349
    %s352 = scalar_lea.vmem %s0, 47
    %v353 = vld [vmem:[%s352] sm:$0x1]
    %354 = vrot.lane.b32.xlu0 %v353, 13
    %v355 = vpop.permute.xlu0 %354
    %vm356 = vcmask 130152
    %s357 = scalar_lea.vmem [#allocation0], 8
    %358 = vst.msk [vmem:[%s357] sm:$0x1] %vm356, %v355
    %s359 = scalar_lea.vmem %s0, 4
    %v360 = vld [vmem:[%s359] sm:$0x1]
    %361 = vrot.lane.b32.xlu0 %v360, 12
    %v362 = vpop.permute.xlu0 %361
    %vm363 = vcmask 121952
    %364 = vst.msk [vmem:[#allocation0] sm:$0x1] %vm363, %v362
    %s365 = scalar_lea.vmem %s0, 46
    %v366 = vld [vmem:[%s365] sm:$0x1]
    %367 = vrot.lane.b32.xlu0 %v366, 10
    %v368 = vpop.permute.xlu0 %367
    %vm369 = vcmask 105552
    %s370 = scalar_lea.vmem [#allocation0], 8
    %371 = vst.msk [vmem:[%s370] sm:$0x1] %vm369, %v368
    %s372 = scalar_lea.vmem %s0, 3
    %v373 = vld [vmem:[%s372] sm:$0x1]
    %374 = vrot.lane.b32.xlu0 %v373, 9
    %v375 = vpop.permute.xlu0 %374
    %vm376 = vcmask 97352
    %377 = vst.msk [vmem:[#allocation0] sm:$0x1] %vm376, %v375
    %s378 = scalar_lea.vmem %s0, 45
    %v379 = vld [vmem:[%s378] sm:$0x1]
    %380 = vrot.lane.b32.xlu0 %v379, 7
    %v381 = vpop.permute.xlu0 %380
    %vm382 = vcmask 80952
    %s383 = scalar_lea.vmem [#allocation0], 8
    %384 = vst.msk [vmem:[%s383] sm:$0x1] %vm382, %v381
    %s385 = scalar_lea.vmem %s0, 2
    %v386 = vld [vmem:[%s385] sm:$0x1]
    %387 = vrot.lane.b32.xlu0 %v386, 6
    %v388 = vpop.permute.xlu0 %387
    %vm389 = vcmask 72752
    %390 = vst.msk [vmem:[#allocation0] sm:$0x1] %vm389, %v388
    %s391 = scalar_lea.vmem %s0, 44
    %v392 = vld [vmem:[%s391] sm:$0x1]
    %393 = vrot.lane.b32.xlu0 %v392, 4
    %v394 = vpop.permute.xlu0 %393
    %vm395 = vcmask 56352
    %s396 = scalar_lea.vmem [#allocation0], 8
    %397 = vst.msk [vmem:[%s396] sm:$0x1] %vm395, %v394
    %s398 = scalar_lea.vmem %s0, 1
    %v399 = vld [vmem:[%s398] sm:$0x1]
    %400 = vrot.lane.b32.xlu0 %v399, 3
    %v401 = vpop.permute.xlu0 %400
    %vm402 = vcmask 48152
    %403 = vst.msk [vmem:[#allocation0] sm:$0x1] %vm402, %v401
    %s404 = scalar_lea.vmem %s0, 43
    %v405 = vld [vmem:[%s404] sm:$0x1]
    %406 = vrot.lane.b32.xlu0 %v405, 1
    %v407 = vpop.permute.xlu0 %406
    %vm408 = vcmask 31752
    %s409 = scalar_lea.vmem [#allocation0], 8
    %410 = vst.msk [vmem:[%s409] sm:$0x1] %vm408, %v407
    %s412 = sshllo.u32 0, 1
    %v414 = vld [vmem:[#allocation0] sm:%s412]
    %s415 = sshllo.u32 0, 1
    %416 = vst [vmem:[%s1] sm:%s415] %v414
    %s417 = scalar_lea.vmem [#allocation0], 8
    %v418 = vld [vmem:[%s417] sm:%s412]
    %s419 = sshllo.u32 0, 1
    %s420 = scalar_lea.vmem %s1, 1
    %421 = vst [vmem:[%s420] sm:%s419] %v418

// kernel: tile.53
$region0: #{tile.53}
  #allocation0 [shape = 's32[1]{0}', space=sflag, size = 0x4, scoped, tag = 'scoped memory for tile.53']
  %s0 = inlined_call_operand.vmem [shape: f32[8], index: 0, kind: input, shape index: {}]
  %s1 = inlined_call_operand.vmem [shape: f32[32,8], index: 1, kind: output, shape index: {}]
  // Predicated region
  $region2: #{tile.53} parent=0 // pred_check
    _
  $region3: #{tile.53} parent=0 // pred_check_branch
    %3 = sbr.rel (0) target = $region5
  $region4: #{tile.53} parent=0 // pred_region
    _
  $region5: #{tile.53} parent=0 // pred_fallthru
    _
  %v4 = vld [vmem:[%s0] ss:$0 sm:$0xff]
  %5 = vst [vmem:[%s1] sm:$0xff] %v4
  %s6 = scalar_lea.vmem %s1, 8
  %7 = vst [vmem:[%s6] sm:$0xff] %v4
  %s8 = scalar_lea.vmem %s1, 16
  %9 = vst [vmem:[%s8] sm:$0xff] %v4
  %s10 = scalar_lea.vmem %s1, 24
  %11 = vst [vmem:[%s10] sm:$0xff] %v4

// kernel: tile.54
$region0: #{tile.54}
  %s0 = inlined_call_operand.vmem [shape: f32[32,8], index: 0, kind: input, shape index: {}]
  %s1 = inlined_call_operand.vmem [shape: f32[1,256], index: 1, kind: output, shape index: {}]
  $region1: #{tile.54} parent=0
    #allocation0 [shape = 'u8[8192]{0}', space=vmem, size = 0x2000, scoped, tag = 'scoped mem for output reshape']
    %s2 = smov 3
    %v3 = vld [vmem:[%s0] ss:$16 sm:%s2]
    %vm4 = vcmask 64512
    %5 = vst.msk [vmem:[#allocation0] ss:$8 sm:$0x3] %vm4, %v3
    %s6 = scalar_lea.vmem %s0, 15
    %s7 = smov 3
    %v8 = vld [vmem:[%s6] ss:$16 sm:%s7]
    %9 = vrot.lane.b32.xlu0 %v8, 120
    %v10 = vpop.permute.xlu0 %9
    %vm11 = vcmask 1048512
    %12 = vst.msk [vmem:[#allocation0] ss:$8 sm:$0x3] %vm11, %v10
    %s13 = scalar_lea.vmem %s0, 14
    %s14 = smov 3
    %v15 = vld [vmem:[%s13] ss:$16 sm:%s14]
    %16 = vrot.lane.b32.xlu0 %v15, 112
    %v17 = vpop.permute.xlu0 %16
    %vm18 = vcmask 982912
    %19 = vst.msk [vmem:[#allocation0] ss:$8 sm:$0x3] %vm18, %v17
    %s20 = scalar_lea.vmem %s0, 13
    %s21 = smov 3
    %v22 = vld [vmem:[%s20] ss:$16 sm:%s21]
    %23 = vrot.lane.b32.xlu0 %v22, 104
    %v24 = vpop.permute.xlu0 %23
    %vm25 = vcmask 917312
    %26 = vst.msk [vmem:[#allocation0] ss:$8 sm:$0x3] %vm25, %v24
    %s27 = scalar_lea.vmem %s0, 12
    %s28 = smov 3
    %v29 = vld [vmem:[%s27] ss:$16 sm:%s28]
    %30 = vrot.lane.b32.xlu0 %v29, 96
    %v31 = vpop.permute.xlu0 %30
    %vm32 = vcmask 851712
    %33 = vst.msk [vmem:[#allocation0] ss:$8 sm:$0x3] %vm32, %v31
    %s34 = scalar_lea.vmem %s0, 11
    %s35 = smov 3
    %v36 = vld [vmem:[%s34] ss:$16 sm:%s35]
    %37 = vrot.lane.b32.xlu0 %v36, 88
    %v38 = vpop.permute.xlu0 %37
    %vm39 = vcmask 786112
    %40 = vst.msk [vmem:[#allocation0] ss:$8 sm:$0x3] %vm39, %v38
    %s41 = scalar_lea.vmem %s0, 10
    %s42 = smov 3
    %v43 = vld [vmem:[%s41] ss:$16 sm:%s42]
    %44 = vrot.lane.b32.xlu0 %v43, 80
    %v45 = vpop.permute.xlu0 %44
    %vm46 = vcmask 720512
    %47 = vst.msk [vmem:[#allocation0] ss:$8 sm:$0x3] %vm46, %v45
    %s48 = scalar_lea.vmem %s0, 9
    %s49 = smov 3
    %v50 = vld [vmem:[%s48] ss:$16 sm:%s49]
    %51 = vrot.lane.b32.xlu0 %v50, 72
    %v52 = vpop.permute.xlu0 %51
    %vm53 = vcmask 654912
    %54 = vst.msk [vmem:[#allocation0] ss:$8 sm:$0x3] %vm53, %v52
    %s55 = scalar_lea.vmem %s0, 8
    %s56 = smov 3
    %v57 = vld [vmem:[%s55] ss:$16 sm:%s56]
    %58 = vrot.lane.b32.xlu0 %v57, 64
    %v59 = vpop.permute.xlu0 %58
    %vm60 = vcmask 589312
    %61 = vst.msk [vmem:[#allocation0] ss:$8 sm:$0x3] %vm60, %v59
    %s62 = scalar_lea.vmem %s0, 7
    %s63 = smov 3
    %v64 = vld [vmem:[%s62] ss:$16 sm:%s63]
    %65 = vrot.lane.b32.xlu0 %v64, 56
    %v66 = vpop.permute.xlu0 %65
    %vm67 = vcmask 523712
    %68 = vst.msk [vmem:[#allocation0] ss:$8 sm:$0x3] %vm67, %v66
    %s69 = scalar_lea.vmem %s0, 6
    %s70 = smov 3
    %v71 = vld [vmem:[%s69] ss:$16 sm:%s70]
    %72 = vrot.lane.b32.xlu0 %v71, 48
    %v73 = vpop.permute.xlu0 %72
    %vm74 = vcmask 458112
    %75 = vst.msk [vmem:[#allocation0] ss:$8 sm:$0x3] %vm74, %v73
    %s76 = scalar_lea.vmem %s0, 5
    %s77 = smov 3
    %v78 = vld [vmem:[%s76] ss:$16 sm:%s77]
    %79 = vrot.lane.b32.xlu0 %v78, 40
    %v80 = vpop.permute.xlu0 %79
    %vm81 = vcmask 392512
    %82 = vst.msk [vmem:[#allocation0] ss:$8 sm:$0x3] %vm81, %v80
    %s83 = scalar_lea.vmem %s0, 4
    %s84 = smov 3
    %v85 = vld [vmem:[%s83] ss:$16 sm:%s84]
    %86 = vrot.lane.b32.xlu0 %v85, 32
    %v87 = vpop.permute.xlu0 %86
    %vm88 = vcmask 326912
    %89 = vst.msk [vmem:[#allocation0] ss:$8 sm:$0x3] %vm88, %v87
    %s90 = scalar_lea.vmem %s0, 3
    %s91 = smov 3
    %v92 = vld [vmem:[%s90] ss:$16 sm:%s91]
    %93 = vrot.lane.b32.xlu0 %v92, 24
    %v94 = vpop.permute.xlu0 %93
    %vm95 = vcmask 261312
    %96 = vst.msk [vmem:[#allocation0] ss:$8 sm:$0x3] %vm95, %v94
    %s97 = scalar_lea.vmem %s0, 2
    %s98 = smov 3
    %v99 = vld [vmem:[%s97] ss:$16 sm:%s98]
    %100 = vrot.lane.b32.xlu0 %v99, 16
    %v101 = vpop.permute.xlu0 %100
    %vm102 = vcmask 195712
    %103 = vst.msk [vmem:[#allocation0] ss:$8 sm:$0x3] %vm102, %v101
    %s104 = scalar_lea.vmem %s0, 1
    %s105 = smov 3
    %v106 = vld [vmem:[%s104] ss:$16 sm:%s105]
    %107 = vrot.lane.b32.xlu0 %v106, 8
    %v108 = vpop.permute.xlu0 %107
    %vm109 = vcmask 130112
    %110 = vst.msk [vmem:[#allocation0] ss:$8 sm:$0x3] %vm109, %v108
    %s112 = sshllo.u32 0, 1
    %v114 = vld [vmem:[#allocation0] sm:%s112]
    %s115 = sshllo.u32 0, 1
    %116 = vst [vmem:[%s1] sm:%s115] %v114
    %s117 = scalar_lea.vmem [#allocation0], 8
    %v118 = vld [vmem:[%s117] sm:%s112]
    %s119 = sshllo.u32 0, 1
    %s120 = scalar_lea.vmem %s1, 1
    %121 = vst [vmem:[%s120] sm:%s119] %v118

// kernel: tile.48
$region0: #{tile.48}
  #allocation0 [shape = 's32[1]{0}', space=sflag, size = 0x4, scoped, tag = 'scoped memory for tile.48']
  %s0 = inlined_call_operand.vmem [shape: f32[16], index: 0, kind: input, shape index: {}]
  %s1 = inlined_call_operand.vmem [shape: f32[16,16], index: 1, kind: output, shape index: {}]
  // Predicated region
  $region2: #{tile.48} parent=0 // pred_check
    _
  $region3: #{tile.48} parent=0 // pred_check_branch
    %3 = sbr.rel (0) target = $region5
  $region4: #{tile.48} parent=0 // pred_region
    _
  $region5: #{tile.48} parent=0 // pred_fallthru
    _
  %v4 = vld [vmem:[%s0] ss:$0 sm:$0xff]
  %5 = vst [vmem:[%s1] sm:$0xff] %v4
  %s6 = scalar_lea.vmem %s1, 8
  %7 = vst [vmem:[%s6] sm:$0xff] %v4

// kernel: tile.49
$region0: #{tile.49}
  %s0 = inlined_call_operand.vmem [shape: f32[16,16], index: 0, kind: input, shape index: {}]
  %s1 = inlined_call_operand.vmem [shape: f32[1,256], index: 1, kind: output, shape index: {}]
  $region1: #{tile.49} parent=0
    #allocation0 [shape = 'u8[8192]{0}', space=vmem, size = 0x2000, scoped, tag = 'scoped mem for output reshape']
    %s2 = smov 3
    %v3 = vld [vmem:[%s0] ss:$8 sm:%s2]
    %vm4 = vcmask 130048
    %5 = vst.msk [vmem:[#allocation0] ss:$8 sm:$0x3] %vm4, %v3
    %s6 = scalar_lea.vmem %s0, 7
    %s7 = smov 3
    %v8 = vld [vmem:[%s6] ss:$8 sm:%s7]
    %9 = vrot.lane.b32.xlu0 %v8, 112
    %v10 = vpop.permute.xlu0 %9
    %vm11 = vcmask 1048448
    %12 = vst.msk [vmem:[#allocation0] ss:$8 sm:$0x3] %vm11, %v10
    %s13 = scalar_lea.vmem %s0, 6
    %s14 = smov 3
    %v15 = vld [vmem:[%s13] ss:$8 sm:%s14]
    %16 = vrot.lane.b32.xlu0 %v15, 96
    %v17 = vpop.permute.xlu0 %16
    %vm18 = vcmask 917248
    %19 = vst.msk [vmem:[#allocation0] ss:$8 sm:$0x3] %vm18, %v17
    %s20 = scalar_lea.vmem %s0, 5
    %s21 = smov 3
    %v22 = vld [vmem:[%s20] ss:$8 sm:%s21]
    %23 = vrot.lane.b32.xlu0 %v22, 80
    %v24 = vpop.permute.xlu0 %23
    %vm25 = vcmask 786048
    %26 = vst.msk [vmem:[#allocation0] ss:$8 sm:$0x3] %vm25, %v24
    %s27 = scalar_lea.vmem %s0, 4
    %s28 = smov 3
    %v29 = vld [vmem:[%s27] ss:$8 sm:%s28]
    %30 = vrot.lane.b32.xlu0 %v29, 64
    %v31 = vpop.permute.xlu0 %30
    %vm32 = vcmask 654848
    %33 = vst.msk [vmem:[#allocation0] ss:$8 sm:$0x3] %vm32, %v31
    %s34 = scalar_lea.vmem %s0, 3
    %s35 = smov 3
    %v36 = vld [vmem:[%s34] ss:$8 sm:%s35]
    %37 = vrot.lane.b32.xlu0 %v36, 48
    %v38 = vpop.permute.xlu0 %37
    %vm39 = vcmask 523648
    %40 = vst.msk [vmem:[#allocation0] ss:$8 sm:$0x3] %vm39, %v38
    %s41 = scalar_lea.vmem %s0, 2
    %s42 = smov 3
    %v43 = vld [vmem:[%s41] ss:$8 sm:%s42]
    %44 = vrot.lane.b32.xlu0 %v43, 32
    %v45 = vpop.permute.xlu0 %44
    %vm46 = vcmask 392448
    %47 = vst.msk [vmem:[#allocation0] ss:$8 sm:$0x3] %vm46, %v45
    %s48 = scalar_lea.vmem %s0, 1
    %s49 = smov 3
    %v50 = vld [vmem:[%s48] ss:$8 sm:%s49]
    %51 = vrot.lane.b32.xlu0 %v50, 16
    %v52 = vpop.permute.xlu0 %51
    %vm53 = vcmask 261248
    %54 = vst.msk [vmem:[#allocation0] ss:$8 sm:$0x3] %vm53, %v52
    %s56 = sshllo.u32 0, 1
    %v58 = vld [vmem:[#allocation0] sm:%s56]
    %s59 = sshllo.u32 0, 1
    %60 = vst [vmem:[%s1] sm:%s59] %v58
    %s61 = scalar_lea.vmem [#allocation0], 8
    %v62 = vld [vmem:[%s61] sm:%s56]
    %s63 = sshllo.u32 0, 1
    %s64 = scalar_lea.vmem %s1, 1
    %65 = vst [vmem:[%s64] sm:%s63] %v62

// kernel: tile.43
$region0: #{tile.43}
  #allocation0 [shape = 's32[1]{0}', space=sflag, size = 0x4, scoped, tag = 'scoped memory for tile.43']
  %s0 = inlined_call_operand.vmem [shape: f32[16], index: 0, kind: input, shape index: {}]
  %s1 = inlined_call_operand.vmem [shape: f32[8,16], index: 1, kind: output, shape index: {}]
  // Predicated region
  $region2: #{tile.43} parent=0 // pred_check
    _
  $region3: #{tile.43} parent=0 // pred_check_branch
    %3 = sbr.rel (0) target = $region5
  $region4: #{tile.43} parent=0 // pred_region
    _
  $region5: #{tile.43} parent=0 // pred_fallthru
    _
  %v4 = vld [vmem:[%s0] ss:$0 sm:$0xff]
  %5 = vst [vmem:[%s1] sm:$0xff] %v4

// kernel: tile.44
$region0: #{tile.44}
  %s0 = inlined_call_operand.vmem [shape: f32[8,16], index: 0, kind: input, shape index: {}]
  %s1 = inlined_call_operand.vmem [shape: f32[1,128], index: 1, kind: output, shape index: {}]
  $region1: #{tile.44} parent=0
    #allocation0 [shape = 'u8[4096]{0}', space=vmem, size = 0x1000, scoped, tag = 'scoped mem for output reshape']
    %v2 = vld [vmem:[%s0] sm:$0x1]
    %vm3 = vcmask 130048
    %4 = vst.msk [vmem:[#allocation0] sm:$0x1] %vm3, %v2
    %s5 = scalar_lea.vmem %s0, 7
    %v6 = vld [vmem:[%s5] sm:$0x1]
    %7 = vrot.lane.b32.xlu0 %v6, 112
    %v8 = vpop.permute.xlu0 %7
    %vm9 = vcmask 1048448
    %10 = vst.msk [vmem:[#allocation0] sm:$0x1] %vm9, %v8
    %s11 = scalar_lea.vmem %s0, 6
    %v12 = vld [vmem:[%s11] sm:$0x1]
    %13 = vrot.lane.b32.xlu0 %v12, 96
    %v14 = vpop.permute.xlu0 %13
    %vm15 = vcmask 917248
    %16 = vst.msk [vmem:[#allocation0] sm:$0x1] %vm15, %v14
    %s17 = scalar_lea.vmem %s0, 5
    %v18 = vld [vmem:[%s17] sm:$0x1]
    %19 = vrot.lane.b32.xlu0 %v18, 80
    %v20 = vpop.permute.xlu0 %19
    %vm21 = vcmask 786048
    %22 = vst.msk [vmem:[#allocation0] sm:$0x1] %vm21, %v20
    %s23 = scalar_lea.vmem %s0, 4
    %v24 = vld [vmem:[%s23] sm:$0x1]
    %25 = vrot.lane.b32.xlu0 %v24, 64
    %v26 = vpop.permute.xlu0 %25
    %vm27 = vcmask 654848
    %28 = vst.msk [vmem:[#allocation0] sm:$0x1] %vm27, %v26
    %s29 = scalar_lea.vmem %s0, 3
    %v30 = vld [vmem:[%s29] sm:$0x1]
    %31 = vrot.lane.b32.xlu0 %v30, 48
    %v32 = vpop.permute.xlu0 %31
    %vm33 = vcmask 523648
    %34 = vst.msk [vmem:[#allocation0] sm:$0x1] %vm33, %v32
    %s35 = scalar_lea.vmem %s0, 2
    %v36 = vld [vmem:[%s35] sm:$0x1]
    %37 = vrot.lane.b32.xlu0 %v36, 32
    %v38 = vpop.permute.xlu0 %37
    %vm39 = vcmask 392448
    %40 = vst.msk [vmem:[#allocation0] sm:$0x1] %vm39, %v38
    %s41 = scalar_lea.vmem %s0, 1
    %v42 = vld [vmem:[%s41] sm:$0x1]
    %43 = vrot.lane.b32.xlu0 %v42, 16
    %v44 = vpop.permute.xlu0 %43
    %vm45 = vcmask 261248
    %46 = vst.msk [vmem:[#allocation0] sm:$0x1] %vm45, %v44
    %s48 = sshllo.u32 0, 1
    %v50 = vld [vmem:[#allocation0] sm:%s48]
    %s51 = sshllo.u32 0, 1
    %52 = vst [vmem:[%s1] sm:%s51] %v50

// kernel: tile.38
$region0: #{tile.38}
  #allocation0 [shape = 's32[1]{0}', space=sflag, size = 0x4, scoped, tag = 'scoped memory for tile.38']
  %s0 = inlined_call_operand.vmem [shape: f32[16], index: 0, kind: input, shape index: {}]
  %s1 = inlined_call_operand.vmem [shape: f32[4,16], index: 1, kind: output, shape index: {}]
  // Predicated region
  $region2: #{tile.38} parent=0 // pred_check
    _
  $region3: #{tile.38} parent=0 // pred_check_branch
    %3 = sbr.rel (0) target = $region5
  $region4: #{tile.38} parent=0 // pred_region
    _
  $region5: #{tile.38} parent=0 // pred_fallthru
    _
  %v4 = vld [vmem:[%s0] ss:$0 sm:$0xff]
  %5 = vst [vmem:[%s1] sm:$0xf] %v4

// kernel: tile.39
$region0: #{tile.39}
  %s0 = inlined_call_operand.vmem [shape: f32[4,16], index: 0, kind: input, shape index: {}]
  %s1 = inlined_call_operand.vmem [shape: f32[1,64], index: 1, kind: output, shape index: {}]
  $region1: #{tile.39} parent=0
    #allocation0 [shape = 'u8[4096]{0}', space=vmem, size = 0x1000, scoped, tag = 'scoped mem for output reshape']
    #allocation1 [shape = 'u8[4096]{0}', space=vmem, size = 0x1000, scoped, tag = 'scoped mem for input reshape']
    %s3 = sshllo.u32 0, 4
    %v4 = vld [vmem:[%s0] sm:%s3]
    %5 = vst [vmem:[#allocation1] sm:%s3] %v4
    %v6 = vld [vmem:[#allocation1] sm:$0x1]
    %vm7 = vcmask 130048
    %8 = vst.msk [vmem:[#allocation0] sm:$0x1] %vm7, %v6
    %s9 = scalar_lea.vmem [#allocation1], 3
    %v10 = vld [vmem:[%s9] sm:$0x1]
    %11 = vrot.lane.b32.xlu0 %v10, 48
    %v12 = vpop.permute.xlu0 %11
    %vm13 = vcmask 523648
    %14 = vst.msk [vmem:[#allocation0] sm:$0x1] %vm13, %v12
    %s15 = scalar_lea.vmem [#allocation1], 2
    %v16 = vld [vmem:[%s15] sm:$0x1]
    %17 = vrot.lane.b32.xlu0 %v16, 32
    %v18 = vpop.permute.xlu0 %17
    %vm19 = vcmask 392448
    %20 = vst.msk [vmem:[#allocation0] sm:$0x1] %vm19, %v18
    %s21 = scalar_lea.vmem [#allocation1], 1
    %v22 = vld [vmem:[%s21] sm:$0x1]
    %23 = vrot.lane.b32.xlu0 %v22, 16
    %v24 = vpop.permute.xlu0 %23
    %vm25 = vcmask 261248
    %26 = vst.msk [vmem:[#allocation0] sm:$0x1] %vm25, %v24
    %s28 = sshllo.u32 0, 1
    %v30 = vld [vmem:[#allocation0] sm:%s28]
    %s31 = sshllo.u32 0, 1
    %32 = vst [vmem:[%s1] sm:%s31] %v30

// kernel: tile.33
$region0: #{tile.33}
  #allocation0 [shape = 's32[1]{0}', space=sflag, size = 0x4, scoped, tag = 'scoped memory for tile.33']
  %s0 = inlined_call_operand.vmem [shape: f32[16], index: 0, kind: input, shape index: {}]
  %s1 = inlined_call_operand.vmem [shape: f32[2,16], index: 1, kind: output, shape index: {}]
  // Predicated region
  $region2: #{tile.33} parent=0 // pred_check
    _
  $region3: #{tile.33} parent=0 // pred_check_branch
    %3 = sbr.rel (0) target = $region5
  $region4: #{tile.33} parent=0 // pred_region
    _
  $region5: #{tile.33} parent=0 // pred_fallthru
    _
  %v4 = vld [vmem:[%s0] ss:$0 sm:$0xff]
  %5 = vst [vmem:[%s1] sm:$0x3] %v4

// kernel: tile.34
$region0: #{tile.34}
  %s0 = inlined_call_operand.vmem [shape: f32[2,16], index: 0, kind: input, shape index: {}]
  %s1 = inlined_call_operand.vmem [shape: f32[1,32], index: 1, kind: output, shape index: {}]
  $region1: #{tile.34} parent=0
    #allocation0 [shape = 'u8[4096]{0}', space=vmem, size = 0x1000, scoped, tag = 'scoped mem for output reshape']
    #allocation1 [shape = 'u8[4096]{0}', space=vmem, size = 0x1000, scoped, tag = 'scoped mem for input reshape']
    %s3 = sshllo.u32 0, 2
    %v4 = vld [vmem:[%s0] sm:%s3]
    %5 = vst [vmem:[#allocation1] sm:%s3] %v4
    %v6 = vld [vmem:[#allocation1] sm:$0x1]
    %vm7 = vcmask 130048
    %8 = vst.msk [vmem:[#allocation0] sm:$0x1] %vm7, %v6
    %s9 = scalar_lea.vmem [#allocation1], 1
    %v10 = vld [vmem:[%s9] sm:$0x1]
    %11 = vrot.lane.b32.xlu0 %v10, 16
    %v12 = vpop.permute.xlu0 %11
    %vm13 = vcmask 261248
    %14 = vst.msk [vmem:[#allocation0] sm:$0x1] %vm13, %v12
    %s16 = sshllo.u32 0, 1
    %v18 = vld [vmem:[#allocation0] sm:%s16]
    %s19 = sshllo.u32 0, 1
    %20 = vst [vmem:[%s1] sm:%s19] %v18

// kernel: generator_forward.1
$region0: #{generator_forward.1}
  #allocation0 [shape = 'u32[]', space=smem, size = 0x4, offset = 0x4, fixed_abs, tag = 'smem constant byte address 0x4 - core index']
  #allocation1 [shape = 'u32[144,128]{1,0:T(1,128)}', space=vmem, size = 0x12000, scoped, tag = 'internal scratch']
  %s0 = inlined_call_operand.smem [shape: u32[40], index: -1, kind: input, shape index: {}]
  %s1 = sld [smem:[%s0]]
  %s2 = scalar_lea.smem %s0, 1
  %s3 = sld [smem:[%s2]]
  %s4 = scalar_lea.smem %s0, 2
  %s5 = sld [smem:[%s4]]
  %s6 = scalar_lea.smem %s0, 3
  %s7 = sld [smem:[%s6]]
  %s8 = scalar_lea.smem %s0, 4
  %s9 = sld [smem:[%s8]]
  %s10 = scalar_lea.smem %s0, 5
  %s11 = sld [smem:[%s10]]
  %s12 = scalar_lea.smem %s0, 6
  %s13 = sld [smem:[%s12]]
  %s14 = scalar_lea.smem %s0, 7
  %s15 = sld [smem:[%s14]]
  %s16 = scalar_lea.smem %s0, 8
  %s17 = sld [smem:[%s16]]
  %s18 = scalar_lea.smem %s0, 9
  %s19 = sld [smem:[%s18]]
  %s20 = scalar_lea.smem %s0, 10
  %s21 = sld [smem:[%s20]]
  %s22 = scalar_lea.smem %s0, 11
  %s23 = sld [smem:[%s22]]
  %s24 = scalar_lea.smem %s0, 12
  %s25 = sld [smem:[%s24]]
  %s26 = scalar_lea.smem %s0, 13
  %s27 = sld [smem:[%s26]]
  %s28 = scalar_lea.smem %s0, 14
  %s29 = sld [smem:[%s28]]
  %s30 = scalar_lea.smem %s0, 15
  %s31 = sld [smem:[%s30]]
  %s32 = scalar_lea.smem %s0, 16
  %s33 = sld [smem:[%s32]]
  %s34 = scalar_lea.smem %s0, 17
  %s35 = sld [smem:[%s34]]
  %s36 = scalar_lea.smem %s0, 18
  %s37 = sld [smem:[%s36]]
  %s38 = scalar_lea.smem %s0, 19
  %s39 = sld [smem:[%s38]]
  %s40 = scalar_lea.smem %s0, 20
  %s41 = sld [smem:[%s40]]
  %s42 = scalar_lea.smem %s0, 21
  %s43 = sld [smem:[%s42]]
  %s44 = scalar_lea.smem %s0, 22
  %s45 = sld [smem:[%s44]]
  %s46 = scalar_lea.smem %s0, 23
  %s47 = sld [smem:[%s46]]
  %s48 = scalar_lea.smem %s0, 24
  %s49 = sld [smem:[%s48]]
  %s50 = scalar_lea.smem %s0, 25
  %s51 = sld [smem:[%s50]]
  %s52 = scalar_lea.smem %s0, 26
  %s53 = sld [smem:[%s52]]
  %s54 = scalar_lea.smem %s0, 27
  %s55 = sld [smem:[%s54]]
  %s56 = scalar_lea.smem %s0, 28
  %s57 = sld [smem:[%s56]]
  %s58 = scalar_lea.smem %s0, 29
  %s59 = sld [smem:[%s58]]
  %s60 = scalar_lea.smem %s0, 30
  %s61 = sld [smem:[%s60]]
  %s62 = scalar_lea.smem %s0, 31
  %s63 = sld [smem:[%s62]]
  %s64 = scalar_lea.smem %s0, 32
  %s65 = sld [smem:[%s64]]
  %s66 = scalar_lea.smem %s0, 33
  %s67 = sld [smem:[%s66]]
  %s68 = scalar_lea.smem %s0, 34
  %s69 = sld [smem:[%s68]]
  %s70 = scalar_lea.smem %s0, 35
  %s71 = sld [smem:[%s70]]
  %s72 = scalar_lea.smem %s0, 36
  %s73 = sld [smem:[%s72]]
  %s74 = scalar_lea.smem %s0, 37
  %s75 = sld [smem:[%s74]]
  %s76 = scalar_lea.smem %s0, 38
  %s77 = sld [smem:[%s76]]
  %s78 = scalar_lea.smem %s0, 39
  %s79 = sld [smem:[%s78]]
  %s80 = sld [smem:[#allocation0]]
  $region166: #{generator_forward.1} parent=0
    _
  %s82 = ssub.s32 1, %s80
  %s83 = scalar_select 0, %s82, %s80
  // Predicated region
  $region2: #{generator_forward.1} parent=0 // pred_check
    _
  $region3: #{generator_forward.1} parent=0 // pred_check_branch
    %85 = sbr.rel (0) target = $region5
  $region4: #{generator_forward.1} parent=0 // pred_region
    _
  $region5: #{generator_forward.1} parent=0 // pred_fallthru
    _
  // Predicated region
  $region6: #{generator_forward.1} parent=0 // pred_check
    _
  $region7: #{generator_forward.1} parent=0 // pred_check_branch
    %87 = sbr.rel (0) target = $region9
  $region8: #{generator_forward.1} parent=0 // pred_region
    _
  $region9: #{generator_forward.1} parent=0 // pred_fallthru
    _
  // Predicated region
  $region10: #{generator_forward.1} parent=0 // pred_check
    _
  $region11: #{generator_forward.1} parent=0 // pred_check_branch
    %89 = sbr.rel (0) target = $region13
  $region12: #{generator_forward.1} parent=0 // pred_region
    _
  $region13: #{generator_forward.1} parent=0 // pred_fallthru
    _
  // Predicated region
  $region14: #{generator_forward.1} parent=0 // pred_check
    _
  $region15: #{generator_forward.1} parent=0 // pred_check_branch
    %91 = sbr.rel (0) target = $region17
  $region16: #{generator_forward.1} parent=0 // pred_region
    _
  $region17: #{generator_forward.1} parent=0 // pred_fallthru
    _
  // Predicated region
  $region18: #{generator_forward.1} parent=0 // pred_check
    _
  $region19: #{generator_forward.1} parent=0 // pred_check_branch
    %93 = sbr.rel (0) target = $region21
  $region20: #{generator_forward.1} parent=0 // pred_region
    _
  $region21: #{generator_forward.1} parent=0 // pred_fallthru
    _
  // Predicated region
  $region22: #{generator_forward.1} parent=0 // pred_check
    _
  $region23: #{generator_forward.1} parent=0 // pred_check_branch
    %95 = sbr.rel (0) target = $region25
  $region24: #{generator_forward.1} parent=0 // pred_region
    _
  $region25: #{generator_forward.1} parent=0 // pred_fallthru
    _
  // Predicated region
  $region26: #{generator_forward.1} parent=0 // pred_check
    _
  $region27: #{generator_forward.1} parent=0 // pred_check_branch
    %97 = sbr.rel (0) target = $region29
  $region28: #{generator_forward.1} parent=0 // pred_region
    _
  $region29: #{generator_forward.1} parent=0 // pred_fallthru
    _
  // Predicated region
  $region30: #{generator_forward.1} parent=0 // pred_check
    _
  $region31: #{generator_forward.1} parent=0 // pred_check_branch
    %99 = sbr.rel (0) target = $region33
  $region32: #{generator_forward.1} parent=0 // pred_region
    _
  $region33: #{generator_forward.1} parent=0 // pred_fallthru
    _
  // Predicated region
  $region34: #{generator_forward.1} parent=0 // pred_check
    _
  $region35: #{generator_forward.1} parent=0 // pred_check_branch
    %101 = sbr.rel (0) target = $region37
  $region36: #{generator_forward.1} parent=0 // pred_region
    _
  $region37: #{generator_forward.1} parent=0 // pred_fallthru
    _
  // Predicated region
  $region38: #{generator_forward.1} parent=0 // pred_check
    _
  $region39: #{generator_forward.1} parent=0 // pred_check_branch
    %103 = sbr.rel (0) target = $region41
  $region40: #{generator_forward.1} parent=0 // pred_region
    _
  $region41: #{generator_forward.1} parent=0 // pred_fallthru
    _
  // Predicated region
  $region42: #{generator_forward.1} parent=0 // pred_check
    _
  $region43: #{generator_forward.1} parent=0 // pred_check_branch
    %105 = sbr.rel (0) target = $region45
  $region44: #{generator_forward.1} parent=0 // pred_region
    _
  $region45: #{generator_forward.1} parent=0 // pred_fallthru
    _
  // Predicated region
  $region46: #{generator_forward.1} parent=0 // pred_check
    _
  $region47: #{generator_forward.1} parent=0 // pred_check_branch
    %107 = sbr.rel (0) target = $region49
  $region48: #{generator_forward.1} parent=0 // pred_region
    _
  $region49: #{generator_forward.1} parent=0 // pred_fallthru
    _
  // Predicated region
  $region50: #{generator_forward.1} parent=0 // pred_check
    _
  $region51: #{generator_forward.1} parent=0 // pred_check_branch
    %109 = sbr.rel (0) target = $region53
  $region52: #{generator_forward.1} parent=0 // pred_region
    _
  $region53: #{generator_forward.1} parent=0 // pred_fallthru
    _
  // Predicated region
  $region54: #{generator_forward.1} parent=0 // pred_check
    _
  $region55: #{generator_forward.1} parent=0 // pred_check_branch
    %111 = sbr.rel (0) target = $region57
  $region56: #{generator_forward.1} parent=0 // pred_region
    _
  $region57: #{generator_forward.1} parent=0 // pred_fallthru
    _
  // Predicated region
  $region58: #{generator_forward.1} parent=0 // pred_check
    _
  $region59: #{generator_forward.1} parent=0 // pred_check_branch
    %113 = sbr.rel (0) target = $region61
  $region60: #{generator_forward.1} parent=0 // pred_region
    _
  $region61: #{generator_forward.1} parent=0 // pred_fallthru
    _
  // Predicated region
  $region62: #{generator_forward.1} parent=0 // pred_check
    _
  $region63: #{generator_forward.1} parent=0 // pred_check_branch
    %115 = sbr.rel (0) target = $region65
  $region64: #{generator_forward.1} parent=0 // pred_region
    _
  $region65: #{generator_forward.1} parent=0 // pred_fallthru
    _
  // Predicated region
  $region66: #{generator_forward.1} parent=0 // pred_check
    _
  $region67: #{generator_forward.1} parent=0 // pred_check_branch
    %117 = sbr.rel (0) target = $region69
  $region68: #{generator_forward.1} parent=0 // pred_region
    _
  $region69: #{generator_forward.1} parent=0 // pred_fallthru
    _
  // Predicated region
  $region70: #{generator_forward.1} parent=0 // pred_check
    _
  $region71: #{generator_forward.1} parent=0 // pred_check_branch
    %119 = sbr.rel (0) target = $region73
  $region72: #{generator_forward.1} parent=0 // pred_region
    _
  $region73: #{generator_forward.1} parent=0 // pred_fallthru
    _
  // Predicated region
  $region74: #{generator_forward.1} parent=0 // pred_check
    _
  $region75: #{generator_forward.1} parent=0 // pred_check_branch
    %121 = sbr.rel (0) target = $region77
  $region76: #{generator_forward.1} parent=0 // pred_region
    _
  $region77: #{generator_forward.1} parent=0 // pred_fallthru
    _
  // Predicated region
  $region78: #{generator_forward.1} parent=0 // pred_check
    _
  $region79: #{generator_forward.1} parent=0 // pred_check_branch
    %123 = sbr.rel (0) target = $region81
  $region80: #{generator_forward.1} parent=0 // pred_region
    _
  $region81: #{generator_forward.1} parent=0 // pred_fallthru
    _
  // Predicated region
  $region82: #{generator_forward.1} parent=0 // pred_check
    _
  $region83: #{generator_forward.1} parent=0 // pred_check_branch
    %125 = sbr.rel (0) target = $region85
  $region84: #{generator_forward.1} parent=0 // pred_region
    _
  $region85: #{generator_forward.1} parent=0 // pred_fallthru
    _
  // Predicated region
  $region86: #{generator_forward.1} parent=0 // pred_check
    _
  $region87: #{generator_forward.1} parent=0 // pred_check_branch
    %127 = sbr.rel (0) target = $region89
  $region88: #{generator_forward.1} parent=0 // pred_region
    _
  $region89: #{generator_forward.1} parent=0 // pred_fallthru
    _
  // Predicated region
  $region90: #{generator_forward.1} parent=0 // pred_check
    _
  $region91: #{generator_forward.1} parent=0 // pred_check_branch
    %129 = sbr.rel (0) target = $region93
  $region92: #{generator_forward.1} parent=0 // pred_region
    _
  $region93: #{generator_forward.1} parent=0 // pred_fallthru
    _
  // Predicated region
  $region94: #{generator_forward.1} parent=0 // pred_check
    _
  $region95: #{generator_forward.1} parent=0 // pred_check_branch
    %131 = sbr.rel (0) target = $region97
  $region96: #{generator_forward.1} parent=0 // pred_region
    _
  $region97: #{generator_forward.1} parent=0 // pred_fallthru
    _
  // Predicated region
  $region98: #{generator_forward.1} parent=0 // pred_check
    _
  $region99: #{generator_forward.1} parent=0 // pred_check_branch
    %133 = sbr.rel (0) target = $region101
  $region100: #{generator_forward.1} parent=0 // pred_region
    _
  $region101: #{generator_forward.1} parent=0 // pred_fallthru
    _
  // Predicated region
  $region102: #{generator_forward.1} parent=0 // pred_check
    _
  $region103: #{generator_forward.1} parent=0 // pred_check_branch
    %135 = sbr.rel (0) target = $region105
  $region104: #{generator_forward.1} parent=0 // pred_region
    _
  $region105: #{generator_forward.1} parent=0 // pred_fallthru
    _
  // Predicated region
  $region106: #{generator_forward.1} parent=0 // pred_check
    _
  $region107: #{generator_forward.1} parent=0 // pred_check_branch
    %137 = sbr.rel (0) target = $region109
  $region108: #{generator_forward.1} parent=0 // pred_region
    _
  $region109: #{generator_forward.1} parent=0 // pred_fallthru
    _
  // Predicated region
  $region110: #{generator_forward.1} parent=0 // pred_check
    _
  $region111: #{generator_forward.1} parent=0 // pred_check_branch
    %139 = sbr.rel (0) target = $region113
  $region112: #{generator_forward.1} parent=0 // pred_region
    _
  $region113: #{generator_forward.1} parent=0 // pred_fallthru
    _
  // Predicated region
  $region114: #{generator_forward.1} parent=0 // pred_check
    _
  $region115: #{generator_forward.1} parent=0 // pred_check_branch
    %141 = sbr.rel (0) target = $region117
  $region116: #{generator_forward.1} parent=0 // pred_region
    _
  $region117: #{generator_forward.1} parent=0 // pred_fallthru
    _
  // Predicated region
  $region118: #{generator_forward.1} parent=0 // pred_check
    _
  $region119: #{generator_forward.1} parent=0 // pred_check_branch
    %143 = sbr.rel (0) target = $region121
  $region120: #{generator_forward.1} parent=0 // pred_region
    _
  $region121: #{generator_forward.1} parent=0 // pred_fallthru
    _
  // Predicated region
  $region122: #{generator_forward.1} parent=0 // pred_check
    _
  $region123: #{generator_forward.1} parent=0 // pred_check_branch
    %145 = sbr.rel (0) target = $region125
  $region124: #{generator_forward.1} parent=0 // pred_region
    _
  $region125: #{generator_forward.1} parent=0 // pred_fallthru
    _
  // Predicated region
  $region126: #{generator_forward.1} parent=0 // pred_check
    _
  $region127: #{generator_forward.1} parent=0 // pred_check_branch
    %147 = sbr.rel (0) target = $region129
  $region128: #{generator_forward.1} parent=0 // pred_region
    _
  $region129: #{generator_forward.1} parent=0 // pred_fallthru
    _
  // Predicated region
  $region130: #{generator_forward.1} parent=0 // pred_check
    _
  $region131: #{generator_forward.1} parent=0 // pred_check_branch
    %149 = sbr.rel (0) target = $region133
  $region132: #{generator_forward.1} parent=0 // pred_region
    _
  $region133: #{generator_forward.1} parent=0 // pred_fallthru
    _
  // Predicated region
  $region134: #{generator_forward.1} parent=0 // pred_check
    _
  $region135: #{generator_forward.1} parent=0 // pred_check_branch
    %151 = sbr.rel (0) target = $region137
  $region136: #{generator_forward.1} parent=0 // pred_region
    _
  $region137: #{generator_forward.1} parent=0 // pred_fallthru
    _
  // Predicated region
  $region138: #{generator_forward.1} parent=0 // pred_check
    _
  $region139: #{generator_forward.1} parent=0 // pred_check_branch
    %153 = sbr.rel (0) target = $region141
  $region140: #{generator_forward.1} parent=0 // pred_region
    _
  $region141: #{generator_forward.1} parent=0 // pred_fallthru
    _
  // Predicated region
  $region142: #{generator_forward.1} parent=0 // pred_check
    _
  $region143: #{generator_forward.1} parent=0 // pred_check_branch
    %155 = sbr.rel (0) target = $region145
  $region144: #{generator_forward.1} parent=0 // pred_region
    _
  $region145: #{generator_forward.1} parent=0 // pred_fallthru
    _
  // Predicated region
  $region146: #{generator_forward.1} parent=0 // pred_check
    _
  $region147: #{generator_forward.1} parent=0 // pred_check_branch
    %157 = sbr.rel (0) target = $region149
  $region148: #{generator_forward.1} parent=0 // pred_region
    _
  $region149: #{generator_forward.1} parent=0 // pred_fallthru
    _
  // Predicated region
  $region150: #{generator_forward.1} parent=0 // pred_check
    _
  $region151: #{generator_forward.1} parent=0 // pred_check_branch
    %159 = sbr.rel (0) target = $region153
  $region152: #{generator_forward.1} parent=0 // pred_region
    _
  $region153: #{generator_forward.1} parent=0 // pred_fallthru
    _
  // Predicated region
  $region154: #{generator_forward.1} parent=0 // pred_check
    _
  $region155: #{generator_forward.1} parent=0 // pred_check_branch
    %161 = sbr.rel (0) target = $region157
  $region156: #{generator_forward.1} parent=0 // pred_region
    _
  $region157: #{generator_forward.1} parent=0 // pred_fallthru
    _
  %v162 = vld [vmem:[%s1] sm:$0x3]
  %v163 = vmax.f32 %v162, 0.0
  %v164 = vld [vmem:[%s3] sm:$0xf]
  %vm165 = vcmask 15360
  %v167 = vsel %vm165, %v164, 0
  %vm169 = vcmask 1041408
  %v171 = vsel %vm169, %v163, 0
  %173 = vmatprep.subr.mxu0 0.0
  %174 = vmatpush1.msra.mxu0 %v171
  %175 = vmatprep.subr.mxu0 0.0
  %176 = vmatpush1.msra.mxu0 0.0
  %177 = vmatprep.subr.mxu0 0.0
  %178 = vmatpush1.msra.mxu0 0.0
  %179 = vmatprep.subr.mxu0 0.0
  %180 = vmatpush1.msra.mxu0 0.0
  %181 = vmatprep.subr.mxu0 0.0
  %182 = vmatpush1.msra.mxu0 0.0
  %183 = vmatprep.subr.mxu0 0.0
  %184 = vmatpush1.msra.mxu0 0.0
  %185 = vmatprep.subr.mxu0 0.0
  %186 = vmatpush1.msra.mxu0 0.0
  %187 = vmatprep.subr.mxu0 0.0
  %188 = vmatpush1.msra.mxu0 0.0
  %189 = vmatprep.subr.mxu0 0.0
  %190 = vmatpush1.msra.mxu0 0.0
  %191 = vmatprep.subr.mxu0 0.0
  %192 = vmatpush1.msra.mxu0 0.0
  %193 = vmatprep.subr.mxu0 0.0
  %194 = vmatpush1.msra.mxu0 0.0
  %195 = vmatprep.subr.mxu0 0.0
  %196 = vmatpush1.msra.mxu0 0.0
  %197 = vmatprep.subr.mxu0 0.0
  %198 = vmatpush1.msra.mxu0 0.0
  %199 = vmatprep.subr.mxu0 0.0
  %200 = vmatpush1.msra.mxu0 0.0
  %201 = vmatprep.subr.mxu0 0.0
  %202 = vmatpush1.msra.mxu0 0.0
  %203 = vmatprep.subr.mxu0 0.0
  %204 = vmatpush1.msra.mxu0 0.0
  %205 = vmatprep.subr.mxu0 0.0
  %206 = vmatpush1.msra.mxu0 0.0
  %207 = vmatprep.subr.mxu0 0.0
  %208 = vmatpush1.msra.mxu0 0.0
  %209 = vmatprep.subr.mxu0 0.0
  %210 = vmatpush1.msra.mxu0 0.0
  %211 = vmatprep.subr.mxu0 0.0
  %212 = vmatpush1.msra.mxu0 0.0
  %213 = vmatprep.subr.mxu0 0.0
  %214 = vmatpush1.msra.mxu0 0.0
  %215 = vmatprep.subr.mxu0 0.0
  %216 = vmatpush1.msra.mxu0 0.0
  %217 = vmatprep.subr.mxu0 0.0
  %218 = vmatpush1.msra.mxu0 0.0
  %219 = vmatprep.subr.mxu0 0.0
  %220 = vmatpush1.msra.mxu0 0.0
  %221 = vmatprep.subr.mxu0 0.0
  %222 = vmatpush1.msra.mxu0 0.0
  %223 = vmatprep.subr.mxu0 0.0
  %224 = vmatpush1.msra.mxu0 0.0
  %225 = vmatprep.subr.mxu0 0.0
  %226 = vmatpush1.msra.mxu0 0.0
  %227 = vmatprep.subr.mxu0 0.0
  %228 = vmatpush1.msra.mxu0 0.0
  %229 = vmatprep.subr.mxu0 0.0
  %230 = vmatpush1.msra.mxu0 0.0
  %231 = vmatprep.subr.mxu0 0.0
  %232 = vmatpush1.msra.mxu0 0.0
  %233 = vmatprep.subr.mxu0 0.0
  %234 = vmatpush1.msra.mxu0 0.0
  %235 = vmatprep.subr.mxu0 0.0
  %236 = vmatpush1.msra.mxu0 0.0
  %237 = vmatprep.mubr.f32.mxu0 0.0
  %238 = vmatmul.mubr.f32.gmra.mrb[0].mxu0 %v167
  %v239 = vpop.f32.mrb[0].mxu0
  %v240 = vadd.f32 0.0, %v239
  %v241 = vpop.f32.mrb[0].mxu0
  %242 = vdwg.mxu0
  %v243 = vld [vmem:[%s5] sm:$0xff]
  %v244 = vld [vmem:[%s5 + $0x8] sm:$0xff]
  %v245 = vld [vmem:[%s5 + $0x10] sm:$0xff]
  %v246 = vld [vmem:[%s5 + $0x18] sm:$0xff]
  %s247 = scalar_lea.vmem %s3, 4
  %v248 = vld [vmem:[%s247] sm:$0xf]
  %v250 = vsel %vm165, %v248, 0
  %252 = vmatprep.subr.mxu0 0.0
  %253 = vmatpush1.msra.mxu0 %v171
  %254 = vmatprep.subr.mxu0 0.0
  %255 = vmatpush1.msra.mxu0 0.0
  %256 = vmatprep.subr.mxu0 0.0
  %257 = vmatpush1.msra.mxu0 0.0
  %258 = vmatprep.subr.mxu0 0.0
  %259 = vmatpush1.msra.mxu0 0.0
  %260 = vmatprep.subr.mxu0 0.0
  %261 = vmatpush1.msra.mxu0 0.0
  %262 = vmatprep.subr.mxu0 0.0
  %263 = vmatpush1.msra.mxu0 0.0
  %264 = vmatprep.subr.mxu0 0.0
  %265 = vmatpush1.msra.mxu0 0.0
  %266 = vmatprep.subr.mxu0 0.0
  %267 = vmatpush1.msra.mxu0 0.0
  %268 = vmatprep.subr.mxu0 0.0
  %269 = vmatpush1.msra.mxu0 0.0
  %270 = vmatprep.subr.mxu0 0.0
  %271 = vmatpush1.msra.mxu0 0.0
  %272 = vmatprep.subr.mxu0 0.0
  %273 = vmatpush1.msra.mxu0 0.0
  %274 = vmatprep.subr.mxu0 0.0
  %275 = vmatpush1.msra.mxu0 0.0
  %276 = vmatprep.subr.mxu0 0.0
  %277 = vmatpush1.msra.mxu0 0.0
  %278 = vmatprep.subr.mxu0 0.0
  %279 = vmatpush1.msra.mxu0 0.0
  %280 = vmatprep.subr.mxu0 0.0
  %281 = vmatpush1.msra.mxu0 0.0
  %282 = vmatprep.subr.mxu0 0.0
  %283 = vmatpush1.msra.mxu0 0.0
  %284 = vmatprep.subr.mxu0 0.0
  %285 = vmatpush1.msra.mxu0 0.0
  %286 = vmatprep.subr.mxu0 0.0
  %287 = vmatpush1.msra.mxu0 0.0
  %288 = vmatprep.subr.mxu0 0.0
  %289 = vmatpush1.msra.mxu0 0.0
  %290 = vmatprep.subr.mxu0 0.0
  %291 = vmatpush1.msra.mxu0 0.0
  %292 = vmatprep.subr.mxu0 0.0
  %293 = vmatpush1.msra.mxu0 0.0
  %294 = vmatprep.subr.mxu0 0.0
  %295 = vmatpush1.msra.mxu0 0.0
  %296 = vmatprep.subr.mxu0 0.0
  %297 = vmatpush1.msra.mxu0 0.0
  %298 = vmatprep.subr.mxu0 0.0
  %299 = vmatpush1.msra.mxu0 0.0
  %300 = vmatprep.subr.mxu0 0.0
  %301 = vmatpush1.msra.mxu0 0.0
  %302 = vmatprep.subr.mxu0 0.0
  %303 = vmatpush1.msra.mxu0 0.0
  %304 = vmatprep.subr.mxu0 0.0
  %305 = vmatpush1.msra.mxu0 0.0
  %306 = vmatprep.subr.mxu0 0.0
  %307 = vmatpush1.msra.mxu0 0.0
  %308 = vmatprep.subr.mxu0 0.0
  %309 = vmatpush1.msra.mxu0 0.0
  %310 = vmatprep.subr.mxu0 0.0
  %311 = vmatpush1.msra.mxu0 0.0
  %312 = vmatprep.subr.mxu0 0.0
  %313 = vmatpush1.msra.mxu0 0.0
  %314 = vmatprep.subr.mxu0 0.0
  %315 = vmatpush1.msra.mxu0 0.0
  %316 = vmatprep.mubr.f32.mxu0 0.0
  %317 = vmatmul.mubr.f32.gmra.mrb[0].mxu0 %v250
  %v318 = vpop.f32.mrb[0].mxu0
  %v319 = vadd.f32 0.0, %v318
  %v320 = vpop.f32.mrb[0].mxu0
  %321 = vdwg.mxu0
  %s322 = scalar_lea.vmem %s5, 32
  %v323 = vld [vmem:[%s322] sm:$0xff]
  %v324 = vld [vmem:[%s322 + $0x8] sm:$0xff]
  %v325 = vld [vmem:[%s322 + $0x10] sm:$0xff]
  %v326 = vld [vmem:[%s322 + $0x18] sm:$0xff]
  %vm327 = vcmask 261120
  %v329 = vsel %vm327, %v319, 0
  %331 = vmatprep.subr.mxu0 0.0
  %332 = vmatpush1.msra.mxu0 %v323
  %333 = vmatprep.subr.mxu0 0.0
  %334 = vmatpush1.msra.mxu0 %v324
  %335 = vmatprep.subr.mxu0 0.0
  %336 = vmatpush1.msra.mxu0 %v325
  %337 = vmatprep.subr.mxu0 0.0
  %338 = vmatpush1.msra.mxu0 %v326
  %339 = vmatprep.subr.mxu0 0.0
  %340 = vmatpush1.msra.mxu0 0.0
  %341 = vmatprep.subr.mxu0 0.0
  %342 = vmatpush1.msra.mxu0 0.0
  %343 = vmatprep.subr.mxu0 0.0
  %344 = vmatpush1.msra.mxu0 0.0
  %345 = vmatprep.subr.mxu0 0.0
  %346 = vmatpush1.msra.mxu0 0.0
  %347 = vmatprep.subr.mxu0 0.0
  %348 = vmatpush1.msra.mxu0 0.0
  %349 = vmatprep.subr.mxu0 0.0
  %350 = vmatpush1.msra.mxu0 0.0
  %351 = vmatprep.subr.mxu0 0.0
  %352 = vmatpush1.msra.mxu0 0.0
  %353 = vmatprep.subr.mxu0 0.0
  %354 = vmatpush1.msra.mxu0 0.0
  %355 = vmatprep.subr.mxu0 0.0
  %356 = vmatpush1.msra.mxu0 0.0
  %357 = vmatprep.subr.mxu0 0.0
  %358 = vmatpush1.msra.mxu0 0.0
  %359 = vmatprep.subr.mxu0 0.0
  %360 = vmatpush1.msra.mxu0 0.0
  %361 = vmatprep.subr.mxu0 0.0
  %362 = vmatpush1.msra.mxu0 0.0
  %363 = vmatprep.subr.mxu0 0.0
  %364 = vmatpush1.msra.mxu0 0.0
  %365 = vmatprep.subr.mxu0 0.0
  %366 = vmatpush1.msra.mxu0 0.0
  %367 = vmatprep.subr.mxu0 0.0
  %368 = vmatpush1.msra.mxu0 0.0
  %369 = vmatprep.subr.mxu0 0.0
  %370 = vmatpush1.msra.mxu0 0.0
  %371 = vmatprep.subr.mxu0 0.0
  %372 = vmatpush1.msra.mxu0 0.0
  %373 = vmatprep.subr.mxu0 0.0
  %374 = vmatpush1.msra.mxu0 0.0
  %375 = vmatprep.subr.mxu0 0.0
  %376 = vmatpush1.msra.mxu0 0.0
  %377 = vmatprep.subr.mxu0 0.0
  %378 = vmatpush1.msra.mxu0 0.0
  %379 = vmatprep.subr.mxu0 0.0
  %380 = vmatpush1.msra.mxu0 0.0
  %381 = vmatprep.subr.mxu0 0.0
  %382 = vmatpush1.msra.mxu0 0.0
  %383 = vmatprep.subr.mxu0 0.0
  %384 = vmatpush1.msra.mxu0 0.0
  %385 = vmatprep.subr.mxu0 0.0
  %386 = vmatpush1.msra.mxu0 0.0
  %387 = vmatprep.subr.mxu0 0.0
  %388 = vmatpush1.msra.mxu0 0.0
  %389 = vmatprep.subr.mxu0 0.0
  %390 = vmatpush1.msra.mxu0 0.0
  %391 = vmatprep.subr.mxu0 0.0
  %392 = vmatpush1.msra.mxu0 0.0
  %393 = vmatprep.subr.mxu0 0.0
  %394 = vmatpush1.msra.mxu0 0.0
  %395 = vmatprep.mubr.f32.mxu0 0.0
  %396 = vmatmul.mubr.f32.gmra.mrb[0].mxu0 %v329
  %v397 = vpop.f32.mrb[0].mxu0
  %v398 = vadd.f32 0.0, %v397
  %v399 = vpop.f32.mrb[0].mxu0
  %400 = vdwg.mxu0
  %v402 = vsel %vm327, %v240, 0
  %404 = vmatprep.subr.mxu0 0.0
  %405 = vmatpush1.msra.mxu0 %v243
  %406 = vmatprep.subr.mxu0 0.0
  %407 = vmatpush1.msra.mxu0 %v244
  %408 = vmatprep.subr.mxu0 0.0
  %409 = vmatpush1.msra.mxu0 %v245
  %410 = vmatprep.subr.mxu0 0.0
  %411 = vmatpush1.msra.mxu0 %v246
  %412 = vmatprep.subr.mxu0 0.0
  %413 = vmatpush1.msra.mxu0 0.0
  %414 = vmatprep.subr.mxu0 0.0
  %415 = vmatpush1.msra.mxu0 0.0
  %416 = vmatprep.subr.mxu0 0.0
  %417 = vmatpush1.msra.mxu0 0.0
  %418 = vmatprep.subr.mxu0 0.0
  %419 = vmatpush1.msra.mxu0 0.0
  %420 = vmatprep.subr.mxu0 0.0
  %421 = vmatpush1.msra.mxu0 0.0
  %422 = vmatprep.subr.mxu0 0.0
  %423 = vmatpush1.msra.mxu0 0.0
  %424 = vmatprep.subr.mxu0 0.0
  %425 = vmatpush1.msra.mxu0 0.0
  %426 = vmatprep.subr.mxu0 0.0
  %427 = vmatpush1.msra.mxu0 0.0
  %428 = vmatprep.subr.mxu0 0.0
  %429 = vmatpush1.msra.mxu0 0.0
  %430 = vmatprep.subr.mxu0 0.0
  %431 = vmatpush1.msra.mxu0 0.0
  %432 = vmatprep.subr.mxu0 0.0
  %433 = vmatpush1.msra.mxu0 0.0
  %434 = vmatprep.subr.mxu0 0.0
  %435 = vmatpush1.msra.mxu0 0.0
  %436 = vmatprep.subr.mxu0 0.0
  %437 = vmatpush1.msra.mxu0 0.0
  %438 = vmatprep.subr.mxu0 0.0
  %439 = vmatpush1.msra.mxu0 0.0
  %440 = vmatprep.subr.mxu0 0.0
  %441 = vmatpush1.msra.mxu0 0.0
  %442 = vmatprep.subr.mxu0 0.0
  %443 = vmatpush1.msra.mxu0 0.0
  %444 = vmatprep.subr.mxu0 0.0
  %445 = vmatpush1.msra.mxu0 0.0
  %446 = vmatprep.subr.mxu0 0.0
  %447 = vmatpush1.msra.mxu0 0.0
  %448 = vmatprep.subr.mxu0 0.0
  %449 = vmatpush1.msra.mxu0 0.0
  %450 = vmatprep.subr.mxu0 0.0
  %451 = vmatpush1.msra.mxu0 0.0
  %452 = vmatprep.subr.mxu0 0.0
  %453 = vmatpush1.msra.mxu0 0.0
  %454 = vmatprep.subr.mxu0 0.0
  %455 = vmatpush1.msra.mxu0 0.0
  %456 = vmatprep.subr.mxu0 0.0
  %457 = vmatpush1.msra.mxu0 0.0
  %458 = vmatprep.subr.mxu0 0.0
  %459 = vmatpush1.msra.mxu0 0.0
  %460 = vmatprep.subr.mxu0 0.0
  %461 = vmatpush1.msra.mxu0 0.0
  %462 = vmatprep.subr.mxu0 0.0
  %463 = vmatpush1.msra.mxu0 0.0
  %464 = vmatprep.subr.mxu0 0.0
  %465 = vmatpush1.msra.mxu0 0.0
  %466 = vmatprep.subr.mxu0 0.0
  %467 = vmatpush1.msra.mxu0 0.0
  %468 = vmatprep.mubr.f32.mxu0 0.0
  %469 = vmatmul.mubr.f32.gmra.mrb[0].mxu0 %v402
  %v470 = vpop.f32.mrb[0].mxu0
  %v471 = vadd.f32 %v398, %v470
  %v472 = vpop.f32.mrb[0].mxu0
  %473 = vdwg.mxu0
  %s474 = scalar_lea.vmem %s3, 8
  %v475 = vld [vmem:[%s474] sm:$0xf]
  %v477 = vsel %vm165, %v475, 0
  %479 = vmatprep.subr.mxu0 0.0
  %480 = vmatpush1.msra.mxu0 %v171
  %481 = vmatprep.subr.mxu0 0.0
  %482 = vmatpush1.msra.mxu0 0.0
  %483 = vmatprep.subr.mxu0 0.0
  %484 = vmatpush1.msra.mxu0 0.0
  %485 = vmatprep.subr.mxu0 0.0
  %486 = vmatpush1.msra.mxu0 0.0
  %487 = vmatprep.subr.mxu0 0.0
  %488 = vmatpush1.msra.mxu0 0.0
  %489 = vmatprep.subr.mxu0 0.0
  %490 = vmatpush1.msra.mxu0 0.0
  %491 = vmatprep.subr.mxu0 0.0
  %492 = vmatpush1.msra.mxu0 0.0
  %493 = vmatprep.subr.mxu0 0.0
  %494 = vmatpush1.msra.mxu0 0.0
  %495 = vmatprep.subr.mxu0 0.0
  %496 = vmatpush1.msra.mxu0 0.0
  %497 = vmatprep.subr.mxu0 0.0
  %498 = vmatpush1.msra.mxu0 0.0
  %499 = vmatprep.subr.mxu0 0.0
  %500 = vmatpush1.msra.mxu0 0.0
  %501 = vmatprep.subr.mxu0 0.0
  %502 = vmatpush1.msra.mxu0 0.0
  %503 = vmatprep.subr.mxu0 0.0
  %504 = vmatpush1.msra.mxu0 0.0
  %505 = vmatprep.subr.mxu0 0.0
  %506 = vmatpush1.msra.mxu0 0.0
  %507 = vmatprep.subr.mxu0 0.0
  %508 = vmatpush1.msra.mxu0 0.0
  %509 = vmatprep.subr.mxu0 0.0
  %510 = vmatpush1.msra.mxu0 0.0
  %511 = vmatprep.subr.mxu0 0.0
  %512 = vmatpush1.msra.mxu0 0.0
  %513 = vmatprep.subr.mxu0 0.0
  %514 = vmatpush1.msra.mxu0 0.0
  %515 = vmatprep.subr.mxu0 0.0
  %516 = vmatpush1.msra.mxu0 0.0
  %517 = vmatprep.subr.mxu0 0.0
  %518 = vmatpush1.msra.mxu0 0.0
  %519 = vmatprep.subr.mxu0 0.0
  %520 = vmatpush1.msra.mxu0 0.0
  %521 = vmatprep.subr.mxu0 0.0
  %522 = vmatpush1.msra.mxu0 0.0
  %523 = vmatprep.subr.mxu0 0.0
  %524 = vmatpush1.msra.mxu0 0.0
  %525 = vmatprep.subr.mxu0 0.0
  %526 = vmatpush1.msra.mxu0 0.0
  %527 = vmatprep.subr.mxu0 0.0
  %528 = vmatpush1.msra.mxu0 0.0
  %529 = vmatprep.subr.mxu0 0.0
  %530 = vmatpush1.msra.mxu0 0.0
  %531 = vmatprep.subr.mxu0 0.0
  %532 = vmatpush1.msra.mxu0 0.0
  %533 = vmatprep.subr.mxu0 0.0
  %534 = vmatpush1.msra.mxu0 0.0
  %535 = vmatprep.subr.mxu0 0.0
  %536 = vmatpush1.msra.mxu0 0.0
  %537 = vmatprep.subr.mxu0 0.0
  %538 = vmatpush1.msra.mxu0 0.0
  %539 = vmatprep.subr.mxu0 0.0
  %540 = vmatpush1.msra.mxu0 0.0
  %541 = vmatprep.subr.mxu0 0.0
  %542 = vmatpush1.msra.mxu0 0.0
  %543 = vmatprep.mubr.f32.mxu0 0.0
  %544 = vmatmul.mubr.f32.gmra.mrb[0].mxu0 %v477
  %v545 = vpop.f32.mrb[0].mxu0
  %v546 = vadd.f32 0.0, %v545
  %v547 = vpop.f32.mrb[0].mxu0
  %548 = vdwg.mxu0
  %s549 = scalar_lea.vmem %s5, 64
  %v550 = vld [vmem:[%s549] sm:$0xff]
  %v551 = vld [vmem:[%s549 + $0x8] sm:$0xff]
  %v552 = vld [vmem:[%s549 + $0x10] sm:$0xff]
  %v553 = vld [vmem:[%s549 + $0x18] sm:$0xff]
  %v555 = vsel %vm327, %v546, 0
  %557 = vmatprep.subr.mxu0 0.0
  %558 = vmatpush1.msra.mxu0 %v550
  %559 = vmatprep.subr.mxu0 0.0
  %560 = vmatpush1.msra.mxu0 %v551
  %561 = vmatprep.subr.mxu0 0.0
  %562 = vmatpush1.msra.mxu0 %v552
  %563 = vmatprep.subr.mxu0 0.0
  %564 = vmatpush1.msra.mxu0 %v553
  %565 = vmatprep.subr.mxu0 0.0
  %566 = vmatpush1.msra.mxu0 0.0
  %567 = vmatprep.subr.mxu0 0.0
  %568 = vmatpush1.msra.mxu0 0.0
  %569 = vmatprep.subr.mxu0 0.0
  %570 = vmatpush1.msra.mxu0 0.0
  %571 = vmatprep.subr.mxu0 0.0
  %572 = vmatpush1.msra.mxu0 0.0
  %573 = vmatprep.subr.mxu0 0.0
  %574 = vmatpush1.msra.mxu0 0.0
  %575 = vmatprep.subr.mxu0 0.0
  %576 = vmatpush1.msra.mxu0 0.0
  %577 = vmatprep.subr.mxu0 0.0
  %578 = vmatpush1.msra.mxu0 0.0
  %579 = vmatprep.subr.mxu0 0.0
  %580 = vmatpush1.msra.mxu0 0.0
  %581 = vmatprep.subr.mxu0 0.0
  %582 = vmatpush1.msra.mxu0 0.0
  %583 = vmatprep.subr.mxu0 0.0
  %584 = vmatpush1.msra.mxu0 0.0
  %585 = vmatprep.subr.mxu0 0.0
  %586 = vmatpush1.msra.mxu0 0.0
  %587 = vmatprep.subr.mxu0 0.0
  %588 = vmatpush1.msra.mxu0 0.0
  %589 = vmatprep.subr.mxu0 0.0
  %590 = vmatpush1.msra.mxu0 0.0
  %591 = vmatprep.subr.mxu0 0.0
  %592 = vmatpush1.msra.mxu0 0.0
  %593 = vmatprep.subr.mxu0 0.0
  %594 = vmatpush1.msra.mxu0 0.0
  %595 = vmatprep.subr.mxu0 0.0
  %596 = vmatpush1.msra.mxu0 0.0
  %597 = vmatprep.subr.mxu0 0.0
  %598 = vmatpush1.msra.mxu0 0.0
  %599 = vmatprep.subr.mxu0 0.0
  %600 = vmatpush1.msra.mxu0 0.0
  %601 = vmatprep.subr.mxu0 0.0
  %602 = vmatpush1.msra.mxu0 0.0
  %603 = vmatprep.subr.mxu0 0.0
  %604 = vmatpush1.msra.mxu0 0.0
  %605 = vmatprep.subr.mxu0 0.0
  %606 = vmatpush1.msra.mxu0 0.0
  %607 = vmatprep.subr.mxu0 0.0
  %608 = vmatpush1.msra.mxu0 0.0
  %609 = vmatprep.subr.mxu0 0.0
  %610 = vmatpush1.msra.mxu0 0.0
  %611 = vmatprep.subr.mxu0 0.0
  %612 = vmatpush1.msra.mxu0 0.0
  %613 = vmatprep.subr.mxu0 0.0
  %614 = vmatpush1.msra.mxu0 0.0
  %615 = vmatprep.subr.mxu0 0.0
  %616 = vmatpush1.msra.mxu0 0.0
  %617 = vmatprep.subr.mxu0 0.0
  %618 = vmatpush1.msra.mxu0 0.0
  %619 = vmatprep.subr.mxu0 0.0
  %620 = vmatpush1.msra.mxu0 0.0
  %621 = vmatprep.mubr.f32.mxu0 0.0
  %622 = vmatmul.mubr.f32.gmra.mrb[0].mxu0 %v555
  %v623 = vpop.f32.mrb[0].mxu0
  %v624 = vadd.f32 0.0, %v623
  %v625 = vpop.f32.mrb[0].mxu0
  %626 = vdwg.mxu0
  %v627 = vadd.f32 %v471, %v624
  %v628 = vld [vmem:[%s7] sm:$0x1]
  %v630 = vlaneseq
  %v631 = vshrl.u32 %v630, 7
  %v632 = vsub.s32 0, %v631
  %v633 = vrot.slane %v628, %v632
  %v635 = vadd.f32 %v627, %v633
  %vm636 = vcmask 257024
  %v637 = vsel %vm636, %v635, 0.0
  %v638 = vrot.slane %v637, 4
  %v639 = vadd.f32 %v637, %v638
  %v640 = vrot.slane %v639, 2
  %v641 = vadd.f32 %v639, %v640
  %v642 = vrot.slane %v641, 1
  %v643 = vadd.f32 %v641, %v642
  %v644 = vld [vmem:[%s9] sm:$0xff]
  %v645 = vld [vmem:[%s9 + $0x8] sm:$0xff]
  %v646 = vld [vmem:[%s9 + $0x10] sm:$0xff]
  %v647 = vld [vmem:[%s9 + $0x18] sm:$0xff]
  %v649 = vsel %vm327, %v643, 0
  %651 = vmatprep.subr.mxu0 0.0
  %652 = vmatpush1.msra.mxu0 %v644
  %653 = vmatprep.subr.mxu0 0.0
  %654 = vmatpush1.msra.mxu0 %v645
  %655 = vmatprep.subr.mxu0 0.0
  %656 = vmatpush1.msra.mxu0 %v646
  %657 = vmatprep.subr.mxu0 0.0
  %658 = vmatpush1.msra.mxu0 %v647
  %659 = vmatprep.subr.mxu0 0.0
  %660 = vmatpush1.msra.mxu0 0.0
  %661 = vmatprep.subr.mxu0 0.0
  %662 = vmatpush1.msra.mxu0 0.0
  %663 = vmatprep.subr.mxu0 0.0
  %664 = vmatpush1.msra.mxu0 0.0
  %665 = vmatprep.subr.mxu0 0.0
  %666 = vmatpush1.msra.mxu0 0.0
  %667 = vmatprep.subr.mxu0 0.0
  %668 = vmatpush1.msra.mxu0 0.0
  %669 = vmatprep.subr.mxu0 0.0
  %670 = vmatpush1.msra.mxu0 0.0
  %671 = vmatprep.subr.mxu0 0.0
  %672 = vmatpush1.msra.mxu0 0.0
  %673 = vmatprep.subr.mxu0 0.0
  %674 = vmatpush1.msra.mxu0 0.0
  %675 = vmatprep.subr.mxu0 0.0
  %676 = vmatpush1.msra.mxu0 0.0
  %677 = vmatprep.subr.mxu0 0.0
  %678 = vmatpush1.msra.mxu0 0.0
  %679 = vmatprep.subr.mxu0 0.0
  %680 = vmatpush1.msra.mxu0 0.0
  %681 = vmatprep.subr.mxu0 0.0
  %682 = vmatpush1.msra.mxu0 0.0
  %683 = vmatprep.subr.mxu0 0.0
  %684 = vmatpush1.msra.mxu0 0.0
  %685 = vmatprep.subr.mxu0 0.0
  %686 = vmatpush1.msra.mxu0 0.0
  %687 = vmatprep.subr.mxu0 0.0
  %688 = vmatpush1.msra.mxu0 0.0
  %689 = vmatprep.subr.mxu0 0.0
  %690 = vmatpush1.msra.mxu0 0.0
  %691 = vmatprep.subr.mxu0 0.0
  %692 = vmatpush1.msra.mxu0 0.0
  %693 = vmatprep.subr.mxu0 0.0
  %694 = vmatpush1.msra.mxu0 0.0
  %695 = vmatprep.subr.mxu0 0.0
  %696 = vmatpush1.msra.mxu0 0.0
  %697 = vmatprep.subr.mxu0 0.0
  %698 = vmatpush1.msra.mxu0 0.0
  %699 = vmatprep.subr.mxu0 0.0
  %700 = vmatpush1.msra.mxu0 0.0
  %701 = vmatprep.subr.mxu0 0.0
  %702 = vmatpush1.msra.mxu0 0.0
  %703 = vmatprep.subr.mxu0 0.0
  %704 = vmatpush1.msra.mxu0 0.0
  %705 = vmatprep.subr.mxu0 0.0
  %706 = vmatpush1.msra.mxu0 0.0
  %707 = vmatprep.subr.mxu0 0.0
  %708 = vmatpush1.msra.mxu0 0.0
  %709 = vmatprep.subr.mxu0 0.0
  %710 = vmatpush1.msra.mxu0 0.0
  %711 = vmatprep.subr.mxu0 0.0
  %712 = vmatpush1.msra.mxu0 0.0
  %713 = vmatprep.subr.mxu0 0.0
  %714 = vmatpush1.msra.mxu0 0.0
  %715 = vmatprep.mubr.f32.mxu0 0.0
  %716 = vmatmul.mubr.f32.gmra.mrb[0].mxu0 %v649
  %v717 = vpop.f32.mrb[0].mxu0
  %v718 = vadd.f32 0.0, %v717
  %v719 = vpop.f32.mrb[0].mxu0
  %720 = vdwg.mxu0
  %v721 = vmul.f32 %v718, 0.125
  %v722 = vld [vmem:[%s11] sm:$0xff]
  %v723 = vld [vmem:[%s11 + $0x8] sm:$0xff]
  %vm724 = vcmask 130048
  %v726 = vsel %vm724, %v721, 0
  %728 = vmatprep.subr.mxu0 0.0
  %729 = vmatpush1.msra.mxu0 %v722
  %730 = vmatprep.subr.mxu0 0.0
  %731 = vmatpush1.msra.mxu0 %v723
  %732 = vmatprep.subr.mxu0 0.0
  %733 = vmatpush1.msra.mxu0 0.0
  %734 = vmatprep.subr.mxu0 0.0
  %735 = vmatpush1.msra.mxu0 0.0
  %736 = vmatprep.subr.mxu0 0.0
  %737 = vmatpush1.msra.mxu0 0.0
  %738 = vmatprep.subr.mxu0 0.0
  %739 = vmatpush1.msra.mxu0 0.0
  %740 = vmatprep.subr.mxu0 0.0
  %741 = vmatpush1.msra.mxu0 0.0
  %742 = vmatprep.subr.mxu0 0.0
  %743 = vmatpush1.msra.mxu0 0.0
  %744 = vmatprep.subr.mxu0 0.0
  %745 = vmatpush1.msra.mxu0 0.0
  %746 = vmatprep.subr.mxu0 0.0
  %747 = vmatpush1.msra.mxu0 0.0
  %748 = vmatprep.subr.mxu0 0.0
  %749 = vmatpush1.msra.mxu0 0.0
  %750 = vmatprep.subr.mxu0 0.0
  %751 = vmatpush1.msra.mxu0 0.0
  %752 = vmatprep.subr.mxu0 0.0
  %753 = vmatpush1.msra.mxu0 0.0
  %754 = vmatprep.subr.mxu0 0.0
  %755 = vmatpush1.msra.mxu0 0.0
  %756 = vmatprep.subr.mxu0 0.0
  %757 = vmatpush1.msra.mxu0 0.0
  %758 = vmatprep.subr.mxu0 0.0
  %759 = vmatpush1.msra.mxu0 0.0
  %760 = vmatprep.subr.mxu0 0.0
  %761 = vmatpush1.msra.mxu0 0.0
  %762 = vmatprep.subr.mxu0 0.0
  %763 = vmatpush1.msra.mxu0 0.0
  %764 = vmatprep.subr.mxu0 0.0
  %765 = vmatpush1.msra.mxu0 0.0
  %766 = vmatprep.subr.mxu0 0.0
  %767 = vmatpush1.msra.mxu0 0.0
  %768 = vmatprep.subr.mxu0 0.0
  %769 = vmatpush1.msra.mxu0 0.0
  %770 = vmatprep.subr.mxu0 0.0
  %771 = vmatpush1.msra.mxu0 0.0
  %772 = vmatprep.subr.mxu0 0.0
  %773 = vmatpush1.msra.mxu0 0.0
  %774 = vmatprep.subr.mxu0 0.0
  %775 = vmatpush1.msra.mxu0 0.0
  %776 = vmatprep.subr.mxu0 0.0
  %777 = vmatpush1.msra.mxu0 0.0
  %778 = vmatprep.subr.mxu0 0.0
  %779 = vmatpush1.msra.mxu0 0.0
  %780 = vmatprep.subr.mxu0 0.0
  %781 = vmatpush1.msra.mxu0 0.0
  %782 = vmatprep.subr.mxu0 0.0
  %783 = vmatpush1.msra.mxu0 0.0
  %784 = vmatprep.subr.mxu0 0.0
  %785 = vmatpush1.msra.mxu0 0.0
  %786 = vmatprep.subr.mxu0 0.0
  %787 = vmatpush1.msra.mxu0 0.0
  %788 = vmatprep.subr.mxu0 0.0
  %789 = vmatpush1.msra.mxu0 0.0
  %790 = vmatprep.subr.mxu0 0.0
  %791 = vmatpush1.msra.mxu0 0.0
  %792 = vmatprep.mubr.f32.mxu0 0.0
  %793 = vmatmul.mubr.f32.gmra.mrb[0].mxu0 %v726
  %v794 = vpop.f32.mrb[0].mxu0
  %v795 = vadd.f32 0.0, %v794
  %v796 = vpop.f32.mrb[0].mxu0
  %797 = vdwg.mxu0
  %v798 = vlaneseq
  %v799 = vshrl.u32 %v798, 7
  %v800 = vsub.s32 0, %v799
  %v801 = vrot.slane %v795, %v800
  %v802 = vsub.f32 %v635, %v801
  %v803 = vmul.f32 %v802, %v802
  %v804 = vsel %vm636, %v803, 0.0
  %v805 = vrot.slane %v804, 4
  %v806 = vadd.f32 %v804, %v805
  %v807 = vrot.slane %v806, 2
  %v808 = vadd.f32 %v806, %v807
  %v809 = vrot.slane %v808, 1
  %v810 = vadd.f32 %v808, %v809
  %v812 = vsel %vm327, %v810, 0
  %814 = vmatprep.subr.mxu0 0.0
  %815 = vmatpush1.msra.mxu0 %v644
  %816 = vmatprep.subr.mxu0 0.0
  %817 = vmatpush1.msra.mxu0 %v645
  %818 = vmatprep.subr.mxu0 0.0
  %819 = vmatpush1.msra.mxu0 %v646
  %820 = vmatprep.subr.mxu0 0.0
  %821 = vmatpush1.msra.mxu0 %v647
  %822 = vmatprep.subr.mxu0 0.0
  %823 = vmatpush1.msra.mxu0 0.0
  %824 = vmatprep.subr.mxu0 0.0
  %825 = vmatpush1.msra.mxu0 0.0
  %826 = vmatprep.subr.mxu0 0.0
  %827 = vmatpush1.msra.mxu0 0.0
  %828 = vmatprep.subr.mxu0 0.0
  %829 = vmatpush1.msra.mxu0 0.0
  %830 = vmatprep.subr.mxu0 0.0
  %831 = vmatpush1.msra.mxu0 0.0
  %832 = vmatprep.subr.mxu0 0.0
  %833 = vmatpush1.msra.mxu0 0.0
  %834 = vmatprep.subr.mxu0 0.0
  %835 = vmatpush1.msra.mxu0 0.0
  %836 = vmatprep.subr.mxu0 0.0
  %837 = vmatpush1.msra.mxu0 0.0
  %838 = vmatprep.subr.mxu0 0.0
  %839 = vmatpush1.msra.mxu0 0.0
  %840 = vmatprep.subr.mxu0 0.0
  %841 = vmatpush1.msra.mxu0 0.0
  %842 = vmatprep.subr.mxu0 0.0
  %843 = vmatpush1.msra.mxu0 0.0
  %844 = vmatprep.subr.mxu0 0.0
  %845 = vmatpush1.msra.mxu0 0.0
  %846 = vmatprep.subr.mxu0 0.0
  %847 = vmatpush1.msra.mxu0 0.0
  %848 = vmatprep.subr.mxu0 0.0
  %849 = vmatpush1.msra.mxu0 0.0
  %850 = vmatprep.subr.mxu0 0.0
  %851 = vmatpush1.msra.mxu0 0.0
  %852 = vmatprep.subr.mxu0 0.0
  %853 = vmatpush1.msra.mxu0 0.0
  %854 = vmatprep.subr.mxu0 0.0
  %855 = vmatpush1.msra.mxu0 0.0
  %856 = vmatprep.subr.mxu0 0.0
  %857 = vmatpush1.msra.mxu0 0.0
  %858 = vmatprep.subr.mxu0 0.0
  %859 = vmatpush1.msra.mxu0 0.0
  %860 = vmatprep.subr.mxu0 0.0
  %861 = vmatpush1.msra.mxu0 0.0
  %862 = vmatprep.subr.mxu0 0.0
  %863 = vmatpush1.msra.mxu0 0.0
  %864 = vmatprep.subr.mxu0 0.0
  %865 = vmatpush1.msra.mxu0 0.0
  %866 = vmatprep.subr.mxu0 0.0
  %867 = vmatpush1.msra.mxu0 0.0
  %868 = vmatprep.subr.mxu0 0.0
  %869 = vmatpush1.msra.mxu0 0.0
  %870 = vmatprep.subr.mxu0 0.0
  %871 = vmatpush1.msra.mxu0 0.0
  %872 = vmatprep.subr.mxu0 0.0
  %873 = vmatpush1.msra.mxu0 0.0
  %874 = vmatprep.subr.mxu0 0.0
  %875 = vmatpush1.msra.mxu0 0.0
  %876 = vmatprep.subr.mxu0 0.0
  %877 = vmatpush1.msra.mxu0 0.0
  %878 = vmatprep.mubr.f32.mxu0 0.0
  %879 = vmatmul.mubr.f32.gmra.mrb[0].mxu0 %v812
  %v880 = vpop.f32.mrb[0].mxu0
  %v881 = vadd.f32 0.0, %v880
  %v882 = vpop.f32.mrb[0].mxu0
  %883 = vdwg.mxu0
  %v884 = vmul.f32 %v881, 0.125
  %v885 = vld [vmem:[%s13] sm:$0x1]
  %v886 = vadd.f32 %v884, 1e-05
  %v887 = vrsqrt.pop %v886
  %v888 = vmul.f32 %v885, %v887
  %v889 = vld [vmem:[%s15] sm:$0x1]
  %v890 = vmul.f32 %v721, %v888
  %v891 = vsub.f32 %v889, %v890
  %v893 = vsel %vm724, %v888, 0
  %895 = vmatprep.subr.mxu0 0.0
  %896 = vmatpush1.msra.mxu0 %v722
  %897 = vmatprep.subr.mxu0 0.0
  %898 = vmatpush1.msra.mxu0 %v723
  %899 = vmatprep.subr.mxu0 0.0
  %900 = vmatpush1.msra.mxu0 0.0
  %901 = vmatprep.subr.mxu0 0.0
  %902 = vmatpush1.msra.mxu0 0.0
  %903 = vmatprep.subr.mxu0 0.0
  %904 = vmatpush1.msra.mxu0 0.0
  %905 = vmatprep.subr.mxu0 0.0
  %906 = vmatpush1.msra.mxu0 0.0
  %907 = vmatprep.subr.mxu0 0.0
  %908 = vmatpush1.msra.mxu0 0.0
  %909 = vmatprep.subr.mxu0 0.0
  %910 = vmatpush1.msra.mxu0 0.0
  %911 = vmatprep.subr.mxu0 0.0
  %912 = vmatpush1.msra.mxu0 0.0
  %913 = vmatprep.subr.mxu0 0.0
  %914 = vmatpush1.msra.mxu0 0.0
  %915 = vmatprep.subr.mxu0 0.0
  %916 = vmatpush1.msra.mxu0 0.0
  %917 = vmatprep.subr.mxu0 0.0
  %918 = vmatpush1.msra.mxu0 0.0
  %919 = vmatprep.subr.mxu0 0.0
  %920 = vmatpush1.msra.mxu0 0.0
  %921 = vmatprep.subr.mxu0 0.0
  %922 = vmatpush1.msra.mxu0 0.0
  %923 = vmatprep.subr.mxu0 0.0
  %924 = vmatpush1.msra.mxu0 0.0
  %925 = vmatprep.subr.mxu0 0.0
  %926 = vmatpush1.msra.mxu0 0.0
  %927 = vmatprep.subr.mxu0 0.0
  %928 = vmatpush1.msra.mxu0 0.0
  %929 = vmatprep.subr.mxu0 0.0
  %930 = vmatpush1.msra.mxu0 0.0
  %931 = vmatprep.subr.mxu0 0.0
  %932 = vmatpush1.msra.mxu0 0.0
  %933 = vmatprep.subr.mxu0 0.0
  %934 = vmatpush1.msra.mxu0 0.0
  %935 = vmatprep.subr.mxu0 0.0
  %936 = vmatpush1.msra.mxu0 0.0
  %937 = vmatprep.subr.mxu0 0.0
  %938 = vmatpush1.msra.mxu0 0.0
  %939 = vmatprep.subr.mxu0 0.0
  %940 = vmatpush1.msra.mxu0 0.0
  %941 = vmatprep.subr.mxu0 0.0
  %942 = vmatpush1.msra.mxu0 0.0
  %943 = vmatprep.subr.mxu0 0.0
  %944 = vmatpush1.msra.mxu0 0.0
  %945 = vmatprep.subr.mxu0 0.0
  %946 = vmatpush1.msra.mxu0 0.0
  %947 = vmatprep.subr.mxu0 0.0
  %948 = vmatpush1.msra.mxu0 0.0
  %949 = vmatprep.subr.mxu0 0.0
  %950 = vmatpush1.msra.mxu0 0.0
  %951 = vmatprep.subr.mxu0 0.0
  %952 = vmatpush1.msra.mxu0 0.0
  %953 = vmatprep.subr.mxu0 0.0
  %954 = vmatpush1.msra.mxu0 0.0
  %955 = vmatprep.subr.mxu0 0.0
  %956 = vmatpush1.msra.mxu0 0.0
  %957 = vmatprep.subr.mxu0 0.0
  %958 = vmatpush1.msra.mxu0 0.0
  %959 = vmatprep.mubr.f32.mxu0 0.0
  %960 = vmatmul.mubr.f32.gmra.mrb[0].mxu0 %v893
  %v961 = vpop.f32.mrb[0].mxu0
  %v962 = vadd.f32 0.0, %v961
  %v963 = vpop.f32.mrb[0].mxu0
  %964 = vdwg.mxu0
  %v965 = vlaneseq
  %v966 = vshrl.u32 %v965, 7
  %v967 = vsub.s32 0, %v966
  %v968 = vrot.slane %v962, %v967
  %v969 = vmul.f32 %v635, %v968
  %v971 = vsel %vm724, %v891, 0
  %973 = vmatprep.subr.mxu0 0.0
  %974 = vmatpush1.msra.mxu0 %v722
  %975 = vmatprep.subr.mxu0 0.0
  %976 = vmatpush1.msra.mxu0 %v723
  %977 = vmatprep.subr.mxu0 0.0
  %978 = vmatpush1.msra.mxu0 0.0
  %979 = vmatprep.subr.mxu0 0.0
  %980 = vmatpush1.msra.mxu0 0.0
  %981 = vmatprep.subr.mxu0 0.0
  %982 = vmatpush1.msra.mxu0 0.0
  %983 = vmatprep.subr.mxu0 0.0
  %984 = vmatpush1.msra.mxu0 0.0
  %985 = vmatprep.subr.mxu0 0.0
  %986 = vmatpush1.msra.mxu0 0.0
  %987 = vmatprep.subr.mxu0 0.0
  %988 = vmatpush1.msra.mxu0 0.0
  %989 = vmatprep.subr.mxu0 0.0
  %990 = vmatpush1.msra.mxu0 0.0
  %991 = vmatprep.subr.mxu0 0.0
  %992 = vmatpush1.msra.mxu0 0.0
  %993 = vmatprep.subr.mxu0 0.0
  %994 = vmatpush1.msra.mxu0 0.0
  %995 = vmatprep.subr.mxu0 0.0
  %996 = vmatpush1.msra.mxu0 0.0
  %997 = vmatprep.subr.mxu0 0.0
  %998 = vmatpush1.msra.mxu0 0.0
  %999 = vmatprep.subr.mxu0 0.0
  %1000 = vmatpush1.msra.mxu0 0.0
  %1001 = vmatprep.subr.mxu0 0.0
  %1002 = vmatpush1.msra.mxu0 0.0
  %1003 = vmatprep.subr.mxu0 0.0
  %1004 = vmatpush1.msra.mxu0 0.0
  %1005 = vmatprep.subr.mxu0 0.0
  %1006 = vmatpush1.msra.mxu0 0.0
  %1007 = vmatprep.subr.mxu0 0.0
  %1008 = vmatpush1.msra.mxu0 0.0
  %1009 = vmatprep.subr.mxu0 0.0
  %1010 = vmatpush1.msra.mxu0 0.0
  %1011 = vmatprep.subr.mxu0 0.0
  %1012 = vmatpush1.msra.mxu0 0.0
  %1013 = vmatprep.subr.mxu0 0.0
  %1014 = vmatpush1.msra.mxu0 0.0
  %1015 = vmatprep.subr.mxu0 0.0
  %1016 = vmatpush1.msra.mxu0 0.0
  %1017 = vmatprep.subr.mxu0 0.0
  %1018 = vmatpush1.msra.mxu0 0.0
  %1019 = vmatprep.subr.mxu0 0.0
  %1020 = vmatpush1.msra.mxu0 0.0
  %1021 = vmatprep.subr.mxu0 0.0
  %1022 = vmatpush1.msra.mxu0 0.0
  %1023 = vmatprep.subr.mxu0 0.0
  %1024 = vmatpush1.msra.mxu0 0.0
  %1025 = vmatprep.subr.mxu0 0.0
  %1026 = vmatpush1.msra.mxu0 0.0
  %1027 = vmatprep.subr.mxu0 0.0
  %1028 = vmatpush1.msra.mxu0 0.0
  %1029 = vmatprep.subr.mxu0 0.0
  %1030 = vmatpush1.msra.mxu0 0.0
  %1031 = vmatprep.subr.mxu0 0.0
  %1032 = vmatpush1.msra.mxu0 0.0
  %1033 = vmatprep.subr.mxu0 0.0
  %1034 = vmatpush1.msra.mxu0 0.0
  %1035 = vmatprep.subr.mxu0 0.0
  %1036 = vmatpush1.msra.mxu0 0.0
  %1037 = vmatprep.mubr.f32.mxu0 0.0
  %1038 = vmatmul.mubr.f32.gmra.mrb[0].mxu0 %v971
  %v1039 = vpop.f32.mrb[0].mxu0
  %v1040 = vadd.f32 0.0, %v1039
  %v1041 = vpop.f32.mrb[0].mxu0
  %1042 = vdwg.mxu0
  %v1043 = vlaneseq
  %v1044 = vshrl.u32 %v1043, 7
  %v1045 = vsub.s32 0, %v1044
  %v1046 = vrot.slane %v1040, %v1045
  %v1047 = vadd.f32 %v969, %v1046
  %v1048 = vmax.f32 %v1047, 0.0
  %v1049 = vld [vmem:[%s17] sm:$0xff]
  %vm1050 = vcmask 31744
  %v1052 = vsel %vm1050, %v1049, 0
  %vm1054 = vcmask 1043456
  %v1056 = vsel %vm1054, %v1048, 0
  %1058 = vmatprep.subr.mxu0 0.0
  %1059 = vmatpush1.msra.mxu0 %v1056
  %1060 = vmatprep.subr.mxu0 0.0
  %1061 = vmatpush1.msra.mxu0 0.0
  %1062 = vmatprep.subr.mxu0 0.0
  %1063 = vmatpush1.msra.mxu0 0.0
  %1064 = vmatprep.subr.mxu0 0.0
  %1065 = vmatpush1.msra.mxu0 0.0
  %1066 = vmatprep.subr.mxu0 0.0
  %1067 = vmatpush1.msra.mxu0 0.0
  %1068 = vmatprep.subr.mxu0 0.0
  %1069 = vmatpush1.msra.mxu0 0.0
  %1070 = vmatprep.subr.mxu0 0.0
  %1071 = vmatpush1.msra.mxu0 0.0
  %1072 = vmatprep.subr.mxu0 0.0
  %1073 = vmatpush1.msra.mxu0 0.0
  %1074 = vmatprep.subr.mxu0 0.0
  %1075 = vmatpush1.msra.mxu0 0.0
  %1076 = vmatprep.subr.mxu0 0.0
  %1077 = vmatpush1.msra.mxu0 0.0
  %1078 = vmatprep.subr.mxu0 0.0
  %1079 = vmatpush1.msra.mxu0 0.0
  %1080 = vmatprep.subr.mxu0 0.0
  %1081 = vmatpush1.msra.mxu0 0.0
  %1082 = vmatprep.subr.mxu0 0.0
  %1083 = vmatpush1.msra.mxu0 0.0
  %1084 = vmatprep.subr.mxu0 0.0
  %1085 = vmatpush1.msra.mxu0 0.0
  %1086 = vmatprep.subr.mxu0 0.0
  %1087 = vmatpush1.msra.mxu0 0.0
  %1088 = vmatprep.subr.mxu0 0.0
  %1089 = vmatpush1.msra.mxu0 0.0
  %1090 = vmatprep.subr.mxu0 0.0
  %1091 = vmatpush1.msra.mxu0 0.0
  %1092 = vmatprep.subr.mxu0 0.0
  %1093 = vmatpush1.msra.mxu0 0.0
  %1094 = vmatprep.subr.mxu0 0.0
  %1095 = vmatpush1.msra.mxu0 0.0
  %1096 = vmatprep.subr.mxu0 0.0
  %1097 = vmatpush1.msra.mxu0 0.0
  %1098 = vmatprep.subr.mxu0 0.0
  %1099 = vmatpush1.msra.mxu0 0.0
  %1100 = vmatprep.subr.mxu0 0.0
  %1101 = vmatpush1.msra.mxu0 0.0
  %1102 = vmatprep.subr.mxu0 0.0
  %1103 = vmatpush1.msra.mxu0 0.0
  %1104 = vmatprep.subr.mxu0 0.0
  %1105 = vmatpush1.msra.mxu0 0.0
  %1106 = vmatprep.subr.mxu0 0.0
  %1107 = vmatpush1.msra.mxu0 0.0
  %1108 = vmatprep.subr.mxu0 0.0
  %1109 = vmatpush1.msra.mxu0 0.0
  %1110 = vmatprep.subr.mxu0 0.0
  %1111 = vmatpush1.msra.mxu0 0.0
  %1112 = vmatprep.subr.mxu0 0.0
  %1113 = vmatpush1.msra.mxu0 0.0
  %1114 = vmatprep.subr.mxu0 0.0
  %1115 = vmatpush1.msra.mxu0 0.0
  %1116 = vmatprep.subr.mxu0 0.0
  %1117 = vmatpush1.msra.mxu0 0.0
  %1118 = vmatprep.subr.mxu0 0.0
  %1119 = vmatpush1.msra.mxu0 0.0
  %1120 = vmatprep.subr.mxu0 0.0
  %1121 = vmatpush1.msra.mxu0 0.0
  %1122 = vmatprep.mubr.f32.mxu0 0.0
  %1123 = vmatmul.mubr.f32.gmra.mrb[0].mxu0 %v1052
  %v1124 = vpop.f32.mrb[0].mxu0
  %v1125 = vadd.f32 0.0, %v1124
  %v1126 = vpop.f32.mrb[0].mxu0
  %1127 = vdwg.mxu0
  %v1128 = vld [vmem:[%s19] sm:$0xff]
  %v1129 = vld [vmem:[%s19 + $0x8] sm:$0xff]
  %v1130 = vld [vmem:[%s19 + $0x10] sm:$0xff]
  %v1131 = vld [vmem:[%s19 + $0x18] sm:$0xff]
  %s1132 = scalar_lea.vmem %s17, 8
  %v1133 = vld [vmem:[%s1132] sm:$0xff]
  %v1135 = vsel %vm1050, %v1133, 0
  %1137 = vmatprep.subr.mxu0 0.0
  %1138 = vmatpush1.msra.mxu0 %v1056
  %1139 = vmatprep.subr.mxu0 0.0
  %1140 = vmatpush1.msra.mxu0 0.0
  %1141 = vmatprep.subr.mxu0 0.0
  %1142 = vmatpush1.msra.mxu0 0.0
  %1143 = vmatprep.subr.mxu0 0.0
  %1144 = vmatpush1.msra.mxu0 0.0
  %1145 = vmatprep.subr.mxu0 0.0
  %1146 = vmatpush1.msra.mxu0 0.0
  %1147 = vmatprep.subr.mxu0 0.0
  %1148 = vmatpush1.msra.mxu0 0.0
  %1149 = vmatprep.subr.mxu0 0.0
  %1150 = vmatpush1.msra.mxu0 0.0
  %1151 = vmatprep.subr.mxu0 0.0
  %1152 = vmatpush1.msra.mxu0 0.0
  %1153 = vmatprep.subr.mxu0 0.0
  %1154 = vmatpush1.msra.mxu0 0.0
  %1155 = vmatprep.subr.mxu0 0.0
  %1156 = vmatpush1.msra.mxu0 0.0
  %1157 = vmatprep.subr.mxu0 0.0
  %1158 = vmatpush1.msra.mxu0 0.0
  %1159 = vmatprep.subr.mxu0 0.0
  %1160 = vmatpush1.msra.mxu0 0.0
  %1161 = vmatprep.subr.mxu0 0.0
  %1162 = vmatpush1.msra.mxu0 0.0
  %1163 = vmatprep.subr.mxu0 0.0
  %1164 = vmatpush1.msra.mxu0 0.0
  %1165 = vmatprep.subr.mxu0 0.0
  %1166 = vmatpush1.msra.mxu0 0.0
  %1167 = vmatprep.subr.mxu0 0.0
  %1168 = vmatpush1.msra.mxu0 0.0
  %1169 = vmatprep.subr.mxu0 0.0
  %1170 = vmatpush1.msra.mxu0 0.0
  %1171 = vmatprep.subr.mxu0 0.0
  %1172 = vmatpush1.msra.mxu0 0.0
  %1173 = vmatprep.subr.mxu0 0.0
  %1174 = vmatpush1.msra.mxu0 0.0
  %1175 = vmatprep.subr.mxu0 0.0
  %1176 = vmatpush1.msra.mxu0 0.0
  %1177 = vmatprep.subr.mxu0 0.0
  %1178 = vmatpush1.msra.mxu0 0.0
  %1179 = vmatprep.subr.mxu0 0.0
  %1180 = vmatpush1.msra.mxu0 0.0
  %1181 = vmatprep.subr.mxu0 0.0
  %1182 = vmatpush1.msra.mxu0 0.0
  %1183 = vmatprep.subr.mxu0 0.0
  %1184 = vmatpush1.msra.mxu0 0.0
  %1185 = vmatprep.subr.mxu0 0.0
  %1186 = vmatpush1.msra.mxu0 0.0
  %1187 = vmatprep.subr.mxu0 0.0
  %1188 = vmatpush1.msra.mxu0 0.0
  %1189 = vmatprep.subr.mxu0 0.0
  %1190 = vmatpush1.msra.mxu0 0.0
  %1191 = vmatprep.subr.mxu0 0.0
  %1192 = vmatpush1.msra.mxu0 0.0
  %1193 = vmatprep.subr.mxu0 0.0
  %1194 = vmatpush1.msra.mxu0 0.0
  %1195 = vmatprep.subr.mxu0 0.0
  %1196 = vmatpush1.msra.mxu0 0.0
  %1197 = vmatprep.subr.mxu0 0.0
  %1198 = vmatpush1.msra.mxu0 0.0
  %1199 = vmatprep.subr.mxu0 0.0
  %1200 = vmatpush1.msra.mxu0 0.0
  %1201 = vmatprep.mubr.f32.mxu0 0.0
  %1202 = vmatmul.mubr.f32.gmra.mrb[0].mxu0 %v1135
  %v1203 = vpop.f32.mrb[0].mxu0
  %v1204 = vadd.f32 0.0, %v1203
  %v1205 = vpop.f32.mrb[0].mxu0
  %1206 = vdwg.mxu0
  %s1207 = scalar_lea.vmem %s19, 32
  %v1208 = vld [vmem:[%s1207] sm:$0xff]
  %v1209 = vld [vmem:[%s1207 + $0x8] sm:$0xff]
  %v1210 = vld [vmem:[%s1207 + $0x10] sm:$0xff]
  %v1211 = vld [vmem:[%s1207 + $0x18] sm:$0xff]
  %v1213 = vsel %vm327, %v1204, 0
  %1215 = vmatprep.subr.mxu0 0.0
  %1216 = vmatpush1.msra.mxu0 %v1208
  %1217 = vmatprep.subr.mxu0 0.0
  %1218 = vmatpush1.msra.mxu0 %v1209
  %1219 = vmatprep.subr.mxu0 0.0
  %1220 = vmatpush1.msra.mxu0 %v1210
  %1221 = vmatprep.subr.mxu0 0.0
  %1222 = vmatpush1.msra.mxu0 %v1211
  %1223 = vmatprep.subr.mxu0 0.0
  %1224 = vmatpush1.msra.mxu0 0.0
  %1225 = vmatprep.subr.mxu0 0.0
  %1226 = vmatpush1.msra.mxu0 0.0
  %1227 = vmatprep.subr.mxu0 0.0
  %1228 = vmatpush1.msra.mxu0 0.0
  %1229 = vmatprep.subr.mxu0 0.0
  %1230 = vmatpush1.msra.mxu0 0.0
  %1231 = vmatprep.subr.mxu0 0.0
  %1232 = vmatpush1.msra.mxu0 0.0
  %1233 = vmatprep.subr.mxu0 0.0
  %1234 = vmatpush1.msra.mxu0 0.0
  %1235 = vmatprep.subr.mxu0 0.0
  %1236 = vmatpush1.msra.mxu0 0.0
  %1237 = vmatprep.subr.mxu0 0.0
  %1238 = vmatpush1.msra.mxu0 0.0
  %1239 = vmatprep.subr.mxu0 0.0
  %1240 = vmatpush1.msra.mxu0 0.0
  %1241 = vmatprep.subr.mxu0 0.0
  %1242 = vmatpush1.msra.mxu0 0.0
  %1243 = vmatprep.subr.mxu0 0.0
  %1244 = vmatpush1.msra.mxu0 0.0
  %1245 = vmatprep.subr.mxu0 0.0
  %1246 = vmatpush1.msra.mxu0 0.0
  %1247 = vmatprep.subr.mxu0 0.0
  %1248 = vmatpush1.msra.mxu0 0.0
  %1249 = vmatprep.subr.mxu0 0.0
  %1250 = vmatpush1.msra.mxu0 0.0
  %1251 = vmatprep.subr.mxu0 0.0
  %1252 = vmatpush1.msra.mxu0 0.0
  %1253 = vmatprep.subr.mxu0 0.0
  %1254 = vmatpush1.msra.mxu0 0.0
  %1255 = vmatprep.subr.mxu0 0.0
  %1256 = vmatpush1.msra.mxu0 0.0
  %1257 = vmatprep.subr.mxu0 0.0
  %1258 = vmatpush1.msra.mxu0 0.0
  %1259 = vmatprep.subr.mxu0 0.0
  %1260 = vmatpush1.msra.mxu0 0.0
  %1261 = vmatprep.subr.mxu0 0.0
  %1262 = vmatpush1.msra.mxu0 0.0
  %1263 = vmatprep.subr.mxu0 0.0
  %1264 = vmatpush1.msra.mxu0 0.0
  %1265 = vmatprep.subr.mxu0 0.0
  %1266 = vmatpush1.msra.mxu0 0.0
  %1267 = vmatprep.subr.mxu0 0.0
  %1268 = vmatpush1.msra.mxu0 0.0
  %1269 = vmatprep.subr.mxu0 0.0
  %1270 = vmatpush1.msra.mxu0 0.0
  %1271 = vmatprep.subr.mxu0 0.0
  %1272 = vmatpush1.msra.mxu0 0.0
  %1273 = vmatprep.subr.mxu0 0.0
  %1274 = vmatpush1.msra.mxu0 0.0
  %1275 = vmatprep.subr.mxu0 0.0
  %1276 = vmatpush1.msra.mxu0 0.0
  %1277 = vmatprep.subr.mxu0 0.0
  %1278 = vmatpush1.msra.mxu0 0.0
  %1279 = vmatprep.mubr.f32.mxu0 0.0
  %1280 = vmatmul.mubr.f32.gmra.mrb[0].mxu0 %v1213
  %v1281 = vpop.f32.mrb[0].mxu0
  %v1282 = vadd.f32 0.0, %v1281
  %v1283 = vpop.f32.mrb[0].mxu0
  %1284 = vdwg.mxu0
  %v1286 = vsel %vm327, %v1125, 0
  %1288 = vmatprep.subr.mxu0 0.0
  %1289 = vmatpush1.msra.mxu0 %v1128
  %1290 = vmatprep.subr.mxu0 0.0
  %1291 = vmatpush1.msra.mxu0 %v1129
  %1292 = vmatprep.subr.mxu0 0.0
  %1293 = vmatpush1.msra.mxu0 %v1130
  %1294 = vmatprep.subr.mxu0 0.0
  %1295 = vmatpush1.msra.mxu0 %v1131
  %1296 = vmatprep.subr.mxu0 0.0
  %1297 = vmatpush1.msra.mxu0 0.0
  %1298 = vmatprep.subr.mxu0 0.0
  %1299 = vmatpush1.msra.mxu0 0.0
  %1300 = vmatprep.subr.mxu0 0.0
  %1301 = vmatpush1.msra.mxu0 0.0
  %1302 = vmatprep.subr.mxu0 0.0
  %1303 = vmatpush1.msra.mxu0 0.0
  %1304 = vmatprep.subr.mxu0 0.0
  %1305 = vmatpush1.msra.mxu0 0.0
  %1306 = vmatprep.subr.mxu0 0.0
  %1307 = vmatpush1.msra.mxu0 0.0
  %1308 = vmatprep.subr.mxu0 0.0
  %1309 = vmatpush1.msra.mxu0 0.0
  %1310 = vmatprep.subr.mxu0 0.0
  %1311 = vmatpush1.msra.mxu0 0.0
  %1312 = vmatprep.subr.mxu0 0.0
  %1313 = vmatpush1.msra.mxu0 0.0
  %1314 = vmatprep.subr.mxu0 0.0
  %1315 = vmatpush1.msra.mxu0 0.0
  %1316 = vmatprep.subr.mxu0 0.0
  %1317 = vmatpush1.msra.mxu0 0.0
  %1318 = vmatprep.subr.mxu0 0.0
  %1319 = vmatpush1.msra.mxu0 0.0
  %1320 = vmatprep.subr.mxu0 0.0
  %1321 = vmatpush1.msra.mxu0 0.0
  %1322 = vmatprep.subr.mxu0 0.0
  %1323 = vmatpush1.msra.mxu0 0.0
  %1324 = vmatprep.subr.mxu0 0.0
  %1325 = vmatpush1.msra.mxu0 0.0
  %1326 = vmatprep.subr.mxu0 0.0
  %1327 = vmatpush1.msra.mxu0 0.0
  %1328 = vmatprep.subr.mxu0 0.0
  %1329 = vmatpush1.msra.mxu0 0.0
  %1330 = vmatprep.subr.mxu0 0.0
  %1331 = vmatpush1.msra.mxu0 0.0
  %1332 = vmatprep.subr.mxu0 0.0
  %1333 = vmatpush1.msra.mxu0 0.0
  %1334 = vmatprep.subr.mxu0 0.0
  %1335 = vmatpush1.msra.mxu0 0.0
  %1336 = vmatprep.subr.mxu0 0.0
  %1337 = vmatpush1.msra.mxu0 0.0
  %1338 = vmatprep.subr.mxu0 0.0
  %1339 = vmatpush1.msra.mxu0 0.0
  %1340 = vmatprep.subr.mxu0 0.0
  %1341 = vmatpush1.msra.mxu0 0.0
  %1342 = vmatprep.subr.mxu0 0.0
  %1343 = vmatpush1.msra.mxu0 0.0
  %1344 = vmatprep.subr.mxu0 0.0
  %1345 = vmatpush1.msra.mxu0 0.0
  %1346 = vmatprep.subr.mxu0 0.0
  %1347 = vmatpush1.msra.mxu0 0.0
  %1348 = vmatprep.subr.mxu0 0.0
  %1349 = vmatpush1.msra.mxu0 0.0
  %1350 = vmatprep.subr.mxu0 0.0
  %1351 = vmatpush1.msra.mxu0 0.0
  %1352 = vmatprep.mubr.f32.mxu0 0.0
  %1353 = vmatmul.mubr.f32.gmra.mrb[0].mxu0 %v1286
  %v1354 = vpop.f32.mrb[0].mxu0
  %v1355 = vadd.f32 %v1282, %v1354
  %v1356 = vpop.f32.mrb[0].mxu0
  %1357 = vdwg.mxu0
  %s1358 = scalar_lea.vmem %s17, 16
  %v1359 = vld [vmem:[%s1358] sm:$0xff]
  %v1361 = vsel %vm1050, %v1359, 0
  %1363 = vmatprep.subr.mxu0 0.0
  %1364 = vmatpush1.msra.mxu0 %v1056
  %1365 = vmatprep.subr.mxu0 0.0
  %1366 = vmatpush1.msra.mxu0 0.0
  %1367 = vmatprep.subr.mxu0 0.0
  %1368 = vmatpush1.msra.mxu0 0.0
  %1369 = vmatprep.subr.mxu0 0.0
  %1370 = vmatpush1.msra.mxu0 0.0
  %1371 = vmatprep.subr.mxu0 0.0
  %1372 = vmatpush1.msra.mxu0 0.0
  %1373 = vmatprep.subr.mxu0 0.0
  %1374 = vmatpush1.msra.mxu0 0.0
  %1375 = vmatprep.subr.mxu0 0.0
  %1376 = vmatpush1.msra.mxu0 0.0
  %1377 = vmatprep.subr.mxu0 0.0
  %1378 = vmatpush1.msra.mxu0 0.0
  %1379 = vmatprep.subr.mxu0 0.0
  %1380 = vmatpush1.msra.mxu0 0.0
  %1381 = vmatprep.subr.mxu0 0.0
  %1382 = vmatpush1.msra.mxu0 0.0
  %1383 = vmatprep.subr.mxu0 0.0
  %1384 = vmatpush1.msra.mxu0 0.0
  %1385 = vmatprep.subr.mxu0 0.0
  %1386 = vmatpush1.msra.mxu0 0.0
  %1387 = vmatprep.subr.mxu0 0.0
  %1388 = vmatpush1.msra.mxu0 0.0
  %1389 = vmatprep.subr.mxu0 0.0
  %1390 = vmatpush1.msra.mxu0 0.0
  %1391 = vmatprep.subr.mxu0 0.0
  %1392 = vmatpush1.msra.mxu0 0.0
  %1393 = vmatprep.subr.mxu0 0.0
  %1394 = vmatpush1.msra.mxu0 0.0
  %1395 = vmatprep.subr.mxu0 0.0
  %1396 = vmatpush1.msra.mxu0 0.0
  %1397 = vmatprep.subr.mxu0 0.0
  %1398 = vmatpush1.msra.mxu0 0.0
  %1399 = vmatprep.subr.mxu0 0.0
  %1400 = vmatpush1.msra.mxu0 0.0
  %1401 = vmatprep.subr.mxu0 0.0
  %1402 = vmatpush1.msra.mxu0 0.0
  %1403 = vmatprep.subr.mxu0 0.0
  %1404 = vmatpush1.msra.mxu0 0.0
  %1405 = vmatprep.subr.mxu0 0.0
  %1406 = vmatpush1.msra.mxu0 0.0
  %1407 = vmatprep.subr.mxu0 0.0
  %1408 = vmatpush1.msra.mxu0 0.0
  %1409 = vmatprep.subr.mxu0 0.0
  %1410 = vmatpush1.msra.mxu0 0.0
  %1411 = vmatprep.subr.mxu0 0.0
  %1412 = vmatpush1.msra.mxu0 0.0
  %1413 = vmatprep.subr.mxu0 0.0
  %1414 = vmatpush1.msra.mxu0 0.0
  %1415 = vmatprep.subr.mxu0 0.0
  %1416 = vmatpush1.msra.mxu0 0.0
  %1417 = vmatprep.subr.mxu0 0.0
  %1418 = vmatpush1.msra.mxu0 0.0
  %1419 = vmatprep.subr.mxu0 0.0
  %1420 = vmatpush1.msra.mxu0 0.0
  %1421 = vmatprep.subr.mxu0 0.0
  %1422 = vmatpush1.msra.mxu0 0.0
  %1423 = vmatprep.subr.mxu0 0.0
  %1424 = vmatpush1.msra.mxu0 0.0
  %1425 = vmatprep.subr.mxu0 0.0
  %1426 = vmatpush1.msra.mxu0 0.0
  %1427 = vmatprep.mubr.f32.mxu0 0.0
  %1428 = vmatmul.mubr.f32.gmra.mrb[0].mxu0 %v1361
  %v1429 = vpop.f32.mrb[0].mxu0
  %v1430 = vadd.f32 0.0, %v1429
  %v1431 = vpop.f32.mrb[0].mxu0
  %1432 = vdwg.mxu0
  %s1433 = scalar_lea.vmem %s19, 64
  %v1434 = vld [vmem:[%s1433] sm:$0xff]
  %v1435 = vld [vmem:[%s1433 + $0x8] sm:$0xff]
  %v1436 = vld [vmem:[%s1433 + $0x10] sm:$0xff]
  %v1437 = vld [vmem:[%s1433 + $0x18] sm:$0xff]
  %v1439 = vsel %vm327, %v1430, 0
  %1441 = vmatprep.subr.mxu0 0.0
  %1442 = vmatpush1.msra.mxu0 %v1434
  %1443 = vmatprep.subr.mxu0 0.0
  %1444 = vmatpush1.msra.mxu0 %v1435
  %1445 = vmatprep.subr.mxu0 0.0
  %1446 = vmatpush1.msra.mxu0 %v1436
  %1447 = vmatprep.subr.mxu0 0.0
  %1448 = vmatpush1.msra.mxu0 %v1437
  %1449 = vmatprep.subr.mxu0 0.0
  %1450 = vmatpush1.msra.mxu0 0.0
  %1451 = vmatprep.subr.mxu0 0.0
  %1452 = vmatpush1.msra.mxu0 0.0
  %1453 = vmatprep.subr.mxu0 0.0
  %1454 = vmatpush1.msra.mxu0 0.0
  %1455 = vmatprep.subr.mxu0 0.0
  %1456 = vmatpush1.msra.mxu0 0.0
  %1457 = vmatprep.subr.mxu0 0.0
  %1458 = vmatpush1.msra.mxu0 0.0
  %1459 = vmatprep.subr.mxu0 0.0
  %1460 = vmatpush1.msra.mxu0 0.0
  %1461 = vmatprep.subr.mxu0 0.0
  %1462 = vmatpush1.msra.mxu0 0.0
  %1463 = vmatprep.subr.mxu0 0.0
  %1464 = vmatpush1.msra.mxu0 0.0
  %1465 = vmatprep.subr.mxu0 0.0
  %1466 = vmatpush1.msra.mxu0 0.0
  %1467 = vmatprep.subr.mxu0 0.0
  %1468 = vmatpush1.msra.mxu0 0.0
  %1469 = vmatprep.subr.mxu0 0.0
  %1470 = vmatpush1.msra.mxu0 0.0
  %1471 = vmatprep.subr.mxu0 0.0
  %1472 = vmatpush1.msra.mxu0 0.0
  %1473 = vmatprep.subr.mxu0 0.0
  %1474 = vmatpush1.msra.mxu0 0.0
  %1475 = vmatprep.subr.mxu0 0.0
  %1476 = vmatpush1.msra.mxu0 0.0
  %1477 = vmatprep.subr.mxu0 0.0
  %1478 = vmatpush1.msra.mxu0 0.0
  %1479 = vmatprep.subr.mxu0 0.0
  %1480 = vmatpush1.msra.mxu0 0.0
  %1481 = vmatprep.subr.mxu0 0.0
  %1482 = vmatpush1.msra.mxu0 0.0
  %1483 = vmatprep.subr.mxu0 0.0
  %1484 = vmatpush1.msra.mxu0 0.0
  %1485 = vmatprep.subr.mxu0 0.0
  %1486 = vmatpush1.msra.mxu0 0.0
  %1487 = vmatprep.subr.mxu0 0.0
  %1488 = vmatpush1.msra.mxu0 0.0
  %1489 = vmatprep.subr.mxu0 0.0
  %1490 = vmatpush1.msra.mxu0 0.0
  %1491 = vmatprep.subr.mxu0 0.0
  %1492 = vmatpush1.msra.mxu0 0.0
  %1493 = vmatprep.subr.mxu0 0.0
  %1494 = vmatpush1.msra.mxu0 0.0
  %1495 = vmatprep.subr.mxu0 0.0
  %1496 = vmatpush1.msra.mxu0 0.0
  %1497 = vmatprep.subr.mxu0 0.0
  %1498 = vmatpush1.msra.mxu0 0.0
  %1499 = vmatprep.subr.mxu0 0.0
  %1500 = vmatpush1.msra.mxu0 0.0
  %1501 = vmatprep.subr.mxu0 0.0
  %1502 = vmatpush1.msra.mxu0 0.0
  %1503 = vmatprep.subr.mxu0 0.0
  %1504 = vmatpush1.msra.mxu0 0.0
  %1505 = vmatprep.mubr.f32.mxu0 0.0
  %1506 = vmatmul.mubr.f32.gmra.mrb[0].mxu0 %v1439
  %v1507 = vpop.f32.mrb[0].mxu0
  %v1508 = vadd.f32 0.0, %v1507
  %v1509 = vpop.f32.mrb[0].mxu0
  %1510 = vdwg.mxu0
  %v1511 = vadd.f32 %v1355, %v1508
  %v1512 = vld [vmem:[%s21] sm:$0x1]
  %v1514 = vlaneseq
  %v1515 = vshrl.u32 %v1514, 7
  %v1516 = vsub.s32 0, %v1515
  %v1517 = vrot.slane %v1512, %v1516
  %v1519 = vadd.f32 %v1511, %v1517
  %vm1520 = vcmask 523264
  %v1521 = vsel %vm1520, %v1519, 0.0
  %v1522 = vrot.slane %v1521, 4
  %v1523 = vadd.f32 %v1521, %v1522
  %v1524 = vrot.slane %v1523, 2
  %v1525 = vadd.f32 %v1523, %v1524
  %v1526 = vrot.slane %v1525, 1
  %v1527 = vadd.f32 %v1525, %v1526
  %v1528 = vld [vmem:[%s23] sm:$0xff]
  %v1529 = vld [vmem:[%s23 + $0x8] sm:$0xff]
  %v1530 = vld [vmem:[%s23 + $0x10] sm:$0xff]
  %v1531 = vld [vmem:[%s23 + $0x18] sm:$0xff]
  %v1532 = vld [vmem:[%s23 + $0x20] sm:$0xff]
  %v1533 = vld [vmem:[%s23 + $0x28] sm:$0xff]
  %v1534 = vld [vmem:[%s23 + $0x30] sm:$0xff]
  %v1535 = vld [vmem:[%s23 + $0x38] sm:$0xff]
  %v1537 = vsel %vm1520, %v1527, 0
  %1539 = vmatprep.subr.mxu0 0.0
  %1540 = vmatpush1.msra.mxu0 %v1528
  %1541 = vmatprep.subr.mxu0 0.0
  %1542 = vmatpush1.msra.mxu0 %v1529
  %1543 = vmatprep.subr.mxu0 0.0
  %1544 = vmatpush1.msra.mxu0 %v1530
  %1545 = vmatprep.subr.mxu0 0.0
  %1546 = vmatpush1.msra.mxu0 %v1531
  %1547 = vmatprep.subr.mxu0 0.0
  %1548 = vmatpush1.msra.mxu0 %v1532
  %1549 = vmatprep.subr.mxu0 0.0
  %1550 = vmatpush1.msra.mxu0 %v1533
  %1551 = vmatprep.subr.mxu0 0.0
  %1552 = vmatpush1.msra.mxu0 %v1534
  %1553 = vmatprep.subr.mxu0 0.0
  %1554 = vmatpush1.msra.mxu0 %v1535
  %1555 = vmatprep.subr.mxu0 0.0
  %1556 = vmatpush1.msra.mxu0 0.0
  %1557 = vmatprep.subr.mxu0 0.0
  %1558 = vmatpush1.msra.mxu0 0.0
  %1559 = vmatprep.subr.mxu0 0.0
  %1560 = vmatpush1.msra.mxu0 0.0
  %1561 = vmatprep.subr.mxu0 0.0
  %1562 = vmatpush1.msra.mxu0 0.0
  %1563 = vmatprep.subr.mxu0 0.0
  %1564 = vmatpush1.msra.mxu0 0.0
  %1565 = vmatprep.subr.mxu0 0.0
  %1566 = vmatpush1.msra.mxu0 0.0
  %1567 = vmatprep.subr.mxu0 0.0
  %1568 = vmatpush1.msra.mxu0 0.0
  %1569 = vmatprep.subr.mxu0 0.0
  %1570 = vmatpush1.msra.mxu0 0.0
  %1571 = vmatprep.subr.mxu0 0.0
  %1572 = vmatpush1.msra.mxu0 0.0
  %1573 = vmatprep.subr.mxu0 0.0
  %1574 = vmatpush1.msra.mxu0 0.0
  %1575 = vmatprep.subr.mxu0 0.0
  %1576 = vmatpush1.msra.mxu0 0.0
  %1577 = vmatprep.subr.mxu0 0.0
  %1578 = vmatpush1.msra.mxu0 0.0
  %1579 = vmatprep.subr.mxu0 0.0
  %1580 = vmatpush1.msra.mxu0 0.0
  %1581 = vmatprep.subr.mxu0 0.0
  %1582 = vmatpush1.msra.mxu0 0.0
  %1583 = vmatprep.subr.mxu0 0.0
  %1584 = vmatpush1.msra.mxu0 0.0
  %1585 = vmatprep.subr.mxu0 0.0
  %1586 = vmatpush1.msra.mxu0 0.0
  %1587 = vmatprep.subr.mxu0 0.0
  %1588 = vmatpush1.msra.mxu0 0.0
  %1589 = vmatprep.subr.mxu0 0.0
  %1590 = vmatpush1.msra.mxu0 0.0
  %1591 = vmatprep.subr.mxu0 0.0
  %1592 = vmatpush1.msra.mxu0 0.0
  %1593 = vmatprep.subr.mxu0 0.0
  %1594 = vmatpush1.msra.mxu0 0.0
  %1595 = vmatprep.subr.mxu0 0.0
  %1596 = vmatpush1.msra.mxu0 0.0
  %1597 = vmatprep.subr.mxu0 0.0
  %1598 = vmatpush1.msra.mxu0 0.0
  %1599 = vmatprep.subr.mxu0 0.0
  %1600 = vmatpush1.msra.mxu0 0.0
  %1601 = vmatprep.subr.mxu0 0.0
  %1602 = vmatpush1.msra.mxu0 0.0
  %1603 = vmatprep.mubr.f32.mxu0 0.0
  %1604 = vmatmul.mubr.f32.gmra.mrb[0].mxu0 %v1537
  %v1605 = vpop.f32.mrb[0].mxu0
  %v1606 = vadd.f32 0.0, %v1605
  %v1607 = vpop.f32.mrb[0].mxu0
  %1608 = vdwg.mxu0
  %v1609 = vmul.f32 %v1606, 0.03125
  %v1610 = vld [vmem:[%s25] sm:$0xff]
  %v1611 = vld [vmem:[%s25 + $0x8] sm:$0xff]
  %v1613 = vsel %vm724, %v1609, 0
  %1615 = vmatprep.subr.mxu0 0.0
  %1616 = vmatpush1.msra.mxu0 %v1610
  %1617 = vmatprep.subr.mxu0 0.0
  %1618 = vmatpush1.msra.mxu0 %v1611
  %1619 = vmatprep.subr.mxu0 0.0
  %1620 = vmatpush1.msra.mxu0 0.0
  %1621 = vmatprep.subr.mxu0 0.0
  %1622 = vmatpush1.msra.mxu0 0.0
  %1623 = vmatprep.subr.mxu0 0.0
  %1624 = vmatpush1.msra.mxu0 0.0
  %1625 = vmatprep.subr.mxu0 0.0
  %1626 = vmatpush1.msra.mxu0 0.0
  %1627 = vmatprep.subr.mxu0 0.0
  %1628 = vmatpush1.msra.mxu0 0.0
  %1629 = vmatprep.subr.mxu0 0.0
  %1630 = vmatpush1.msra.mxu0 0.0
  %1631 = vmatprep.subr.mxu0 0.0
  %1632 = vmatpush1.msra.mxu0 0.0
  %1633 = vmatprep.subr.mxu0 0.0
  %1634 = vmatpush1.msra.mxu0 0.0
  %1635 = vmatprep.subr.mxu0 0.0
  %1636 = vmatpush1.msra.mxu0 0.0
  %1637 = vmatprep.subr.mxu0 0.0
  %1638 = vmatpush1.msra.mxu0 0.0
  %1639 = vmatprep.subr.mxu0 0.0
  %1640 = vmatpush1.msra.mxu0 0.0
  %1641 = vmatprep.subr.mxu0 0.0
  %1642 = vmatpush1.msra.mxu0 0.0
  %1643 = vmatprep.subr.mxu0 0.0
  %1644 = vmatpush1.msra.mxu0 0.0
  %1645 = vmatprep.subr.mxu0 0.0
  %1646 = vmatpush1.msra.mxu0 0.0
  %1647 = vmatprep.subr.mxu0 0.0
  %1648 = vmatpush1.msra.mxu0 0.0
  %1649 = vmatprep.subr.mxu0 0.0
  %1650 = vmatpush1.msra.mxu0 0.0
  %1651 = vmatprep.subr.mxu0 0.0
  %1652 = vmatpush1.msra.mxu0 0.0
  %1653 = vmatprep.subr.mxu0 0.0
  %1654 = vmatpush1.msra.mxu0 0.0
  %1655 = vmatprep.subr.mxu0 0.0
  %1656 = vmatpush1.msra.mxu0 0.0
  %1657 = vmatprep.subr.mxu0 0.0
  %1658 = vmatpush1.msra.mxu0 0.0
  %1659 = vmatprep.subr.mxu0 0.0
  %1660 = vmatpush1.msra.mxu0 0.0
  %1661 = vmatprep.subr.mxu0 0.0
  %1662 = vmatpush1.msra.mxu0 0.0
  %1663 = vmatprep.subr.mxu0 0.0
  %1664 = vmatpush1.msra.mxu0 0.0
  %1665 = vmatprep.subr.mxu0 0.0
  %1666 = vmatpush1.msra.mxu0 0.0
  %1667 = vmatprep.subr.mxu0 0.0
  %1668 = vmatpush1.msra.mxu0 0.0
  %1669 = vmatprep.subr.mxu0 0.0
  %1670 = vmatpush1.msra.mxu0 0.0
  %1671 = vmatprep.subr.mxu0 0.0
  %1672 = vmatpush1.msra.mxu0 0.0
  %1673 = vmatprep.subr.mxu0 0.0
  %1674 = vmatpush1.msra.mxu0 0.0
  %1675 = vmatprep.subr.mxu0 0.0
  %1676 = vmatpush1.msra.mxu0 0.0
  %1677 = vmatprep.subr.mxu0 0.0
  %1678 = vmatpush1.msra.mxu0 0.0
  %1679 = vmatprep.mubr.f32.mxu0 0.0
  %1680 = vmatmul.mubr.f32.gmra.mrb[0].mxu0 %v1613
  %v1681 = vpop.f32.mrb[0].mxu0
  %v1682 = vadd.f32 0.0, %v1681
  %v1683 = vpop.f32.mrb[0].mxu0
  %1684 = vdwg.mxu0
  %v1685 = vlaneseq
  %v1686 = vshrl.u32 %v1685, 7
  %v1687 = vsub.s32 0, %v1686
  %v1688 = vrot.slane %v1682, %v1687
  %v1689 = vsub.f32 %v1519, %v1688
  %v1690 = vmul.f32 %v1689, %v1689
  %v1691 = vsel %vm1520, %v1690, 0.0
  %v1692 = vrot.slane %v1691, 4
  %v1693 = vadd.f32 %v1691, %v1692
  %v1694 = vrot.slane %v1693, 2
  %v1695 = vadd.f32 %v1693, %v1694
  %v1696 = vrot.slane %v1695, 1
  %v1697 = vadd.f32 %v1695, %v1696
  %v1699 = vsel %vm1520, %v1697, 0
  %1701 = vmatprep.subr.mxu0 0.0
  %1702 = vmatpush1.msra.mxu0 %v1528
  %1703 = vmatprep.subr.mxu0 0.0
  %1704 = vmatpush1.msra.mxu0 %v1529
  %1705 = vmatprep.subr.mxu0 0.0
  %1706 = vmatpush1.msra.mxu0 %v1530
  %1707 = vmatprep.subr.mxu0 0.0
  %1708 = vmatpush1.msra.mxu0 %v1531
  %1709 = vmatprep.subr.mxu0 0.0
  %1710 = vmatpush1.msra.mxu0 %v1532
  %1711 = vmatprep.subr.mxu0 0.0
  %1712 = vmatpush1.msra.mxu0 %v1533
  %1713 = vmatprep.subr.mxu0 0.0
  %1714 = vmatpush1.msra.mxu0 %v1534
  %1715 = vmatprep.subr.mxu0 0.0
  %1716 = vmatpush1.msra.mxu0 %v1535
  %1717 = vmatprep.subr.mxu0 0.0
  %1718 = vmatpush1.msra.mxu0 0.0
  %1719 = vmatprep.subr.mxu0 0.0
  %1720 = vmatpush1.msra.mxu0 0.0
  %1721 = vmatprep.subr.mxu0 0.0
  %1722 = vmatpush1.msra.mxu0 0.0
  %1723 = vmatprep.subr.mxu0 0.0
  %1724 = vmatpush1.msra.mxu0 0.0
  %1725 = vmatprep.subr.mxu0 0.0
  %1726 = vmatpush1.msra.mxu0 0.0
  %1727 = vmatprep.subr.mxu0 0.0
  %1728 = vmatpush1.msra.mxu0 0.0
  %1729 = vmatprep.subr.mxu0 0.0
  %1730 = vmatpush1.msra.mxu0 0.0
  %1731 = vmatprep.subr.mxu0 0.0
  %1732 = vmatpush1.msra.mxu0 0.0
  %1733 = vmatprep.subr.mxu0 0.0
  %1734 = vmatpush1.msra.mxu0 0.0
  %1735 = vmatprep.subr.mxu0 0.0
  %1736 = vmatpush1.msra.mxu0 0.0
  %1737 = vmatprep.subr.mxu0 0.0
  %1738 = vmatpush1.msra.mxu0 0.0
  %1739 = vmatprep.subr.mxu0 0.0
  %1740 = vmatpush1.msra.mxu0 0.0
  %1741 = vmatprep.subr.mxu0 0.0
  %1742 = vmatpush1.msra.mxu0 0.0
  %1743 = vmatprep.subr.mxu0 0.0
  %1744 = vmatpush1.msra.mxu0 0.0
  %1745 = vmatprep.subr.mxu0 0.0
  %1746 = vmatpush1.msra.mxu0 0.0
  %1747 = vmatprep.subr.mxu0 0.0
  %1748 = vmatpush1.msra.mxu0 0.0
  %1749 = vmatprep.subr.mxu0 0.0
  %1750 = vmatpush1.msra.mxu0 0.0
  %1751 = vmatprep.subr.mxu0 0.0
  %1752 = vmatpush1.msra.mxu0 0.0
  %1753 = vmatprep.subr.mxu0 0.0
  %1754 = vmatpush1.msra.mxu0 0.0
  %1755 = vmatprep.subr.mxu0 0.0
  %1756 = vmatpush1.msra.mxu0 0.0
  %1757 = vmatprep.subr.mxu0 0.0
  %1758 = vmatpush1.msra.mxu0 0.0
  %1759 = vmatprep.subr.mxu0 0.0
  %1760 = vmatpush1.msra.mxu0 0.0
  %1761 = vmatprep.subr.mxu0 0.0
  %1762 = vmatpush1.msra.mxu0 0.0
  %1763 = vmatprep.subr.mxu0 0.0
  %1764 = vmatpush1.msra.mxu0 0.0
  %1765 = vmatprep.mubr.f32.mxu0 0.0
  %1766 = vmatmul.mubr.f32.gmra.mrb[0].mxu0 %v1699
  %v1767 = vpop.f32.mrb[0].mxu0
  %v1768 = vadd.f32 0.0, %v1767
  %v1769 = vpop.f32.mrb[0].mxu0
  %1770 = vdwg.mxu0
  %v1771 = vmul.f32 %v1768, 0.03125
  %v1772 = vld [vmem:[%s27] sm:$0x1]
  %v1773 = vadd.f32 %v1771, 1e-05
  %v1774 = vrsqrt.pop %v1773
  %v1775 = vmul.f32 %v1772, %v1774
  %v1776 = vld [vmem:[%s29] sm:$0x1]
  %v1777 = vmul.f32 %v1609, %v1775
  %v1778 = vsub.f32 %v1776, %v1777
  %v1780 = vsel %vm724, %v1775, 0
  %1782 = vmatprep.subr.mxu0 0.0
  %1783 = vmatpush1.msra.mxu0 %v1610
  %1784 = vmatprep.subr.mxu0 0.0
  %1785 = vmatpush1.msra.mxu0 %v1611
  %1786 = vmatprep.subr.mxu0 0.0
  %1787 = vmatpush1.msra.mxu0 0.0
  %1788 = vmatprep.subr.mxu0 0.0
  %1789 = vmatpush1.msra.mxu0 0.0
  %1790 = vmatprep.subr.mxu0 0.0
  %1791 = vmatpush1.msra.mxu0 0.0
  %1792 = vmatprep.subr.mxu0 0.0
  %1793 = vmatpush1.msra.mxu0 0.0
  %1794 = vmatprep.subr.mxu0 0.0
  %1795 = vmatpush1.msra.mxu0 0.0
  %1796 = vmatprep.subr.mxu0 0.0
  %1797 = vmatpush1.msra.mxu0 0.0
  %1798 = vmatprep.subr.mxu0 0.0
  %1799 = vmatpush1.msra.mxu0 0.0
  %1800 = vmatprep.subr.mxu0 0.0
  %1801 = vmatpush1.msra.mxu0 0.0
  %1802 = vmatprep.subr.mxu0 0.0
  %1803 = vmatpush1.msra.mxu0 0.0
  %1804 = vmatprep.subr.mxu0 0.0
  %1805 = vmatpush1.msra.mxu0 0.0
  %1806 = vmatprep.subr.mxu0 0.0
  %1807 = vmatpush1.msra.mxu0 0.0
  %1808 = vmatprep.subr.mxu0 0.0
  %1809 = vmatpush1.msra.mxu0 0.0
  %1810 = vmatprep.subr.mxu0 0.0
  %1811 = vmatpush1.msra.mxu0 0.0
  %1812 = vmatprep.subr.mxu0 0.0
  %1813 = vmatpush1.msra.mxu0 0.0
  %1814 = vmatprep.subr.mxu0 0.0
  %1815 = vmatpush1.msra.mxu0 0.0
  %1816 = vmatprep.subr.mxu0 0.0
  %1817 = vmatpush1.msra.mxu0 0.0
  %1818 = vmatprep.subr.mxu0 0.0
  %1819 = vmatpush1.msra.mxu0 0.0
  %1820 = vmatprep.subr.mxu0 0.0
  %1821 = vmatpush1.msra.mxu0 0.0
  %1822 = vmatprep.subr.mxu0 0.0
  %1823 = vmatpush1.msra.mxu0 0.0
  %1824 = vmatprep.subr.mxu0 0.0
  %1825 = vmatpush1.msra.mxu0 0.0
  %1826 = vmatprep.subr.mxu0 0.0
  %1827 = vmatpush1.msra.mxu0 0.0
  %1828 = vmatprep.subr.mxu0 0.0
  %1829 = vmatpush1.msra.mxu0 0.0
  %1830 = vmatprep.subr.mxu0 0.0
  %1831 = vmatpush1.msra.mxu0 0.0
  %1832 = vmatprep.subr.mxu0 0.0
  %1833 = vmatpush1.msra.mxu0 0.0
  %1834 = vmatprep.subr.mxu0 0.0
  %1835 = vmatpush1.msra.mxu0 0.0
  %1836 = vmatprep.subr.mxu0 0.0
  %1837 = vmatpush1.msra.mxu0 0.0
  %1838 = vmatprep.subr.mxu0 0.0
  %1839 = vmatpush1.msra.mxu0 0.0
  %1840 = vmatprep.subr.mxu0 0.0
  %1841 = vmatpush1.msra.mxu0 0.0
  %1842 = vmatprep.subr.mxu0 0.0
  %1843 = vmatpush1.msra.mxu0 0.0
  %1844 = vmatprep.subr.mxu0 0.0
  %1845 = vmatpush1.msra.mxu0 0.0
  %1846 = vmatprep.mubr.f32.mxu0 0.0
  %1847 = vmatmul.mubr.f32.gmra.mrb[0].mxu0 %v1780
  %v1848 = vpop.f32.mrb[0].mxu0
  %v1849 = vadd.f32 0.0, %v1848
  %v1850 = vpop.f32.mrb[0].mxu0
  %1851 = vdwg.mxu0
  %v1852 = vlaneseq
  %v1853 = vshrl.u32 %v1852, 7
  %v1854 = vsub.s32 0, %v1853
  %v1855 = vrot.slane %v1849, %v1854
  %v1856 = vmul.f32 %v1519, %v1855
  %v1858 = vsel %vm724, %v1778, 0
  %1860 = vmatprep.subr.mxu0 0.0
  %1861 = vmatpush1.msra.mxu0 %v1610
  %1862 = vmatprep.subr.mxu0 0.0
  %1863 = vmatpush1.msra.mxu0 %v1611
  %1864 = vmatprep.subr.mxu0 0.0
  %1865 = vmatpush1.msra.mxu0 0.0
  %1866 = vmatprep.subr.mxu0 0.0
  %1867 = vmatpush1.msra.mxu0 0.0
  %1868 = vmatprep.subr.mxu0 0.0
  %1869 = vmatpush1.msra.mxu0 0.0
  %1870 = vmatprep.subr.mxu0 0.0
  %1871 = vmatpush1.msra.mxu0 0.0
  %1872 = vmatprep.subr.mxu0 0.0
  %1873 = vmatpush1.msra.mxu0 0.0
  %1874 = vmatprep.subr.mxu0 0.0
  %1875 = vmatpush1.msra.mxu0 0.0
  %1876 = vmatprep.subr.mxu0 0.0
  %1877 = vmatpush1.msra.mxu0 0.0
  %1878 = vmatprep.subr.mxu0 0.0
  %1879 = vmatpush1.msra.mxu0 0.0
  %1880 = vmatprep.subr.mxu0 0.0
  %1881 = vmatpush1.msra.mxu0 0.0
  %1882 = vmatprep.subr.mxu0 0.0
  %1883 = vmatpush1.msra.mxu0 0.0
  %1884 = vmatprep.subr.mxu0 0.0
  %1885 = vmatpush1.msra.mxu0 0.0
  %1886 = vmatprep.subr.mxu0 0.0
  %1887 = vmatpush1.msra.mxu0 0.0
  %1888 = vmatprep.subr.mxu0 0.0
  %1889 = vmatpush1.msra.mxu0 0.0
  %1890 = vmatprep.subr.mxu0 0.0
  %1891 = vmatpush1.msra.mxu0 0.0
  %1892 = vmatprep.subr.mxu0 0.0
  %1893 = vmatpush1.msra.mxu0 0.0
  %1894 = vmatprep.subr.mxu0 0.0
  %1895 = vmatpush1.msra.mxu0 0.0
  %1896 = vmatprep.subr.mxu0 0.0
  %1897 = vmatpush1.msra.mxu0 0.0
  %1898 = vmatprep.subr.mxu0 0.0
  %1899 = vmatpush1.msra.mxu0 0.0
  %1900 = vmatprep.subr.mxu0 0.0
  %1901 = vmatpush1.msra.mxu0 0.0
  %1902 = vmatprep.subr.mxu0 0.0
  %1903 = vmatpush1.msra.mxu0 0.0
  %1904 = vmatprep.subr.mxu0 0.0
  %1905 = vmatpush1.msra.mxu0 0.0
  %1906 = vmatprep.subr.mxu0 0.0
  %1907 = vmatpush1.msra.mxu0 0.0
  %1908 = vmatprep.subr.mxu0 0.0
  %1909 = vmatpush1.msra.mxu0 0.0
  %1910 = vmatprep.subr.mxu0 0.0
  %1911 = vmatpush1.msra.mxu0 0.0
  %1912 = vmatprep.subr.mxu0 0.0
  %1913 = vmatpush1.msra.mxu0 0.0
  %1914 = vmatprep.subr.mxu0 0.0
  %1915 = vmatpush1.msra.mxu0 0.0
  %1916 = vmatprep.subr.mxu0 0.0
  %1917 = vmatpush1.msra.mxu0 0.0
  %1918 = vmatprep.subr.mxu0 0.0
  %1919 = vmatpush1.msra.mxu0 0.0
  %1920 = vmatprep.subr.mxu0 0.0
  %1921 = vmatpush1.msra.mxu0 0.0
  %1922 = vmatprep.subr.mxu0 0.0
  %1923 = vmatpush1.msra.mxu0 0.0
  %1924 = vmatprep.mubr.f32.mxu0 0.0
  %1925 = vmatmul.mubr.f32.gmra.mrb[0].mxu0 %v1858
  %v1926 = vpop.f32.mrb[0].mxu0
  %v1927 = vadd.f32 0.0, %v1926
  %v1928 = vpop.f32.mrb[0].mxu0
  %1929 = vdwg.mxu0
  %v1930 = vlaneseq
  %v1931 = vshrl.u32 %v1930, 7
  %v1932 = vsub.s32 0, %v1931
  %v1933 = vrot.slane %v1927, %v1932
  %v1934 = vadd.f32 %v1856, %v1933
  %v1935 = vmax.f32 %v1934, 0.0
  %v1936 = vld [vmem:[%s31] sm:$0xff]
  %v1937 = vld [vmem:[%s31 + $0x8] sm:$0xff]
  %vm1938 = vcmask 64512
  %v1940 = vsel %vm1938, %v1936, 0
  %v1943 = vsel %vm1938, %v1937, 0
  %1945 = vmatprep.subr.mxu0 0.0
  %1946 = vmatpush1.msra.mxu0 %v1935
  %1947 = vmatprep.subr.mxu0 0.0
  %1948 = vmatpush1.msra.mxu0 0.0
  %1949 = vmatprep.subr.mxu0 0.0
  %1950 = vmatpush1.msra.mxu0 0.0
  %1951 = vmatprep.subr.mxu0 0.0
  %1952 = vmatpush1.msra.mxu0 0.0
  %1953 = vmatprep.subr.mxu0 0.0
  %1954 = vmatpush1.msra.mxu0 0.0
  %1955 = vmatprep.subr.mxu0 0.0
  %1956 = vmatpush1.msra.mxu0 0.0
  %1957 = vmatprep.subr.mxu0 0.0
  %1958 = vmatpush1.msra.mxu0 0.0
  %1959 = vmatprep.subr.mxu0 0.0
  %1960 = vmatpush1.msra.mxu0 0.0
  %1961 = vmatprep.subr.mxu0 0.0
  %1962 = vmatpush1.msra.mxu0 0.0
  %1963 = vmatprep.subr.mxu0 0.0
  %1964 = vmatpush1.msra.mxu0 0.0
  %1965 = vmatprep.subr.mxu0 0.0
  %1966 = vmatpush1.msra.mxu0 0.0
  %1967 = vmatprep.subr.mxu0 0.0
  %1968 = vmatpush1.msra.mxu0 0.0
  %1969 = vmatprep.subr.mxu0 0.0
  %1970 = vmatpush1.msra.mxu0 0.0
  %1971 = vmatprep.subr.mxu0 0.0
  %1972 = vmatpush1.msra.mxu0 0.0
  %1973 = vmatprep.subr.mxu0 0.0
  %1974 = vmatpush1.msra.mxu0 0.0
  %1975 = vmatprep.subr.mxu0 0.0
  %1976 = vmatpush1.msra.mxu0 0.0
  %1977 = vmatprep.subr.mxu0 0.0
  %1978 = vmatpush1.msra.mxu0 0.0
  %1979 = vmatprep.subr.mxu0 0.0
  %1980 = vmatpush1.msra.mxu0 0.0
  %1981 = vmatprep.subr.mxu0 0.0
  %1982 = vmatpush1.msra.mxu0 0.0
  %1983 = vmatprep.subr.mxu0 0.0
  %1984 = vmatpush1.msra.mxu0 0.0
  %1985 = vmatprep.subr.mxu0 0.0
  %1986 = vmatpush1.msra.mxu0 0.0
  %1987 = vmatprep.subr.mxu0 0.0
  %1988 = vmatpush1.msra.mxu0 0.0
  %1989 = vmatprep.subr.mxu0 0.0
  %1990 = vmatpush1.msra.mxu0 0.0
  %1991 = vmatprep.subr.mxu0 0.0
  %1992 = vmatpush1.msra.mxu0 0.0
  %1993 = vmatprep.subr.mxu0 0.0
  %1994 = vmatpush1.msra.mxu0 0.0
  %1995 = vmatprep.subr.mxu0 0.0
  %1996 = vmatpush1.msra.mxu0 0.0
  %1997 = vmatprep.subr.mxu0 0.0
  %1998 = vmatpush1.msra.mxu0 0.0
  %1999 = vmatprep.subr.mxu0 0.0
  %2000 = vmatpush1.msra.mxu0 0.0
  %2001 = vmatprep.subr.mxu0 0.0
  %2002 = vmatpush1.msra.mxu0 0.0
  %2003 = vmatprep.subr.mxu0 0.0
  %2004 = vmatpush1.msra.mxu0 0.0
  %2005 = vmatprep.subr.mxu0 0.0
  %2006 = vmatpush1.msra.mxu0 0.0
  %2007 = vmatprep.subr.mxu0 0.0
  %2008 = vmatpush1.msra.mxu0 0.0
  %2009 = vmatprep.mubr.f32.mxu0 0.0
  %2010 = vmatmul.mubr.f32.gmra.mrb[0].mxu0 %v1940
  %v2011 = vpop.f32.mrb[0].mxu0
  %v2012 = vadd.f32 0.0, %v2011
  %v2013 = vpop.f32.mrb[0].mxu0
  %2014 = vmatprep.mubr.f32.mxu0 0.0
  %2015 = vmatmul.mubr.f32.gmra.mrb[0].mxu0 %v1943
  %v2016 = vpop.f32.mrb[0].mxu0
  %v2017 = vadd.f32 0.0, %v2016
  %v2018 = vpop.f32.mrb[0].mxu0
  %2019 = vdwg.mxu0
  %v2020 = vld [vmem:[%s33] sm:$0xff]
  %v2021 = vld [vmem:[%s33 + $0x8] sm:$0xff]
  %v2022 = vld [vmem:[%s33 + $0x10] sm:$0xff]
  %v2023 = vld [vmem:[%s33 + $0x18] sm:$0xff]
  %v2024 = vld [vmem:[%s33 + $0x20] sm:$0xff]
  %v2025 = vld [vmem:[%s33 + $0x28] sm:$0xff]
  %v2026 = vld [vmem:[%s33 + $0x30] sm:$0xff]
  %v2027 = vld [vmem:[%s33 + $0x38] sm:$0xff]
  %s2028 = scalar_lea.vmem %s31, 16
  %v2029 = vld [vmem:[%s2028] sm:$0xff]
  %v2030 = vld [vmem:[%s2028 + $0x8] sm:$0xff]
  %v2032 = vsel %vm1938, %v2029, 0
  %v2035 = vsel %vm1938, %v2030, 0
  %2037 = vmatprep.subr.mxu0 0.0
  %2038 = vmatpush1.msra.mxu0 %v1935
  %2039 = vmatprep.subr.mxu0 0.0
  %2040 = vmatpush1.msra.mxu0 0.0
  %2041 = vmatprep.subr.mxu0 0.0
  %2042 = vmatpush1.msra.mxu0 0.0
  %2043 = vmatprep.subr.mxu0 0.0
  %2044 = vmatpush1.msra.mxu0 0.0
  %2045 = vmatprep.subr.mxu0 0.0
  %2046 = vmatpush1.msra.mxu0 0.0
  %2047 = vmatprep.subr.mxu0 0.0
  %2048 = vmatpush1.msra.mxu0 0.0
  %2049 = vmatprep.subr.mxu0 0.0
  %2050 = vmatpush1.msra.mxu0 0.0
  %2051 = vmatprep.subr.mxu0 0.0
  %2052 = vmatpush1.msra.mxu0 0.0
  %2053 = vmatprep.subr.mxu0 0.0
  %2054 = vmatpush1.msra.mxu0 0.0
  %2055 = vmatprep.subr.mxu0 0.0
  %2056 = vmatpush1.msra.mxu0 0.0
  %2057 = vmatprep.subr.mxu0 0.0
  %2058 = vmatpush1.msra.mxu0 0.0
  %2059 = vmatprep.subr.mxu0 0.0
  %2060 = vmatpush1.msra.mxu0 0.0
  %2061 = vmatprep.subr.mxu0 0.0
  %2062 = vmatpush1.msra.mxu0 0.0
  %2063 = vmatprep.subr.mxu0 0.0
  %2064 = vmatpush1.msra.mxu0 0.0
  %2065 = vmatprep.subr.mxu0 0.0
  %2066 = vmatpush1.msra.mxu0 0.0
  %2067 = vmatprep.subr.mxu0 0.0
  %2068 = vmatpush1.msra.mxu0 0.0
  %2069 = vmatprep.subr.mxu0 0.0
  %2070 = vmatpush1.msra.mxu0 0.0
  %2071 = vmatprep.subr.mxu0 0.0
  %2072 = vmatpush1.msra.mxu0 0.0
  %2073 = vmatprep.subr.mxu0 0.0
  %2074 = vmatpush1.msra.mxu0 0.0
  %2075 = vmatprep.subr.mxu0 0.0
  %2076 = vmatpush1.msra.mxu0 0.0
  %2077 = vmatprep.subr.mxu0 0.0
  %2078 = vmatpush1.msra.mxu0 0.0
  %2079 = vmatprep.subr.mxu0 0.0
  %2080 = vmatpush1.msra.mxu0 0.0
  %2081 = vmatprep.subr.mxu0 0.0
  %2082 = vmatpush1.msra.mxu0 0.0
  %2083 = vmatprep.subr.mxu0 0.0
  %2084 = vmatpush1.msra.mxu0 0.0
  %2085 = vmatprep.subr.mxu0 0.0
  %2086 = vmatpush1.msra.mxu0 0.0
  %2087 = vmatprep.subr.mxu0 0.0
  %2088 = vmatpush1.msra.mxu0 0.0
  %2089 = vmatprep.subr.mxu0 0.0
  %2090 = vmatpush1.msra.mxu0 0.0
  %2091 = vmatprep.subr.mxu0 0.0
  %2092 = vmatpush1.msra.mxu0 0.0
  %2093 = vmatprep.subr.mxu0 0.0
  %2094 = vmatpush1.msra.mxu0 0.0
  %2095 = vmatprep.subr.mxu0 0.0
  %2096 = vmatpush1.msra.mxu0 0.0
  %2097 = vmatprep.subr.mxu0 0.0
  %2098 = vmatpush1.msra.mxu0 0.0
  %2099 = vmatprep.subr.mxu0 0.0
  %2100 = vmatpush1.msra.mxu0 0.0
  %2101 = vmatprep.mubr.f32.mxu0 0.0
  %2102 = vmatmul.mubr.f32.gmra.mrb[0].mxu0 %v2032
  %v2103 = vpop.f32.mrb[0].mxu0
  %v2104 = vadd.f32 0.0, %v2103
  %v2105 = vpop.f32.mrb[0].mxu0
  %2106 = vmatprep.mubr.f32.mxu0 0.0
  %2107 = vmatmul.mubr.f32.gmra.mrb[0].mxu0 %v2035
  %v2108 = vpop.f32.mrb[0].mxu0
  %v2109 = vadd.f32 0.0, %v2108
  %v2110 = vpop.f32.mrb[0].mxu0
  %2111 = vdwg.mxu0
  %s2112 = scalar_lea.vmem %s33, 64
  %v2113 = vld [vmem:[%s2112] sm:$0xff]
  %v2114 = vld [vmem:[%s2112 + $0x8] sm:$0xff]
  %v2115 = vld [vmem:[%s2112 + $0x10] sm:$0xff]
  %v2116 = vld [vmem:[%s2112 + $0x18] sm:$0xff]
  %v2117 = vld [vmem:[%s2112 + $0x20] sm:$0xff]
  %v2118 = vld [vmem:[%s2112 + $0x28] sm:$0xff]
  %v2119 = vld [vmem:[%s2112 + $0x30] sm:$0xff]
  %v2120 = vld [vmem:[%s2112 + $0x38] sm:$0xff]
  %v2122 = vsel %vm1520, %v2104, 0
  %v2125 = vsel %vm1520, %v2109, 0
  %2127 = vmatprep.subr.mxu0 0.0
  %2128 = vmatpush1.msra.mxu0 %v2113
  %2129 = vmatprep.subr.mxu0 0.0
  %2130 = vmatpush1.msra.mxu0 %v2114
  %2131 = vmatprep.subr.mxu0 0.0
  %2132 = vmatpush1.msra.mxu0 %v2115
  %2133 = vmatprep.subr.mxu0 0.0
  %2134 = vmatpush1.msra.mxu0 %v2116
  %2135 = vmatprep.subr.mxu0 0.0
  %2136 = vmatpush1.msra.mxu0 %v2117
  %2137 = vmatprep.subr.mxu0 0.0
  %2138 = vmatpush1.msra.mxu0 %v2118
  %2139 = vmatprep.subr.mxu0 0.0
  %2140 = vmatpush1.msra.mxu0 %v2119
  %2141 = vmatprep.subr.mxu0 0.0
  %2142 = vmatpush1.msra.mxu0 %v2120
  %2143 = vmatprep.subr.mxu0 0.0
  %2144 = vmatpush1.msra.mxu0 0.0
  %2145 = vmatprep.subr.mxu0 0.0
  %2146 = vmatpush1.msra.mxu0 0.0
  %2147 = vmatprep.subr.mxu0 0.0
  %2148 = vmatpush1.msra.mxu0 0.0
  %2149 = vmatprep.subr.mxu0 0.0
  %2150 = vmatpush1.msra.mxu0 0.0
  %2151 = vmatprep.subr.mxu0 0.0
  %2152 = vmatpush1.msra.mxu0 0.0
  %2153 = vmatprep.subr.mxu0 0.0
  %2154 = vmatpush1.msra.mxu0 0.0
  %2155 = vmatprep.subr.mxu0 0.0
  %2156 = vmatpush1.msra.mxu0 0.0
  %2157 = vmatprep.subr.mxu0 0.0
  %2158 = vmatpush1.msra.mxu0 0.0
  %2159 = vmatprep.subr.mxu0 0.0
  %2160 = vmatpush1.msra.mxu0 0.0
  %2161 = vmatprep.subr.mxu0 0.0
  %2162 = vmatpush1.msra.mxu0 0.0
  %2163 = vmatprep.subr.mxu0 0.0
  %2164 = vmatpush1.msra.mxu0 0.0
  %2165 = vmatprep.subr.mxu0 0.0
  %2166 = vmatpush1.msra.mxu0 0.0
  %2167 = vmatprep.subr.mxu0 0.0
  %2168 = vmatpush1.msra.mxu0 0.0
  %2169 = vmatprep.subr.mxu0 0.0
  %2170 = vmatpush1.msra.mxu0 0.0
  %2171 = vmatprep.subr.mxu0 0.0
  %2172 = vmatpush1.msra.mxu0 0.0
  %2173 = vmatprep.subr.mxu0 0.0
  %2174 = vmatpush1.msra.mxu0 0.0
  %2175 = vmatprep.subr.mxu0 0.0
  %2176 = vmatpush1.msra.mxu0 0.0
  %2177 = vmatprep.subr.mxu0 0.0
  %2178 = vmatpush1.msra.mxu0 0.0
  %2179 = vmatprep.subr.mxu0 0.0
  %2180 = vmatpush1.msra.mxu0 0.0
  %2181 = vmatprep.subr.mxu0 0.0
  %2182 = vmatpush1.msra.mxu0 0.0
  %2183 = vmatprep.subr.mxu0 0.0
  %2184 = vmatpush1.msra.mxu0 0.0
  %2185 = vmatprep.subr.mxu0 0.0
  %2186 = vmatpush1.msra.mxu0 0.0
  %2187 = vmatprep.subr.mxu0 0.0
  %2188 = vmatpush1.msra.mxu0 0.0
  %2189 = vmatprep.subr.mxu0 0.0
  %2190 = vmatpush1.msra.mxu0 0.0
  %2191 = vmatprep.mubr.f32.mxu0 0.0
  %2192 = vmatmul.mubr.f32.gmra.mrb[0].mxu0 %v2122
  %v2193 = vpop.f32.mrb[0].mxu0
  %v2194 = vadd.f32 0.0, %v2193
  %v2195 = vpop.f32.mrb[0].mxu0
  %2196 = vmatprep.mubr.f32.mxu0 0.0
  %2197 = vmatmul.mubr.f32.gmra.mrb[0].mxu0 %v2125
  %v2198 = vpop.f32.mrb[0].mxu0
  %v2199 = vadd.f32 0.0, %v2198
  %v2200 = vpop.f32.mrb[0].mxu0
  %2201 = vdwg.mxu0
  %v2203 = vsel %vm1520, %v2012, 0
  %v2206 = vsel %vm1520, %v2017, 0
  %2208 = vmatprep.subr.mxu0 0.0
  %2209 = vmatpush1.msra.mxu0 %v2020
  %2210 = vmatprep.subr.mxu0 0.0
  %2211 = vmatpush1.msra.mxu0 %v2021
  %2212 = vmatprep.subr.mxu0 0.0
  %2213 = vmatpush1.msra.mxu0 %v2022
  %2214 = vmatprep.subr.mxu0 0.0
  %2215 = vmatpush1.msra.mxu0 %v2023
  %2216 = vmatprep.subr.mxu0 0.0
  %2217 = vmatpush1.msra.mxu0 %v2024
  %2218 = vmatprep.subr.mxu0 0.0
  %2219 = vmatpush1.msra.mxu0 %v2025
  %2220 = vmatprep.subr.mxu0 0.0
  %2221 = vmatpush1.msra.mxu0 %v2026
  %2222 = vmatprep.subr.mxu0 0.0
  %2223 = vmatpush1.msra.mxu0 %v2027
  %2224 = vmatprep.subr.mxu0 0.0
  %2225 = vmatpush1.msra.mxu0 0.0
  %2226 = vmatprep.subr.mxu0 0.0
  %2227 = vmatpush1.msra.mxu0 0.0
  %2228 = vmatprep.subr.mxu0 0.0
  %2229 = vmatpush1.msra.mxu0 0.0
  %2230 = vmatprep.subr.mxu0 0.0
  %2231 = vmatpush1.msra.mxu0 0.0
  %2232 = vmatprep.subr.mxu0 0.0
  %2233 = vmatpush1.msra.mxu0 0.0
  %2234 = vmatprep.subr.mxu0 0.0
  %2235 = vmatpush1.msra.mxu0 0.0
  %2236 = vmatprep.subr.mxu0 0.0
  %2237 = vmatpush1.msra.mxu0 0.0
  %2238 = vmatprep.subr.mxu0 0.0
  %2239 = vmatpush1.msra.mxu0 0.0
  %2240 = vmatprep.subr.mxu0 0.0
  %2241 = vmatpush1.msra.mxu0 0.0
  %2242 = vmatprep.subr.mxu0 0.0
  %2243 = vmatpush1.msra.mxu0 0.0
  %2244 = vmatprep.subr.mxu0 0.0
  %2245 = vmatpush1.msra.mxu0 0.0
  %2246 = vmatprep.subr.mxu0 0.0
  %2247 = vmatpush1.msra.mxu0 0.0
  %2248 = vmatprep.subr.mxu0 0.0
  %2249 = vmatpush1.msra.mxu0 0.0
  %2250 = vmatprep.subr.mxu0 0.0
  %2251 = vmatpush1.msra.mxu0 0.0
  %2252 = vmatprep.subr.mxu0 0.0
  %2253 = vmatpush1.msra.mxu0 0.0
  %2254 = vmatprep.subr.mxu0 0.0
  %2255 = vmatpush1.msra.mxu0 0.0
  %2256 = vmatprep.subr.mxu0 0.0
  %2257 = vmatpush1.msra.mxu0 0.0
  %2258 = vmatprep.subr.mxu0 0.0
  %2259 = vmatpush1.msra.mxu0 0.0
  %2260 = vmatprep.subr.mxu0 0.0
  %2261 = vmatpush1.msra.mxu0 0.0
  %2262 = vmatprep.subr.mxu0 0.0
  %2263 = vmatpush1.msra.mxu0 0.0
  %2264 = vmatprep.subr.mxu0 0.0
  %2265 = vmatpush1.msra.mxu0 0.0
  %2266 = vmatprep.subr.mxu0 0.0
  %2267 = vmatpush1.msra.mxu0 0.0
  %2268 = vmatprep.subr.mxu0 0.0
  %2269 = vmatpush1.msra.mxu0 0.0
  %2270 = vmatprep.subr.mxu0 0.0
  %2271 = vmatpush1.msra.mxu0 0.0
  %2272 = vmatprep.mubr.f32.mxu0 0.0
  %2273 = vmatmul.mubr.f32.gmra.mrb[0].mxu0 %v2203
  %v2274 = vpop.f32.mrb[0].mxu0
  %v2275 = vadd.f32 %v2194, %v2274
  %v2276 = vpop.f32.mrb[0].mxu0
  %2277 = vmatprep.mubr.f32.mxu0 0.0
  %2278 = vmatmul.mubr.f32.gmra.mrb[0].mxu0 %v2206
  %v2279 = vpop.f32.mrb[0].mxu0
  %v2280 = vadd.f32 %v2199, %v2279
  %v2281 = vpop.f32.mrb[0].mxu0
  %2282 = vdwg.mxu0
  %s2283 = scalar_lea.vmem %s31, 32
  %v2284 = vld [vmem:[%s2283] sm:$0xff]
  %v2285 = vld [vmem:[%s2283 + $0x8] sm:$0xff]
  %v2287 = vsel %vm1938, %v2284, 0
  %v2290 = vsel %vm1938, %v2285, 0
  %2292 = vmatprep.subr.mxu0 0.0
  %2293 = vmatpush1.msra.mxu0 %v1935
  %2294 = vmatprep.subr.mxu0 0.0
  %2295 = vmatpush1.msra.mxu0 0.0
  %2296 = vmatprep.subr.mxu0 0.0
  %2297 = vmatpush1.msra.mxu0 0.0
  %2298 = vmatprep.subr.mxu0 0.0
  %2299 = vmatpush1.msra.mxu0 0.0
  %2300 = vmatprep.subr.mxu0 0.0
  %2301 = vmatpush1.msra.mxu0 0.0
  %2302 = vmatprep.subr.mxu0 0.0
  %2303 = vmatpush1.msra.mxu0 0.0
  %2304 = vmatprep.subr.mxu0 0.0
  %2305 = vmatpush1.msra.mxu0 0.0
  %2306 = vmatprep.subr.mxu0 0.0
  %2307 = vmatpush1.msra.mxu0 0.0
  %2308 = vmatprep.subr.mxu0 0.0
  %2309 = vmatpush1.msra.mxu0 0.0
  %2310 = vmatprep.subr.mxu0 0.0
  %2311 = vmatpush1.msra.mxu0 0.0
  %2312 = vmatprep.subr.mxu0 0.0
  %2313 = vmatpush1.msra.mxu0 0.0
  %2314 = vmatprep.subr.mxu0 0.0
  %2315 = vmatpush1.msra.mxu0 0.0
  %2316 = vmatprep.subr.mxu0 0.0
  %2317 = vmatpush1.msra.mxu0 0.0
  %2318 = vmatprep.subr.mxu0 0.0
  %2319 = vmatpush1.msra.mxu0 0.0
  %2320 = vmatprep.subr.mxu0 0.0
  %2321 = vmatpush1.msra.mxu0 0.0
  %2322 = vmatprep.subr.mxu0 0.0
  %2323 = vmatpush1.msra.mxu0 0.0
  %2324 = vmatprep.subr.mxu0 0.0
  %2325 = vmatpush1.msra.mxu0 0.0
  %2326 = vmatprep.subr.mxu0 0.0
  %2327 = vmatpush1.msra.mxu0 0.0
  %2328 = vmatprep.subr.mxu0 0.0
  %2329 = vmatpush1.msra.mxu0 0.0
  %2330 = vmatprep.subr.mxu0 0.0
  %2331 = vmatpush1.msra.mxu0 0.0
  %2332 = vmatprep.subr.mxu0 0.0
  %2333 = vmatpush1.msra.mxu0 0.0
  %2334 = vmatprep.subr.mxu0 0.0
  %2335 = vmatpush1.msra.mxu0 0.0
  %2336 = vmatprep.subr.mxu0 0.0
  %2337 = vmatpush1.msra.mxu0 0.0
  %2338 = vmatprep.subr.mxu0 0.0
  %2339 = vmatpush1.msra.mxu0 0.0
  %2340 = vmatprep.subr.mxu0 0.0
  %2341 = vmatpush1.msra.mxu0 0.0
  %2342 = vmatprep.subr.mxu0 0.0
  %2343 = vmatpush1.msra.mxu0 0.0
  %2344 = vmatprep.subr.mxu0 0.0
  %2345 = vmatpush1.msra.mxu0 0.0
  %2346 = vmatprep.subr.mxu0 0.0
  %2347 = vmatpush1.msra.mxu0 0.0
  %2348 = vmatprep.subr.mxu0 0.0
  %2349 = vmatpush1.msra.mxu0 0.0
  %2350 = vmatprep.subr.mxu0 0.0
  %2351 = vmatpush1.msra.mxu0 0.0
  %2352 = vmatprep.subr.mxu0 0.0
  %2353 = vmatpush1.msra.mxu0 0.0
  %2354 = vmatprep.subr.mxu0 0.0
  %2355 = vmatpush1.msra.mxu0 0.0
  %2356 = vmatprep.mubr.f32.mxu0 0.0
  %2357 = vmatmul.mubr.f32.gmra.mrb[0].mxu0 %v2287
  %v2358 = vpop.f32.mrb[0].mxu0
  %v2359 = vadd.f32 0.0, %v2358
  %v2360 = vpop.f32.mrb[0].mxu0
  %2361 = vmatprep.mubr.f32.mxu0 0.0
  %2362 = vmatmul.mubr.f32.gmra.mrb[0].mxu0 %v2290
  %v2363 = vpop.f32.mrb[0].mxu0
  %v2364 = vadd.f32 0.0, %v2363
  %v2365 = vpop.f32.mrb[0].mxu0
  %2366 = vdwg.mxu0
  %s2367 = scalar_lea.vmem %s33, 128
  %v2368 = vld [vmem:[%s2367] sm:$0xff]
  %v2369 = vld [vmem:[%s2367 + $0x8] sm:$0xff]
  %v2370 = vld [vmem:[%s2367 + $0x10] sm:$0xff]
  %v2371 = vld [vmem:[%s2367 + $0x18] sm:$0xff]
  %v2372 = vld [vmem:[%s2367 + $0x20] sm:$0xff]
  %v2373 = vld [vmem:[%s2367 + $0x28] sm:$0xff]
  %v2374 = vld [vmem:[%s2367 + $0x30] sm:$0xff]
  %v2375 = vld [vmem:[%s2367 + $0x38] sm:$0xff]
  %v2377 = vsel %vm1520, %v2359, 0
  %v2380 = vsel %vm1520, %v2364, 0
  %2382 = vmatprep.subr.mxu0 0.0
  %2383 = vmatpush1.msra.mxu0 %v2368
  %2384 = vmatprep.subr.mxu0 0.0
  %2385 = vmatpush1.msra.mxu0 %v2369
  %2386 = vmatprep.subr.mxu0 0.0
  %2387 = vmatpush1.msra.mxu0 %v2370
  %2388 = vmatprep.subr.mxu0 0.0
  %2389 = vmatpush1.msra.mxu0 %v2371
  %2390 = vmatprep.subr.mxu0 0.0
  %2391 = vmatpush1.msra.mxu0 %v2372
  %2392 = vmatprep.subr.mxu0 0.0
  %2393 = vmatpush1.msra.mxu0 %v2373
  %2394 = vmatprep.subr.mxu0 0.0
  %2395 = vmatpush1.msra.mxu0 %v2374
  %2396 = vmatprep.subr.mxu0 0.0
  %2397 = vmatpush1.msra.mxu0 %v2375
  %2398 = vmatprep.subr.mxu0 0.0
  %2399 = vmatpush1.msra.mxu0 0.0
  %2400 = vmatprep.subr.mxu0 0.0
  %2401 = vmatpush1.msra.mxu0 0.0
  %2402 = vmatprep.subr.mxu0 0.0
  %2403 = vmatpush1.msra.mxu0 0.0
  %2404 = vmatprep.subr.mxu0 0.0
  %2405 = vmatpush1.msra.mxu0 0.0
  %2406 = vmatprep.subr.mxu0 0.0
  %2407 = vmatpush1.msra.mxu0 0.0
  %2408 = vmatprep.subr.mxu0 0.0
  %2409 = vmatpush1.msra.mxu0 0.0
  %2410 = vmatprep.subr.mxu0 0.0
  %2411 = vmatpush1.msra.mxu0 0.0
  %2412 = vmatprep.subr.mxu0 0.0
  %2413 = vmatpush1.msra.mxu0 0.0
  %2414 = vmatprep.subr.mxu0 0.0
  %2415 = vmatpush1.msra.mxu0 0.0
  %2416 = vmatprep.subr.mxu0 0.0
  %2417 = vmatpush1.msra.mxu0 0.0
  %2418 = vmatprep.subr.mxu0 0.0
  %2419 = vmatpush1.msra.mxu0 0.0
  %2420 = vmatprep.subr.mxu0 0.0
  %2421 = vmatpush1.msra.mxu0 0.0
  %2422 = vmatprep.subr.mxu0 0.0
  %2423 = vmatpush1.msra.mxu0 0.0
  %2424 = vmatprep.subr.mxu0 0.0
  %2425 = vmatpush1.msra.mxu0 0.0
  %2426 = vmatprep.subr.mxu0 0.0
  %2427 = vmatpush1.msra.mxu0 0.0
  %2428 = vmatprep.subr.mxu0 0.0
  %2429 = vmatpush1.msra.mxu0 0.0
  %2430 = vmatprep.subr.mxu0 0.0
  %2431 = vmatpush1.msra.mxu0 0.0
  %2432 = vmatprep.subr.mxu0 0.0
  %2433 = vmatpush1.msra.mxu0 0.0
  %2434 = vmatprep.subr.mxu0 0.0
  %2435 = vmatpush1.msra.mxu0 0.0
  %2436 = vmatprep.subr.mxu0 0.0
  %2437 = vmatpush1.msra.mxu0 0.0
  %2438 = vmatprep.subr.mxu0 0.0
  %2439 = vmatpush1.msra.mxu0 0.0
  %2440 = vmatprep.subr.mxu0 0.0
  %2441 = vmatpush1.msra.mxu0 0.0
  %2442 = vmatprep.subr.mxu0 0.0
  %2443 = vmatpush1.msra.mxu0 0.0
  %2444 = vmatprep.subr.mxu0 0.0
  %2445 = vmatpush1.msra.mxu0 0.0
  %2446 = vmatprep.mubr.f32.mxu0 0.0
  %2447 = vmatmul.mubr.f32.gmra.mrb[0].mxu0 %v2377
  %v2448 = vpop.f32.mrb[0].mxu0
  %v2449 = vadd.f32 0.0, %v2448
  %v2450 = vpop.f32.mrb[0].mxu0
  %2451 = vmatprep.mubr.f32.mxu0 0.0
  %2452 = vmatmul.mubr.f32.gmra.mrb[0].mxu0 %v2380
  %v2453 = vpop.f32.mrb[0].mxu0
  %v2454 = vadd.f32 0.0, %v2453
  %v2455 = vpop.f32.mrb[0].mxu0
  %2456 = vdwg.mxu0
  %v2457 = vadd.f32 %v2275, %v2449
  %v2458 = vadd.f32 %v2280, %v2454
  %v2459 = vld [vmem:[%s35] sm:$0x1]
  %v2461 = vlaneseq
  %v2462 = vshrl.u32 %v2461, 7
  %v2463 = vsub.s32 0, %v2462
  %v2464 = vrot.slane %v2459, %v2463
  %v2466 = vadd.f32 %v2457, %v2464
  %v2467 = vadd.f32 %v2458, %v2464
  %v2468 = vadd.f32 %v2466, %v2467
  %v2469 = vrot.slane %v2468, 4
  %v2470 = vadd.f32 %v2468, %v2469
  %v2471 = vrot.slane %v2470, 2
  %v2472 = vadd.f32 %v2470, %v2471
  %v2473 = vrot.slane %v2472, 1
  %v2474 = vadd.f32 %v2472, %v2473
  %v2475 = vld [vmem:[%s37] sm:$0xff]
  %v2476 = vld [vmem:[%s37 + $0x8] sm:$0xff]
  %v2477 = vld [vmem:[%s37 + $0x10] sm:$0xff]
  %v2478 = vld [vmem:[%s37 + $0x18] sm:$0xff]
  %v2479 = vld [vmem:[%s37 + $0x20] sm:$0xff]
  %v2480 = vld [vmem:[%s37 + $0x28] sm:$0xff]
  %v2481 = vld [vmem:[%s37 + $0x30] sm:$0xff]
  %v2482 = vld [vmem:[%s37 + $0x38] sm:$0xff]
  %v2483 = vld [vmem:[%s37 + $0x40] sm:$0xff]
  %v2484 = vld [vmem:[%s37 + $0x48] sm:$0xff]
  %v2485 = vld [vmem:[%s37 + $0x50] sm:$0xff]
  %v2486 = vld [vmem:[%s37 + $0x58] sm:$0xff]
  %v2487 = vld [vmem:[%s37 + $0x60] sm:$0xff]
  %v2488 = vld [vmem:[%s37 + $0x68] sm:$0xff]
  %v2489 = vld [vmem:[%s37 + $0x70] sm:$0xff]
  %v2490 = vld [vmem:[%s37 + $0x78] sm:$0xff]
  %2491 = vmatprep.subr.mxu0 0.0
  %2492 = vmatpush1.msra.mxu0 %v2475
  %2493 = vmatprep.subr.mxu0 0.0
  %2494 = vmatpush1.msra.mxu0 %v2476
  %2495 = vmatprep.subr.mxu0 0.0
  %2496 = vmatpush1.msra.mxu0 %v2477
  %2497 = vmatprep.subr.mxu0 0.0
  %2498 = vmatpush1.msra.mxu0 %v2478
  %2499 = vmatprep.subr.mxu0 0.0
  %2500 = vmatpush1.msra.mxu0 %v2479
  %2501 = vmatprep.subr.mxu0 0.0
  %2502 = vmatpush1.msra.mxu0 %v2480
  %2503 = vmatprep.subr.mxu0 0.0
  %2504 = vmatpush1.msra.mxu0 %v2481
  %2505 = vmatprep.subr.mxu0 0.0
  %2506 = vmatpush1.msra.mxu0 %v2482
  %2507 = vmatprep.subr.mxu0 0.0
  %2508 = vmatpush1.msra.mxu0 %v2483
  %2509 = vmatprep.subr.mxu0 0.0
  %2510 = vmatpush1.msra.mxu0 %v2484
  %2511 = vmatprep.subr.mxu0 0.0
  %2512 = vmatpush1.msra.mxu0 %v2485
  %2513 = vmatprep.subr.mxu0 0.0
  %2514 = vmatpush1.msra.mxu0 %v2486
  %2515 = vmatprep.subr.mxu0 0.0
  %2516 = vmatpush1.msra.mxu0 %v2487
  %2517 = vmatprep.subr.mxu0 0.0
  %2518 = vmatpush1.msra.mxu0 %v2488
  %2519 = vmatprep.subr.mxu0 0.0
  %2520 = vmatpush1.msra.mxu0 %v2489
  %2521 = vmatprep.subr.mxu0 0.0
  %2522 = vmatpush1.msra.mxu0 %v2490
  %2523 = vmatprep.subr.mxu0 0.0
  %2524 = vmatpush1.msra.mxu0 0.0
  %2525 = vmatprep.subr.mxu0 0.0
  %2526 = vmatpush1.msra.mxu0 0.0
  %2527 = vmatprep.subr.mxu0 0.0
  %2528 = vmatpush1.msra.mxu0 0.0
  %2529 = vmatprep.subr.mxu0 0.0
  %2530 = vmatpush1.msra.mxu0 0.0
  %2531 = vmatprep.subr.mxu0 0.0
  %2532 = vmatpush1.msra.mxu0 0.0
  %2533 = vmatprep.subr.mxu0 0.0
  %2534 = vmatpush1.msra.mxu0 0.0
  %2535 = vmatprep.subr.mxu0 0.0
  %2536 = vmatpush1.msra.mxu0 0.0
  %2537 = vmatprep.subr.mxu0 0.0
  %2538 = vmatpush1.msra.mxu0 0.0
  %2539 = vmatprep.subr.mxu0 0.0
  %2540 = vmatpush1.msra.mxu0 0.0
  %2541 = vmatprep.subr.mxu0 0.0
  %2542 = vmatpush1.msra.mxu0 0.0
  %2543 = vmatprep.subr.mxu0 0.0
  %2544 = vmatpush1.msra.mxu0 0.0
  %2545 = vmatprep.subr.mxu0 0.0
  %2546 = vmatpush1.msra.mxu0 0.0
  %2547 = vmatprep.subr.mxu0 0.0
  %2548 = vmatpush1.msra.mxu0 0.0
  %2549 = vmatprep.subr.mxu0 0.0
  %2550 = vmatpush1.msra.mxu0 0.0
  %2551 = vmatprep.subr.mxu0 0.0
  %2552 = vmatpush1.msra.mxu0 0.0
  %2553 = vmatprep.subr.mxu0 0.0
  %2554 = vmatpush1.msra.mxu0 0.0
  %2555 = vmatprep.mubr.f32.mxu0 0.0
  %2556 = vmatmul.mubr.f32.gmra.mrb[0].mxu0 %v2474
  %v2557 = vpop.f32.mrb[0].mxu0
  %v2558 = vadd.f32 0.0, %v2557
  %v2559 = vpop.f32.mrb[0].mxu0
  %2560 = vdwg.mxu0
  %v2561 = vmul.f32 %v2558, 0.0078125
  %v2562 = vld [vmem:[%s39] sm:$0xff]
  %v2563 = vld [vmem:[%s39 + $0x8] sm:$0xff]
  %v2565 = vsel %vm724, %v2561, 0
  %2567 = vmatprep.subr.mxu0 0.0
  %2568 = vmatpush1.msra.mxu0 %v2562
  %2569 = vmatprep.subr.mxu0 0.0
  %2570 = vmatpush1.msra.mxu0 %v2563
  %2571 = vmatprep.subr.mxu0 0.0
  %2572 = vmatpush1.msra.mxu0 0.0
  %2573 = vmatprep.subr.mxu0 0.0
  %2574 = vmatpush1.msra.mxu0 0.0
  %2575 = vmatprep.subr.mxu0 0.0
  %2576 = vmatpush1.msra.mxu0 0.0
  %2577 = vmatprep.subr.mxu0 0.0
  %2578 = vmatpush1.msra.mxu0 0.0
  %2579 = vmatprep.subr.mxu0 0.0
  %2580 = vmatpush1.msra.mxu0 0.0
  %2581 = vmatprep.subr.mxu0 0.0
  %2582 = vmatpush1.msra.mxu0 0.0
  %2583 = vmatprep.subr.mxu0 0.0
  %2584 = vmatpush1.msra.mxu0 0.0
  %2585 = vmatprep.subr.mxu0 0.0
  %2586 = vmatpush1.msra.mxu0 0.0
  %2587 = vmatprep.subr.mxu0 0.0
  %2588 = vmatpush1.msra.mxu0 0.0
  %2589 = vmatprep.subr.mxu0 0.0
  %2590 = vmatpush1.msra.mxu0 0.0
  %2591 = vmatprep.subr.mxu0 0.0
  %2592 = vmatpush1.msra.mxu0 0.0
  %2593 = vmatprep.subr.mxu0 0.0
  %2594 = vmatpush1.msra.mxu0 0.0
  %2595 = vmatprep.subr.mxu0 0.0
  %2596 = vmatpush1.msra.mxu0 0.0
  %2597 = vmatprep.subr.mxu0 0.0
  %2598 = vmatpush1.msra.mxu0 0.0
  %2599 = vmatprep.subr.mxu0 0.0
  %2600 = vmatpush1.msra.mxu0 0.0
  %2601 = vmatprep.subr.mxu0 0.0
  %2602 = vmatpush1.msra.mxu0 0.0
  %2603 = vmatprep.subr.mxu0 0.0
  %2604 = vmatpush1.msra.mxu0 0.0
  %2605 = vmatprep.subr.mxu0 0.0
  %2606 = vmatpush1.msra.mxu0 0.0
  %2607 = vmatprep.subr.mxu0 0.0
  %2608 = vmatpush1.msra.mxu0 0.0
  %2609 = vmatprep.subr.mxu0 0.0
  %2610 = vmatpush1.msra.mxu0 0.0
  %2611 = vmatprep.subr.mxu0 0.0
  %2612 = vmatpush1.msra.mxu0 0.0
  %2613 = vmatprep.subr.mxu0 0.0
  %2614 = vmatpush1.msra.mxu0 0.0
  %2615 = vmatprep.subr.mxu0 0.0
  %2616 = vmatpush1.msra.mxu0 0.0
  %2617 = vmatprep.subr.mxu0 0.0
  %2618 = vmatpush1.msra.mxu0 0.0
  %2619 = vmatprep.subr.mxu0 0.0
  %2620 = vmatpush1.msra.mxu0 0.0
  %2621 = vmatprep.subr.mxu0 0.0
  %2622 = vmatpush1.msra.mxu0 0.0
  %2623 = vmatprep.subr.mxu0 0.0
  %2624 = vmatpush1.msra.mxu0 0.0
  %2625 = vmatprep.subr.mxu0 0.0
  %2626 = vmatpush1.msra.mxu0 0.0
  %2627 = vmatprep.subr.mxu0 0.0
  %2628 = vmatpush1.msra.mxu0 0.0
  %2629 = vmatprep.subr.mxu0 0.0
  %2630 = vmatpush1.msra.mxu0 0.0
  %2631 = vmatprep.mubr.f32.mxu0 0.0
  %2632 = vmatmul.mubr.f32.gmra.mrb[0].mxu0 %v2565
  %v2633 = vpop.f32.mrb[0].mxu0
  %v2634 = vadd.f32 0.0, %v2633
  %v2635 = vpop.f32.mrb[0].mxu0
  %2636 = vdwg.mxu0
  %v2637 = vlaneseq
  %v2638 = vshrl.u32 %v2637, 7
  %v2639 = vsub.s32 0, %v2638
  %v2640 = vrot.slane %v2634, %v2639
  %v2641 = vsub.f32 %v2466, %v2640
  %v2642 = vsub.f32 %v2467, %v2640
  %v2643 = vmul.f32 %v2641, %v2641
  %v2644 = vmul.f32 %v2642, %v2642
  %v2645 = vadd.f32 %v2643, %v2644
  %v2646 = vrot.slane %v2645, 4
  %v2647 = vadd.f32 %v2645, %v2646
  %v2648 = vrot.slane %v2647, 2
  %v2649 = vadd.f32 %v2647, %v2648
  %v2650 = vrot.slane %v2649, 1
  %v2651 = vadd.f32 %v2649, %v2650
  %2652 = vmatprep.subr.mxu0 0.0
  %2653 = vmatpush1.msra.mxu0 %v2475
  %2654 = vmatprep.subr.mxu0 0.0
  %2655 = vmatpush1.msra.mxu0 %v2476
  %2656 = vmatprep.subr.mxu0 0.0
  %2657 = vmatpush1.msra.mxu0 %v2477
  %2658 = vmatprep.subr.mxu0 0.0
  %2659 = vmatpush1.msra.mxu0 %v2478
  %2660 = vmatprep.subr.mxu0 0.0
  %2661 = vmatpush1.msra.mxu0 %v2479
  %2662 = vmatprep.subr.mxu0 0.0
  %2663 = vmatpush1.msra.mxu0 %v2480
  %2664 = vmatprep.subr.mxu0 0.0
  %2665 = vmatpush1.msra.mxu0 %v2481
  %2666 = vmatprep.subr.mxu0 0.0
  %2667 = vmatpush1.msra.mxu0 %v2482
  %2668 = vmatprep.subr.mxu0 0.0
  %2669 = vmatpush1.msra.mxu0 %v2483
  %2670 = vmatprep.subr.mxu0 0.0
  %2671 = vmatpush1.msra.mxu0 %v2484
  %2672 = vmatprep.subr.mxu0 0.0
  %2673 = vmatpush1.msra.mxu0 %v2485
  %2674 = vmatprep.subr.mxu0 0.0
  %2675 = vmatpush1.msra.mxu0 %v2486
  %2676 = vmatprep.subr.mxu0 0.0
  %2677 = vmatpush1.msra.mxu0 %v2487
  %2678 = vmatprep.subr.mxu0 0.0
  %2679 = vmatpush1.msra.mxu0 %v2488
  %2680 = vmatprep.subr.mxu0 0.0
  %2681 = vmatpush1.msra.mxu0 %v2489
  %2682 = vmatprep.subr.mxu0 0.0
  %2683 = vmatpush1.msra.mxu0 %v2490
  %2684 = vmatprep.subr.mxu0 0.0
  %2685 = vmatpush1.msra.mxu0 0.0
  %2686 = vmatprep.subr.mxu0 0.0
  %2687 = vmatpush1.msra.mxu0 0.0
  %2688 = vmatprep.subr.mxu0 0.0
  %2689 = vmatpush1.msra.mxu0 0.0
  %2690 = vmatprep.subr.mxu0 0.0
  %2691 = vmatpush1.msra.mxu0 0.0
  %2692 = vmatprep.subr.mxu0 0.0
  %2693 = vmatpush1.msra.mxu0 0.0
  %2694 = vmatprep.subr.mxu0 0.0
  %2695 = vmatpush1.msra.mxu0 0.0
  %2696 = vmatprep.subr.mxu0 0.0
  %2697 = vmatpush1.msra.mxu0 0.0
  %2698 = vmatprep.subr.mxu0 0.0
  %2699 = vmatpush1.msra.mxu0 0.0
  %2700 = vmatprep.subr.mxu0 0.0
  %2701 = vmatpush1.msra.mxu0 0.0
  %2702 = vmatprep.subr.mxu0 0.0
  %2703 = vmatpush1.msra.mxu0 0.0
  %2704 = vmatprep.subr.mxu0 0.0
  %2705 = vmatpush1.msra.mxu0 0.0
  %2706 = vmatprep.subr.mxu0 0.0
  %2707 = vmatpush1.msra.mxu0 0.0
  %2708 = vmatprep.subr.mxu0 0.0
  %2709 = vmatpush1.msra.mxu0 0.0
  %2710 = vmatprep.subr.mxu0 0.0
  %2711 = vmatpush1.msra.mxu0 0.0
  %2712 = vmatprep.subr.mxu0 0.0
  %2713 = vmatpush1.msra.mxu0 0.0
  %2714 = vmatprep.subr.mxu0 0.0
  %2715 = vmatpush1.msra.mxu0 0.0
  %2716 = vmatprep.mubr.f32.mxu0 0.0
  %2717 = vmatmul.mubr.f32.gmra.mrb[0].mxu0 %v2651
  %v2718 = vpop.f32.mrb[0].mxu0
  %v2719 = vadd.f32 0.0, %v2718
  %v2720 = vpop.f32.mrb[0].mxu0
  %2721 = vdwg.mxu0
  %v2722 = vmul.f32 %v2719, 0.0078125
  %v2723 = vld [vmem:[%s41] sm:$0x1]
  %v2724 = vadd.f32 %v2722, 1e-05
  %v2725 = vrsqrt.pop %v2724
  %v2726 = vmul.f32 %v2723, %v2725
  %v2727 = vld [vmem:[%s43] sm:$0x1]
  %v2728 = vmul.f32 %v2561, %v2726
  %v2729 = vsub.f32 %v2727, %v2728
  %v2731 = vsel %vm724, %v2726, 0
  %2733 = vmatprep.subr.mxu0 0.0
  %2734 = vmatpush1.msra.mxu0 %v2562
  %2735 = vmatprep.subr.mxu0 0.0
  %2736 = vmatpush1.msra.mxu0 %v2563
  %2737 = vmatprep.subr.mxu0 0.0
  %2738 = vmatpush1.msra.mxu0 0.0
  %2739 = vmatprep.subr.mxu0 0.0
  %2740 = vmatpush1.msra.mxu0 0.0
  %2741 = vmatprep.subr.mxu0 0.0
  %2742 = vmatpush1.msra.mxu0 0.0
  %2743 = vmatprep.subr.mxu0 0.0
  %2744 = vmatpush1.msra.mxu0 0.0
  %2745 = vmatprep.subr.mxu0 0.0
  %2746 = vmatpush1.msra.mxu0 0.0
  %2747 = vmatprep.subr.mxu0 0.0
  %2748 = vmatpush1.msra.mxu0 0.0
  %2749 = vmatprep.subr.mxu0 0.0
  %2750 = vmatpush1.msra.mxu0 0.0
  %2751 = vmatprep.subr.mxu0 0.0
  %2752 = vmatpush1.msra.mxu0 0.0
  %2753 = vmatprep.subr.mxu0 0.0
  %2754 = vmatpush1.msra.mxu0 0.0
  %2755 = vmatprep.subr.mxu0 0.0
  %2756 = vmatpush1.msra.mxu0 0.0
  %2757 = vmatprep.subr.mxu0 0.0
  %2758 = vmatpush1.msra.mxu0 0.0
  %2759 = vmatprep.subr.mxu0 0.0
  %2760 = vmatpush1.msra.mxu0 0.0
  %2761 = vmatprep.subr.mxu0 0.0
  %2762 = vmatpush1.msra.mxu0 0.0
  %2763 = vmatprep.subr.mxu0 0.0
  %2764 = vmatpush1.msra.mxu0 0.0
  %2765 = vmatprep.subr.mxu0 0.0
  %2766 = vmatpush1.msra.mxu0 0.0
  %2767 = vmatprep.subr.mxu0 0.0
  %2768 = vmatpush1.msra.mxu0 0.0
  %2769 = vmatprep.subr.mxu0 0.0
  %2770 = vmatpush1.msra.mxu0 0.0
  %2771 = vmatprep.subr.mxu0 0.0
  %2772 = vmatpush1.msra.mxu0 0.0
  %2773 = vmatprep.subr.mxu0 0.0
  %2774 = vmatpush1.msra.mxu0 0.0
  %2775 = vmatprep.subr.mxu0 0.0
  %2776 = vmatpush1.msra.mxu0 0.0
  %2777 = vmatprep.subr.mxu0 0.0
  %2778 = vmatpush1.msra.mxu0 0.0
  %2779 = vmatprep.subr.mxu0 0.0
  %2780 = vmatpush1.msra.mxu0 0.0
  %2781 = vmatprep.subr.mxu0 0.0
  %2782 = vmatpush1.msra.mxu0 0.0
  %2783 = vmatprep.subr.mxu0 0.0
  %2784 = vmatpush1.msra.mxu0 0.0
  %2785 = vmatprep.subr.mxu0 0.0
  %2786 = vmatpush1.msra.mxu0 0.0
  %2787 = vmatprep.subr.mxu0 0.0
  %2788 = vmatpush1.msra.mxu0 0.0
  %2789 = vmatprep.subr.mxu0 0.0
  %2790 = vmatpush1.msra.mxu0 0.0
  %2791 = vmatprep.subr.mxu0 0.0
  %2792 = vmatpush1.msra.mxu0 0.0
  %2793 = vmatprep.subr.mxu0 0.0
  %2794 = vmatpush1.msra.mxu0 0.0
  %2795 = vmatprep.subr.mxu0 0.0
  %2796 = vmatpush1.msra.mxu0 0.0
  %2797 = vmatprep.mubr.f32.mxu0 0.0
  %2798 = vmatmul.mubr.f32.gmra.mrb[0].mxu0 %v2731
  %v2799 = vpop.f32.mrb[0].mxu0
  %v2800 = vadd.f32 0.0, %v2799
  %v2801 = vpop.f32.mrb[0].mxu0
  %2802 = vdwg.mxu0
  %v2803 = vlaneseq
  %v2804 = vshrl.u32 %v2803, 7
  %v2805 = vsub.s32 0, %v2804
  %v2806 = vrot.slane %v2800, %v2805
  %v2807 = vmul.f32 %v2466, %v2806
  %v2808 = vmul.f32 %v2467, %v2806
  %v2810 = vsel %vm724, %v2729, 0
  %2812 = vmatprep.subr.mxu0 0.0
  %2813 = vmatpush1.msra.mxu0 %v2562
  %2814 = vmatprep.subr.mxu0 0.0
  %2815 = vmatpush1.msra.mxu0 %v2563
  %2816 = vmatprep.subr.mxu0 0.0
  %2817 = vmatpush1.msra.mxu0 0.0
  %2818 = vmatprep.subr.mxu0 0.0
  %2819 = vmatpush1.msra.mxu0 0.0
  %2820 = vmatprep.subr.mxu0 0.0
  %2821 = vmatpush1.msra.mxu0 0.0
  %2822 = vmatprep.subr.mxu0 0.0
  %2823 = vmatpush1.msra.mxu0 0.0
  %2824 = vmatprep.subr.mxu0 0.0
  %2825 = vmatpush1.msra.mxu0 0.0
  %2826 = vmatprep.subr.mxu0 0.0
  %2827 = vmatpush1.msra.mxu0 0.0
  %2828 = vmatprep.subr.mxu0 0.0
  %2829 = vmatpush1.msra.mxu0 0.0
  %2830 = vmatprep.subr.mxu0 0.0
  %2831 = vmatpush1.msra.mxu0 0.0
  %2832 = vmatprep.subr.mxu0 0.0
  %2833 = vmatpush1.msra.mxu0 0.0
  %2834 = vmatprep.subr.mxu0 0.0
  %2835 = vmatpush1.msra.mxu0 0.0
  %2836 = vmatprep.subr.mxu0 0.0
  %2837 = vmatpush1.msra.mxu0 0.0
  %2838 = vmatprep.subr.mxu0 0.0
  %2839 = vmatpush1.msra.mxu0 0.0
  %2840 = vmatprep.subr.mxu0 0.0
  %2841 = vmatpush1.msra.mxu0 0.0
  %2842 = vmatprep.subr.mxu0 0.0
  %2843 = vmatpush1.msra.mxu0 0.0
  %2844 = vmatprep.subr.mxu0 0.0
  %2845 = vmatpush1.msra.mxu0 0.0
  %2846 = vmatprep.subr.mxu0 0.0
  %2847 = vmatpush1.msra.mxu0 0.0
  %2848 = vmatprep.subr.mxu0 0.0
  %2849 = vmatpush1.msra.mxu0 0.0
  %2850 = vmatprep.subr.mxu0 0.0
  %2851 = vmatpush1.msra.mxu0 0.0
  %2852 = vmatprep.subr.mxu0 0.0
  %2853 = vmatpush1.msra.mxu0 0.0
  %2854 = vmatprep.subr.mxu0 0.0
  %2855 = vmatpush1.msra.mxu0 0.0
  %2856 = vmatprep.subr.mxu0 0.0
  %2857 = vmatpush1.msra.mxu0 0.0
  %2858 = vmatprep.subr.mxu0 0.0
  %2859 = vmatpush1.msra.mxu0 0.0
  %2860 = vmatprep.subr.mxu0 0.0
  %2861 = vmatpush1.msra.mxu0 0.0
  %2862 = vmatprep.subr.mxu0 0.0
  %2863 = vmatpush1.msra.mxu0 0.0
  %2864 = vmatprep.subr.mxu0 0.0
  %2865 = vmatpush1.msra.mxu0 0.0
  %2866 = vmatprep.subr.mxu0 0.0
  %2867 = vmatpush1.msra.mxu0 0.0
  %2868 = vmatprep.subr.mxu0 0.0
  %2869 = vmatpush1.msra.mxu0 0.0
  %2870 = vmatprep.subr.mxu0 0.0
  %2871 = vmatpush1.msra.mxu0 0.0
  %2872 = vmatprep.subr.mxu0 0.0
  %2873 = vmatpush1.msra.mxu0 0.0
  %2874 = vmatprep.subr.mxu0 0.0
  %2875 = vmatpush1.msra.mxu0 0.0
  %2876 = vmatprep.mubr.f32.mxu0 0.0
  %2877 = vmatmul.mubr.f32.gmra.mrb[0].mxu0 %v2810
  %v2878 = vpop.f32.mrb[0].mxu0
  %v2879 = vadd.f32 0.0, %v2878
  %v2880 = vpop.f32.mrb[0].mxu0
  %2881 = vdwg.mxu0
  %v2882 = vlaneseq
  %v2883 = vshrl.u32 %v2882, 7
  %v2884 = vsub.s32 0, %v2883
  %v2885 = vrot.slane %v2879, %v2884
  %v2886 = vadd.f32 %v2807, %v2885
  %v2887 = vadd.f32 %v2808, %v2885
  %v2888 = vmax.f32 %v2886, 0.0
  %v2889 = vmax.f32 %v2887, 0.0
  %v2890 = vld [vmem:[%s45] sm:$0xff]
  %v2891 = vld [vmem:[%s45 + $0x8] sm:$0xff]
  %v2892 = vld [vmem:[%s45 + $0x10] sm:$0xff]
  %v2893 = vld [vmem:[%s45 + $0x18] sm:$0xff]
  %v2895 = vsel %vm724, %v2890, 0
  %v2898 = vsel %vm724, %v2891, 0
  %v2901 = vsel %vm724, %v2892, 0
  %v2904 = vsel %vm724, %v2893, 0
  %2906 = vmatprep.subr.mxu0 0.0
  %2907 = vmatpush1.msra.mxu0 %v2888
  %2908 = vmatprep.subr.mxu0 0.0
  %2909 = vmatpush1.msra.mxu0 %v2889
  %2910 = vmatprep.subr.mxu0 0.0
  %2911 = vmatpush1.msra.mxu0 0.0
  %2912 = vmatprep.subr.mxu0 0.0
  %2913 = vmatpush1.msra.mxu0 0.0
  %2914 = vmatprep.subr.mxu0 0.0
  %2915 = vmatpush1.msra.mxu0 0.0
  %2916 = vmatprep.subr.mxu0 0.0
  %2917 = vmatpush1.msra.mxu0 0.0
  %2918 = vmatprep.subr.mxu0 0.0
  %2919 = vmatpush1.msra.mxu0 0.0
  %2920 = vmatprep.subr.mxu0 0.0
  %2921 = vmatpush1.msra.mxu0 0.0
  %2922 = vmatprep.subr.mxu0 0.0
  %2923 = vmatpush1.msra.mxu0 0.0
  %2924 = vmatprep.subr.mxu0 0.0
  %2925 = vmatpush1.msra.mxu0 0.0
  %2926 = vmatprep.subr.mxu0 0.0
  %2927 = vmatpush1.msra.mxu0 0.0
  %2928 = vmatprep.subr.mxu0 0.0
  %2929 = vmatpush1.msra.mxu0 0.0
  %2930 = vmatprep.subr.mxu0 0.0
  %2931 = vmatpush1.msra.mxu0 0.0
  %2932 = vmatprep.subr.mxu0 0.0
  %2933 = vmatpush1.msra.mxu0 0.0
  %2934 = vmatprep.subr.mxu0 0.0
  %2935 = vmatpush1.msra.mxu0 0.0
  %2936 = vmatprep.subr.mxu0 0.0
  %2937 = vmatpush1.msra.mxu0 0.0
  %2938 = vmatprep.subr.mxu0 0.0
  %2939 = vmatpush1.msra.mxu0 0.0
  %2940 = vmatprep.subr.mxu0 0.0
  %2941 = vmatpush1.msra.mxu0 0.0
  %2942 = vmatprep.subr.mxu0 0.0
  %2943 = vmatpush1.msra.mxu0 0.0
  %2944 = vmatprep.subr.mxu0 0.0
  %2945 = vmatpush1.msra.mxu0 0.0
  %2946 = vmatprep.subr.mxu0 0.0
  %2947 = vmatpush1.msra.mxu0 0.0
  %2948 = vmatprep.subr.mxu0 0.0
  %2949 = vmatpush1.msra.mxu0 0.0
  %2950 = vmatprep.subr.mxu0 0.0
  %2951 = vmatpush1.msra.mxu0 0.0
  %2952 = vmatprep.subr.mxu0 0.0
  %2953 = vmatpush1.msra.mxu0 0.0
  %2954 = vmatprep.subr.mxu0 0.0
  %2955 = vmatpush1.msra.mxu0 0.0
  %2956 = vmatprep.subr.mxu0 0.0
  %2957 = vmatpush1.msra.mxu0 0.0
  %2958 = vmatprep.subr.mxu0 0.0
  %2959 = vmatpush1.msra.mxu0 0.0
  %2960 = vmatprep.subr.mxu0 0.0
  %2961 = vmatpush1.msra.mxu0 0.0
  %2962 = vmatprep.subr.mxu0 0.0
  %2963 = vmatpush1.msra.mxu0 0.0
  %2964 = vmatprep.subr.mxu0 0.0
  %2965 = vmatpush1.msra.mxu0 0.0
  %2966 = vmatprep.subr.mxu0 0.0
  %2967 = vmatpush1.msra.mxu0 0.0
  %2968 = vmatprep.subr.mxu0 0.0
  %2969 = vmatpush1.msra.mxu0 0.0
  %2970 = vmatprep.mubr.f32.mxu0 0.0
  %2971 = vmatmul.mubr.f32.gmra.mrb[0].mxu0 %v2895
  %v2972 = vpop.f32.mrb[0].mxu0
  %v2973 = vadd.f32 0.0, %v2972
  %v2974 = vpop.f32.mrb[0].mxu0
  %2975 = vmatprep.mubr.f32.mxu0 0.0
  %2976 = vmatmul.mubr.f32.gmra.mrb[0].mxu0 %v2898
  %v2977 = vpop.f32.mrb[0].mxu0
  %v2978 = vadd.f32 0.0, %v2977
  %v2979 = vpop.f32.mrb[0].mxu0
  %2980 = vmatprep.mubr.f32.mxu0 0.0
  %2981 = vmatmul.mubr.f32.gmra.mrb[0].mxu0 %v2901
  %v2982 = vpop.f32.mrb[0].mxu0
  %v2983 = vadd.f32 0.0, %v2982
  %v2984 = vpop.f32.mrb[0].mxu0
  %2985 = vmatprep.mubr.f32.mxu0 0.0
  %2986 = vmatmul.mubr.f32.gmra.mrb[0].mxu0 %v2904
  %v2987 = vpop.f32.mrb[0].mxu0
  %v2988 = vadd.f32 0.0, %v2987
  %v2989 = vpop.f32.mrb[0].mxu0
  %2990 = vdwg.mxu0
  %v2991 = vld [vmem:[%s47] sm:$0xff]
  %v2992 = vld [vmem:[%s47 + $0x8] sm:$0xff]
  %v2993 = vld [vmem:[%s47 + $0x10] sm:$0xff]
  %v2994 = vld [vmem:[%s47 + $0x18] sm:$0xff]
  %v2995 = vld [vmem:[%s47 + $0x20] sm:$0xff]
  %v2996 = vld [vmem:[%s47 + $0x28] sm:$0xff]
  %v2997 = vld [vmem:[%s47 + $0x30] sm:$0xff]
  %v2998 = vld [vmem:[%s47 + $0x38] sm:$0xff]
  %v2999 = vld [vmem:[%s47 + $0x40] sm:$0xff]
  %v3000 = vld [vmem:[%s47 + $0x48] sm:$0xff]
  %v3001 = vld [vmem:[%s47 + $0x50] sm:$0xff]
  %v3002 = vld [vmem:[%s47 + $0x58] sm:$0xff]
  %v3003 = vld [vmem:[%s47 + $0x60] sm:$0xff]
  %v3004 = vld [vmem:[%s47 + $0x68] sm:$0xff]
  %v3005 = vld [vmem:[%s47 + $0x70] sm:$0xff]
  %v3006 = vld [vmem:[%s47 + $0x78] sm:$0xff]
  %v3007 = vld [vmem:[%s47 + $0x80] sm:$0xff]
  %v3008 = vld [vmem:[%s47 + $0x88] sm:$0xff]
  %v3009 = vld [vmem:[%s47 + $0x90] sm:$0xff]
  %v3010 = vld [vmem:[%s47 + $0x98] sm:$0xff]
  %v3011 = vld [vmem:[%s47 + $0xa0] sm:$0xff]
  %v3012 = vld [vmem:[%s47 + $0xa8] sm:$0xff]
  %v3013 = vld [vmem:[%s47 + $0xb0] sm:$0xff]
  %v3014 = vld [vmem:[%s47 + $0xb8] sm:$0xff]
  %v3015 = vld [vmem:[%s47 + $0xc0] sm:$0xff]
  %v3016 = vld [vmem:[%s47 + $0xc8] sm:$0xff]
  %v3017 = vld [vmem:[%s47 + $0xd0] sm:$0xff]
  %v3018 = vld [vmem:[%s47 + $0xd8] sm:$0xff]
  %v3019 = vld [vmem:[%s47 + $0xe0] sm:$0xff]
  %v3020 = vld [vmem:[%s47 + $0xe8] sm:$0xff]
  %v3021 = vld [vmem:[%s47 + $0xf0] sm:$0xff]
  %v3022 = vld [vmem:[%s47 + $0xf8] sm:$0xff]
  %s3023 = scalar_lea.vmem %s45, 32
  %v3024 = vld [vmem:[%s3023] sm:$0xff]
  %v3025 = vld [vmem:[%s3023 + $0x8] sm:$0xff]
  %v3026 = vld [vmem:[%s3023 + $0x10] sm:$0xff]
  %v3027 = vld [vmem:[%s3023 + $0x18] sm:$0xff]
  %v3029 = vsel %vm724, %v3024, 0
  %v3032 = vsel %vm724, %v3025, 0
  %v3035 = vsel %vm724, %v3026, 0
  %v3038 = vsel %vm724, %v3027, 0
  %3040 = vmatprep.subr.mxu0 0.0
  %3041 = vmatpush1.msra.mxu0 %v2888
  %3042 = vmatprep.subr.mxu0 0.0
  %3043 = vmatpush1.msra.mxu0 %v2889
  %3044 = vmatprep.subr.mxu0 0.0
  %3045 = vmatpush1.msra.mxu0 0.0
  %3046 = vmatprep.subr.mxu0 0.0
  %3047 = vmatpush1.msra.mxu0 0.0
  %3048 = vmatprep.subr.mxu0 0.0
  %3049 = vmatpush1.msra.mxu0 0.0
  %3050 = vmatprep.subr.mxu0 0.0
  %3051 = vmatpush1.msra.mxu0 0.0
  %3052 = vmatprep.subr.mxu0 0.0
  %3053 = vmatpush1.msra.mxu0 0.0
  %3054 = vmatprep.subr.mxu0 0.0
  %3055 = vmatpush1.msra.mxu0 0.0
  %3056 = vmatprep.subr.mxu0 0.0
  %3057 = vmatpush1.msra.mxu0 0.0
  %3058 = vmatprep.subr.mxu0 0.0
  %3059 = vmatpush1.msra.mxu0 0.0
  %3060 = vmatprep.subr.mxu0 0.0
  %3061 = vmatpush1.msra.mxu0 0.0
  %3062 = vmatprep.subr.mxu0 0.0
  %3063 = vmatpush1.msra.mxu0 0.0
  %3064 = vmatprep.subr.mxu0 0.0
  %3065 = vmatpush1.msra.mxu0 0.0
  %3066 = vmatprep.subr.mxu0 0.0
  %3067 = vmatpush1.msra.mxu0 0.0
  %3068 = vmatprep.subr.mxu0 0.0
  %3069 = vmatpush1.msra.mxu0 0.0
  %3070 = vmatprep.subr.mxu0 0.0
  %3071 = vmatpush1.msra.mxu0 0.0
  %3072 = vmatprep.subr.mxu0 0.0
  %3073 = vmatpush1.msra.mxu0 0.0
  %3074 = vmatprep.subr.mxu0 0.0
  %3075 = vmatpush1.msra.mxu0 0.0
  %3076 = vmatprep.subr.mxu0 0.0
  %3077 = vmatpush1.msra.mxu0 0.0
  %3078 = vmatprep.subr.mxu0 0.0
  %3079 = vmatpush1.msra.mxu0 0.0
  %3080 = vmatprep.subr.mxu0 0.0
  %3081 = vmatpush1.msra.mxu0 0.0
  %3082 = vmatprep.subr.mxu0 0.0
  %3083 = vmatpush1.msra.mxu0 0.0
  %3084 = vmatprep.subr.mxu0 0.0
  %3085 = vmatpush1.msra.mxu0 0.0
  %3086 = vmatprep.subr.mxu0 0.0
  %3087 = vmatpush1.msra.mxu0 0.0
  %3088 = vmatprep.subr.mxu0 0.0
  %3089 = vmatpush1.msra.mxu0 0.0
  %3090 = vmatprep.subr.mxu0 0.0
  %3091 = vmatpush1.msra.mxu0 0.0
  %3092 = vmatprep.subr.mxu0 0.0
  %3093 = vmatpush1.msra.mxu0 0.0
  %3094 = vmatprep.subr.mxu0 0.0
  %3095 = vmatpush1.msra.mxu0 0.0
  %3096 = vmatprep.subr.mxu0 0.0
  %3097 = vmatpush1.msra.mxu0 0.0
  %3098 = vmatprep.subr.mxu0 0.0
  %3099 = vmatpush1.msra.mxu0 0.0
  %3100 = vmatprep.subr.mxu0 0.0
  %3101 = vmatpush1.msra.mxu0 0.0
  %3102 = vmatprep.subr.mxu0 0.0
  %3103 = vmatpush1.msra.mxu0 0.0
  %3104 = vmatprep.mubr.f32.mxu0 0.0
  %3105 = vmatmul.mubr.f32.gmra.mrb[0].mxu0 %v3029
  %v3106 = vpop.f32.mrb[0].mxu0
  %v3107 = vadd.f32 0.0, %v3106
  %v3108 = vpop.f32.mrb[0].mxu0
  %3109 = vmatprep.mubr.f32.mxu0 0.0
  %3110 = vmatmul.mubr.f32.gmra.mrb[0].mxu0 %v3032
  %v3111 = vpop.f32.mrb[0].mxu0
  %v3112 = vadd.f32 0.0, %v3111
  %v3113 = vpop.f32.mrb[0].mxu0
  %3114 = vmatprep.mubr.f32.mxu0 0.0
  %3115 = vmatmul.mubr.f32.gmra.mrb[0].mxu0 %v3035
  %v3116 = vpop.f32.mrb[0].mxu0
  %v3117 = vadd.f32 0.0, %v3116
  %v3118 = vpop.f32.mrb[0].mxu0
  %3119 = vmatprep.mubr.f32.mxu0 0.0
  %3120 = vmatmul.mubr.f32.gmra.mrb[0].mxu0 %v3038
  %v3121 = vpop.f32.mrb[0].mxu0
  %v3122 = vadd.f32 0.0, %v3121
  %v3123 = vpop.f32.mrb[0].mxu0
  %3124 = vdwg.mxu0
  %s3125 = scalar_lea.vmem %s47, 256
  %v3126 = vld [vmem:[%s3125] sm:$0xff]
  %v3127 = vld [vmem:[%s3125 + $0x8] sm:$0xff]
  %v3128 = vld [vmem:[%s3125 + $0x10] sm:$0xff]
  %v3129 = vld [vmem:[%s3125 + $0x18] sm:$0xff]
  %v3130 = vld [vmem:[%s3125 + $0x20] sm:$0xff]
  %v3131 = vld [vmem:[%s3125 + $0x28] sm:$0xff]
  %v3132 = vld [vmem:[%s3125 + $0x30] sm:$0xff]
  %v3133 = vld [vmem:[%s3125 + $0x38] sm:$0xff]
  %v3134 = vld [vmem:[%s3125 + $0x40] sm:$0xff]
  %v3135 = vld [vmem:[%s3125 + $0x48] sm:$0xff]
  %v3136 = vld [vmem:[%s3125 + $0x50] sm:$0xff]
  %v3137 = vld [vmem:[%s3125 + $0x58] sm:$0xff]
  %v3138 = vld [vmem:[%s3125 + $0x60] sm:$0xff]
  %v3139 = vld [vmem:[%s3125 + $0x68] sm:$0xff]
  %v3140 = vld [vmem:[%s3125 + $0x70] sm:$0xff]
  %v3141 = vld [vmem:[%s3125 + $0x78] sm:$0xff]
  %v3142 = vld [vmem:[%s3125 + $0x80] sm:$0xff]
  %v3143 = vld [vmem:[%s3125 + $0x88] sm:$0xff]
  %v3144 = vld [vmem:[%s3125 + $0x90] sm:$0xff]
  %v3145 = vld [vmem:[%s3125 + $0x98] sm:$0xff]
  %v3146 = vld [vmem:[%s3125 + $0xa0] sm:$0xff]
  %v3147 = vld [vmem:[%s3125 + $0xa8] sm:$0xff]
  %v3148 = vld [vmem:[%s3125 + $0xb0] sm:$0xff]
  %v3149 = vld [vmem:[%s3125 + $0xb8] sm:$0xff]
  %v3150 = vld [vmem:[%s3125 + $0xc0] sm:$0xff]
  %v3151 = vld [vmem:[%s3125 + $0xc8] sm:$0xff]
  %v3152 = vld [vmem:[%s3125 + $0xd0] sm:$0xff]
  %v3153 = vld [vmem:[%s3125 + $0xd8] sm:$0xff]
  %v3154 = vld [vmem:[%s3125 + $0xe0] sm:$0xff]
  %v3155 = vld [vmem:[%s3125 + $0xe8] sm:$0xff]
  %v3156 = vld [vmem:[%s3125 + $0xf0] sm:$0xff]
  %v3157 = vld [vmem:[%s3125 + $0xf8] sm:$0xff]
  %3158 = vmatprep.subr.mxu0 %v3127
  %3159 = vmatpush1.msra.mxu0 %v3126
  %3160 = vmatprep.subr.mxu0 %v3129
  %3161 = vmatpush1.msra.mxu0 %v3128
  %3162 = vmatprep.subr.mxu0 %v3131
  %3163 = vmatpush1.msra.mxu0 %v3130
  %3164 = vmatprep.subr.mxu0 %v3133
  %3165 = vmatpush1.msra.mxu0 %v3132
  %3166 = vmatprep.subr.mxu0 %v3135
  %3167 = vmatpush1.msra.mxu0 %v3134
  %3168 = vmatprep.subr.mxu0 %v3137
  %3169 = vmatpush1.msra.mxu0 %v3136
  %3170 = vmatprep.subr.mxu0 %v3139
  %3171 = vmatpush1.msra.mxu0 %v3138
  %3172 = vmatprep.subr.mxu0 %v3141
  %3173 = vmatpush1.msra.mxu0 %v3140
  %3174 = vmatprep.subr.mxu0 %v3143
  %3175 = vmatpush1.msra.mxu0 %v3142
  %3176 = vmatprep.subr.mxu0 %v3145
  %3177 = vmatpush1.msra.mxu0 %v3144
  %3178 = vmatprep.subr.mxu0 %v3147
  %3179 = vmatpush1.msra.mxu0 %v3146
  %3180 = vmatprep.subr.mxu0 %v3149
  %3181 = vmatpush1.msra.mxu0 %v3148
  %3182 = vmatprep.subr.mxu0 %v3151
  %3183 = vmatpush1.msra.mxu0 %v3150
  %3184 = vmatprep.subr.mxu0 %v3153
  %3185 = vmatpush1.msra.mxu0 %v3152
  %3186 = vmatprep.subr.mxu0 %v3155
  %3187 = vmatpush1.msra.mxu0 %v3154
  %3188 = vmatprep.subr.mxu0 %v3157
  %3189 = vmatpush1.msra.mxu0 %v3156
  %3190 = vmatprep.subr.mxu0 0.0
  %3191 = vmatpush1.msra.mxu0 0.0
  %3192 = vmatprep.subr.mxu0 0.0
  %3193 = vmatpush1.msra.mxu0 0.0
  %3194 = vmatprep.subr.mxu0 0.0
  %3195 = vmatpush1.msra.mxu0 0.0
  %3196 = vmatprep.subr.mxu0 0.0
  %3197 = vmatpush1.msra.mxu0 0.0
  %3198 = vmatprep.subr.mxu0 0.0
  %3199 = vmatpush1.msra.mxu0 0.0
  %3200 = vmatprep.subr.mxu0 0.0
  %3201 = vmatpush1.msra.mxu0 0.0
  %3202 = vmatprep.subr.mxu0 0.0
  %3203 = vmatpush1.msra.mxu0 0.0
  %3204 = vmatprep.subr.mxu0 0.0
  %3205 = vmatpush1.msra.mxu0 0.0
  %3206 = vmatprep.subr.mxu0 0.0
  %3207 = vmatpush1.msra.mxu0 0.0
  %3208 = vmatprep.subr.mxu0 0.0
  %3209 = vmatpush1.msra.mxu0 0.0
  %3210 = vmatprep.subr.mxu0 0.0
  %3211 = vmatpush1.msra.mxu0 0.0
  %3212 = vmatprep.subr.mxu0 0.0
  %3213 = vmatpush1.msra.mxu0 0.0
  %3214 = vmatprep.subr.mxu0 0.0
  %3215 = vmatpush1.msra.mxu0 0.0
  %3216 = vmatprep.subr.mxu0 0.0
  %3217 = vmatpush1.msra.mxu0 0.0
  %3218 = vmatprep.subr.mxu0 0.0
  %3219 = vmatpush1.msra.mxu0 0.0
  %3220 = vmatprep.subr.mxu0 0.0
  %3221 = vmatpush1.msra.mxu0 0.0
  %3222 = vmatprep.mubr.f32.mxu0 0.0
  %3223 = vmatmul.mubr.f32.gmra.mrb[0].mxu0 %v3107
  %v3224 = vpop.f32.mrb[0].mxu0
  %v3225 = vadd.f32 0.0, %v3224
  %v3226 = vpop.f32.mrb[0].mxu0
  %v3227 = vadd.f32 0.0, %v3226
  %3228 = vmatprep.mubr.f32.mxu0 0.0
  %3229 = vmatmul.mubr.f32.gmra.mrb[0].mxu0 %v3112
  %v3230 = vpop.f32.mrb[0].mxu0
  %v3231 = vadd.f32 0.0, %v3230
  %v3232 = vpop.f32.mrb[0].mxu0
  %v3233 = vadd.f32 0.0, %v3232
  %3234 = vmatprep.mubr.f32.mxu0 0.0
  %3235 = vmatmul.mubr.f32.gmra.mrb[0].mxu0 %v3117
  %v3236 = vpop.f32.mrb[0].mxu0
  %v3237 = vadd.f32 0.0, %v3236
  %v3238 = vpop.f32.mrb[0].mxu0
  %v3239 = vadd.f32 0.0, %v3238
  %3240 = vmatprep.mubr.f32.mxu0 0.0
  %3241 = vmatmul.mubr.f32.gmra.mrb[0].mxu0 %v3122
  %v3242 = vpop.f32.mrb[0].mxu0
  %v3243 = vadd.f32 0.0, %v3242
  %v3244 = vpop.f32.mrb[0].mxu0
  %v3245 = vadd.f32 0.0, %v3244
  %3246 = vdwg.mxu0
  %3247 = vmatprep.subr.mxu0 %v2992
  %3248 = vmatpush1.msra.mxu0 %v2991
  %3249 = vmatprep.subr.mxu0 %v2994
  %3250 = vmatpush1.msra.mxu0 %v2993
  %3251 = vmatprep.subr.mxu0 %v2996
  %3252 = vmatpush1.msra.mxu0 %v2995
  %3253 = vmatprep.subr.mxu0 %v2998
  %3254 = vmatpush1.msra.mxu0 %v2997
  %3255 = vmatprep.subr.mxu0 %v3000
  %3256 = vmatpush1.msra.mxu0 %v2999
  %3257 = vmatprep.subr.mxu0 %v3002
  %3258 = vmatpush1.msra.mxu0 %v3001
  %3259 = vmatprep.subr.mxu0 %v3004
  %3260 = vmatpush1.msra.mxu0 %v3003
  %3261 = vmatprep.subr.mxu0 %v3006
  %3262 = vmatpush1.msra.mxu0 %v3005
  %3263 = vmatprep.subr.mxu0 %v3008
  %3264 = vmatpush1.msra.mxu0 %v3007
  %3265 = vmatprep.subr.mxu0 %v3010
  %3266 = vmatpush1.msra.mxu0 %v3009
  %3267 = vmatprep.subr.mxu0 %v3012
  %3268 = vmatpush1.msra.mxu0 %v3011
  %3269 = vmatprep.subr.mxu0 %v3014
  %3270 = vmatpush1.msra.mxu0 %v3013
  %3271 = vmatprep.subr.mxu0 %v3016
  %3272 = vmatpush1.msra.mxu0 %v3015
  %3273 = vmatprep.subr.mxu0 %v3018
  %3274 = vmatpush1.msra.mxu0 %v3017
  %3275 = vmatprep.subr.mxu0 %v3020
  %3276 = vmatpush1.msra.mxu0 %v3019
  %3277 = vmatprep.subr.mxu0 %v3022
  %3278 = vmatpush1.msra.mxu0 %v3021
  %3279 = vmatprep.subr.mxu0 0.0
  %3280 = vmatpush1.msra.mxu0 0.0
  %3281 = vmatprep.subr.mxu0 0.0
  %3282 = vmatpush1.msra.mxu0 0.0
  %3283 = vmatprep.subr.mxu0 0.0
  %3284 = vmatpush1.msra.mxu0 0.0
  %3285 = vmatprep.subr.mxu0 0.0
  %3286 = vmatpush1.msra.mxu0 0.0
  %3287 = vmatprep.subr.mxu0 0.0
  %3288 = vmatpush1.msra.mxu0 0.0
  %3289 = vmatprep.subr.mxu0 0.0
  %3290 = vmatpush1.msra.mxu0 0.0
  %3291 = vmatprep.subr.mxu0 0.0
  %3292 = vmatpush1.msra.mxu0 0.0
  %3293 = vmatprep.subr.mxu0 0.0
  %3294 = vmatpush1.msra.mxu0 0.0
  %3295 = vmatprep.subr.mxu0 0.0
  %3296 = vmatpush1.msra.mxu0 0.0
  %3297 = vmatprep.subr.mxu0 0.0
  %3298 = vmatpush1.msra.mxu0 0.0
  %3299 = vmatprep.subr.mxu0 0.0
  %3300 = vmatpush1.msra.mxu0 0.0
  %3301 = vmatprep.subr.mxu0 0.0
  %3302 = vmatpush1.msra.mxu0 0.0
  %3303 = vmatprep.subr.mxu0 0.0
  %3304 = vmatpush1.msra.mxu0 0.0
  %3305 = vmatprep.subr.mxu0 0.0
  %3306 = vmatpush1.msra.mxu0 0.0
  %3307 = vmatprep.subr.mxu0 0.0
  %3308 = vmatpush1.msra.mxu0 0.0
  %3309 = vmatprep.subr.mxu0 0.0
  %3310 = vmatpush1.msra.mxu0 0.0
  %3311 = vmatprep.mubr.f32.mxu0 0.0
  %3312 = vmatmul.mubr.f32.gmra.mrb[0].mxu0 %v2973
  %v3313 = vpop.f32.mrb[0].mxu0
  %v3314 = vadd.f32 %v3225, %v3313
  %v3315 = vpop.f32.mrb[0].mxu0
  %v3316 = vadd.f32 %v3227, %v3315
  %3317 = vmatprep.mubr.f32.mxu0 0.0
  %3318 = vmatmul.mubr.f32.gmra.mrb[0].mxu0 %v2978
  %v3319 = vpop.f32.mrb[0].mxu0
  %v3320 = vadd.f32 %v3231, %v3319
  %v3321 = vpop.f32.mrb[0].mxu0
  %v3322 = vadd.f32 %v3233, %v3321
  %3323 = vmatprep.mubr.f32.mxu0 0.0
  %3324 = vmatmul.mubr.f32.gmra.mrb[0].mxu0 %v2983
  %v3325 = vpop.f32.mrb[0].mxu0
  %v3326 = vadd.f32 %v3237, %v3325
  %v3327 = vpop.f32.mrb[0].mxu0
  %v3328 = vadd.f32 %v3239, %v3327
  %3329 = vmatprep.mubr.f32.mxu0 0.0
  %3330 = vmatmul.mubr.f32.gmra.mrb[0].mxu0 %v2988
  %v3331 = vpop.f32.mrb[0].mxu0
  %v3332 = vadd.f32 %v3243, %v3331
  %v3333 = vpop.f32.mrb[0].mxu0
  %v3334 = vadd.f32 %v3245, %v3333
  %3335 = vdwg.mxu0
  %s3336 = scalar_lea.vmem %s45, 64
  %v3337 = vld [vmem:[%s3336] sm:$0xff]
  %v3338 = vld [vmem:[%s3336 + $0x8] sm:$0xff]
  %v3339 = vld [vmem:[%s3336 + $0x10] sm:$0xff]
  %v3340 = vld [vmem:[%s3336 + $0x18] sm:$0xff]
  %v3342 = vsel %vm724, %v3337, 0
  %v3345 = vsel %vm724, %v3338, 0
  %v3348 = vsel %vm724, %v3339, 0
  %v3351 = vsel %vm724, %v3340, 0
  %3353 = vmatprep.subr.mxu0 0.0
  %3354 = vmatpush1.msra.mxu0 %v2888
  %3355 = vmatprep.subr.mxu0 0.0
  %3356 = vmatpush1.msra.mxu0 %v2889
  %3357 = vmatprep.subr.mxu0 0.0
  %3358 = vmatpush1.msra.mxu0 0.0
  %3359 = vmatprep.subr.mxu0 0.0
  %3360 = vmatpush1.msra.mxu0 0.0
  %3361 = vmatprep.subr.mxu0 0.0
  %3362 = vmatpush1.msra.mxu0 0.0
  %3363 = vmatprep.subr.mxu0 0.0
  %3364 = vmatpush1.msra.mxu0 0.0
  %3365 = vmatprep.subr.mxu0 0.0
  %3366 = vmatpush1.msra.mxu0 0.0
  %3367 = vmatprep.subr.mxu0 0.0
  %3368 = vmatpush1.msra.mxu0 0.0
  %3369 = vmatprep.subr.mxu0 0.0
  %3370 = vmatpush1.msra.mxu0 0.0
  %3371 = vmatprep.subr.mxu0 0.0
  %3372 = vmatpush1.msra.mxu0 0.0
  %3373 = vmatprep.subr.mxu0 0.0
  %3374 = vmatpush1.msra.mxu0 0.0
  %3375 = vmatprep.subr.mxu0 0.0
  %3376 = vmatpush1.msra.mxu0 0.0
  %3377 = vmatprep.subr.mxu0 0.0
  %3378 = vmatpush1.msra.mxu0 0.0
  %3379 = vmatprep.subr.mxu0 0.0
  %3380 = vmatpush1.msra.mxu0 0.0
  %3381 = vmatprep.subr.mxu0 0.0
  %3382 = vmatpush1.msra.mxu0 0.0
  %3383 = vmatprep.subr.mxu0 0.0
  %3384 = vmatpush1.msra.mxu0 0.0
  %3385 = vmatprep.subr.mxu0 0.0
  %3386 = vmatpush1.msra.mxu0 0.0
  %3387 = vmatprep.subr.mxu0 0.0
  %3388 = vmatpush1.msra.mxu0 0.0
  %3389 = vmatprep.subr.mxu0 0.0
  %3390 = vmatpush1.msra.mxu0 0.0
  %3391 = vmatprep.subr.mxu0 0.0
  %3392 = vmatpush1.msra.mxu0 0.0
  %3393 = vmatprep.subr.mxu0 0.0
  %3394 = vmatpush1.msra.mxu0 0.0
  %3395 = vmatprep.subr.mxu0 0.0
  %3396 = vmatpush1.msra.mxu0 0.0
  %3397 = vmatprep.subr.mxu0 0.0
  %3398 = vmatpush1.msra.mxu0 0.0
  %3399 = vmatprep.subr.mxu0 0.0
  %3400 = vmatpush1.msra.mxu0 0.0
  %3401 = vmatprep.subr.mxu0 0.0
  %3402 = vmatpush1.msra.mxu0 0.0
  %3403 = vmatprep.subr.mxu0 0.0
  %3404 = vmatpush1.msra.mxu0 0.0
  %3405 = vmatprep.subr.mxu0 0.0
  %3406 = vmatpush1.msra.mxu0 0.0
  %3407 = vmatprep.subr.mxu0 0.0
  %3408 = vmatpush1.msra.mxu0 0.0
  %3409 = vmatprep.subr.mxu0 0.0
  %3410 = vmatpush1.msra.mxu0 0.0
  %3411 = vmatprep.subr.mxu0 0.0
  %3412 = vmatpush1.msra.mxu0 0.0
  %3413 = vmatprep.subr.mxu0 0.0
  %3414 = vmatpush1.msra.mxu0 0.0
  %3415 = vmatprep.subr.mxu0 0.0
  %3416 = vmatpush1.msra.mxu0 0.0
  %3417 = vmatprep.mubr.f32.mxu0 0.0
  %3418 = vmatmul.mubr.f32.gmra.mrb[0].mxu0 %v3342
  %v3419 = vpop.f32.mrb[0].mxu0
  %v3420 = vadd.f32 0.0, %v3419
  %v3421 = vpop.f32.mrb[0].mxu0
  %3422 = vmatprep.mubr.f32.mxu0 0.0
  %3423 = vmatmul.mubr.f32.gmra.mrb[0].mxu0 %v3345
  %v3424 = vpop.f32.mrb[0].mxu0
  %v3425 = vadd.f32 0.0, %v3424
  %v3426 = vpop.f32.mrb[0].mxu0
  %3427 = vmatprep.mubr.f32.mxu0 0.0
  %3428 = vmatmul.mubr.f32.gmra.mrb[0].mxu0 %v3348
  %v3429 = vpop.f32.mrb[0].mxu0
  %v3430 = vadd.f32 0.0, %v3429
  %v3431 = vpop.f32.mrb[0].mxu0
  %3432 = vmatprep.mubr.f32.mxu0 0.0
  %3433 = vmatmul.mubr.f32.gmra.mrb[0].mxu0 %v3351
  %v3434 = vpop.f32.mrb[0].mxu0
  %v3435 = vadd.f32 0.0, %v3434
  %v3436 = vpop.f32.mrb[0].mxu0
  %3437 = vdwg.mxu0
  %s3438 = scalar_lea.vmem %s47, 512
  %v3439 = vld [vmem:[%s3438] sm:$0xff]
  %v3440 = vld [vmem:[%s3438 + $0x8] sm:$0xff]
  %v3441 = vld [vmem:[%s3438 + $0x10] sm:$0xff]
  %v3442 = vld [vmem:[%s3438 + $0x18] sm:$0xff]
  %v3443 = vld [vmem:[%s3438 + $0x20] sm:$0xff]
  %v3444 = vld [vmem:[%s3438 + $0x28] sm:$0xff]
  %v3445 = vld [vmem:[%s3438 + $0x30] sm:$0xff]
  %v3446 = vld [vmem:[%s3438 + $0x38] sm:$0xff]
  %v3447 = vld [vmem:[%s3438 + $0x40] sm:$0xff]
  %v3448 = vld [vmem:[%s3438 + $0x48] sm:$0xff]
  %v3449 = vld [vmem:[%s3438 + $0x50] sm:$0xff]
  %v3450 = vld [vmem:[%s3438 + $0x58] sm:$0xff]
  %v3451 = vld [vmem:[%s3438 + $0x60] sm:$0xff]
  %v3452 = vld [vmem:[%s3438 + $0x68] sm:$0xff]
  %v3453 = vld [vmem:[%s3438 + $0x70] sm:$0xff]
  %v3454 = vld [vmem:[%s3438 + $0x78] sm:$0xff]
  %v3455 = vld [vmem:[%s3438 + $0x80] sm:$0xff]
  %v3456 = vld [vmem:[%s3438 + $0x88] sm:$0xff]
  %v3457 = vld [vmem:[%s3438 + $0x90] sm:$0xff]
  %v3458 = vld [vmem:[%s3438 + $0x98] sm:$0xff]
  %v3459 = vld [vmem:[%s3438 + $0xa0] sm:$0xff]
  %v3460 = vld [vmem:[%s3438 + $0xa8] sm:$0xff]
  %v3461 = vld [vmem:[%s3438 + $0xb0] sm:$0xff]
  %v3462 = vld [vmem:[%s3438 + $0xb8] sm:$0xff]
  %v3463 = vld [vmem:[%s3438 + $0xc0] sm:$0xff]
  %v3464 = vld [vmem:[%s3438 + $0xc8] sm:$0xff]
  %v3465 = vld [vmem:[%s3438 + $0xd0] sm:$0xff]
  %v3466 = vld [vmem:[%s3438 + $0xd8] sm:$0xff]
  %v3467 = vld [vmem:[%s3438 + $0xe0] sm:$0xff]
  %v3468 = vld [vmem:[%s3438 + $0xe8] sm:$0xff]
  %v3469 = vld [vmem:[%s3438 + $0xf0] sm:$0xff]
  %v3470 = vld [vmem:[%s3438 + $0xf8] sm:$0xff]
  %3471 = vmatprep.subr.mxu0 %v3440
  %3472 = vmatpush1.msra.mxu0 %v3439
  %3473 = vmatprep.subr.mxu0 %v3442
  %3474 = vmatpush1.msra.mxu0 %v3441
  %3475 = vmatprep.subr.mxu0 %v3444
  %3476 = vmatpush1.msra.mxu0 %v3443
  %3477 = vmatprep.subr.mxu0 %v3446
  %3478 = vmatpush1.msra.mxu0 %v3445
  %3479 = vmatprep.subr.mxu0 %v3448
  %3480 = vmatpush1.msra.mxu0 %v3447
  %3481 = vmatprep.subr.mxu0 %v3450
  %3482 = vmatpush1.msra.mxu0 %v3449
  %3483 = vmatprep.subr.mxu0 %v3452
  %3484 = vmatpush1.msra.mxu0 %v3451
  %3485 = vmatprep.subr.mxu0 %v3454
  %3486 = vmatpush1.msra.mxu0 %v3453
  %3487 = vmatprep.subr.mxu0 %v3456
  %3488 = vmatpush1.msra.mxu0 %v3455
  %3489 = vmatprep.subr.mxu0 %v3458
  %3490 = vmatpush1.msra.mxu0 %v3457
  %3491 = vmatprep.subr.mxu0 %v3460
  %3492 = vmatpush1.msra.mxu0 %v3459
  %3493 = vmatprep.subr.mxu0 %v3462
  %3494 = vmatpush1.msra.mxu0 %v3461
  %3495 = vmatprep.subr.mxu0 %v3464
  %3496 = vmatpush1.msra.mxu0 %v3463
  %3497 = vmatprep.subr.mxu0 %v3466
  %3498 = vmatpush1.msra.mxu0 %v3465
  %3499 = vmatprep.subr.mxu0 %v3468
  %3500 = vmatpush1.msra.mxu0 %v3467
  %3501 = vmatprep.subr.mxu0 %v3470
  %3502 = vmatpush1.msra.mxu0 %v3469
  %3503 = vmatprep.subr.mxu0 0.0
  %3504 = vmatpush1.msra.mxu0 0.0
  %3505 = vmatprep.subr.mxu0 0.0
  %3506 = vmatpush1.msra.mxu0 0.0
  %3507 = vmatprep.subr.mxu0 0.0
  %3508 = vmatpush1.msra.mxu0 0.0
  %3509 = vmatprep.subr.mxu0 0.0
  %3510 = vmatpush1.msra.mxu0 0.0
  %3511 = vmatprep.subr.mxu0 0.0
  %3512 = vmatpush1.msra.mxu0 0.0
  %3513 = vmatprep.subr.mxu0 0.0
  %3514 = vmatpush1.msra.mxu0 0.0
  %3515 = vmatprep.subr.mxu0 0.0
  %3516 = vmatpush1.msra.mxu0 0.0
  %3517 = vmatprep.subr.mxu0 0.0
  %3518 = vmatpush1.msra.mxu0 0.0
  %3519 = vmatprep.subr.mxu0 0.0
  %3520 = vmatpush1.msra.mxu0 0.0
  %3521 = vmatprep.subr.mxu0 0.0
  %3522 = vmatpush1.msra.mxu0 0.0
  %3523 = vmatprep.subr.mxu0 0.0
  %3524 = vmatpush1.msra.mxu0 0.0
  %3525 = vmatprep.subr.mxu0 0.0
  %3526 = vmatpush1.msra.mxu0 0.0
  %3527 = vmatprep.subr.mxu0 0.0
  %3528 = vmatpush1.msra.mxu0 0.0
  %3529 = vmatprep.subr.mxu0 0.0
  %3530 = vmatpush1.msra.mxu0 0.0
  %3531 = vmatprep.subr.mxu0 0.0
  %3532 = vmatpush1.msra.mxu0 0.0
  %3533 = vmatprep.subr.mxu0 0.0
  %3534 = vmatpush1.msra.mxu0 0.0
  %3535 = vmatprep.mubr.f32.mxu0 0.0
  %3536 = vmatmul.mubr.f32.gmra.mrb[0].mxu0 %v3420
  %v3537 = vpop.f32.mrb[0].mxu0
  %v3538 = vadd.f32 0.0, %v3537
  %v3539 = vpop.f32.mrb[0].mxu0
  %v3540 = vadd.f32 0.0, %v3539
  %3541 = vmatprep.mubr.f32.mxu0 0.0
  %3542 = vmatmul.mubr.f32.gmra.mrb[0].mxu0 %v3425
  %v3543 = vpop.f32.mrb[0].mxu0
  %v3544 = vadd.f32 0.0, %v3543
  %v3545 = vpop.f32.mrb[0].mxu0
  %v3546 = vadd.f32 0.0, %v3545
  %3547 = vmatprep.mubr.f32.mxu0 0.0
  %3548 = vmatmul.mubr.f32.gmra.mrb[0].mxu0 %v3430
  %v3549 = vpop.f32.mrb[0].mxu0
  %v3550 = vadd.f32 0.0, %v3549
  %v3551 = vpop.f32.mrb[0].mxu0
  %v3552 = vadd.f32 0.0, %v3551
  %3553 = vmatprep.mubr.f32.mxu0 0.0
  %3554 = vmatmul.mubr.f32.gmra.mrb[0].mxu0 %v3435
  %v3555 = vpop.f32.mrb[0].mxu0
  %v3556 = vadd.f32 0.0, %v3555
  %v3557 = vpop.f32.mrb[0].mxu0
  %v3558 = vadd.f32 0.0, %v3557
  %3559 = vdwg.mxu0
  %v3560 = vadd.f32 %v3314, %v3538
  %v3561 = vadd.f32 %v3316, %v3540
  %v3562 = vadd.f32 %v3320, %v3544
  %v3563 = vadd.f32 %v3322, %v3546
  %v3564 = vadd.f32 %v3326, %v3550
  %v3565 = vadd.f32 %v3328, %v3552
  %v3566 = vadd.f32 %v3332, %v3556
  %v3567 = vadd.f32 %v3334, %v3558
  %v3568 = vld [vmem:[%s49] sm:$0x3]
  %v3570 = vlaneseq
  %v3571 = vshrl.u32 %v3570, 7
  %v3572 = vsub.s32 0, %v3571
  %v3573 = vrot.slane %v3568, %v3572
  %v3574 = vlaneseq
  %v3575 = vshrl.u32 %v3574, 7
  %v3576 = vsub.s32 1, %v3575
  %v3577 = vrot.slane %v3568, %v3576
  %v3580 = vadd.f32 %v3560, %v3573
  %v3581 = vadd.f32 %v3561, %v3577
  %v3582 = vadd.f32 %v3562, %v3573
  %v3583 = vadd.f32 %v3563, %v3577
  %v3584 = vadd.f32 %v3564, %v3573
  %v3585 = vadd.f32 %v3565, %v3577
  %v3586 = vadd.f32 %v3566, %v3573
  %v3587 = vadd.f32 %v3567, %v3577
  %v3588 = vadd.f32 %v3580, %v3582
  %v3589 = vadd.f32 %v3588, %v3584
  %v3590 = vadd.f32 %v3589, %v3586
  %v3591 = vrot.slane %v3590, 4
  %v3592 = vadd.f32 %v3590, %v3591
  %v3593 = vrot.slane %v3592, 2
  %v3594 = vadd.f32 %v3592, %v3593
  %v3595 = vrot.slane %v3594, 1
  %v3596 = vadd.f32 %v3594, %v3595
  %v3597 = vadd.f32 %v3581, %v3583
  %v3598 = vadd.f32 %v3597, %v3585
  %v3599 = vadd.f32 %v3598, %v3587
  %v3600 = vrot.slane %v3599, 4
  %v3601 = vadd.f32 %v3599, %v3600
  %v3602 = vrot.slane %v3601, 2
  %v3603 = vadd.f32 %v3601, %v3602
  %v3604 = vrot.slane %v3603, 1
  %v3605 = vadd.f32 %v3603, %v3604
  %v3606 = vld [vmem:[%s51] sm:$0xff]
  %v3607 = vld [vmem:[%s51 + $0x8] sm:$0xff]
  %v3608 = vld [vmem:[%s51 + $0x10] sm:$0xff]
  %v3609 = vld [vmem:[%s51 + $0x18] sm:$0xff]
  %v3610 = vld [vmem:[%s51 + $0x20] sm:$0xff]
  %v3611 = vld [vmem:[%s51 + $0x28] sm:$0xff]
  %v3612 = vld [vmem:[%s51 + $0x30] sm:$0xff]
  %v3613 = vld [vmem:[%s51 + $0x38] sm:$0xff]
  %v3614 = vld [vmem:[%s51 + $0x40] sm:$0xff]
  %v3615 = vld [vmem:[%s51 + $0x48] sm:$0xff]
  %v3616 = vld [vmem:[%s51 + $0x50] sm:$0xff]
  %v3617 = vld [vmem:[%s51 + $0x58] sm:$0xff]
  %v3618 = vld [vmem:[%s51 + $0x60] sm:$0xff]
  %v3619 = vld [vmem:[%s51 + $0x68] sm:$0xff]
  %v3620 = vld [vmem:[%s51 + $0x70] sm:$0xff]
  %v3621 = vld [vmem:[%s51 + $0x78] sm:$0xff]
  %v3622 = vld [vmem:[%s51 + $0x80] sm:$0xff]
  %v3623 = vld [vmem:[%s51 + $0x88] sm:$0xff]
  %v3624 = vld [vmem:[%s51 + $0x90] sm:$0xff]
  %v3625 = vld [vmem:[%s51 + $0x98] sm:$0xff]
  %v3626 = vld [vmem:[%s51 + $0xa0] sm:$0xff]
  %v3627 = vld [vmem:[%s51 + $0xa8] sm:$0xff]
  %v3628 = vld [vmem:[%s51 + $0xb0] sm:$0xff]
  %v3629 = vld [vmem:[%s51 + $0xb8] sm:$0xff]
  %v3630 = vld [vmem:[%s51 + $0xc0] sm:$0xff]
  %v3631 = vld [vmem:[%s51 + $0xc8] sm:$0xff]
  %v3632 = vld [vmem:[%s51 + $0xd0] sm:$0xff]
  %v3633 = vld [vmem:[%s51 + $0xd8] sm:$0xff]
  %v3634 = vld [vmem:[%s51 + $0xe0] sm:$0xff]
  %v3635 = vld [vmem:[%s51 + $0xe8] sm:$0xff]
  %v3636 = vld [vmem:[%s51 + $0xf0] sm:$0xff]
  %v3637 = vld [vmem:[%s51 + $0xf8] sm:$0xff]
  %3638 = vmatprep.subr.mxu0 0.0
  %3639 = vmatpush1.msra.mxu0 %v3606
  %3640 = vmatprep.subr.mxu0 0.0
  %3641 = vmatpush1.msra.mxu0 %v3607
  %3642 = vmatprep.subr.mxu0 0.0
  %3643 = vmatpush1.msra.mxu0 %v3608
  %3644 = vmatprep.subr.mxu0 0.0
  %3645 = vmatpush1.msra.mxu0 %v3609
  %3646 = vmatprep.subr.mxu0 0.0
  %3647 = vmatpush1.msra.mxu0 %v3610
  %3648 = vmatprep.subr.mxu0 0.0
  %3649 = vmatpush1.msra.mxu0 %v3611
  %3650 = vmatprep.subr.mxu0 0.0
  %3651 = vmatpush1.msra.mxu0 %v3612
  %3652 = vmatprep.subr.mxu0 0.0
  %3653 = vmatpush1.msra.mxu0 %v3613
  %3654 = vmatprep.subr.mxu0 0.0
  %3655 = vmatpush1.msra.mxu0 %v3614
  %3656 = vmatprep.subr.mxu0 0.0
  %3657 = vmatpush1.msra.mxu0 %v3615
  %3658 = vmatprep.subr.mxu0 0.0
  %3659 = vmatpush1.msra.mxu0 %v3616
  %3660 = vmatprep.subr.mxu0 0.0
  %3661 = vmatpush1.msra.mxu0 %v3617
  %3662 = vmatprep.subr.mxu0 0.0
  %3663 = vmatpush1.msra.mxu0 %v3618
  %3664 = vmatprep.subr.mxu0 0.0
  %3665 = vmatpush1.msra.mxu0 %v3619
  %3666 = vmatprep.subr.mxu0 0.0
  %3667 = vmatpush1.msra.mxu0 %v3620
  %3668 = vmatprep.subr.mxu0 0.0
  %3669 = vmatpush1.msra.mxu0 %v3621
  %3670 = vmatprep.subr.mxu0 0.0
  %3671 = vmatpush1.msra.mxu0 %v3622
  %3672 = vmatprep.subr.mxu0 0.0
  %3673 = vmatpush1.msra.mxu0 %v3623
  %3674 = vmatprep.subr.mxu0 0.0
  %3675 = vmatpush1.msra.mxu0 %v3624
  %3676 = vmatprep.subr.mxu0 0.0
  %3677 = vmatpush1.msra.mxu0 %v3625
  %3678 = vmatprep.subr.mxu0 0.0
  %3679 = vmatpush1.msra.mxu0 %v3626
  %3680 = vmatprep.subr.mxu0 0.0
  %3681 = vmatpush1.msra.mxu0 %v3627
  %3682 = vmatprep.subr.mxu0 0.0
  %3683 = vmatpush1.msra.mxu0 %v3628
  %3684 = vmatprep.subr.mxu0 0.0
  %3685 = vmatpush1.msra.mxu0 %v3629
  %3686 = vmatprep.subr.mxu0 0.0
  %3687 = vmatpush1.msra.mxu0 %v3630
  %3688 = vmatprep.subr.mxu0 0.0
  %3689 = vmatpush1.msra.mxu0 %v3631
  %3690 = vmatprep.subr.mxu0 0.0
  %3691 = vmatpush1.msra.mxu0 %v3632
  %3692 = vmatprep.subr.mxu0 0.0
  %3693 = vmatpush1.msra.mxu0 %v3633
  %3694 = vmatprep.subr.mxu0 0.0
  %3695 = vmatpush1.msra.mxu0 %v3634
  %3696 = vmatprep.subr.mxu0 0.0
  %3697 = vmatpush1.msra.mxu0 %v3635
  %3698 = vmatprep.subr.mxu0 0.0
  %3699 = vmatpush1.msra.mxu0 %v3636
  %3700 = vmatprep.subr.mxu0 0.0
  %3701 = vmatpush1.msra.mxu0 %v3637
  %3702 = vmatprep.mubr.f32.mxu0 %v3605
  %3703 = vmatmul.mubr.f32.gmra.mrb[0].mxu0 %v3596
  %v3704 = vpop.f32.mrb[0].mxu0
  %v3705 = vadd.f32 0.0, %v3704
  %v3706 = vpop.f32.mrb[0].mxu0
  %3707 = vdwg.mxu0
  %v3708 = vmul.f32 %v3705, 0.001953125
  %v3709 = vld [vmem:[%s53] sm:$0xff]
  %v3710 = vld [vmem:[%s53 + $0x8] sm:$0xff]
  %v3711 = vld [vmem:[%s53 + $0x10] sm:$0xff]
  %v3712 = vld [vmem:[%s53 + $0x18] sm:$0xff]
  %v3714 = vsel %vm724, %v3708, 0
  %3716 = vmatprep.subr.mxu0 %v3710
  %3717 = vmatpush1.msra.mxu0 %v3709
  %3718 = vmatprep.subr.mxu0 %v3712
  %3719 = vmatpush1.msra.mxu0 %v3711
  %3720 = vmatprep.subr.mxu0 0.0
  %3721 = vmatpush1.msra.mxu0 0.0
  %3722 = vmatprep.subr.mxu0 0.0
  %3723 = vmatpush1.msra.mxu0 0.0
  %3724 = vmatprep.subr.mxu0 0.0
  %3725 = vmatpush1.msra.mxu0 0.0
  %3726 = vmatprep.subr.mxu0 0.0
  %3727 = vmatpush1.msra.mxu0 0.0
  %3728 = vmatprep.subr.mxu0 0.0
  %3729 = vmatpush1.msra.mxu0 0.0
  %3730 = vmatprep.subr.mxu0 0.0
  %3731 = vmatpush1.msra.mxu0 0.0
  %3732 = vmatprep.subr.mxu0 0.0
  %3733 = vmatpush1.msra.mxu0 0.0
  %3734 = vmatprep.subr.mxu0 0.0
  %3735 = vmatpush1.msra.mxu0 0.0
  %3736 = vmatprep.subr.mxu0 0.0
  %3737 = vmatpush1.msra.mxu0 0.0
  %3738 = vmatprep.subr.mxu0 0.0
  %3739 = vmatpush1.msra.mxu0 0.0
  %3740 = vmatprep.subr.mxu0 0.0
  %3741 = vmatpush1.msra.mxu0 0.0
  %3742 = vmatprep.subr.mxu0 0.0
  %3743 = vmatpush1.msra.mxu0 0.0
  %3744 = vmatprep.subr.mxu0 0.0
  %3745 = vmatpush1.msra.mxu0 0.0
  %3746 = vmatprep.subr.mxu0 0.0
  %3747 = vmatpush1.msra.mxu0 0.0
  %3748 = vmatprep.subr.mxu0 0.0
  %3749 = vmatpush1.msra.mxu0 0.0
  %3750 = vmatprep.subr.mxu0 0.0
  %3751 = vmatpush1.msra.mxu0 0.0
  %3752 = vmatprep.subr.mxu0 0.0
  %3753 = vmatpush1.msra.mxu0 0.0
  %3754 = vmatprep.subr.mxu0 0.0
  %3755 = vmatpush1.msra.mxu0 0.0
  %3756 = vmatprep.subr.mxu0 0.0
  %3757 = vmatpush1.msra.mxu0 0.0
  %3758 = vmatprep.subr.mxu0 0.0
  %3759 = vmatpush1.msra.mxu0 0.0
  %3760 = vmatprep.subr.mxu0 0.0
  %3761 = vmatpush1.msra.mxu0 0.0
  %3762 = vmatprep.subr.mxu0 0.0
  %3763 = vmatpush1.msra.mxu0 0.0
  %3764 = vmatprep.subr.mxu0 0.0
  %3765 = vmatpush1.msra.mxu0 0.0
  %3766 = vmatprep.subr.mxu0 0.0
  %3767 = vmatpush1.msra.mxu0 0.0
  %3768 = vmatprep.subr.mxu0 0.0
  %3769 = vmatpush1.msra.mxu0 0.0
  %3770 = vmatprep.subr.mxu0 0.0
  %3771 = vmatpush1.msra.mxu0 0.0
  %3772 = vmatprep.subr.mxu0 0.0
  %3773 = vmatpush1.msra.mxu0 0.0
  %3774 = vmatprep.subr.mxu0 0.0
  %3775 = vmatpush1.msra.mxu0 0.0
  %3776 = vmatprep.subr.mxu0 0.0
  %3777 = vmatpush1.msra.mxu0 0.0
  %3778 = vmatprep.subr.mxu0 0.0
  %3779 = vmatpush1.msra.mxu0 0.0
  %3780 = vmatprep.mubr.f32.mxu0 0.0
  %3781 = vmatmul.mubr.f32.gmra.mrb[0].mxu0 %v3714
  %v3782 = vpop.f32.mrb[0].mxu0
  %v3783 = vadd.f32 0.0, %v3782
  %v3784 = vpop.f32.mrb[0].mxu0
  %v3785 = vadd.f32 0.0, %v3784
  %3786 = vdwg.mxu0
  %v3787 = vlaneseq
  %v3788 = vshrl.u32 %v3787, 7
  %v3789 = vsub.s32 0, %v3788
  %v3790 = vrot.slane %v3783, %v3789
  %v3791 = vlaneseq
  %v3792 = vshrl.u32 %v3791, 7
  %v3793 = vsub.s32 0, %v3792
  %v3794 = vrot.slane %v3785, %v3793
  %v3795 = vsub.f32 %v3580, %v3790
  %v3796 = vsub.f32 %v3581, %v3794
  %v3797 = vsub.f32 %v3582, %v3790
  %v3798 = vsub.f32 %v3583, %v3794
  %v3799 = vsub.f32 %v3584, %v3790
  %v3800 = vsub.f32 %v3585, %v3794
  %v3801 = vsub.f32 %v3586, %v3790
  %v3802 = vsub.f32 %v3587, %v3794
  %v3803 = vmul.f32 %v3795, %v3795
  %v3804 = vmul.f32 %v3796, %v3796
  %v3805 = vmul.f32 %v3797, %v3797
  %v3806 = vmul.f32 %v3798, %v3798
  %v3807 = vmul.f32 %v3799, %v3799
  %v3808 = vmul.f32 %v3800, %v3800
  %v3809 = vmul.f32 %v3801, %v3801
  %v3810 = vmul.f32 %v3802, %v3802
  %v3811 = vadd.f32 %v3803, %v3805
  %v3812 = vadd.f32 %v3811, %v3807
  %v3813 = vadd.f32 %v3812, %v3809
  %v3814 = vrot.slane %v3813, 4
  %v3815 = vadd.f32 %v3813, %v3814
  %v3816 = vrot.slane %v3815, 2
  %v3817 = vadd.f32 %v3815, %v3816
  %v3818 = vrot.slane %v3817, 1
  %v3819 = vadd.f32 %v3817, %v3818
  %v3820 = vadd.f32 %v3804, %v3806
  %v3821 = vadd.f32 %v3820, %v3808
  %v3822 = vadd.f32 %v3821, %v3810
  %v3823 = vrot.slane %v3822, 4
  %v3824 = vadd.f32 %v3822, %v3823
  %v3825 = vrot.slane %v3824, 2
  %v3826 = vadd.f32 %v3824, %v3825
  %v3827 = vrot.slane %v3826, 1
  %v3828 = vadd.f32 %v3826, %v3827
  %3829 = vmatprep.subr.mxu0 0.0
  %3830 = vmatpush1.msra.mxu0 %v3606
  %3831 = vmatprep.subr.mxu0 0.0
  %3832 = vmatpush1.msra.mxu0 %v3607
  %3833 = vmatprep.subr.mxu0 0.0
  %3834 = vmatpush1.msra.mxu0 %v3608
  %3835 = vmatprep.subr.mxu0 0.0
  %3836 = vmatpush1.msra.mxu0 %v3609
  %3837 = vmatprep.subr.mxu0 0.0
  %3838 = vmatpush1.msra.mxu0 %v3610
  %3839 = vmatprep.subr.mxu0 0.0
  %3840 = vmatpush1.msra.mxu0 %v3611
  %3841 = vmatprep.subr.mxu0 0.0
  %3842 = vmatpush1.msra.mxu0 %v3612
  %3843 = vmatprep.subr.mxu0 0.0
  %3844 = vmatpush1.msra.mxu0 %v3613
  %3845 = vmatprep.subr.mxu0 0.0
  %3846 = vmatpush1.msra.mxu0 %v3614
  %3847 = vmatprep.subr.mxu0 0.0
  %3848 = vmatpush1.msra.mxu0 %v3615
  %3849 = vmatprep.subr.mxu0 0.0
  %3850 = vmatpush1.msra.mxu0 %v3616
  %3851 = vmatprep.subr.mxu0 0.0
  %3852 = vmatpush1.msra.mxu0 %v3617
  %3853 = vmatprep.subr.mxu0 0.0
  %3854 = vmatpush1.msra.mxu0 %v3618
  %3855 = vmatprep.subr.mxu0 0.0
  %3856 = vmatpush1.msra.mxu0 %v3619
  %3857 = vmatprep.subr.mxu0 0.0
  %3858 = vmatpush1.msra.mxu0 %v3620
  %3859 = vmatprep.subr.mxu0 0.0
  %3860 = vmatpush1.msra.mxu0 %v3621
  %3861 = vmatprep.subr.mxu0 0.0
  %3862 = vmatpush1.msra.mxu0 %v3622
  %3863 = vmatprep.subr.mxu0 0.0
  %3864 = vmatpush1.msra.mxu0 %v3623
  %3865 = vmatprep.subr.mxu0 0.0
  %3866 = vmatpush1.msra.mxu0 %v3624
  %3867 = vmatprep.subr.mxu0 0.0
  %3868 = vmatpush1.msra.mxu0 %v3625
  %3869 = vmatprep.subr.mxu0 0.0
  %3870 = vmatpush1.msra.mxu0 %v3626
  %3871 = vmatprep.subr.mxu0 0.0
  %3872 = vmatpush1.msra.mxu0 %v3627
  %3873 = vmatprep.subr.mxu0 0.0
  %3874 = vmatpush1.msra.mxu0 %v3628
  %3875 = vmatprep.subr.mxu0 0.0
  %3876 = vmatpush1.msra.mxu0 %v3629
  %3877 = vmatprep.subr.mxu0 0.0
  %3878 = vmatpush1.msra.mxu0 %v3630
  %3879 = vmatprep.subr.mxu0 0.0
  %3880 = vmatpush1.msra.mxu0 %v3631
  %3881 = vmatprep.subr.mxu0 0.0
  %3882 = vmatpush1.msra.mxu0 %v3632
  %3883 = vmatprep.subr.mxu0 0.0
  %3884 = vmatpush1.msra.mxu0 %v3633
  %3885 = vmatprep.subr.mxu0 0.0
  %3886 = vmatpush1.msra.mxu0 %v3634
  %3887 = vmatprep.subr.mxu0 0.0
  %3888 = vmatpush1.msra.mxu0 %v3635
  %3889 = vmatprep.subr.mxu0 0.0
  %3890 = vmatpush1.msra.mxu0 %v3636
  %3891 = vmatprep.subr.mxu0 0.0
  %3892 = vmatpush1.msra.mxu0 %v3637
  %3893 = vmatprep.mubr.f32.mxu0 %v3828
  %3894 = vmatmul.mubr.f32.gmra.mrb[0].mxu0 %v3819
  %v3895 = vpop.f32.mrb[0].mxu0
  %v3896 = vadd.f32 0.0, %v3895
  %v3897 = vpop.f32.mrb[0].mxu0
  %3898 = vdwg.mxu0
  %v3899 = vmul.f32 %v3896, 0.001953125
  %v3900 = vld [vmem:[%s55] sm:$0x1]
  %v3901 = vadd.f32 %v3899, 1e-05
  %v3902 = vrsqrt.pop %v3901
  %v3903 = vmul.f32 %v3900, %v3902
  %v3904 = vld [vmem:[%s57] sm:$0x1]
  %v3905 = vmul.f32 %v3708, %v3903
  %v3906 = vsub.f32 %v3904, %v3905
  %v3908 = vsel %vm724, %v3903, 0
  %3910 = vmatprep.subr.mxu0 %v3710
  %3911 = vmatpush1.msra.mxu0 %v3709
  %3912 = vmatprep.subr.mxu0 %v3712
  %3913 = vmatpush1.msra.mxu0 %v3711
  %3914 = vmatprep.subr.mxu0 0.0
  %3915 = vmatpush1.msra.mxu0 0.0
  %3916 = vmatprep.subr.mxu0 0.0
  %3917 = vmatpush1.msra.mxu0 0.0
  %3918 = vmatprep.subr.mxu0 0.0
  %3919 = vmatpush1.msra.mxu0 0.0
  %3920 = vmatprep.subr.mxu0 0.0
  %3921 = vmatpush1.msra.mxu0 0.0
  %3922 = vmatprep.subr.mxu0 0.0
  %3923 = vmatpush1.msra.mxu0 0.0
  %3924 = vmatprep.subr.mxu0 0.0
  %3925 = vmatpush1.msra.mxu0 0.0
  %3926 = vmatprep.subr.mxu0 0.0
  %3927 = vmatpush1.msra.mxu0 0.0
  %3928 = vmatprep.subr.mxu0 0.0
  %3929 = vmatpush1.msra.mxu0 0.0
  %3930 = vmatprep.subr.mxu0 0.0
  %3931 = vmatpush1.msra.mxu0 0.0
  %3932 = vmatprep.subr.mxu0 0.0
  %3933 = vmatpush1.msra.mxu0 0.0
  %3934 = vmatprep.subr.mxu0 0.0
  %3935 = vmatpush1.msra.mxu0 0.0
  %3936 = vmatprep.subr.mxu0 0.0
  %3937 = vmatpush1.msra.mxu0 0.0
  %3938 = vmatprep.subr.mxu0 0.0
  %3939 = vmatpush1.msra.mxu0 0.0
  %3940 = vmatprep.subr.mxu0 0.0
  %3941 = vmatpush1.msra.mxu0 0.0
  %3942 = vmatprep.subr.mxu0 0.0
  %3943 = vmatpush1.msra.mxu0 0.0
  %3944 = vmatprep.subr.mxu0 0.0
  %3945 = vmatpush1.msra.mxu0 0.0
  %3946 = vmatprep.subr.mxu0 0.0
  %3947 = vmatpush1.msra.mxu0 0.0
  %3948 = vmatprep.subr.mxu0 0.0
  %3949 = vmatpush1.msra.mxu0 0.0
  %3950 = vmatprep.subr.mxu0 0.0
  %3951 = vmatpush1.msra.mxu0 0.0
  %3952 = vmatprep.subr.mxu0 0.0
  %3953 = vmatpush1.msra.mxu0 0.0
  %3954 = vmatprep.subr.mxu0 0.0
  %3955 = vmatpush1.msra.mxu0 0.0
  %3956 = vmatprep.subr.mxu0 0.0
  %3957 = vmatpush1.msra.mxu0 0.0
  %3958 = vmatprep.subr.mxu0 0.0
  %3959 = vmatpush1.msra.mxu0 0.0
  %3960 = vmatprep.subr.mxu0 0.0
  %3961 = vmatpush1.msra.mxu0 0.0
  %3962 = vmatprep.subr.mxu0 0.0
  %3963 = vmatpush1.msra.mxu0 0.0
  %3964 = vmatprep.subr.mxu0 0.0
  %3965 = vmatpush1.msra.mxu0 0.0
  %3966 = vmatprep.subr.mxu0 0.0
  %3967 = vmatpush1.msra.mxu0 0.0
  %3968 = vmatprep.subr.mxu0 0.0
  %3969 = vmatpush1.msra.mxu0 0.0
  %3970 = vmatprep.subr.mxu0 0.0
  %3971 = vmatpush1.msra.mxu0 0.0
  %3972 = vmatprep.subr.mxu0 0.0
  %3973 = vmatpush1.msra.mxu0 0.0
  %3974 = vmatprep.mubr.f32.mxu0 0.0
  %3975 = vmatmul.mubr.f32.gmra.mrb[0].mxu0 %v3908
  %v3976 = vpop.f32.mrb[0].mxu0
  %v3977 = vadd.f32 0.0, %v3976
  %v3978 = vpop.f32.mrb[0].mxu0
  %v3979 = vadd.f32 0.0, %v3978
  %3980 = vdwg.mxu0
  %v3981 = vlaneseq
  %v3982 = vshrl.u32 %v3981, 7
  %v3983 = vsub.s32 0, %v3982
  %v3984 = vrot.slane %v3977, %v3983
  %v3985 = vlaneseq
  %v3986 = vshrl.u32 %v3985, 7
  %v3987 = vsub.s32 0, %v3986
  %v3988 = vrot.slane %v3979, %v3987
  %v3989 = vmul.f32 %v3580, %v3984
  %v3990 = vmul.f32 %v3581, %v3988
  %v3991 = vmul.f32 %v3582, %v3984
  %v3992 = vmul.f32 %v3583, %v3988
  %v3993 = vmul.f32 %v3584, %v3984
  %v3994 = vmul.f32 %v3585, %v3988
  %v3995 = vmul.f32 %v3586, %v3984
  %v3996 = vmul.f32 %v3587, %v3988
  %v3998 = vsel %vm724, %v3906, 0
  %4000 = vmatprep.subr.mxu0 %v3710
  %4001 = vmatpush1.msra.mxu0 %v3709
  %4002 = vmatprep.subr.mxu0 %v3712
  %4003 = vmatpush1.msra.mxu0 %v3711
  %4004 = vmatprep.subr.mxu0 0.0
  %4005 = vmatpush1.msra.mxu0 0.0
  %4006 = vmatprep.subr.mxu0 0.0
  %4007 = vmatpush1.msra.mxu0 0.0
  %4008 = vmatprep.subr.mxu0 0.0
  %4009 = vmatpush1.msra.mxu0 0.0
  %4010 = vmatprep.subr.mxu0 0.0
  %4011 = vmatpush1.msra.mxu0 0.0
  %4012 = vmatprep.subr.mxu0 0.0
  %4013 = vmatpush1.msra.mxu0 0.0
  %4014 = vmatprep.subr.mxu0 0.0
  %4015 = vmatpush1.msra.mxu0 0.0
  %4016 = vmatprep.subr.mxu0 0.0
  %4017 = vmatpush1.msra.mxu0 0.0
  %4018 = vmatprep.subr.mxu0 0.0
  %4019 = vmatpush1.msra.mxu0 0.0
  %4020 = vmatprep.subr.mxu0 0.0
  %4021 = vmatpush1.msra.mxu0 0.0
  %4022 = vmatprep.subr.mxu0 0.0
  %4023 = vmatpush1.msra.mxu0 0.0
  %4024 = vmatprep.subr.mxu0 0.0
  %4025 = vmatpush1.msra.mxu0 0.0
  %4026 = vmatprep.subr.mxu0 0.0
  %4027 = vmatpush1.msra.mxu0 0.0
  %4028 = vmatprep.subr.mxu0 0.0
  %4029 = vmatpush1.msra.mxu0 0.0
  %4030 = vmatprep.subr.mxu0 0.0
  %4031 = vmatpush1.msra.mxu0 0.0
  %4032 = vmatprep.subr.mxu0 0.0
  %4033 = vmatpush1.msra.mxu0 0.0
  %4034 = vmatprep.subr.mxu0 0.0
  %4035 = vmatpush1.msra.mxu0 0.0
  %4036 = vmatprep.subr.mxu0 0.0
  %4037 = vmatpush1.msra.mxu0 0.0
  %4038 = vmatprep.subr.mxu0 0.0
  %4039 = vmatpush1.msra.mxu0 0.0
  %4040 = vmatprep.subr.mxu0 0.0
  %4041 = vmatpush1.msra.mxu0 0.0
  %4042 = vmatprep.subr.mxu0 0.0
  %4043 = vmatpush1.msra.mxu0 0.0
  %4044 = vmatprep.subr.mxu0 0.0
  %4045 = vmatpush1.msra.mxu0 0.0
  %4046 = vmatprep.subr.mxu0 0.0
  %4047 = vmatpush1.msra.mxu0 0.0
  %4048 = vmatprep.subr.mxu0 0.0
  %4049 = vmatpush1.msra.mxu0 0.0
  %4050 = vmatprep.subr.mxu0 0.0
  %4051 = vmatpush1.msra.mxu0 0.0
  %4052 = vmatprep.subr.mxu0 0.0
  %4053 = vmatpush1.msra.mxu0 0.0
  %4054 = vmatprep.subr.mxu0 0.0
  %4055 = vmatpush1.msra.mxu0 0.0
  %4056 = vmatprep.subr.mxu0 0.0
  %4057 = vmatpush1.msra.mxu0 0.0
  %4058 = vmatprep.subr.mxu0 0.0
  %4059 = vmatpush1.msra.mxu0 0.0
  %4060 = vmatprep.subr.mxu0 0.0
  %4061 = vmatpush1.msra.mxu0 0.0
  %4062 = vmatprep.subr.mxu0 0.0
  %4063 = vmatpush1.msra.mxu0 0.0
  %4064 = vmatprep.mubr.f32.mxu0 0.0
  %4065 = vmatmul.mubr.f32.gmra.mrb[0].mxu0 %v3998
  %v4066 = vpop.f32.mrb[0].mxu0
  %v4067 = vadd.f32 0.0, %v4066
  %v4068 = vpop.f32.mrb[0].mxu0
  %v4069 = vadd.f32 0.0, %v4068
  %4070 = vdwg.mxu0
  %v4071 = vlaneseq
  %v4072 = vshrl.u32 %v4071, 7
  %v4073 = vsub.s32 0, %v4072
  %v4074 = vrot.slane %v4067, %v4073
  %v4075 = vlaneseq
  %v4076 = vshrl.u32 %v4075, 7
  %v4077 = vsub.s32 0, %v4076
  %v4078 = vrot.slane %v4069, %v4077
  %v4079 = vadd.f32 %v3989, %v4074
  %v4080 = vadd.f32 %v3990, %v4078
  %v4081 = vadd.f32 %v3991, %v4074
  %v4082 = vadd.f32 %v3992, %v4078
  %v4083 = vadd.f32 %v3993, %v4074
  %v4084 = vadd.f32 %v3994, %v4078
  %v4085 = vadd.f32 %v3995, %v4074
  %v4086 = vadd.f32 %v3996, %v4078
  %v4087 = vmax.f32 %v4079, 0.0
  %v4088 = vmax.f32 %v4080, 0.0
  %v4089 = vmax.f32 %v4081, 0.0
  %v4090 = vmax.f32 %v4082, 0.0
  %v4091 = vmax.f32 %v4083, 0.0
  %v4092 = vmax.f32 %v4084, 0.0
  %v4093 = vmax.f32 %v4085, 0.0
  %v4094 = vmax.f32 %v4086, 0.0
  %v4095 = vld [vmem:[%s59] sm:$0xff]
  %v4096 = vld [vmem:[%s59 + $0x8] sm:$0xff]
  %v4097 = vld [vmem:[%s59 + $0x10] sm:$0xff]
  %v4098 = vld [vmem:[%s59 + $0x18] sm:$0xff]
  %v4099 = vld [vmem:[%s59 + $0x20] sm:$0xff]
  %v4100 = vld [vmem:[%s59 + $0x28] sm:$0xff]
  %v4101 = vld [vmem:[%s59 + $0x30] sm:$0xff]
  %v4102 = vld [vmem:[%s59 + $0x38] sm:$0xff]
  %v4104 = vsel %vm327, %v4095, 0
  %v4107 = vsel %vm327, %v4096, 0
  %v4110 = vsel %vm327, %v4097, 0
  %v4113 = vsel %vm327, %v4098, 0
  %v4116 = vsel %vm327, %v4099, 0
  %v4119 = vsel %vm327, %v4100, 0
  %v4122 = vsel %vm327, %v4101, 0
  %v4125 = vsel %vm327, %v4102, 0
  %4127 = vmatprep.subr.mxu0 %v4088
  %4128 = vmatpush1.msra.mxu0 %v4087
  %4129 = vmatprep.subr.mxu0 %v4090
  %4130 = vmatpush1.msra.mxu0 %v4089
  %4131 = vmatprep.subr.mxu0 %v4092
  %4132 = vmatpush1.msra.mxu0 %v4091
  %4133 = vmatprep.subr.mxu0 %v4094
  %4134 = vmatpush1.msra.mxu0 %v4093
  %4135 = vmatprep.subr.mxu0 0.0
  %4136 = vmatpush1.msra.mxu0 0.0
  %4137 = vmatprep.subr.mxu0 0.0
  %4138 = vmatpush1.msra.mxu0 0.0
  %4139 = vmatprep.subr.mxu0 0.0
  %4140 = vmatpush1.msra.mxu0 0.0
  %4141 = vmatprep.subr.mxu0 0.0
  %4142 = vmatpush1.msra.mxu0 0.0
  %4143 = vmatprep.subr.mxu0 0.0
  %4144 = vmatpush1.msra.mxu0 0.0
  %4145 = vmatprep.subr.mxu0 0.0
  %4146 = vmatpush1.msra.mxu0 0.0
  %4147 = vmatprep.subr.mxu0 0.0
  %4148 = vmatpush1.msra.mxu0 0.0
  %4149 = vmatprep.subr.mxu0 0.0
  %4150 = vmatpush1.msra.mxu0 0.0
  %4151 = vmatprep.subr.mxu0 0.0
  %4152 = vmatpush1.msra.mxu0 0.0
  %4153 = vmatprep.subr.mxu0 0.0
  %4154 = vmatpush1.msra.mxu0 0.0
  %4155 = vmatprep.subr.mxu0 0.0
  %4156 = vmatpush1.msra.mxu0 0.0
  %4157 = vmatprep.subr.mxu0 0.0
  %4158 = vmatpush1.msra.mxu0 0.0
  %4159 = vmatprep.subr.mxu0 0.0
  %4160 = vmatpush1.msra.mxu0 0.0
  %4161 = vmatprep.subr.mxu0 0.0
  %4162 = vmatpush1.msra.mxu0 0.0
  %4163 = vmatprep.subr.mxu0 0.0
  %4164 = vmatpush1.msra.mxu0 0.0
  %4165 = vmatprep.subr.mxu0 0.0
  %4166 = vmatpush1.msra.mxu0 0.0
  %4167 = vmatprep.subr.mxu0 0.0
  %4168 = vmatpush1.msra.mxu0 0.0
  %4169 = vmatprep.subr.mxu0 0.0
  %4170 = vmatpush1.msra.mxu0 0.0
  %4171 = vmatprep.subr.mxu0 0.0
  %4172 = vmatpush1.msra.mxu0 0.0
  %4173 = vmatprep.subr.mxu0 0.0
  %4174 = vmatpush1.msra.mxu0 0.0
  %4175 = vmatprep.subr.mxu0 0.0
  %4176 = vmatpush1.msra.mxu0 0.0
  %4177 = vmatprep.subr.mxu0 0.0
  %4178 = vmatpush1.msra.mxu0 0.0
  %4179 = vmatprep.subr.mxu0 0.0
  %4180 = vmatpush1.msra.mxu0 0.0
  %4181 = vmatprep.subr.mxu0 0.0
  %4182 = vmatpush1.msra.mxu0 0.0
  %4183 = vmatprep.subr.mxu0 0.0
  %4184 = vmatpush1.msra.mxu0 0.0
  %4185 = vmatprep.subr.mxu0 0.0
  %4186 = vmatpush1.msra.mxu0 0.0
  %4187 = vmatprep.subr.mxu0 0.0
  %4188 = vmatpush1.msra.mxu0 0.0
  %4189 = vmatprep.subr.mxu0 0.0
  %4190 = vmatpush1.msra.mxu0 0.0
  %4191 = vmatprep.mubr.f32.mxu0 0.0
  %4192 = vmatmul.mubr.f32.gmra.mrb[0].mxu0 %v4104
  %v4193 = vpop.f32.mrb[0].mxu0
  %v4194 = vadd.f32 0.0, %v4193
  %v4195 = vpop.f32.mrb[0].mxu0
  %v4196 = vadd.f32 0.0, %v4195
  %4197 = vmatprep.mubr.f32.mxu0 0.0
  %4198 = vmatmul.mubr.f32.gmra.mrb[0].mxu0 %v4107
  %v4199 = vpop.f32.mrb[0].mxu0
  %v4200 = vadd.f32 0.0, %v4199
  %v4201 = vpop.f32.mrb[0].mxu0
  %v4202 = vadd.f32 0.0, %v4201
  %4203 = vmatprep.mubr.f32.mxu0 0.0
  %4204 = vmatmul.mubr.f32.gmra.mrb[0].mxu0 %v4110
  %v4205 = vpop.f32.mrb[0].mxu0
  %v4206 = vadd.f32 0.0, %v4205
  %v4207 = vpop.f32.mrb[0].mxu0
  %v4208 = vadd.f32 0.0, %v4207
  %4209 = vmatprep.mubr.f32.mxu0 0.0
  %4210 = vmatmul.mubr.f32.gmra.mrb[0].mxu0 %v4113
  %v4211 = vpop.f32.mrb[0].mxu0
  %v4212 = vadd.f32 0.0, %v4211
  %v4213 = vpop.f32.mrb[0].mxu0
  %v4214 = vadd.f32 0.0, %v4213
  %4215 = vmatprep.mubr.f32.mxu0 0.0
  %4216 = vmatmul.mubr.f32.gmra.mrb[0].mxu0 %v4116
  %v4217 = vpop.f32.mrb[0].mxu0
  %v4218 = vadd.f32 0.0, %v4217
  %v4219 = vpop.f32.mrb[0].mxu0
  %v4220 = vadd.f32 0.0, %v4219
  %4221 = vmatprep.mubr.f32.mxu0 0.0
  %4222 = vmatmul.mubr.f32.gmra.mrb[0].mxu0 %v4119
  %v4223 = vpop.f32.mrb[0].mxu0
  %v4224 = vadd.f32 0.0, %v4223
  %v4225 = vpop.f32.mrb[0].mxu0
  %v4226 = vadd.f32 0.0, %v4225
  %4227 = vmatprep.mubr.f32.mxu0 0.0
  %4228 = vmatmul.mubr.f32.gmra.mrb[0].mxu0 %v4122
  %v4229 = vpop.f32.mrb[0].mxu0
  %v4230 = vadd.f32 0.0, %v4229
  %v4231 = vpop.f32.mrb[0].mxu0
  %v4232 = vadd.f32 0.0, %v4231
  %4233 = vmatprep.mubr.f32.mxu0 0.0
  %4234 = vmatmul.mubr.f32.gmra.mrb[0].mxu0 %v4125
  %v4235 = vpop.f32.mrb[0].mxu0
  %v4236 = vadd.f32 0.0, %v4235
  %v4237 = vpop.f32.mrb[0].mxu0
  %v4238 = vadd.f32 0.0, %v4237
  %4239 = vdwg.mxu0
  %v4240 = vld [vmem:[%s61] sm:$0xff]
  %v4241 = vld [vmem:[%s61 + $0x8] sm:$0xff]
  %v4242 = vld [vmem:[%s61 + $0x10] sm:$0xff]
  %v4243 = vld [vmem:[%s61 + $0x18] sm:$0xff]
  %v4244 = vld [vmem:[%s61 + $0x20] sm:$0xff]
  %v4245 = vld [vmem:[%s61 + $0x28] sm:$0xff]
  %v4246 = vld [vmem:[%s61 + $0x30] sm:$0xff]
  %v4247 = vld [vmem:[%s61 + $0x38] sm:$0xff]
  %v4248 = vld [vmem:[%s61 + $0x40] sm:$0xff]
  %v4249 = vld [vmem:[%s61 + $0x48] sm:$0xff]
  %v4250 = vld [vmem:[%s61 + $0x50] sm:$0xff]
  %v4251 = vld [vmem:[%s61 + $0x58] sm:$0xff]
  %v4252 = vld [vmem:[%s61 + $0x60] sm:$0xff]
  %v4253 = vld [vmem:[%s61 + $0x68] sm:$0xff]
  %v4254 = vld [vmem:[%s61 + $0x70] sm:$0xff]
  %v4255 = vld [vmem:[%s61 + $0x78] sm:$0xff]
  %v4256 = vld [vmem:[%s61 + $0x80] sm:$0xff]
  %v4257 = vld [vmem:[%s61 + $0x88] sm:$0xff]
  %v4258 = vld [vmem:[%s61 + $0x90] sm:$0xff]
  %v4259 = vld [vmem:[%s61 + $0x98] sm:$0xff]
  %v4260 = vld [vmem:[%s61 + $0xa0] sm:$0xff]
  %v4261 = vld [vmem:[%s61 + $0xa8] sm:$0xff]
  %v4262 = vld [vmem:[%s61 + $0xb0] sm:$0xff]
  %v4263 = vld [vmem:[%s61 + $0xb8] sm:$0xff]
  %v4264 = vld [vmem:[%s61 + $0xc0] sm:$0xff]
  %v4265 = vld [vmem:[%s61 + $0xc8] sm:$0xff]
  %v4266 = vld [vmem:[%s61 + $0xd0] sm:$0xff]
  %v4267 = vld [vmem:[%s61 + $0xd8] sm:$0xff]
  %v4268 = vld [vmem:[%s61 + $0xe0] sm:$0xff]
  %v4269 = vld [vmem:[%s61 + $0xe8] sm:$0xff]
  %v4270 = vld [vmem:[%s61 + $0xf0] sm:$0xff]
  %v4271 = vld [vmem:[%s61 + $0xf8] sm:$0xff]
  %v4272 = vld [vmem:[%s61 + $0x100] sm:$0xff]
  %v4273 = vld [vmem:[%s61 + $0x108] sm:$0xff]
  %v4274 = vld [vmem:[%s61 + $0x110] sm:$0xff]
  %v4275 = vld [vmem:[%s61 + $0x118] sm:$0xff]
  %v4276 = vld [vmem:[%s61 + $0x120] sm:$0xff]
  %v4277 = vld [vmem:[%s61 + $0x128] sm:$0xff]
  %v4278 = vld [vmem:[%s61 + $0x130] sm:$0xff]
  %v4279 = vld [vmem:[%s61 + $0x138] sm:$0xff]
  %v4280 = vld [vmem:[%s61 + $0x140] sm:$0xff]
  %v4281 = vld [vmem:[%s61 + $0x148] sm:$0xff]
  %v4282 = vld [vmem:[%s61 + $0x150] sm:$0xff]
  %v4283 = vld [vmem:[%s61 + $0x158] sm:$0xff]
  %v4284 = vld [vmem:[%s61 + $0x160] sm:$0xff]
  %v4285 = vld [vmem:[%s61 + $0x168] sm:$0xff]
  %v4286 = vld [vmem:[%s61 + $0x170] sm:$0xff]
  %v4287 = vld [vmem:[%s61 + $0x178] sm:$0xff]
  %v4288 = vld [vmem:[%s61 + $0x180] sm:$0xff]
  %v4289 = vld [vmem:[%s61 + $0x188] sm:$0xff]
  %v4290 = vld [vmem:[%s61 + $0x190] sm:$0xff]
  %v4291 = vld [vmem:[%s61 + $0x198] sm:$0xff]
  %v4292 = vld [vmem:[%s61 + $0x1a0] sm:$0xff]
  %v4293 = vld [vmem:[%s61 + $0x1a8] sm:$0xff]
  %v4294 = vld [vmem:[%s61 + $0x1b0] sm:$0xff]
  %v4295 = vld [vmem:[%s61 + $0x1b8] sm:$0xff]
  %v4296 = vld [vmem:[%s61 + $0x1c0] sm:$0xff]
  %v4297 = vld [vmem:[%s61 + $0x1c8] sm:$0xff]
  %v4298 = vld [vmem:[%s61 + $0x1d0] sm:$0xff]
  %v4299 = vld [vmem:[%s61 + $0x1d8] sm:$0xff]
  %v4300 = vld [vmem:[%s61 + $0x1e0] sm:$0xff]
  %v4301 = vld [vmem:[%s61 + $0x1e8] sm:$0xff]
  %v4302 = vld [vmem:[%s61 + $0x1f0] sm:$0xff]
  %v4303 = vld [vmem:[%s61 + $0x1f8] sm:$0xff]
  %s4304 = scalar_lea.vmem %s59, 64
  %v4305 = vld [vmem:[%s4304] sm:$0xff]
  %v4306 = vld [vmem:[%s4304 + $0x8] sm:$0xff]
  %v4307 = vld [vmem:[%s4304 + $0x10] sm:$0xff]
  %v4308 = vld [vmem:[%s4304 + $0x18] sm:$0xff]
  %v4309 = vld [vmem:[%s4304 + $0x20] sm:$0xff]
  %v4310 = vld [vmem:[%s4304 + $0x28] sm:$0xff]
  %v4311 = vld [vmem:[%s4304 + $0x30] sm:$0xff]
  %v4312 = vld [vmem:[%s4304 + $0x38] sm:$0xff]
  %v4314 = vsel %vm327, %v4305, 0
  %v4317 = vsel %vm327, %v4306, 0
  %v4320 = vsel %vm327, %v4307, 0
  %v4323 = vsel %vm327, %v4308, 0
  %v4326 = vsel %vm327, %v4309, 0
  %v4329 = vsel %vm327, %v4310, 0
  %v4332 = vsel %vm327, %v4311, 0
  %v4335 = vsel %vm327, %v4312, 0
  %4337 = vmatprep.subr.mxu0 %v4088
  %4338 = vmatpush1.msra.mxu0 %v4087
  %4339 = vmatprep.subr.mxu0 %v4090
  %4340 = vmatpush1.msra.mxu0 %v4089
  %4341 = vmatprep.subr.mxu0 %v4092
  %4342 = vmatpush1.msra.mxu0 %v4091
  %4343 = vmatprep.subr.mxu0 %v4094
  %4344 = vmatpush1.msra.mxu0 %v4093
  %4345 = vmatprep.subr.mxu0 0.0
  %4346 = vmatpush1.msra.mxu0 0.0
  %4347 = vmatprep.subr.mxu0 0.0
  %4348 = vmatpush1.msra.mxu0 0.0
  %4349 = vmatprep.subr.mxu0 0.0
  %4350 = vmatpush1.msra.mxu0 0.0
  %4351 = vmatprep.subr.mxu0 0.0
  %4352 = vmatpush1.msra.mxu0 0.0
  %4353 = vmatprep.subr.mxu0 0.0
  %4354 = vmatpush1.msra.mxu0 0.0
  %4355 = vmatprep.subr.mxu0 0.0
  %4356 = vmatpush1.msra.mxu0 0.0
  %4357 = vmatprep.subr.mxu0 0.0
  %4358 = vmatpush1.msra.mxu0 0.0
  %4359 = vmatprep.subr.mxu0 0.0
  %4360 = vmatpush1.msra.mxu0 0.0
  %4361 = vmatprep.subr.mxu0 0.0
  %4362 = vmatpush1.msra.mxu0 0.0
  %4363 = vmatprep.subr.mxu0 0.0
  %4364 = vmatpush1.msra.mxu0 0.0
  %4365 = vmatprep.subr.mxu0 0.0
  %4366 = vmatpush1.msra.mxu0 0.0
  %4367 = vmatprep.subr.mxu0 0.0
  %4368 = vmatpush1.msra.mxu0 0.0
  %4369 = vmatprep.subr.mxu0 0.0
  %4370 = vmatpush1.msra.mxu0 0.0
  %4371 = vmatprep.subr.mxu0 0.0
  %4372 = vmatpush1.msra.mxu0 0.0
  %4373 = vmatprep.subr.mxu0 0.0
  %4374 = vmatpush1.msra.mxu0 0.0
  %4375 = vmatprep.subr.mxu0 0.0
  %4376 = vmatpush1.msra.mxu0 0.0
  %4377 = vmatprep.subr.mxu0 0.0
  %4378 = vmatpush1.msra.mxu0 0.0
  %4379 = vmatprep.subr.mxu0 0.0
  %4380 = vmatpush1.msra.mxu0 0.0
  %4381 = vmatprep.subr.mxu0 0.0
  %4382 = vmatpush1.msra.mxu0 0.0
  %4383 = vmatprep.subr.mxu0 0.0
  %4384 = vmatpush1.msra.mxu0 0.0
  %4385 = vmatprep.subr.mxu0 0.0
  %4386 = vmatpush1.msra.mxu0 0.0
  %4387 = vmatprep.subr.mxu0 0.0
  %4388 = vmatpush1.msra.mxu0 0.0
  %4389 = vmatprep.subr.mxu0 0.0
  %4390 = vmatpush1.msra.mxu0 0.0
  %4391 = vmatprep.subr.mxu0 0.0
  %4392 = vmatpush1.msra.mxu0 0.0
  %4393 = vmatprep.subr.mxu0 0.0
  %4394 = vmatpush1.msra.mxu0 0.0
  %4395 = vmatprep.subr.mxu0 0.0
  %4396 = vmatpush1.msra.mxu0 0.0
  %4397 = vmatprep.subr.mxu0 0.0
  %4398 = vmatpush1.msra.mxu0 0.0
  %4399 = vmatprep.subr.mxu0 0.0
  %4400 = vmatpush1.msra.mxu0 0.0
  %4401 = vmatprep.mubr.f32.mxu0 0.0
  %4402 = vmatmul.mubr.f32.gmra.mrb[0].mxu0 %v4314
  %v4403 = vpop.f32.mrb[0].mxu0
  %v4404 = vadd.f32 0.0, %v4403
  %v4405 = vpop.f32.mrb[0].mxu0
  %v4406 = vadd.f32 0.0, %v4405
  %4407 = vmatprep.mubr.f32.mxu0 0.0
  %4408 = vmatmul.mubr.f32.gmra.mrb[0].mxu0 %v4317
  %v4409 = vpop.f32.mrb[0].mxu0
  %v4410 = vadd.f32 0.0, %v4409
  %v4411 = vpop.f32.mrb[0].mxu0
  %v4412 = vadd.f32 0.0, %v4411
  %4413 = vmatprep.mubr.f32.mxu0 0.0
  %4414 = vmatmul.mubr.f32.gmra.mrb[0].mxu0 %v4320
  %v4415 = vpop.f32.mrb[0].mxu0
  %v4416 = vadd.f32 0.0, %v4415
  %v4417 = vpop.f32.mrb[0].mxu0
  %v4418 = vadd.f32 0.0, %v4417
  %4419 = vmatprep.mubr.f32.mxu0 0.0
  %4420 = vmatmul.mubr.f32.gmra.mrb[0].mxu0 %v4323
  %v4421 = vpop.f32.mrb[0].mxu0
  %v4422 = vadd.f32 0.0, %v4421
  %v4423 = vpop.f32.mrb[0].mxu0
  %v4424 = vadd.f32 0.0, %v4423
  %4425 = vmatprep.mubr.f32.mxu0 0.0
  %4426 = vmatmul.mubr.f32.gmra.mrb[0].mxu0 %v4326
  %v4427 = vpop.f32.mrb[0].mxu0
  %v4428 = vadd.f32 0.0, %v4427
  %v4429 = vpop.f32.mrb[0].mxu0
  %v4430 = vadd.f32 0.0, %v4429
  %4431 = vmatprep.mubr.f32.mxu0 0.0
  %4432 = vmatmul.mubr.f32.gmra.mrb[0].mxu0 %v4329
  %v4433 = vpop.f32.mrb[0].mxu0
  %v4434 = vadd.f32 0.0, %v4433
  %v4435 = vpop.f32.mrb[0].mxu0
  %v4436 = vadd.f32 0.0, %v4435
  %4437 = vmatprep.mubr.f32.mxu0 0.0
  %4438 = vmatmul.mubr.f32.gmra.mrb[0].mxu0 %v4332
  %v4439 = vpop.f32.mrb[0].mxu0
  %v4440 = vadd.f32 0.0, %v4439
  %v4441 = vpop.f32.mrb[0].mxu0
  %v4442 = vadd.f32 0.0, %v4441
  %4443 = vmatprep.mubr.f32.mxu0 0.0
  %4444 = vmatmul.mubr.f32.gmra.mrb[0].mxu0 %v4335
  %v4445 = vpop.f32.mrb[0].mxu0
  %v4446 = vadd.f32 0.0, %v4445
  %v4447 = vpop.f32.mrb[0].mxu0
  %v4448 = vadd.f32 0.0, %v4447
  %4449 = vdwg.mxu0
  %s4450 = scalar_lea.vmem %s61, 512
  %v4451 = vld [vmem:[%s4450] sm:$0xff]
  %v4452 = vld [vmem:[%s4450 + $0x8] sm:$0xff]
  %v4453 = vld [vmem:[%s4450 + $0x10] sm:$0xff]
  %v4454 = vld [vmem:[%s4450 + $0x18] sm:$0xff]
  %v4455 = vld [vmem:[%s4450 + $0x20] sm:$0xff]
  %v4456 = vld [vmem:[%s4450 + $0x28] sm:$0xff]
  %v4457 = vld [vmem:[%s4450 + $0x30] sm:$0xff]
  %v4458 = vld [vmem:[%s4450 + $0x38] sm:$0xff]
  %v4459 = vld [vmem:[%s4450 + $0x40] sm:$0xff]
  %v4460 = vld [vmem:[%s4450 + $0x48] sm:$0xff]
  %v4461 = vld [vmem:[%s4450 + $0x50] sm:$0xff]
  %v4462 = vld [vmem:[%s4450 + $0x58] sm:$0xff]
  %v4463 = vld [vmem:[%s4450 + $0x60] sm:$0xff]
  %v4464 = vld [vmem:[%s4450 + $0x68] sm:$0xff]
  %v4465 = vld [vmem:[%s4450 + $0x70] sm:$0xff]
  %v4466 = vld [vmem:[%s4450 + $0x78] sm:$0xff]
  %v4467 = vld [vmem:[%s4450 + $0x80] sm:$0xff]
  %v4468 = vld [vmem:[%s4450 + $0x88] sm:$0xff]
  %v4469 = vld [vmem:[%s4450 + $0x90] sm:$0xff]
  %v4470 = vld [vmem:[%s4450 + $0x98] sm:$0xff]
  %v4471 = vld [vmem:[%s4450 + $0xa0] sm:$0xff]
  %v4472 = vld [vmem:[%s4450 + $0xa8] sm:$0xff]
  %v4473 = vld [vmem:[%s4450 + $0xb0] sm:$0xff]
  %v4474 = vld [vmem:[%s4450 + $0xb8] sm:$0xff]
  %v4475 = vld [vmem:[%s4450 + $0xc0] sm:$0xff]
  %v4476 = vld [vmem:[%s4450 + $0xc8] sm:$0xff]
  %v4477 = vld [vmem:[%s4450 + $0xd0] sm:$0xff]
  %v4478 = vld [vmem:[%s4450 + $0xd8] sm:$0xff]
  %v4479 = vld [vmem:[%s4450 + $0xe0] sm:$0xff]
  %v4480 = vld [vmem:[%s4450 + $0xe8] sm:$0xff]
  %v4481 = vld [vmem:[%s4450 + $0xf0] sm:$0xff]
  %v4482 = vld [vmem:[%s4450 + $0xf8] sm:$0xff]
  %v4483 = vld [vmem:[%s4450 + $0x100] sm:$0xff]
  %v4484 = vld [vmem:[%s4450 + $0x108] sm:$0xff]
  %v4485 = vld [vmem:[%s4450 + $0x110] sm:$0xff]
  %v4486 = vld [vmem:[%s4450 + $0x118] sm:$0xff]
  %v4487 = vld [vmem:[%s4450 + $0x120] sm:$0xff]
  %v4488 = vld [vmem:[%s4450 + $0x128] sm:$0xff]
  %v4489 = vld [vmem:[%s4450 + $0x130] sm:$0xff]
  %v4490 = vld [vmem:[%s4450 + $0x138] sm:$0xff]
  %v4491 = vld [vmem:[%s4450 + $0x140] sm:$0xff]
  %v4492 = vld [vmem:[%s4450 + $0x148] sm:$0xff]
  %v4493 = vld [vmem:[%s4450 + $0x150] sm:$0xff]
  %v4494 = vld [vmem:[%s4450 + $0x158] sm:$0xff]
  %v4495 = vld [vmem:[%s4450 + $0x160] sm:$0xff]
  %v4496 = vld [vmem:[%s4450 + $0x168] sm:$0xff]
  %v4497 = vld [vmem:[%s4450 + $0x170] sm:$0xff]
  %v4498 = vld [vmem:[%s4450 + $0x178] sm:$0xff]
  %v4499 = vld [vmem:[%s4450 + $0x180] sm:$0xff]
  %v4500 = vld [vmem:[%s4450 + $0x188] sm:$0xff]
  %v4501 = vld [vmem:[%s4450 + $0x190] sm:$0xff]
  %v4502 = vld [vmem:[%s4450 + $0x198] sm:$0xff]
  %v4503 = vld [vmem:[%s4450 + $0x1a0] sm:$0xff]
  %v4504 = vld [vmem:[%s4450 + $0x1a8] sm:$0xff]
  %v4505 = vld [vmem:[%s4450 + $0x1b0] sm:$0xff]
  %v4506 = vld [vmem:[%s4450 + $0x1b8] sm:$0xff]
  %v4507 = vld [vmem:[%s4450 + $0x1c0] sm:$0xff]
  %v4508 = vld [vmem:[%s4450 + $0x1c8] sm:$0xff]
  %v4509 = vld [vmem:[%s4450 + $0x1d0] sm:$0xff]
  %v4510 = vld [vmem:[%s4450 + $0x1d8] sm:$0xff]
  %v4511 = vld [vmem:[%s4450 + $0x1e0] sm:$0xff]
  %v4512 = vld [vmem:[%s4450 + $0x1e8] sm:$0xff]
  %v4513 = vld [vmem:[%s4450 + $0x1f0] sm:$0xff]
  %v4514 = vld [vmem:[%s4450 + $0x1f8] sm:$0xff]
  %4515 = vmatprep.subr.mxu0 %v4452
  %4516 = vmatpush1.msra.mxu0 %v4451
  %4517 = vmatprep.subr.mxu0 %v4454
  %4518 = vmatpush1.msra.mxu0 %v4453
  %4519 = vmatprep.subr.mxu0 %v4456
  %4520 = vmatpush1.msra.mxu0 %v4455
  %4521 = vmatprep.subr.mxu0 %v4458
  %4522 = vmatpush1.msra.mxu0 %v4457
  %4523 = vmatprep.subr.mxu0 %v4460
  %4524 = vmatpush1.msra.mxu0 %v4459
  %4525 = vmatprep.subr.mxu0 %v4462
  %4526 = vmatpush1.msra.mxu0 %v4461
  %4527 = vmatprep.subr.mxu0 %v4464
  %4528 = vmatpush1.msra.mxu0 %v4463
  %4529 = vmatprep.subr.mxu0 %v4466
  %4530 = vmatpush1.msra.mxu0 %v4465
  %4531 = vmatprep.subr.mxu0 %v4468
  %4532 = vmatpush1.msra.mxu0 %v4467
  %4533 = vmatprep.subr.mxu0 %v4470
  %4534 = vmatpush1.msra.mxu0 %v4469
  %4535 = vmatprep.subr.mxu0 %v4472
  %4536 = vmatpush1.msra.mxu0 %v4471
  %4537 = vmatprep.subr.mxu0 %v4474
  %4538 = vmatpush1.msra.mxu0 %v4473
  %4539 = vmatprep.subr.mxu0 %v4476
  %4540 = vmatpush1.msra.mxu0 %v4475
  %4541 = vmatprep.subr.mxu0 %v4478
  %4542 = vmatpush1.msra.mxu0 %v4477
  %4543 = vmatprep.subr.mxu0 %v4480
  %4544 = vmatpush1.msra.mxu0 %v4479
  %4545 = vmatprep.subr.mxu0 %v4482
  %4546 = vmatpush1.msra.mxu0 %v4481
  %4547 = vmatprep.subr.mxu0 %v4484
  %4548 = vmatpush1.msra.mxu0 %v4483
  %4549 = vmatprep.subr.mxu0 %v4486
  %4550 = vmatpush1.msra.mxu0 %v4485
  %4551 = vmatprep.subr.mxu0 %v4488
  %4552 = vmatpush1.msra.mxu0 %v4487
  %4553 = vmatprep.subr.mxu0 %v4490
  %4554 = vmatpush1.msra.mxu0 %v4489
  %4555 = vmatprep.subr.mxu0 %v4492
  %4556 = vmatpush1.msra.mxu0 %v4491
  %4557 = vmatprep.subr.mxu0 %v4494
  %4558 = vmatpush1.msra.mxu0 %v4493
  %4559 = vmatprep.subr.mxu0 %v4496
  %4560 = vmatpush1.msra.mxu0 %v4495
  %4561 = vmatprep.subr.mxu0 %v4498
  %4562 = vmatpush1.msra.mxu0 %v4497
  %4563 = vmatprep.subr.mxu0 %v4500
  %4564 = vmatpush1.msra.mxu0 %v4499
  %4565 = vmatprep.subr.mxu0 %v4502
  %4566 = vmatpush1.msra.mxu0 %v4501
  %4567 = vmatprep.subr.mxu0 %v4504
  %4568 = vmatpush1.msra.mxu0 %v4503
  %4569 = vmatprep.subr.mxu0 %v4506
  %4570 = vmatpush1.msra.mxu0 %v4505
  %4571 = vmatprep.subr.mxu0 %v4508
  %4572 = vmatpush1.msra.mxu0 %v4507
  %4573 = vmatprep.subr.mxu0 %v4510
  %4574 = vmatpush1.msra.mxu0 %v4509
  %4575 = vmatprep.subr.mxu0 %v4512
  %4576 = vmatpush1.msra.mxu0 %v4511
  %4577 = vmatprep.subr.mxu0 %v4514
  %4578 = vmatpush1.msra.mxu0 %v4513
  %4579 = vmatprep.mubr.f32.mxu0 %v4406
  %4580 = vmatmul.mubr.f32.gmra.mrb[0].mxu0 %v4404
  %v4581 = vpop.f32.mrb[0].mxu0
  %v4582 = vadd.f32 0.0, %v4581
  %v4583 = vpop.f32.mrb[0].mxu0
  %v4584 = vadd.f32 0.0, %v4583
  %4585 = vmatprep.mubr.f32.mxu0 %v4412
  %4586 = vmatmul.mubr.f32.gmra.mrb[0].mxu0 %v4410
  %v4587 = vpop.f32.mrb[0].mxu0
  %v4588 = vadd.f32 0.0, %v4587
  %v4589 = vpop.f32.mrb[0].mxu0
  %v4590 = vadd.f32 0.0, %v4589
  %4591 = vmatprep.mubr.f32.mxu0 %v4418
  %4592 = vmatmul.mubr.f32.gmra.mrb[0].mxu0 %v4416
  %v4593 = vpop.f32.mrb[0].mxu0
  %v4594 = vadd.f32 0.0, %v4593
  %v4595 = vpop.f32.mrb[0].mxu0
  %v4596 = vadd.f32 0.0, %v4595
  %4597 = vmatprep.mubr.f32.mxu0 %v4424
  %4598 = vmatmul.mubr.f32.gmra.mrb[0].mxu0 %v4422
  %v4599 = vpop.f32.mrb[0].mxu0
  %v4600 = vadd.f32 0.0, %v4599
  %v4601 = vpop.f32.mrb[0].mxu0
  %v4602 = vadd.f32 0.0, %v4601
  %4603 = vmatprep.mubr.f32.mxu0 %v4430
  %4604 = vmatmul.mubr.f32.gmra.mrb[0].mxu0 %v4428
  %v4605 = vpop.f32.mrb[0].mxu0
  %v4606 = vadd.f32 0.0, %v4605
  %v4607 = vpop.f32.mrb[0].mxu0
  %v4608 = vadd.f32 0.0, %v4607
  %4609 = vmatprep.mubr.f32.mxu0 %v4436
  %4610 = vmatmul.mubr.f32.gmra.mrb[0].mxu0 %v4434
  %v4611 = vpop.f32.mrb[0].mxu0
  %v4612 = vadd.f32 0.0, %v4611
  %v4613 = vpop.f32.mrb[0].mxu0
  %v4614 = vadd.f32 0.0, %v4613
  %4615 = vmatprep.mubr.f32.mxu0 %v4442
  %4616 = vmatmul.mubr.f32.gmra.mrb[0].mxu0 %v4440
  %v4617 = vpop.f32.mrb[0].mxu0
  %v4618 = vadd.f32 0.0, %v4617
  %v4619 = vpop.f32.mrb[0].mxu0
  %v4620 = vadd.f32 0.0, %v4619
  %4621 = vmatprep.mubr.f32.mxu0 %v4448
  %4622 = vmatmul.mubr.f32.gmra.mrb[0].mxu0 %v4446
  %v4623 = vpop.f32.mrb[0].mxu0
  %v4624 = vadd.f32 0.0, %v4623
  %v4625 = vpop.f32.mrb[0].mxu0
  %v4626 = vadd.f32 0.0, %v4625
  %4627 = vdwg.mxu0
  %4628 = vmatprep.subr.mxu0 %v4241
  %4629 = vmatpush1.msra.mxu0 %v4240
  %4630 = vmatprep.subr.mxu0 %v4243
  %4631 = vmatpush1.msra.mxu0 %v4242
  %4632 = vmatprep.subr.mxu0 %v4245
  %4633 = vmatpush1.msra.mxu0 %v4244
  %4634 = vmatprep.subr.mxu0 %v4247
  %4635 = vmatpush1.msra.mxu0 %v4246
  %4636 = vmatprep.subr.mxu0 %v4249
  %4637 = vmatpush1.msra.mxu0 %v4248
  %4638 = vmatprep.subr.mxu0 %v4251
  %4639 = vmatpush1.msra.mxu0 %v4250
  %4640 = vmatprep.subr.mxu0 %v4253
  %4641 = vmatpush1.msra.mxu0 %v4252
  %4642 = vmatprep.subr.mxu0 %v4255
  %4643 = vmatpush1.msra.mxu0 %v4254
  %4644 = vmatprep.subr.mxu0 %v4257
  %4645 = vmatpush1.msra.mxu0 %v4256
  %4646 = vmatprep.subr.mxu0 %v4259
  %4647 = vmatpush1.msra.mxu0 %v4258
  %4648 = vmatprep.subr.mxu0 %v4261
  %4649 = vmatpush1.msra.mxu0 %v4260
  %4650 = vmatprep.subr.mxu0 %v4263
  %4651 = vmatpush1.msra.mxu0 %v4262
  %4652 = vmatprep.subr.mxu0 %v4265
  %4653 = vmatpush1.msra.mxu0 %v4264
  %4654 = vmatprep.subr.mxu0 %v4267
  %4655 = vmatpush1.msra.mxu0 %v4266
  %4656 = vmatprep.subr.mxu0 %v4269
  %4657 = vmatpush1.msra.mxu0 %v4268
  %4658 = vmatprep.subr.mxu0 %v4271
  %4659 = vmatpush1.msra.mxu0 %v4270
  %4660 = vmatprep.subr.mxu0 %v4273
  %4661 = vmatpush1.msra.mxu0 %v4272
  %4662 = vmatprep.subr.mxu0 %v4275
  %4663 = vmatpush1.msra.mxu0 %v4274
  %4664 = vmatprep.subr.mxu0 %v4277
  %4665 = vmatpush1.msra.mxu0 %v4276
  %4666 = vmatprep.subr.mxu0 %v4279
  %4667 = vmatpush1.msra.mxu0 %v4278
  %4668 = vmatprep.subr.mxu0 %v4281
  %4669 = vmatpush1.msra.mxu0 %v4280
  %4670 = vmatprep.subr.mxu0 %v4283
  %4671 = vmatpush1.msra.mxu0 %v4282
  %4672 = vmatprep.subr.mxu0 %v4285
  %4673 = vmatpush1.msra.mxu0 %v4284
  %4674 = vmatprep.subr.mxu0 %v4287
  %4675 = vmatpush1.msra.mxu0 %v4286
  %4676 = vmatprep.subr.mxu0 %v4289
  %4677 = vmatpush1.msra.mxu0 %v4288
  %4678 = vmatprep.subr.mxu0 %v4291
  %4679 = vmatpush1.msra.mxu0 %v4290
  %4680 = vmatprep.subr.mxu0 %v4293
  %4681 = vmatpush1.msra.mxu0 %v4292
  %4682 = vmatprep.subr.mxu0 %v4295
  %4683 = vmatpush1.msra.mxu0 %v4294
  %4684 = vmatprep.subr.mxu0 %v4297
  %4685 = vmatpush1.msra.mxu0 %v4296
  %4686 = vmatprep.subr.mxu0 %v4299
  %4687 = vmatpush1.msra.mxu0 %v4298
  %4688 = vmatprep.subr.mxu0 %v4301
  %4689 = vmatpush1.msra.mxu0 %v4300
  %4690 = vmatprep.subr.mxu0 %v4303
  %4691 = vmatpush1.msra.mxu0 %v4302
  %4692 = vmatprep.mubr.f32.mxu0 %v4196
  %4693 = vmatmul.mubr.f32.gmra.mrb[0].mxu0 %v4194
  %v4694 = vpop.f32.mrb[0].mxu0
  %v4695 = vadd.f32 %v4582, %v4694
  %v4696 = vpop.f32.mrb[0].mxu0
  %v4697 = vadd.f32 %v4584, %v4696
  %4698 = vmatprep.mubr.f32.mxu0 %v4202
  %4699 = vmatmul.mubr.f32.gmra.mrb[0].mxu0 %v4200
  %v4700 = vpop.f32.mrb[0].mxu0
  %v4701 = vadd.f32 %v4588, %v4700
  %v4702 = vpop.f32.mrb[0].mxu0
  %v4703 = vadd.f32 %v4590, %v4702
  %4704 = vmatprep.mubr.f32.mxu0 %v4208
  %4705 = vmatmul.mubr.f32.gmra.mrb[0].mxu0 %v4206
  %v4706 = vpop.f32.mrb[0].mxu0
  %v4707 = vadd.f32 %v4594, %v4706
  %v4708 = vpop.f32.mrb[0].mxu0
  %v4709 = vadd.f32 %v4596, %v4708
  %4710 = vmatprep.mubr.f32.mxu0 %v4214
  %4711 = vmatmul.mubr.f32.gmra.mrb[0].mxu0 %v4212
  %v4712 = vpop.f32.mrb[0].mxu0
  %v4713 = vadd.f32 %v4600, %v4712
  %v4714 = vpop.f32.mrb[0].mxu0
  %v4715 = vadd.f32 %v4602, %v4714
  %4716 = vmatprep.mubr.f32.mxu0 %v4220
  %4717 = vmatmul.mubr.f32.gmra.mrb[0].mxu0 %v4218
  %v4718 = vpop.f32.mrb[0].mxu0
  %v4719 = vadd.f32 %v4606, %v4718
  %v4720 = vpop.f32.mrb[0].mxu0
  %v4721 = vadd.f32 %v4608, %v4720
  %4722 = vmatprep.mubr.f32.mxu0 %v4226
  %4723 = vmatmul.mubr.f32.gmra.mrb[0].mxu0 %v4224
  %v4724 = vpop.f32.mrb[0].mxu0
  %v4725 = vadd.f32 %v4612, %v4724
  %v4726 = vpop.f32.mrb[0].mxu0
  %v4727 = vadd.f32 %v4614, %v4726
  %4728 = vmatprep.mubr.f32.mxu0 %v4232
  %4729 = vmatmul.mubr.f32.gmra.mrb[0].mxu0 %v4230
  %v4730 = vpop.f32.mrb[0].mxu0
  %v4731 = vadd.f32 %v4618, %v4730
  %v4732 = vpop.f32.mrb[0].mxu0
  %v4733 = vadd.f32 %v4620, %v4732
  %4734 = vmatprep.mubr.f32.mxu0 %v4238
  %4735 = vmatmul.mubr.f32.gmra.mrb[0].mxu0 %v4236
  %v4736 = vpop.f32.mrb[0].mxu0
  %v4737 = vadd.f32 %v4624, %v4736
  %v4738 = vpop.f32.mrb[0].mxu0
  %v4739 = vadd.f32 %v4626, %v4738
  %4740 = vdwg.mxu0
  %s4741 = scalar_lea.vmem %s59, 128
  %v4742 = vld [vmem:[%s4741] sm:$0xff]
  %v4743 = vld [vmem:[%s4741 + $0x8] sm:$0xff]
  %v4744 = vld [vmem:[%s4741 + $0x10] sm:$0xff]
  %v4745 = vld [vmem:[%s4741 + $0x18] sm:$0xff]
  %v4746 = vld [vmem:[%s4741 + $0x20] sm:$0xff]
  %v4747 = vld [vmem:[%s4741 + $0x28] sm:$0xff]
  %v4748 = vld [vmem:[%s4741 + $0x30] sm:$0xff]
  %v4749 = vld [vmem:[%s4741 + $0x38] sm:$0xff]
  %v4751 = vsel %vm327, %v4742, 0
  %v4754 = vsel %vm327, %v4743, 0
  %v4757 = vsel %vm327, %v4744, 0
  %v4760 = vsel %vm327, %v4745, 0
  %v4763 = vsel %vm327, %v4746, 0
  %v4766 = vsel %vm327, %v4747, 0
  %v4769 = vsel %vm327, %v4748, 0
  %v4772 = vsel %vm327, %v4749, 0
  %4774 = vmatprep.subr.mxu0 %v4088
  %4775 = vmatpush1.msra.mxu0 %v4087
  %4776 = vmatprep.subr.mxu0 %v4090
  %4777 = vmatpush1.msra.mxu0 %v4089
  %4778 = vmatprep.subr.mxu0 %v4092
  %4779 = vmatpush1.msra.mxu0 %v4091
  %4780 = vmatprep.subr.mxu0 %v4094
  %4781 = vmatpush1.msra.mxu0 %v4093
  %4782 = vmatprep.subr.mxu0 0.0
  %4783 = vmatpush1.msra.mxu0 0.0
  %4784 = vmatprep.subr.mxu0 0.0
  %4785 = vmatpush1.msra.mxu0 0.0
  %4786 = vmatprep.subr.mxu0 0.0
  %4787 = vmatpush1.msra.mxu0 0.0
  %4788 = vmatprep.subr.mxu0 0.0
  %4789 = vmatpush1.msra.mxu0 0.0
  %4790 = vmatprep.subr.mxu0 0.0
  %4791 = vmatpush1.msra.mxu0 0.0
  %4792 = vmatprep.subr.mxu0 0.0
  %4793 = vmatpush1.msra.mxu0 0.0
  %4794 = vmatprep.subr.mxu0 0.0
  %4795 = vmatpush1.msra.mxu0 0.0
  %4796 = vmatprep.subr.mxu0 0.0
  %4797 = vmatpush1.msra.mxu0 0.0
  %4798 = vmatprep.subr.mxu0 0.0
  %4799 = vmatpush1.msra.mxu0 0.0
  %4800 = vmatprep.subr.mxu0 0.0
  %4801 = vmatpush1.msra.mxu0 0.0
  %4802 = vmatprep.subr.mxu0 0.0
  %4803 = vmatpush1.msra.mxu0 0.0
  %4804 = vmatprep.subr.mxu0 0.0
  %4805 = vmatpush1.msra.mxu0 0.0
  %4806 = vmatprep.subr.mxu0 0.0
  %4807 = vmatpush1.msra.mxu0 0.0
  %4808 = vmatprep.subr.mxu0 0.0
  %4809 = vmatpush1.msra.mxu0 0.0
  %4810 = vmatprep.subr.mxu0 0.0
  %4811 = vmatpush1.msra.mxu0 0.0
  %4812 = vmatprep.subr.mxu0 0.0
  %4813 = vmatpush1.msra.mxu0 0.0
  %4814 = vmatprep.subr.mxu0 0.0
  %4815 = vmatpush1.msra.mxu0 0.0
  %4816 = vmatprep.subr.mxu0 0.0
  %4817 = vmatpush1.msra.mxu0 0.0
  %4818 = vmatprep.subr.mxu0 0.0
  %4819 = vmatpush1.msra.mxu0 0.0
  %4820 = vmatprep.subr.mxu0 0.0
  %4821 = vmatpush1.msra.mxu0 0.0
  %4822 = vmatprep.subr.mxu0 0.0
  %4823 = vmatpush1.msra.mxu0 0.0
  %4824 = vmatprep.subr.mxu0 0.0
  %4825 = vmatpush1.msra.mxu0 0.0
  %4826 = vmatprep.subr.mxu0 0.0
  %4827 = vmatpush1.msra.mxu0 0.0
  %4828 = vmatprep.subr.mxu0 0.0
  %4829 = vmatpush1.msra.mxu0 0.0
  %4830 = vmatprep.subr.mxu0 0.0
  %4831 = vmatpush1.msra.mxu0 0.0
  %4832 = vmatprep.subr.mxu0 0.0
  %4833 = vmatpush1.msra.mxu0 0.0
  %4834 = vmatprep.subr.mxu0 0.0
  %4835 = vmatpush1.msra.mxu0 0.0
  %4836 = vmatprep.subr.mxu0 0.0
  %4837 = vmatpush1.msra.mxu0 0.0
  %4838 = vmatprep.mubr.f32.mxu0 0.0
  %4839 = vmatmul.mubr.f32.gmra.mrb[0].mxu0 %v4751
  %v4840 = vpop.f32.mrb[0].mxu0
  %v4841 = vadd.f32 0.0, %v4840
  %v4842 = vpop.f32.mrb[0].mxu0
  %v4843 = vadd.f32 0.0, %v4842
  %4844 = vmatprep.mubr.f32.mxu0 0.0
  %4845 = vmatmul.mubr.f32.gmra.mrb[0].mxu0 %v4754
  %v4846 = vpop.f32.mrb[0].mxu0
  %v4847 = vadd.f32 0.0, %v4846
  %v4848 = vpop.f32.mrb[0].mxu0
  %v4849 = vadd.f32 0.0, %v4848
  %4850 = vmatprep.mubr.f32.mxu0 0.0
  %4851 = vmatmul.mubr.f32.gmra.mrb[0].mxu0 %v4757
  %v4852 = vpop.f32.mrb[0].mxu0
  %v4853 = vadd.f32 0.0, %v4852
  %v4854 = vpop.f32.mrb[0].mxu0
  %v4855 = vadd.f32 0.0, %v4854
  %4856 = vmatprep.mubr.f32.mxu0 0.0
  %4857 = vmatmul.mubr.f32.gmra.mrb[0].mxu0 %v4760
  %v4858 = vpop.f32.mrb[0].mxu0
  %v4859 = vadd.f32 0.0, %v4858
  %v4860 = vpop.f32.mrb[0].mxu0
  %v4861 = vadd.f32 0.0, %v4860
  %4862 = vmatprep.mubr.f32.mxu0 0.0
  %4863 = vmatmul.mubr.f32.gmra.mrb[0].mxu0 %v4763
  %v4864 = vpop.f32.mrb[0].mxu0
  %v4865 = vadd.f32 0.0, %v4864
  %v4866 = vpop.f32.mrb[0].mxu0
  %v4867 = vadd.f32 0.0, %v4866
  %4868 = vmatprep.mubr.f32.mxu0 0.0
  %4869 = vmatmul.mubr.f32.gmra.mrb[0].mxu0 %v4766
  %v4870 = vpop.f32.mrb[0].mxu0
  %v4871 = vadd.f32 0.0, %v4870
  %v4872 = vpop.f32.mrb[0].mxu0
  %v4873 = vadd.f32 0.0, %v4872
  %4874 = vmatprep.mubr.f32.mxu0 0.0
  %4875 = vmatmul.mubr.f32.gmra.mrb[0].mxu0 %v4769
  %v4876 = vpop.f32.mrb[0].mxu0
  %v4877 = vadd.f32 0.0, %v4876
  %v4878 = vpop.f32.mrb[0].mxu0
  %v4879 = vadd.f32 0.0, %v4878
  %4880 = vmatprep.mubr.f32.mxu0 0.0
  %4881 = vmatmul.mubr.f32.gmra.mrb[0].mxu0 %v4772
  %v4882 = vpop.f32.mrb[0].mxu0
  %v4883 = vadd.f32 0.0, %v4882
  %v4884 = vpop.f32.mrb[0].mxu0
  %v4885 = vadd.f32 0.0, %v4884
  %4886 = vdwg.mxu0
  %s4887 = scalar_lea.vmem %s61, 1024
  %v4888 = vld [vmem:[%s4887] sm:$0xff]
  %v4889 = vld [vmem:[%s4887 + $0x8] sm:$0xff]
  %v4890 = vld [vmem:[%s4887 + $0x10] sm:$0xff]
  %v4891 = vld [vmem:[%s4887 + $0x18] sm:$0xff]
  %v4892 = vld [vmem:[%s4887 + $0x20] sm:$0xff]
  %v4893 = vld [vmem:[%s4887 + $0x28] sm:$0xff]
  %v4894 = vld [vmem:[%s4887 + $0x30] sm:$0xff]
  %v4895 = vld [vmem:[%s4887 + $0x38] sm:$0xff]
  %v4896 = vld [vmem:[%s4887 + $0x40] sm:$0xff]
  %v4897 = vld [vmem:[%s4887 + $0x48] sm:$0xff]
  %v4898 = vld [vmem:[%s4887 + $0x50] sm:$0xff]
  %v4899 = vld [vmem:[%s4887 + $0x58] sm:$0xff]
  %v4900 = vld [vmem:[%s4887 + $0x60] sm:$0xff]
  %v4901 = vld [vmem:[%s4887 + $0x68] sm:$0xff]
  %v4902 = vld [vmem:[%s4887 + $0x70] sm:$0xff]
  %v4903 = vld [vmem:[%s4887 + $0x78] sm:$0xff]
  %v4904 = vld [vmem:[%s4887 + $0x80] sm:$0xff]
  %v4905 = vld [vmem:[%s4887 + $0x88] sm:$0xff]
  %v4906 = vld [vmem:[%s4887 + $0x90] sm:$0xff]
  %v4907 = vld [vmem:[%s4887 + $0x98] sm:$0xff]
  %v4908 = vld [vmem:[%s4887 + $0xa0] sm:$0xff]
  %v4909 = vld [vmem:[%s4887 + $0xa8] sm:$0xff]
  %v4910 = vld [vmem:[%s4887 + $0xb0] sm:$0xff]
  %v4911 = vld [vmem:[%s4887 + $0xb8] sm:$0xff]
  %v4912 = vld [vmem:[%s4887 + $0xc0] sm:$0xff]
  %v4913 = vld [vmem:[%s4887 + $0xc8] sm:$0xff]
  %v4914 = vld [vmem:[%s4887 + $0xd0] sm:$0xff]
  %v4915 = vld [vmem:[%s4887 + $0xd8] sm:$0xff]
  %v4916 = vld [vmem:[%s4887 + $0xe0] sm:$0xff]
  %v4917 = vld [vmem:[%s4887 + $0xe8] sm:$0xff]
  %v4918 = vld [vmem:[%s4887 + $0xf0] sm:$0xff]
  %v4919 = vld [vmem:[%s4887 + $0xf8] sm:$0xff]
  %v4920 = vld [vmem:[%s4887 + $0x100] sm:$0xff]
  %v4921 = vld [vmem:[%s4887 + $0x108] sm:$0xff]
  %v4922 = vld [vmem:[%s4887 + $0x110] sm:$0xff]
  %v4923 = vld [vmem:[%s4887 + $0x118] sm:$0xff]
  %v4924 = vld [vmem:[%s4887 + $0x120] sm:$0xff]
  %v4925 = vld [vmem:[%s4887 + $0x128] sm:$0xff]
  %v4926 = vld [vmem:[%s4887 + $0x130] sm:$0xff]
  %v4927 = vld [vmem:[%s4887 + $0x138] sm:$0xff]
  %v4928 = vld [vmem:[%s4887 + $0x140] sm:$0xff]
  %v4929 = vld [vmem:[%s4887 + $0x148] sm:$0xff]
  %v4930 = vld [vmem:[%s4887 + $0x150] sm:$0xff]
  %v4931 = vld [vmem:[%s4887 + $0x158] sm:$0xff]
  %v4932 = vld [vmem:[%s4887 + $0x160] sm:$0xff]
  %v4933 = vld [vmem:[%s4887 + $0x168] sm:$0xff]
  %v4934 = vld [vmem:[%s4887 + $0x170] sm:$0xff]
  %v4935 = vld [vmem:[%s4887 + $0x178] sm:$0xff]
  %v4936 = vld [vmem:[%s4887 + $0x180] sm:$0xff]
  %v4937 = vld [vmem:[%s4887 + $0x188] sm:$0xff]
  %v4938 = vld [vmem:[%s4887 + $0x190] sm:$0xff]
  %v4939 = vld [vmem:[%s4887 + $0x198] sm:$0xff]
  %v4940 = vld [vmem:[%s4887 + $0x1a0] sm:$0xff]
  %v4941 = vld [vmem:[%s4887 + $0x1a8] sm:$0xff]
  %v4942 = vld [vmem:[%s4887 + $0x1b0] sm:$0xff]
  %v4943 = vld [vmem:[%s4887 + $0x1b8] sm:$0xff]
  %v4944 = vld [vmem:[%s4887 + $0x1c0] sm:$0xff]
  %v4945 = vld [vmem:[%s4887 + $0x1c8] sm:$0xff]
  %v4946 = vld [vmem:[%s4887 + $0x1d0] sm:$0xff]
  %v4947 = vld [vmem:[%s4887 + $0x1d8] sm:$0xff]
  %v4948 = vld [vmem:[%s4887 + $0x1e0] sm:$0xff]
  %v4949 = vld [vmem:[%s4887 + $0x1e8] sm:$0xff]
  %v4950 = vld [vmem:[%s4887 + $0x1f0] sm:$0xff]
  %v4951 = vld [vmem:[%s4887 + $0x1f8] sm:$0xff]
  %4952 = vmatprep.subr.mxu0 %v4889
  %4953 = vmatpush1.msra.mxu0 %v4888
  %4954 = vmatprep.subr.mxu0 %v4891
  %4955 = vmatpush1.msra.mxu0 %v4890
  %4956 = vmatprep.subr.mxu0 %v4893
  %4957 = vmatpush1.msra.mxu0 %v4892
  %4958 = vmatprep.subr.mxu0 %v4895
  %4959 = vmatpush1.msra.mxu0 %v4894
  %4960 = vmatprep.subr.mxu0 %v4897
  %4961 = vmatpush1.msra.mxu0 %v4896
  %4962 = vmatprep.subr.mxu0 %v4899
  %4963 = vmatpush1.msra.mxu0 %v4898
  %4964 = vmatprep.subr.mxu0 %v4901
  %4965 = vmatpush1.msra.mxu0 %v4900
  %4966 = vmatprep.subr.mxu0 %v4903
  %4967 = vmatpush1.msra.mxu0 %v4902
  %4968 = vmatprep.subr.mxu0 %v4905
  %4969 = vmatpush1.msra.mxu0 %v4904
  %4970 = vmatprep.subr.mxu0 %v4907
  %4971 = vmatpush1.msra.mxu0 %v4906
  %4972 = vmatprep.subr.mxu0 %v4909
  %4973 = vmatpush1.msra.mxu0 %v4908
  %4974 = vmatprep.subr.mxu0 %v4911
  %4975 = vmatpush1.msra.mxu0 %v4910
  %4976 = vmatprep.subr.mxu0 %v4913
  %4977 = vmatpush1.msra.mxu0 %v4912
  %4978 = vmatprep.subr.mxu0 %v4915
  %4979 = vmatpush1.msra.mxu0 %v4914
  %4980 = vmatprep.subr.mxu0 %v4917
  %4981 = vmatpush1.msra.mxu0 %v4916
  %4982 = vmatprep.subr.mxu0 %v4919
  %4983 = vmatpush1.msra.mxu0 %v4918
  %4984 = vmatprep.subr.mxu0 %v4921
  %4985 = vmatpush1.msra.mxu0 %v4920
  %4986 = vmatprep.subr.mxu0 %v4923
  %4987 = vmatpush1.msra.mxu0 %v4922
  %4988 = vmatprep.subr.mxu0 %v4925
  %4989 = vmatpush1.msra.mxu0 %v4924
  %4990 = vmatprep.subr.mxu0 %v4927
  %4991 = vmatpush1.msra.mxu0 %v4926
  %4992 = vmatprep.subr.mxu0 %v4929
  %4993 = vmatpush1.msra.mxu0 %v4928
  %4994 = vmatprep.subr.mxu0 %v4931
  %4995 = vmatpush1.msra.mxu0 %v4930
  %4996 = vmatprep.subr.mxu0 %v4933
  %4997 = vmatpush1.msra.mxu0 %v4932
  %4998 = vmatprep.subr.mxu0 %v4935
  %4999 = vmatpush1.msra.mxu0 %v4934
  %5000 = vmatprep.subr.mxu0 %v4937
  %5001 = vmatpush1.msra.mxu0 %v4936
  %5002 = vmatprep.subr.mxu0 %v4939
  %5003 = vmatpush1.msra.mxu0 %v4938
  %5004 = vmatprep.subr.mxu0 %v4941
  %5005 = vmatpush1.msra.mxu0 %v4940
  %5006 = vmatprep.subr.mxu0 %v4943
  %5007 = vmatpush1.msra.mxu0 %v4942
  %5008 = vmatprep.subr.mxu0 %v4945
  %5009 = vmatpush1.msra.mxu0 %v4944
  %5010 = vmatprep.subr.mxu0 %v4947
  %5011 = vmatpush1.msra.mxu0 %v4946
  %5012 = vmatprep.subr.mxu0 %v4949
  %5013 = vmatpush1.msra.mxu0 %v4948
  %5014 = vmatprep.subr.mxu0 %v4951
  %5015 = vmatpush1.msra.mxu0 %v4950
  %5016 = vmatprep.mubr.f32.mxu0 %v4843
  %5017 = vmatmul.mubr.f32.gmra.mrb[0].mxu0 %v4841
  %v5018 = vpop.f32.mrb[0].mxu0
  %v5019 = vadd.f32 0.0, %v5018
  %v5020 = vpop.f32.mrb[0].mxu0
  %v5021 = vadd.f32 0.0, %v5020
  %5022 = vmatprep.mubr.f32.mxu0 %v4849
  %5023 = vmatmul.mubr.f32.gmra.mrb[0].mxu0 %v4847
  %v5024 = vpop.f32.mrb[0].mxu0
  %v5025 = vadd.f32 0.0, %v5024
  %v5026 = vpop.f32.mrb[0].mxu0
  %v5027 = vadd.f32 0.0, %v5026
  %5028 = vmatprep.mubr.f32.mxu0 %v4855
  %5029 = vmatmul.mubr.f32.gmra.mrb[0].mxu0 %v4853
  %v5030 = vpop.f32.mrb[0].mxu0
  %v5031 = vadd.f32 0.0, %v5030
  %v5032 = vpop.f32.mrb[0].mxu0
  %v5033 = vadd.f32 0.0, %v5032
  %5034 = vmatprep.mubr.f32.mxu0 %v4861
  %5035 = vmatmul.mubr.f32.gmra.mrb[0].mxu0 %v4859
  %v5036 = vpop.f32.mrb[0].mxu0
  %v5037 = vadd.f32 0.0, %v5036
  %v5038 = vpop.f32.mrb[0].mxu0
  %v5039 = vadd.f32 0.0, %v5038
  %5040 = vmatprep.mubr.f32.mxu0 %v4867
  %5041 = vmatmul.mubr.f32.gmra.mrb[0].mxu0 %v4865
  %v5042 = vpop.f32.mrb[0].mxu0
  %v5043 = vadd.f32 0.0, %v5042
  %v5044 = vpop.f32.mrb[0].mxu0
  %v5045 = vadd.f32 0.0, %v5044
  %5046 = vmatprep.mubr.f32.mxu0 %v4873
  %5047 = vmatmul.mubr.f32.gmra.mrb[0].mxu0 %v4871
  %v5048 = vpop.f32.mrb[0].mxu0
  %v5049 = vadd.f32 0.0, %v5048
  %v5050 = vpop.f32.mrb[0].mxu0
  %v5051 = vadd.f32 0.0, %v5050
  %5052 = vmatprep.mubr.f32.mxu0 %v4879
  %5053 = vmatmul.mubr.f32.gmra.mrb[0].mxu0 %v4877
  %v5054 = vpop.f32.mrb[0].mxu0
  %v5055 = vadd.f32 0.0, %v5054
  %v5056 = vpop.f32.mrb[0].mxu0
  %v5057 = vadd.f32 0.0, %v5056
  %5058 = vmatprep.mubr.f32.mxu0 %v4885
  %5059 = vmatmul.mubr.f32.gmra.mrb[0].mxu0 %v4883
  %v5060 = vpop.f32.mrb[0].mxu0
  %v5061 = vadd.f32 0.0, %v5060
  %v5062 = vpop.f32.mrb[0].mxu0
  %v5063 = vadd.f32 0.0, %v5062
  %5064 = vdwg.mxu0
  %v5065 = vadd.f32 %v4695, %v5019
  %v5066 = vadd.f32 %v4697, %v5021
  %v5067 = vadd.f32 %v4701, %v5025
  %v5068 = vadd.f32 %v4703, %v5027
  %v5069 = vadd.f32 %v4707, %v5031
  %v5070 = vadd.f32 %v4709, %v5033
  %v5071 = vadd.f32 %v4713, %v5037
  %v5072 = vadd.f32 %v4715, %v5039
  %v5073 = vadd.f32 %v4719, %v5043
  %v5074 = vadd.f32 %v4721, %v5045
  %v5075 = vadd.f32 %v4725, %v5049
  %v5076 = vadd.f32 %v4727, %v5051
  %v5077 = vadd.f32 %v4731, %v5055
  %v5078 = vadd.f32 %v4733, %v5057
  %v5079 = vadd.f32 %v4737, %v5061
  %v5080 = vadd.f32 %v4739, %v5063
  %v5081 = vld [vmem:[%s63] sm:$0x3]
  %v5083 = vlaneseq
  %v5084 = vshrl.u32 %v5083, 7
  %v5085 = vsub.s32 0, %v5084
  %v5086 = vrot.slane %v5081, %v5085
  %v5087 = vlaneseq
  %v5088 = vshrl.u32 %v5087, 7
  %v5089 = vsub.s32 1, %v5088
  %v5090 = vrot.slane %v5081, %v5089
  %v5093 = vadd.f32 %v5065, %v5086
  %v5094 = vadd.f32 %v5066, %v5090
  %v5095 = vadd.f32 %v5067, %v5086
  %v5096 = vadd.f32 %v5068, %v5090
  %v5097 = vadd.f32 %v5069, %v5086
  %v5098 = vadd.f32 %v5070, %v5090
  %v5099 = vadd.f32 %v5071, %v5086
  %v5100 = vadd.f32 %v5072, %v5090
  %v5101 = vadd.f32 %v5073, %v5086
  %v5102 = vadd.f32 %v5074, %v5090
  %v5103 = vadd.f32 %v5075, %v5086
  %v5104 = vadd.f32 %v5076, %v5090
  %v5105 = vadd.f32 %v5077, %v5086
  %v5106 = vadd.f32 %v5078, %v5090
  %v5107 = vadd.f32 %v5079, %v5086
  %v5108 = vadd.f32 %v5080, %v5090
  %v5109 = vadd.f32 %v5093, %v5095
  %v5110 = vadd.f32 %v5109, %v5097
  %v5111 = vadd.f32 %v5110, %v5099
  %v5112 = vadd.f32 %v5111, %v5101
  %v5113 = vadd.f32 %v5112, %v5103
  %v5114 = vadd.f32 %v5113, %v5105
  %v5115 = vadd.f32 %v5114, %v5107
  %v5116 = vrot.slane %v5115, 4
  %v5117 = vadd.f32 %v5115, %v5116
  %v5118 = vrot.slane %v5117, 2
  %v5119 = vadd.f32 %v5117, %v5118
  %v5120 = vrot.slane %v5119, 1
  %v5121 = vadd.f32 %v5119, %v5120
  %v5122 = vadd.f32 %v5094, %v5096
  %v5123 = vadd.f32 %v5122, %v5098
  %v5124 = vadd.f32 %v5123, %v5100
  %v5125 = vadd.f32 %v5124, %v5102
  %v5126 = vadd.f32 %v5125, %v5104
  %v5127 = vadd.f32 %v5126, %v5106
  %v5128 = vadd.f32 %v5127, %v5108
  %v5129 = vrot.slane %v5128, 4
  %v5130 = vadd.f32 %v5128, %v5129
  %v5131 = vrot.slane %v5130, 2
  %v5132 = vadd.f32 %v5130, %v5131
  %v5133 = vrot.slane %v5132, 1
  %v5134 = vadd.f32 %v5132, %v5133
  %v5135 = vld [vmem:[%s65] sm:$0xff]
  %v5136 = vld [vmem:[%s65 + $0x8] sm:$0xff]
  %v5137 = vld [vmem:[%s65 + $0x10] sm:$0xff]
  %v5138 = vld [vmem:[%s65 + $0x18] sm:$0xff]
  %v5139 = vld [vmem:[%s65 + $0x20] sm:$0xff]
  %v5140 = vld [vmem:[%s65 + $0x28] sm:$0xff]
  %v5141 = vld [vmem:[%s65 + $0x30] sm:$0xff]
  %v5142 = vld [vmem:[%s65 + $0x38] sm:$0xff]
  %v5143 = vld [vmem:[%s65 + $0x40] sm:$0xff]
  %v5144 = vld [vmem:[%s65 + $0x48] sm:$0xff]
  %v5145 = vld [vmem:[%s65 + $0x50] sm:$0xff]
  %v5146 = vld [vmem:[%s65 + $0x58] sm:$0xff]
  %v5147 = vld [vmem:[%s65 + $0x60] sm:$0xff]
  %v5148 = vld [vmem:[%s65 + $0x68] sm:$0xff]
  %v5149 = vld [vmem:[%s65 + $0x70] sm:$0xff]
  %v5150 = vld [vmem:[%s65 + $0x78] sm:$0xff]
  %v5151 = vld [vmem:[%s65 + $0x80] sm:$0xff]
  %v5152 = vld [vmem:[%s65 + $0x88] sm:$0xff]
  %v5153 = vld [vmem:[%s65 + $0x90] sm:$0xff]
  %v5154 = vld [vmem:[%s65 + $0x98] sm:$0xff]
  %v5155 = vld [vmem:[%s65 + $0xa0] sm:$0xff]
  %v5156 = vld [vmem:[%s65 + $0xa8] sm:$0xff]
  %v5157 = vld [vmem:[%s65 + $0xb0] sm:$0xff]
  %v5158 = vld [vmem:[%s65 + $0xb8] sm:$0xff]
  %v5159 = vld [vmem:[%s65 + $0xc0] sm:$0xff]
  %v5160 = vld [vmem:[%s65 + $0xc8] sm:$0xff]
  %v5161 = vld [vmem:[%s65 + $0xd0] sm:$0xff]
  %v5162 = vld [vmem:[%s65 + $0xd8] sm:$0xff]
  %v5163 = vld [vmem:[%s65 + $0xe0] sm:$0xff]
  %v5164 = vld [vmem:[%s65 + $0xe8] sm:$0xff]
  %v5165 = vld [vmem:[%s65 + $0xf0] sm:$0xff]
  %v5166 = vld [vmem:[%s65 + $0xf8] sm:$0xff]
  %5167 = vmatprep.subr.mxu0 0.0
  %5168 = vmatpush1.msra.mxu0 %v5135
  %5169 = vmatprep.subr.mxu0 0.0
  %5170 = vmatpush1.msra.mxu0 %v5136
  %5171 = vmatprep.subr.mxu0 0.0
  %5172 = vmatpush1.msra.mxu0 %v5137
  %5173 = vmatprep.subr.mxu0 0.0
  %5174 = vmatpush1.msra.mxu0 %v5138
  %5175 = vmatprep.subr.mxu0 0.0
  %5176 = vmatpush1.msra.mxu0 %v5139
  %5177 = vmatprep.subr.mxu0 0.0
  %5178 = vmatpush1.msra.mxu0 %v5140
  %5179 = vmatprep.subr.mxu0 0.0
  %5180 = vmatpush1.msra.mxu0 %v5141
  %5181 = vmatprep.subr.mxu0 0.0
  %5182 = vmatpush1.msra.mxu0 %v5142
  %5183 = vmatprep.subr.mxu0 0.0
  %5184 = vmatpush1.msra.mxu0 %v5143
  %5185 = vmatprep.subr.mxu0 0.0
  %5186 = vmatpush1.msra.mxu0 %v5144
  %5187 = vmatprep.subr.mxu0 0.0
  %5188 = vmatpush1.msra.mxu0 %v5145
  %5189 = vmatprep.subr.mxu0 0.0
  %5190 = vmatpush1.msra.mxu0 %v5146
  %5191 = vmatprep.subr.mxu0 0.0
  %5192 = vmatpush1.msra.mxu0 %v5147
  %5193 = vmatprep.subr.mxu0 0.0
  %5194 = vmatpush1.msra.mxu0 %v5148
  %5195 = vmatprep.subr.mxu0 0.0
  %5196 = vmatpush1.msra.mxu0 %v5149
  %5197 = vmatprep.subr.mxu0 0.0
  %5198 = vmatpush1.msra.mxu0 %v5150
  %5199 = vmatprep.subr.mxu0 0.0
  %5200 = vmatpush1.msra.mxu0 %v5151
  %5201 = vmatprep.subr.mxu0 0.0
  %5202 = vmatpush1.msra.mxu0 %v5152
  %5203 = vmatprep.subr.mxu0 0.0
  %5204 = vmatpush1.msra.mxu0 %v5153
  %5205 = vmatprep.subr.mxu0 0.0
  %5206 = vmatpush1.msra.mxu0 %v5154
  %5207 = vmatprep.subr.mxu0 0.0
  %5208 = vmatpush1.msra.mxu0 %v5155
  %5209 = vmatprep.subr.mxu0 0.0
  %5210 = vmatpush1.msra.mxu0 %v5156
  %5211 = vmatprep.subr.mxu0 0.0
  %5212 = vmatpush1.msra.mxu0 %v5157
  %5213 = vmatprep.subr.mxu0 0.0
  %5214 = vmatpush1.msra.mxu0 %v5158
  %5215 = vmatprep.subr.mxu0 0.0
  %5216 = vmatpush1.msra.mxu0 %v5159
  %5217 = vmatprep.subr.mxu0 0.0
  %5218 = vmatpush1.msra.mxu0 %v5160
  %5219 = vmatprep.subr.mxu0 0.0
  %5220 = vmatpush1.msra.mxu0 %v5161
  %5221 = vmatprep.subr.mxu0 0.0
  %5222 = vmatpush1.msra.mxu0 %v5162
  %5223 = vmatprep.subr.mxu0 0.0
  %5224 = vmatpush1.msra.mxu0 %v5163
  %5225 = vmatprep.subr.mxu0 0.0
  %5226 = vmatpush1.msra.mxu0 %v5164
  %5227 = vmatprep.subr.mxu0 0.0
  %5228 = vmatpush1.msra.mxu0 %v5165
  %5229 = vmatprep.subr.mxu0 0.0
  %5230 = vmatpush1.msra.mxu0 %v5166
  %5231 = vmatprep.mubr.f32.mxu0 %v5134
  %5232 = vmatmul.mubr.f32.gmra.mrb[0].mxu0 %v5121
  %v5233 = vpop.f32.mrb[0].mxu0
  %v5234 = vadd.f32 0.0, %v5233
  %v5235 = vpop.f32.mrb[0].mxu0
  %5236 = vdwg.mxu0
  %v5237 = vmul.f32 %v5234, 0.00048828125
  %v5238 = vld [vmem:[%s67] sm:$0xff]
  %v5239 = vld [vmem:[%s67 + $0x8] sm:$0xff]
  %v5241 = vsel %vm1938, %v5237, 0
  %5243 = vmatprep.subr.mxu0 %v5239
  %5244 = vmatpush1.msra.mxu0 %v5238
  %5245 = vmatprep.subr.mxu0 0.0
  %5246 = vmatpush1.msra.mxu0 0.0
  %5247 = vmatprep.subr.mxu0 0.0
  %5248 = vmatpush1.msra.mxu0 0.0
  %5249 = vmatprep.subr.mxu0 0.0
  %5250 = vmatpush1.msra.mxu0 0.0
  %5251 = vmatprep.subr.mxu0 0.0
  %5252 = vmatpush1.msra.mxu0 0.0
  %5253 = vmatprep.subr.mxu0 0.0
  %5254 = vmatpush1.msra.mxu0 0.0
  %5255 = vmatprep.subr.mxu0 0.0
  %5256 = vmatpush1.msra.mxu0 0.0
  %5257 = vmatprep.subr.mxu0 0.0
  %5258 = vmatpush1.msra.mxu0 0.0
  %5259 = vmatprep.subr.mxu0 0.0
  %5260 = vmatpush1.msra.mxu0 0.0
  %5261 = vmatprep.subr.mxu0 0.0
  %5262 = vmatpush1.msra.mxu0 0.0
  %5263 = vmatprep.subr.mxu0 0.0
  %5264 = vmatpush1.msra.mxu0 0.0
  %5265 = vmatprep.subr.mxu0 0.0
  %5266 = vmatpush1.msra.mxu0 0.0
  %5267 = vmatprep.subr.mxu0 0.0
  %5268 = vmatpush1.msra.mxu0 0.0
  %5269 = vmatprep.subr.mxu0 0.0
  %5270 = vmatpush1.msra.mxu0 0.0
  %5271 = vmatprep.subr.mxu0 0.0
  %5272 = vmatpush1.msra.mxu0 0.0
  %5273 = vmatprep.subr.mxu0 0.0
  %5274 = vmatpush1.msra.mxu0 0.0
  %5275 = vmatprep.subr.mxu0 0.0
  %5276 = vmatpush1.msra.mxu0 0.0
  %5277 = vmatprep.subr.mxu0 0.0
  %5278 = vmatpush1.msra.mxu0 0.0
  %5279 = vmatprep.subr.mxu0 0.0
  %5280 = vmatpush1.msra.mxu0 0.0
  %5281 = vmatprep.subr.mxu0 0.0
  %5282 = vmatpush1.msra.mxu0 0.0
  %5283 = vmatprep.subr.mxu0 0.0
  %5284 = vmatpush1.msra.mxu0 0.0
  %5285 = vmatprep.subr.mxu0 0.0
  %5286 = vmatpush1.msra.mxu0 0.0
  %5287 = vmatprep.subr.mxu0 0.0
  %5288 = vmatpush1.msra.mxu0 0.0
  %5289 = vmatprep.subr.mxu0 0.0
  %5290 = vmatpush1.msra.mxu0 0.0
  %5291 = vmatprep.subr.mxu0 0.0
  %5292 = vmatpush1.msra.mxu0 0.0
  %5293 = vmatprep.subr.mxu0 0.0
  %5294 = vmatpush1.msra.mxu0 0.0
  %5295 = vmatprep.subr.mxu0 0.0
  %5296 = vmatpush1.msra.mxu0 0.0
  %5297 = vmatprep.subr.mxu0 0.0
  %5298 = vmatpush1.msra.mxu0 0.0
  %5299 = vmatprep.subr.mxu0 0.0
  %5300 = vmatpush1.msra.mxu0 0.0
  %5301 = vmatprep.subr.mxu0 0.0
  %5302 = vmatpush1.msra.mxu0 0.0
  %5303 = vmatprep.subr.mxu0 0.0
  %5304 = vmatpush1.msra.mxu0 0.0
  %5305 = vmatprep.subr.mxu0 0.0
  %5306 = vmatpush1.msra.mxu0 0.0
  %5307 = vmatprep.mubr.f32.mxu0 0.0
  %5308 = vmatmul.mubr.f32.gmra.mrb[0].mxu0 %v5241
  %v5309 = vpop.f32.mrb[0].mxu0
  %v5310 = vadd.f32 0.0, %v5309
  %v5311 = vpop.f32.mrb[0].mxu0
  %v5312 = vadd.f32 0.0, %v5311
  %5313 = vdwg.mxu0
  %v5314 = vlaneseq
  %v5315 = vshrl.u32 %v5314, 7
  %v5316 = vsub.s32 0, %v5315
  %v5317 = vrot.slane %v5310, %v5316
  %v5318 = vlaneseq
  %v5319 = vshrl.u32 %v5318, 7
  %v5320 = vsub.s32 0, %v5319
  %v5321 = vrot.slane %v5312, %v5320
  %v5322 = vsub.f32 %v5093, %v5317
  %v5323 = vsub.f32 %v5094, %v5321
  %v5324 = vsub.f32 %v5095, %v5317
  %v5325 = vsub.f32 %v5096, %v5321
  %v5326 = vsub.f32 %v5097, %v5317
  %v5327 = vsub.f32 %v5098, %v5321
  %v5328 = vsub.f32 %v5099, %v5317
  %v5329 = vsub.f32 %v5100, %v5321
  %v5330 = vsub.f32 %v5101, %v5317
  %v5331 = vsub.f32 %v5102, %v5321
  %v5332 = vsub.f32 %v5103, %v5317
  %v5333 = vsub.f32 %v5104, %v5321
  %v5334 = vsub.f32 %v5105, %v5317
  %v5335 = vsub.f32 %v5106, %v5321
  %v5336 = vsub.f32 %v5107, %v5317
  %v5337 = vsub.f32 %v5108, %v5321
  %v5338 = vmul.f32 %v5322, %v5322
  %v5339 = vmul.f32 %v5323, %v5323
  %v5340 = vmul.f32 %v5324, %v5324
  %v5341 = vmul.f32 %v5325, %v5325
  %v5342 = vmul.f32 %v5326, %v5326
  %v5343 = vmul.f32 %v5327, %v5327
  %v5344 = vmul.f32 %v5328, %v5328
  %v5345 = vmul.f32 %v5329, %v5329
  %v5346 = vmul.f32 %v5330, %v5330
  %v5347 = vmul.f32 %v5331, %v5331
  %v5348 = vmul.f32 %v5332, %v5332
  %v5349 = vmul.f32 %v5333, %v5333
  %v5350 = vmul.f32 %v5334, %v5334
  %v5351 = vmul.f32 %v5335, %v5335
  %v5352 = vmul.f32 %v5336, %v5336
  %v5353 = vmul.f32 %v5337, %v5337
  %v5354 = vadd.f32 %v5338, %v5340
  %v5355 = vadd.f32 %v5354, %v5342
  %v5356 = vadd.f32 %v5355, %v5344
  %v5357 = vadd.f32 %v5356, %v5346
  %v5358 = vadd.f32 %v5357, %v5348
  %v5359 = vadd.f32 %v5358, %v5350
  %v5360 = vadd.f32 %v5359, %v5352
  %v5361 = vrot.slane %v5360, 4
  %v5362 = vadd.f32 %v5360, %v5361
  %v5363 = vrot.slane %v5362, 2
  %v5364 = vadd.f32 %v5362, %v5363
  %v5365 = vrot.slane %v5364, 1
  %v5366 = vadd.f32 %v5364, %v5365
  %v5367 = vadd.f32 %v5339, %v5341
  %v5368 = vadd.f32 %v5367, %v5343
  %v5369 = vadd.f32 %v5368, %v5345
  %v5370 = vadd.f32 %v5369, %v5347
  %v5371 = vadd.f32 %v5370, %v5349
  %v5372 = vadd.f32 %v5371, %v5351
  %v5373 = vadd.f32 %v5372, %v5353
  %v5374 = vrot.slane %v5373, 4
  %v5375 = vadd.f32 %v5373, %v5374
  %v5376 = vrot.slane %v5375, 2
  %v5377 = vadd.f32 %v5375, %v5376
  %v5378 = vrot.slane %v5377, 1
  %v5379 = vadd.f32 %v5377, %v5378
  %5380 = vmatprep.subr.mxu0 0.0
  %5381 = vmatpush1.msra.mxu0 %v5135
  %5382 = vmatprep.subr.mxu0 0.0
  %5383 = vmatpush1.msra.mxu0 %v5136
  %5384 = vmatprep.subr.mxu0 0.0
  %5385 = vmatpush1.msra.mxu0 %v5137
  %5386 = vmatprep.subr.mxu0 0.0
  %5387 = vmatpush1.msra.mxu0 %v5138
  %5388 = vmatprep.subr.mxu0 0.0
  %5389 = vmatpush1.msra.mxu0 %v5139
  %5390 = vmatprep.subr.mxu0 0.0
  %5391 = vmatpush1.msra.mxu0 %v5140
  %5392 = vmatprep.subr.mxu0 0.0
  %5393 = vmatpush1.msra.mxu0 %v5141
  %5394 = vmatprep.subr.mxu0 0.0
  %5395 = vmatpush1.msra.mxu0 %v5142
  %5396 = vmatprep.subr.mxu0 0.0
  %5397 = vmatpush1.msra.mxu0 %v5143
  %5398 = vmatprep.subr.mxu0 0.0
  %5399 = vmatpush1.msra.mxu0 %v5144
  %5400 = vmatprep.subr.mxu0 0.0
  %5401 = vmatpush1.msra.mxu0 %v5145
  %5402 = vmatprep.subr.mxu0 0.0
  %5403 = vmatpush1.msra.mxu0 %v5146
  %5404 = vmatprep.subr.mxu0 0.0
  %5405 = vmatpush1.msra.mxu0 %v5147
  %5406 = vmatprep.subr.mxu0 0.0
  %5407 = vmatpush1.msra.mxu0 %v5148
  %5408 = vmatprep.subr.mxu0 0.0
  %5409 = vmatpush1.msra.mxu0 %v5149
  %5410 = vmatprep.subr.mxu0 0.0
  %5411 = vmatpush1.msra.mxu0 %v5150
  %5412 = vmatprep.subr.mxu0 0.0
  %5413 = vmatpush1.msra.mxu0 %v5151
  %5414 = vmatprep.subr.mxu0 0.0
  %5415 = vmatpush1.msra.mxu0 %v5152
  %5416 = vmatprep.subr.mxu0 0.0
  %5417 = vmatpush1.msra.mxu0 %v5153
  %5418 = vmatprep.subr.mxu0 0.0
  %5419 = vmatpush1.msra.mxu0 %v5154
  %5420 = vmatprep.subr.mxu0 0.0
  %5421 = vmatpush1.msra.mxu0 %v5155
  %5422 = vmatprep.subr.mxu0 0.0
  %5423 = vmatpush1.msra.mxu0 %v5156
  %5424 = vmatprep.subr.mxu0 0.0
  %5425 = vmatpush1.msra.mxu0 %v5157
  %5426 = vmatprep.subr.mxu0 0.0
  %5427 = vmatpush1.msra.mxu0 %v5158
  %5428 = vmatprep.subr.mxu0 0.0
  %5429 = vmatpush1.msra.mxu0 %v5159
  %5430 = vmatprep.subr.mxu0 0.0
  %5431 = vmatpush1.msra.mxu0 %v5160
  %5432 = vmatprep.subr.mxu0 0.0
  %5433 = vmatpush1.msra.mxu0 %v5161
  %5434 = vmatprep.subr.mxu0 0.0
  %5435 = vmatpush1.msra.mxu0 %v5162
  %5436 = vmatprep.subr.mxu0 0.0
  %5437 = vmatpush1.msra.mxu0 %v5163
  %5438 = vmatprep.subr.mxu0 0.0
  %5439 = vmatpush1.msra.mxu0 %v5164
  %5440 = vmatprep.subr.mxu0 0.0
  %5441 = vmatpush1.msra.mxu0 %v5165
  %5442 = vmatprep.subr.mxu0 0.0
  %5443 = vmatpush1.msra.mxu0 %v5166
  %5444 = vmatprep.mubr.f32.mxu0 %v5379
  %5445 = vmatmul.mubr.f32.gmra.mrb[0].mxu0 %v5366
  %v5446 = vpop.f32.mrb[0].mxu0
  %v5447 = vadd.f32 0.0, %v5446
  %v5448 = vpop.f32.mrb[0].mxu0
  %5449 = vdwg.mxu0
  %v5450 = vmul.f32 %v5447, 0.00048828125
  %v5451 = vld [vmem:[%s69] sm:$0x1]
  %v5452 = vadd.f32 %v5450, 1e-05
  %v5453 = vrsqrt.pop %v5452
  %v5454 = vmul.f32 %v5451, %v5453
  %v5455 = vld [vmem:[%s71] sm:$0x1]
  %v5456 = vmul.f32 %v5237, %v5454
  %v5457 = vsub.f32 %v5455, %v5456
  %v5459 = vsel %vm1938, %v5454, 0
  %5461 = vmatprep.subr.mxu0 %v5239
  %5462 = vmatpush1.msra.mxu0 %v5238
  %5463 = vmatprep.subr.mxu0 0.0
  %5464 = vmatpush1.msra.mxu0 0.0
  %5465 = vmatprep.subr.mxu0 0.0
  %5466 = vmatpush1.msra.mxu0 0.0
  %5467 = vmatprep.subr.mxu0 0.0
  %5468 = vmatpush1.msra.mxu0 0.0
  %5469 = vmatprep.subr.mxu0 0.0
  %5470 = vmatpush1.msra.mxu0 0.0
  %5471 = vmatprep.subr.mxu0 0.0
  %5472 = vmatpush1.msra.mxu0 0.0
  %5473 = vmatprep.subr.mxu0 0.0
  %5474 = vmatpush1.msra.mxu0 0.0
  %5475 = vmatprep.subr.mxu0 0.0
  %5476 = vmatpush1.msra.mxu0 0.0
  %5477 = vmatprep.subr.mxu0 0.0
  %5478 = vmatpush1.msra.mxu0 0.0
  %5479 = vmatprep.subr.mxu0 0.0
  %5480 = vmatpush1.msra.mxu0 0.0
  %5481 = vmatprep.subr.mxu0 0.0
  %5482 = vmatpush1.msra.mxu0 0.0
  %5483 = vmatprep.subr.mxu0 0.0
  %5484 = vmatpush1.msra.mxu0 0.0
  %5485 = vmatprep.subr.mxu0 0.0
  %5486 = vmatpush1.msra.mxu0 0.0
  %5487 = vmatprep.subr.mxu0 0.0
  %5488 = vmatpush1.msra.mxu0 0.0
  %5489 = vmatprep.subr.mxu0 0.0
  %5490 = vmatpush1.msra.mxu0 0.0
  %5491 = vmatprep.subr.mxu0 0.0
  %5492 = vmatpush1.msra.mxu0 0.0
  %5493 = vmatprep.subr.mxu0 0.0
  %5494 = vmatpush1.msra.mxu0 0.0
  %5495 = vmatprep.subr.mxu0 0.0
  %5496 = vmatpush1.msra.mxu0 0.0
  %5497 = vmatprep.subr.mxu0 0.0
  %5498 = vmatpush1.msra.mxu0 0.0
  %5499 = vmatprep.subr.mxu0 0.0
  %5500 = vmatpush1.msra.mxu0 0.0
  %5501 = vmatprep.subr.mxu0 0.0
  %5502 = vmatpush1.msra.mxu0 0.0
  %5503 = vmatprep.subr.mxu0 0.0
  %5504 = vmatpush1.msra.mxu0 0.0
  %5505 = vmatprep.subr.mxu0 0.0
  %5506 = vmatpush1.msra.mxu0 0.0
  %5507 = vmatprep.subr.mxu0 0.0
  %5508 = vmatpush1.msra.mxu0 0.0
  %5509 = vmatprep.subr.mxu0 0.0
  %5510 = vmatpush1.msra.mxu0 0.0
  %5511 = vmatprep.subr.mxu0 0.0
  %5512 = vmatpush1.msra.mxu0 0.0
  %5513 = vmatprep.subr.mxu0 0.0
  %5514 = vmatpush1.msra.mxu0 0.0
  %5515 = vmatprep.subr.mxu0 0.0
  %5516 = vmatpush1.msra.mxu0 0.0
  %5517 = vmatprep.subr.mxu0 0.0
  %5518 = vmatpush1.msra.mxu0 0.0
  %5519 = vmatprep.subr.mxu0 0.0
  %5520 = vmatpush1.msra.mxu0 0.0
  %5521 = vmatprep.subr.mxu0 0.0
  %5522 = vmatpush1.msra.mxu0 0.0
  %5523 = vmatprep.subr.mxu0 0.0
  %5524 = vmatpush1.msra.mxu0 0.0
  %5525 = vmatprep.mubr.f32.mxu0 0.0
  %5526 = vmatmul.mubr.f32.gmra.mrb[0].mxu0 %v5459
  %v5527 = vpop.f32.mrb[0].mxu0
  %v5528 = vadd.f32 0.0, %v5527
  %v5529 = vpop.f32.mrb[0].mxu0
  %v5530 = vadd.f32 0.0, %v5529
  %5531 = vdwg.mxu0
  %v5532 = vlaneseq
  %v5533 = vshrl.u32 %v5532, 7
  %v5534 = vsub.s32 0, %v5533
  %v5535 = vrot.slane %v5528, %v5534
  %v5536 = vlaneseq
  %v5537 = vshrl.u32 %v5536, 7
  %v5538 = vsub.s32 0, %v5537
  %v5539 = vrot.slane %v5530, %v5538
  %v5540 = vmul.f32 %v5093, %v5535
  %v5541 = vmul.f32 %v5094, %v5539
  %v5542 = vmul.f32 %v5095, %v5535
  %v5543 = vmul.f32 %v5096, %v5539
  %v5544 = vmul.f32 %v5097, %v5535
  %v5545 = vmul.f32 %v5098, %v5539
  %v5546 = vmul.f32 %v5099, %v5535
  %v5547 = vmul.f32 %v5100, %v5539
  %v5548 = vmul.f32 %v5101, %v5535
  %v5549 = vmul.f32 %v5102, %v5539
  %v5550 = vmul.f32 %v5103, %v5535
  %v5551 = vmul.f32 %v5104, %v5539
  %v5552 = vmul.f32 %v5105, %v5535
  %v5553 = vmul.f32 %v5106, %v5539
  %v5554 = vmul.f32 %v5107, %v5535
  %v5555 = vmul.f32 %v5108, %v5539
  %v5557 = vsel %vm1938, %v5457, 0
  %5559 = vmatprep.subr.mxu0 %v5239
  %5560 = vmatpush1.msra.mxu0 %v5238
  %5561 = vmatprep.subr.mxu0 0.0
  %5562 = vmatpush1.msra.mxu0 0.0
  %5563 = vmatprep.subr.mxu0 0.0
  %5564 = vmatpush1.msra.mxu0 0.0
  %5565 = vmatprep.subr.mxu0 0.0
  %5566 = vmatpush1.msra.mxu0 0.0
  %5567 = vmatprep.subr.mxu0 0.0
  %5568 = vmatpush1.msra.mxu0 0.0
  %5569 = vmatprep.subr.mxu0 0.0
  %5570 = vmatpush1.msra.mxu0 0.0
  %5571 = vmatprep.subr.mxu0 0.0
  %5572 = vmatpush1.msra.mxu0 0.0
  %5573 = vmatprep.subr.mxu0 0.0
  %5574 = vmatpush1.msra.mxu0 0.0
  %5575 = vmatprep.subr.mxu0 0.0
  %5576 = vmatpush1.msra.mxu0 0.0
  %5577 = vmatprep.subr.mxu0 0.0
  %5578 = vmatpush1.msra.mxu0 0.0
  %5579 = vmatprep.subr.mxu0 0.0
  %5580 = vmatpush1.msra.mxu0 0.0
  %5581 = vmatprep.subr.mxu0 0.0
  %5582 = vmatpush1.msra.mxu0 0.0
  %5583 = vmatprep.subr.mxu0 0.0
  %5584 = vmatpush1.msra.mxu0 0.0
  %5585 = vmatprep.subr.mxu0 0.0
  %5586 = vmatpush1.msra.mxu0 0.0
  %5587 = vmatprep.subr.mxu0 0.0
  %5588 = vmatpush1.msra.mxu0 0.0
  %5589 = vmatprep.subr.mxu0 0.0
  %5590 = vmatpush1.msra.mxu0 0.0
  %5591 = vmatprep.subr.mxu0 0.0
  %5592 = vmatpush1.msra.mxu0 0.0
  %5593 = vmatprep.subr.mxu0 0.0
  %5594 = vmatpush1.msra.mxu0 0.0
  %5595 = vmatprep.subr.mxu0 0.0
  %5596 = vmatpush1.msra.mxu0 0.0
  %5597 = vmatprep.subr.mxu0 0.0
  %5598 = vmatpush1.msra.mxu0 0.0
  %5599 = vmatprep.subr.mxu0 0.0
  %5600 = vmatpush1.msra.mxu0 0.0
  %5601 = vmatprep.subr.mxu0 0.0
  %5602 = vmatpush1.msra.mxu0 0.0
  %5603 = vmatprep.subr.mxu0 0.0
  %5604 = vmatpush1.msra.mxu0 0.0
  %5605 = vmatprep.subr.mxu0 0.0
  %5606 = vmatpush1.msra.mxu0 0.0
  %5607 = vmatprep.subr.mxu0 0.0
  %5608 = vmatpush1.msra.mxu0 0.0
  %5609 = vmatprep.subr.mxu0 0.0
  %5610 = vmatpush1.msra.mxu0 0.0
  %5611 = vmatprep.subr.mxu0 0.0
  %5612 = vmatpush1.msra.mxu0 0.0
  %5613 = vmatprep.subr.mxu0 0.0
  %5614 = vmatpush1.msra.mxu0 0.0
  %5615 = vmatprep.subr.mxu0 0.0
  %5616 = vmatpush1.msra.mxu0 0.0
  %5617 = vmatprep.subr.mxu0 0.0
  %5618 = vmatpush1.msra.mxu0 0.0
  %5619 = vmatprep.subr.mxu0 0.0
  %5620 = vmatpush1.msra.mxu0 0.0
  %5621 = vmatprep.subr.mxu0 0.0
  %5622 = vmatpush1.msra.mxu0 0.0
  %5623 = vmatprep.mubr.f32.mxu0 0.0
  %5624 = vmatmul.mubr.f32.gmra.mrb[0].mxu0 %v5557
  %v5625 = vpop.f32.mrb[0].mxu0
  %v5626 = vadd.f32 0.0, %v5625
  %v5627 = vpop.f32.mrb[0].mxu0
  %v5628 = vadd.f32 0.0, %v5627
  %5629 = vdwg.mxu0
  %v5630 = vlaneseq
  %v5631 = vshrl.u32 %v5630, 7
  %v5632 = vsub.s32 0, %v5631
  %v5633 = vrot.slane %v5626, %v5632
  %v5634 = vlaneseq
  %v5635 = vshrl.u32 %v5634, 7
  %v5636 = vsub.s32 0, %v5635
  %v5637 = vrot.slane %v5628, %v5636
  %v5638 = vadd.f32 %v5540, %v5633
  %v5639 = vadd.f32 %v5541, %v5637
  %v5640 = vadd.f32 %v5542, %v5633
  %v5641 = vadd.f32 %v5543, %v5637
  %v5642 = vadd.f32 %v5544, %v5633
  %v5643 = vadd.f32 %v5545, %v5637
  %v5644 = vadd.f32 %v5546, %v5633
  %v5645 = vadd.f32 %v5547, %v5637
  %v5646 = vadd.f32 %v5548, %v5633
  %v5647 = vadd.f32 %v5549, %v5637
  %v5648 = vadd.f32 %v5550, %v5633
  %v5649 = vadd.f32 %v5551, %v5637
  %v5650 = vadd.f32 %v5552, %v5633
  %v5651 = vadd.f32 %v5553, %v5637
  %v5652 = vadd.f32 %v5554, %v5633
  %v5653 = vadd.f32 %v5555, %v5637
  %v5654 = vmax.f32 %v5638, 0.0
  %v5655 = vmax.f32 %v5639, 0.0
  %v5656 = vmax.f32 %v5640, 0.0
  %v5657 = vmax.f32 %v5641, 0.0
  %v5658 = vmax.f32 %v5642, 0.0
  %v5659 = vmax.f32 %v5643, 0.0
  %v5660 = vmax.f32 %v5644, 0.0
  %v5661 = vmax.f32 %v5645, 0.0
  %v5662 = vmax.f32 %v5646, 0.0
  %v5663 = vmax.f32 %v5647, 0.0
  %v5664 = vmax.f32 %v5648, 0.0
  %v5665 = vmax.f32 %v5649, 0.0
  %v5666 = vmax.f32 %v5650, 0.0
  %v5667 = vmax.f32 %v5651, 0.0
  %v5668 = vmax.f32 %v5652, 0.0
  %v5669 = vmax.f32 %v5653, 0.0
  %v5670 = vld [vmem:[%s73] sm:$0xff]
  %v5671 = vld [vmem:[%s73 + $0x8] sm:$0xff]
  %v5672 = vld [vmem:[%s73 + $0x10] sm:$0xff]
  %v5673 = vld [vmem:[%s73 + $0x18] sm:$0xff]
  %v5674 = vld [vmem:[%s73 + $0x20] sm:$0xff]
  %v5675 = vld [vmem:[%s73 + $0x28] sm:$0xff]
  %v5676 = vld [vmem:[%s73 + $0x30] sm:$0xff]
  %v5677 = vld [vmem:[%s73 + $0x38] sm:$0xff]
  %v5678 = vld [vmem:[%s73 + $0x40] sm:$0xff]
  %v5679 = vld [vmem:[%s73 + $0x48] sm:$0xff]
  %v5680 = vld [vmem:[%s73 + $0x50] sm:$0xff]
  %v5681 = vld [vmem:[%s73 + $0x58] sm:$0xff]
  %v5682 = vld [vmem:[%s73 + $0x60] sm:$0xff]
  %v5683 = vld [vmem:[%s73 + $0x68] sm:$0xff]
  %v5684 = vld [vmem:[%s73 + $0x70] sm:$0xff]
  %v5685 = vld [vmem:[%s73 + $0x78] sm:$0xff]
  %v5687 = vsel %vm1520, %v5670, 0
  %v5690 = vsel %vm1520, %v5671, 0
  %v5693 = vsel %vm1520, %v5672, 0
  %v5696 = vsel %vm1520, %v5673, 0
  %v5699 = vsel %vm1520, %v5674, 0
  %v5702 = vsel %vm1520, %v5675, 0
  %v5705 = vsel %vm1520, %v5676, 0
  %v5708 = vsel %vm1520, %v5677, 0
  %v5711 = vsel %vm1520, %v5678, 0
  %v5714 = vsel %vm1520, %v5679, 0
  %v5717 = vsel %vm1520, %v5680, 0
  %v5720 = vsel %vm1520, %v5681, 0
  %v5723 = vsel %vm1520, %v5682, 0
  %v5726 = vsel %vm1520, %v5683, 0
  %v5729 = vsel %vm1520, %v5684, 0
  %v5732 = vsel %vm1520, %v5685, 0
  %5734 = vmatprep.subr.mxu0 %v5655
  %5735 = vmatpush1.msra.mxu0 %v5654
  %5736 = vmatprep.subr.mxu0 %v5657
  %5737 = vmatpush1.msra.mxu0 %v5656
  %5738 = vmatprep.subr.mxu0 %v5659
  %5739 = vmatpush1.msra.mxu0 %v5658
  %5740 = vmatprep.subr.mxu0 %v5661
  %5741 = vmatpush1.msra.mxu0 %v5660
  %5742 = vmatprep.subr.mxu0 %v5663
  %5743 = vmatpush1.msra.mxu0 %v5662
  %5744 = vmatprep.subr.mxu0 %v5665
  %5745 = vmatpush1.msra.mxu0 %v5664
  %5746 = vmatprep.subr.mxu0 %v5667
  %5747 = vmatpush1.msra.mxu0 %v5666
  %5748 = vmatprep.subr.mxu0 %v5669
  %5749 = vmatpush1.msra.mxu0 %v5668
  %5750 = vmatprep.subr.mxu0 0.0
  %5751 = vmatpush1.msra.mxu0 0.0
  %5752 = vmatprep.subr.mxu0 0.0
  %5753 = vmatpush1.msra.mxu0 0.0
  %5754 = vmatprep.subr.mxu0 0.0
  %5755 = vmatpush1.msra.mxu0 0.0
  %5756 = vmatprep.subr.mxu0 0.0
  %5757 = vmatpush1.msra.mxu0 0.0
  %5758 = vmatprep.subr.mxu0 0.0
  %5759 = vmatpush1.msra.mxu0 0.0
  %5760 = vmatprep.subr.mxu0 0.0
  %5761 = vmatpush1.msra.mxu0 0.0
  %5762 = vmatprep.subr.mxu0 0.0
  %5763 = vmatpush1.msra.mxu0 0.0
  %5764 = vmatprep.subr.mxu0 0.0
  %5765 = vmatpush1.msra.mxu0 0.0
  %5766 = vmatprep.subr.mxu0 0.0
  %5767 = vmatpush1.msra.mxu0 0.0
  %5768 = vmatprep.subr.mxu0 0.0
  %5769 = vmatpush1.msra.mxu0 0.0
  %5770 = vmatprep.subr.mxu0 0.0
  %5771 = vmatpush1.msra.mxu0 0.0
  %5772 = vmatprep.subr.mxu0 0.0
  %5773 = vmatpush1.msra.mxu0 0.0
  %5774 = vmatprep.subr.mxu0 0.0
  %5775 = vmatpush1.msra.mxu0 0.0
  %5776 = vmatprep.subr.mxu0 0.0
  %5777 = vmatpush1.msra.mxu0 0.0
  %5778 = vmatprep.subr.mxu0 0.0
  %5779 = vmatpush1.msra.mxu0 0.0
  %5780 = vmatprep.subr.mxu0 0.0
  %5781 = vmatpush1.msra.mxu0 0.0
  %5782 = vmatprep.subr.mxu0 0.0
  %5783 = vmatpush1.msra.mxu0 0.0
  %5784 = vmatprep.subr.mxu0 0.0
  %5785 = vmatpush1.msra.mxu0 0.0
  %5786 = vmatprep.subr.mxu0 0.0
  %5787 = vmatpush1.msra.mxu0 0.0
  %5788 = vmatprep.subr.mxu0 0.0
  %5789 = vmatpush1.msra.mxu0 0.0
  %5790 = vmatprep.subr.mxu0 0.0
  %5791 = vmatpush1.msra.mxu0 0.0
  %5792 = vmatprep.subr.mxu0 0.0
  %5793 = vmatpush1.msra.mxu0 0.0
  %5794 = vmatprep.subr.mxu0 0.0
  %5795 = vmatpush1.msra.mxu0 0.0
  %5796 = vmatprep.subr.mxu0 0.0
  %5797 = vmatpush1.msra.mxu0 0.0
  %5798 = vmatprep.mubr.f32.mxu0 0.0
  %5799 = vmatmul.mubr.f32.gmra.mrb[0].mxu0 %v5687
  %v5800 = vpop.f32.mrb[0].mxu0
  %v5801 = vadd.f32 0.0, %v5800
  %v5802 = vpop.f32.mrb[0].mxu0
  %v5803 = vadd.f32 0.0, %v5802
  %5804 = vmatprep.mubr.f32.mxu0 0.0
  %5805 = vmatmul.mubr.f32.gmra.mrb[0].mxu0 %v5690
  %v5806 = vpop.f32.mrb[0].mxu0
  %v5807 = vadd.f32 0.0, %v5806
  %v5808 = vpop.f32.mrb[0].mxu0
  %v5809 = vadd.f32 0.0, %v5808
  %5810 = vmatprep.mubr.f32.mxu0 0.0
  %5811 = vmatmul.mubr.f32.gmra.mrb[0].mxu0 %v5693
  %v5812 = vpop.f32.mrb[0].mxu0
  %v5813 = vadd.f32 0.0, %v5812
  %v5814 = vpop.f32.mrb[0].mxu0
  %v5815 = vadd.f32 0.0, %v5814
  %5816 = vmatprep.mubr.f32.mxu0 0.0
  %5817 = vmatmul.mubr.f32.gmra.mrb[0].mxu0 %v5696
  %v5818 = vpop.f32.mrb[0].mxu0
  %v5819 = vadd.f32 0.0, %v5818
  %v5820 = vpop.f32.mrb[0].mxu0
  %v5821 = vadd.f32 0.0, %v5820
  %5822 = vmatprep.mubr.f32.mxu0 0.0
  %5823 = vmatmul.mubr.f32.gmra.mrb[0].mxu0 %v5699
  %v5824 = vpop.f32.mrb[0].mxu0
  %v5825 = vadd.f32 0.0, %v5824
  %v5826 = vpop.f32.mrb[0].mxu0
  %v5827 = vadd.f32 0.0, %v5826
  %5828 = vmatprep.mubr.f32.mxu0 0.0
  %5829 = vmatmul.mubr.f32.gmra.mrb[0].mxu0 %v5702
  %v5830 = vpop.f32.mrb[0].mxu0
  %v5831 = vadd.f32 0.0, %v5830
  %v5832 = vpop.f32.mrb[0].mxu0
  %v5833 = vadd.f32 0.0, %v5832
  %5834 = vmatprep.mubr.f32.mxu0 0.0
  %5835 = vmatmul.mubr.f32.gmra.mrb[0].mxu0 %v5705
  %v5836 = vpop.f32.mrb[0].mxu0
  %v5837 = vadd.f32 0.0, %v5836
  %v5838 = vpop.f32.mrb[0].mxu0
  %v5839 = vadd.f32 0.0, %v5838
  %5840 = vmatprep.mubr.f32.mxu0 0.0
  %5841 = vmatmul.mubr.f32.gmra.mrb[0].mxu0 %v5708
  %v5842 = vpop.f32.mrb[0].mxu0
  %v5843 = vadd.f32 0.0, %v5842
  %v5844 = vpop.f32.mrb[0].mxu0
  %v5845 = vadd.f32 0.0, %v5844
  %5846 = vmatprep.mubr.f32.mxu0 0.0
  %5847 = vmatmul.mubr.f32.gmra.mrb[0].mxu0 %v5711
  %v5848 = vpop.f32.mrb[0].mxu0
  %v5849 = vadd.f32 0.0, %v5848
  %v5850 = vpop.f32.mrb[0].mxu0
  %v5851 = vadd.f32 0.0, %v5850
  %5852 = vmatprep.mubr.f32.mxu0 0.0
  %5853 = vmatmul.mubr.f32.gmra.mrb[0].mxu0 %v5714
  %v5854 = vpop.f32.mrb[0].mxu0
  %v5855 = vadd.f32 0.0, %v5854
  %v5856 = vpop.f32.mrb[0].mxu0
  %v5857 = vadd.f32 0.0, %v5856
  %5858 = vmatprep.mubr.f32.mxu0 0.0
  %5859 = vmatmul.mubr.f32.gmra.mrb[0].mxu0 %v5717
  %v5860 = vpop.f32.mrb[0].mxu0
  %v5861 = vadd.f32 0.0, %v5860
  %v5862 = vpop.f32.mrb[0].mxu0
  %v5863 = vadd.f32 0.0, %v5862
  %5864 = vmatprep.mubr.f32.mxu0 0.0
  %5865 = vmatmul.mubr.f32.gmra.mrb[0].mxu0 %v5720
  %v5866 = vpop.f32.mrb[0].mxu0
  %v5867 = vadd.f32 0.0, %v5866
  %v5868 = vpop.f32.mrb[0].mxu0
  %v5869 = vadd.f32 0.0, %v5868
  %5870 = vmatprep.mubr.f32.mxu0 0.0
  %5871 = vmatmul.mubr.f32.gmra.mrb[0].mxu0 %v5723
  %v5872 = vpop.f32.mrb[0].mxu0
  %v5873 = vadd.f32 0.0, %v5872
  %v5874 = vpop.f32.mrb[0].mxu0
  %v5875 = vadd.f32 0.0, %v5874
  %5876 = vmatprep.mubr.f32.mxu0 0.0
  %5877 = vmatmul.mubr.f32.gmra.mrb[0].mxu0 %v5726
  %v5878 = vpop.f32.mrb[0].mxu0
  %v5879 = vadd.f32 0.0, %v5878
  %v5880 = vpop.f32.mrb[0].mxu0
  %v5881 = vadd.f32 0.0, %v5880
  %5882 = vmatprep.mubr.f32.mxu0 0.0
  %5883 = vmatmul.mubr.f32.gmra.mrb[0].mxu0 %v5729
  %v5884 = vpop.f32.mrb[0].mxu0
  %v5885 = vadd.f32 0.0, %v5884
  %v5886 = vpop.f32.mrb[0].mxu0
  %v5887 = vadd.f32 0.0, %v5886
  %5888 = vmatprep.mubr.f32.mxu0 0.0
  %5889 = vmatmul.mubr.f32.gmra.mrb[0].mxu0 %v5732
  %v5890 = vpop.f32.mrb[0].mxu0
  %v5891 = vadd.f32 0.0, %v5890
  %v5892 = vpop.f32.mrb[0].mxu0
  %v5893 = vadd.f32 0.0, %v5892
  %5894 = vdwg.mxu0
  %v5895 = vld [vmem:[%s75] sm:$0xff]
  %v5896 = vld [vmem:[%s75 + $0x8] sm:$0xff]
  %v5897 = vld [vmem:[%s75 + $0x10] sm:$0xff]
  %v5898 = vld [vmem:[%s75 + $0x18] sm:$0xff]
  %v5899 = vld [vmem:[%s75 + $0x20] sm:$0xff]
  %v5900 = vld [vmem:[%s75 + $0x28] sm:$0xff]
  %v5901 = vld [vmem:[%s75 + $0x30] sm:$0xff]
  %v5902 = vld [vmem:[%s75 + $0x38] sm:$0xff]
  %v5903 = vld [vmem:[%s75 + $0x40] sm:$0xff]
  %v5904 = vld [vmem:[%s75 + $0x48] sm:$0xff]
  %v5905 = vld [vmem:[%s75 + $0x50] sm:$0xff]
  %v5906 = vld [vmem:[%s75 + $0x58] sm:$0xff]
  %v5907 = vld [vmem:[%s75 + $0x60] sm:$0xff]
  %v5908 = vld [vmem:[%s75 + $0x68] sm:$0xff]
  %v5909 = vld [vmem:[%s75 + $0x70] sm:$0xff]
  %v5910 = vld [vmem:[%s75 + $0x78] sm:$0xff]
  %v5911 = vld [vmem:[%s75 + $0x80] sm:$0xff]
  %v5912 = vld [vmem:[%s75 + $0x88] sm:$0xff]
  %v5913 = vld [vmem:[%s75 + $0x90] sm:$0xff]
  %v5914 = vld [vmem:[%s75 + $0x98] sm:$0xff]
  %v5915 = vld [vmem:[%s75 + $0xa0] sm:$0xff]
  %v5916 = vld [vmem:[%s75 + $0xa8] sm:$0xff]
  %v5917 = vld [vmem:[%s75 + $0xb0] sm:$0xff]
  %v5918 = vld [vmem:[%s75 + $0xb8] sm:$0xff]
  %v5919 = vld [vmem:[%s75 + $0xc0] sm:$0xff]
  %v5920 = vld [vmem:[%s75 + $0xc8] sm:$0xff]
  %v5921 = vld [vmem:[%s75 + $0xd0] sm:$0xff]
  %v5922 = vld [vmem:[%s75 + $0xd8] sm:$0xff]
  %v5923 = vld [vmem:[%s75 + $0xe0] sm:$0xff]
  %v5924 = vld [vmem:[%s75 + $0xe8] sm:$0xff]
  %v5925 = vld [vmem:[%s75 + $0xf0] sm:$0xff]
  %v5926 = vld [vmem:[%s75 + $0xf8] sm:$0xff]
  %v5927 = vld [vmem:[%s75 + $0x100] sm:$0xff]
  %v5928 = vld [vmem:[%s75 + $0x108] sm:$0xff]
  %v5929 = vld [vmem:[%s75 + $0x110] sm:$0xff]
  %v5930 = vld [vmem:[%s75 + $0x118] sm:$0xff]
  %v5931 = vld [vmem:[%s75 + $0x120] sm:$0xff]
  %v5932 = vld [vmem:[%s75 + $0x128] sm:$0xff]
  %v5933 = vld [vmem:[%s75 + $0x130] sm:$0xff]
  %v5934 = vld [vmem:[%s75 + $0x138] sm:$0xff]
  %v5935 = vld [vmem:[%s75 + $0x140] sm:$0xff]
  %v5936 = vld [vmem:[%s75 + $0x148] sm:$0xff]
  %v5937 = vld [vmem:[%s75 + $0x150] sm:$0xff]
  %v5938 = vld [vmem:[%s75 + $0x158] sm:$0xff]
  %v5939 = vld [vmem:[%s75 + $0x160] sm:$0xff]
  %v5940 = vld [vmem:[%s75 + $0x168] sm:$0xff]
  %v5941 = vld [vmem:[%s75 + $0x170] sm:$0xff]
  %v5942 = vld [vmem:[%s75 + $0x178] sm:$0xff]
  %v5943 = vld [vmem:[%s75 + $0x180] sm:$0xff]
  %v5944 = vld [vmem:[%s75 + $0x188] sm:$0xff]
  %v5945 = vld [vmem:[%s75 + $0x190] sm:$0xff]
  %v5946 = vld [vmem:[%s75 + $0x198] sm:$0xff]
  %v5947 = vld [vmem:[%s75 + $0x1a0] sm:$0xff]
  %v5948 = vld [vmem:[%s75 + $0x1a8] sm:$0xff]
  %v5949 = vld [vmem:[%s75 + $0x1b0] sm:$0xff]
  %v5950 = vld [vmem:[%s75 + $0x1b8] sm:$0xff]
  %v5951 = vld [vmem:[%s75 + $0x1c0] sm:$0xff]
  %v5952 = vld [vmem:[%s75 + $0x1c8] sm:$0xff]
  %v5953 = vld [vmem:[%s75 + $0x1d0] sm:$0xff]
  %v5954 = vld [vmem:[%s75 + $0x1d8] sm:$0xff]
  %v5955 = vld [vmem:[%s75 + $0x1e0] sm:$0xff]
  %v5956 = vld [vmem:[%s75 + $0x1e8] sm:$0xff]
  %v5957 = vld [vmem:[%s75 + $0x1f0] sm:$0xff]
  %v5958 = vld [vmem:[%s75 + $0x1f8] sm:$0xff]
  %s5959 = scalar_lea.vmem %s73, 128
  %v5960 = vld [vmem:[%s5959] sm:$0xff]
  %v5961 = vld [vmem:[%s5959 + $0x8] sm:$0xff]
  %v5962 = vld [vmem:[%s5959 + $0x10] sm:$0xff]
  %v5963 = vld [vmem:[%s5959 + $0x18] sm:$0xff]
  %v5964 = vld [vmem:[%s5959 + $0x20] sm:$0xff]
  %v5965 = vld [vmem:[%s5959 + $0x28] sm:$0xff]
  %v5966 = vld [vmem:[%s5959 + $0x30] sm:$0xff]
  %v5967 = vld [vmem:[%s5959 + $0x38] sm:$0xff]
  %v5968 = vld [vmem:[%s5959 + $0x40] sm:$0xff]
  %v5969 = vld [vmem:[%s5959 + $0x48] sm:$0xff]
  %v5970 = vld [vmem:[%s5959 + $0x50] sm:$0xff]
  %v5971 = vld [vmem:[%s5959 + $0x58] sm:$0xff]
  %v5972 = vld [vmem:[%s5959 + $0x60] sm:$0xff]
  %v5973 = vld [vmem:[%s5959 + $0x68] sm:$0xff]
  %v5974 = vld [vmem:[%s5959 + $0x70] sm:$0xff]
  %v5975 = vld [vmem:[%s5959 + $0x78] sm:$0xff]
  %v5977 = vsel %vm1520, %v5960, 0
  %v5980 = vsel %vm1520, %v5961, 0
  %v5983 = vsel %vm1520, %v5962, 0
  %v5986 = vsel %vm1520, %v5963, 0
  %v5989 = vsel %vm1520, %v5964, 0
  %v5992 = vsel %vm1520, %v5965, 0
  %v5995 = vsel %vm1520, %v5966, 0
  %v5998 = vsel %vm1520, %v5967, 0
  %v6001 = vsel %vm1520, %v5968, 0
  %v6004 = vsel %vm1520, %v5969, 0
  %v6007 = vsel %vm1520, %v5970, 0
  %v6010 = vsel %vm1520, %v5971, 0
  %v6013 = vsel %vm1520, %v5972, 0
  %v6016 = vsel %vm1520, %v5973, 0
  %v6019 = vsel %vm1520, %v5974, 0
  %v6022 = vsel %vm1520, %v5975, 0
  %6024 = vmatprep.subr.mxu0 %v5655
  %6025 = vmatpush1.msra.mxu0 %v5654
  %6026 = vmatprep.subr.mxu0 %v5657
  %6027 = vmatpush1.msra.mxu0 %v5656
  %6028 = vmatprep.subr.mxu0 %v5659
  %6029 = vmatpush1.msra.mxu0 %v5658
  %6030 = vmatprep.subr.mxu0 %v5661
  %6031 = vmatpush1.msra.mxu0 %v5660
  %6032 = vmatprep.subr.mxu0 %v5663
  %6033 = vmatpush1.msra.mxu0 %v5662
  %6034 = vmatprep.subr.mxu0 %v5665
  %6035 = vmatpush1.msra.mxu0 %v5664
  %6036 = vmatprep.subr.mxu0 %v5667
  %6037 = vmatpush1.msra.mxu0 %v5666
  %6038 = vmatprep.subr.mxu0 %v5669
  %6039 = vmatpush1.msra.mxu0 %v5668
  %6040 = vmatprep.subr.mxu0 0.0
  %6041 = vmatpush1.msra.mxu0 0.0
  %6042 = vmatprep.subr.mxu0 0.0
  %6043 = vmatpush1.msra.mxu0 0.0
  %6044 = vmatprep.subr.mxu0 0.0
  %6045 = vmatpush1.msra.mxu0 0.0
  %6046 = vmatprep.subr.mxu0 0.0
  %6047 = vmatpush1.msra.mxu0 0.0
  %6048 = vmatprep.subr.mxu0 0.0
  %6049 = vmatpush1.msra.mxu0 0.0
  %6050 = vmatprep.subr.mxu0 0.0
  %6051 = vmatpush1.msra.mxu0 0.0
  %6052 = vmatprep.subr.mxu0 0.0
  %6053 = vmatpush1.msra.mxu0 0.0
  %6054 = vmatprep.subr.mxu0 0.0
  %6055 = vmatpush1.msra.mxu0 0.0
  %6056 = vmatprep.subr.mxu0 0.0
  %6057 = vmatpush1.msra.mxu0 0.0
  %6058 = vmatprep.subr.mxu0 0.0
  %6059 = vmatpush1.msra.mxu0 0.0
  %6060 = vmatprep.subr.mxu0 0.0
  %6061 = vmatpush1.msra.mxu0 0.0
  %6062 = vmatprep.subr.mxu0 0.0
  %6063 = vmatpush1.msra.mxu0 0.0
  %6064 = vmatprep.subr.mxu0 0.0
  %6065 = vmatpush1.msra.mxu0 0.0
  %6066 = vmatprep.subr.mxu0 0.0
  %6067 = vmatpush1.msra.mxu0 0.0
  %6068 = vmatprep.subr.mxu0 0.0
  %6069 = vmatpush1.msra.mxu0 0.0
  %6070 = vmatprep.subr.mxu0 0.0
  %6071 = vmatpush1.msra.mxu0 0.0
  %6072 = vmatprep.subr.mxu0 0.0
  %6073 = vmatpush1.msra.mxu0 0.0
  %6074 = vmatprep.subr.mxu0 0.0
  %6075 = vmatpush1.msra.mxu0 0.0
  %6076 = vmatprep.subr.mxu0 0.0
  %6077 = vmatpush1.msra.mxu0 0.0
  %6078 = vmatprep.subr.mxu0 0.0
  %6079 = vmatpush1.msra.mxu0 0.0
  %6080 = vmatprep.subr.mxu0 0.0
  %6081 = vmatpush1.msra.mxu0 0.0
  %6082 = vmatprep.subr.mxu0 0.0
  %6083 = vmatpush1.msra.mxu0 0.0
  %6084 = vmatprep.subr.mxu0 0.0
  %6085 = vmatpush1.msra.mxu0 0.0
  %6086 = vmatprep.subr.mxu0 0.0
  %6087 = vmatpush1.msra.mxu0 0.0
  %6088 = vmatprep.mubr.f32.mxu0 0.0
  %6089 = vmatmul.mubr.f32.gmra.mrb[0].mxu0 %v5977
  %v6090 = vpop.f32.mrb[0].mxu0
  %v6091 = vadd.f32 0.0, %v6090
  %v6092 = vpop.f32.mrb[0].mxu0
  %v6093 = vadd.f32 0.0, %v6092
  %6094 = vmatprep.mubr.f32.mxu0 0.0
  %6095 = vmatmul.mubr.f32.gmra.mrb[0].mxu0 %v5980
  %v6096 = vpop.f32.mrb[0].mxu0
  %v6097 = vadd.f32 0.0, %v6096
  %v6098 = vpop.f32.mrb[0].mxu0
  %v6099 = vadd.f32 0.0, %v6098
  %6100 = vmatprep.mubr.f32.mxu0 0.0
  %6101 = vmatmul.mubr.f32.gmra.mrb[0].mxu0 %v5983
  %v6102 = vpop.f32.mrb[0].mxu0
  %v6103 = vadd.f32 0.0, %v6102
  %v6104 = vpop.f32.mrb[0].mxu0
  %v6105 = vadd.f32 0.0, %v6104
  %6106 = vmatprep.mubr.f32.mxu0 0.0
  %6107 = vmatmul.mubr.f32.gmra.mrb[0].mxu0 %v5986
  %v6108 = vpop.f32.mrb[0].mxu0
  %v6109 = vadd.f32 0.0, %v6108
  %v6110 = vpop.f32.mrb[0].mxu0
  %v6111 = vadd.f32 0.0, %v6110
  %6112 = vmatprep.mubr.f32.mxu0 0.0
  %6113 = vmatmul.mubr.f32.gmra.mrb[0].mxu0 %v5989
  %v6114 = vpop.f32.mrb[0].mxu0
  %v6115 = vadd.f32 0.0, %v6114
  %v6116 = vpop.f32.mrb[0].mxu0
  %v6117 = vadd.f32 0.0, %v6116
  %6118 = vmatprep.mubr.f32.mxu0 0.0
  %6119 = vmatmul.mubr.f32.gmra.mrb[0].mxu0 %v5992
  %v6120 = vpop.f32.mrb[0].mxu0
  %v6121 = vadd.f32 0.0, %v6120
  %v6122 = vpop.f32.mrb[0].mxu0
  %v6123 = vadd.f32 0.0, %v6122
  %6124 = vmatprep.mubr.f32.mxu0 0.0
  %6125 = vmatmul.mubr.f32.gmra.mrb[0].mxu0 %v5995
  %v6126 = vpop.f32.mrb[0].mxu0
  %v6127 = vadd.f32 0.0, %v6126
  %v6128 = vpop.f32.mrb[0].mxu0
  %v6129 = vadd.f32 0.0, %v6128
  %6130 = vmatprep.mubr.f32.mxu0 0.0
  %6131 = vmatmul.mubr.f32.gmra.mrb[0].mxu0 %v5998
  %v6132 = vpop.f32.mrb[0].mxu0
  %v6133 = vadd.f32 0.0, %v6132
  %v6134 = vpop.f32.mrb[0].mxu0
  %v6135 = vadd.f32 0.0, %v6134
  %6136 = vmatprep.mubr.f32.mxu0 0.0
  %6137 = vmatmul.mubr.f32.gmra.mrb[0].mxu0 %v6001
  %v6138 = vpop.f32.mrb[0].mxu0
  %v6139 = vadd.f32 0.0, %v6138
  %v6140 = vpop.f32.mrb[0].mxu0
  %v6141 = vadd.f32 0.0, %v6140
  %6142 = vmatprep.mubr.f32.mxu0 0.0
  %6143 = vmatmul.mubr.f32.gmra.mrb[0].mxu0 %v6004
  %v6144 = vpop.f32.mrb[0].mxu0
  %v6145 = vadd.f32 0.0, %v6144
  %v6146 = vpop.f32.mrb[0].mxu0
  %v6147 = vadd.f32 0.0, %v6146
  %6148 = vmatprep.mubr.f32.mxu0 0.0
  %6149 = vmatmul.mubr.f32.gmra.mrb[0].mxu0 %v6007
  %v6150 = vpop.f32.mrb[0].mxu0
  %v6151 = vadd.f32 0.0, %v6150
  %v6152 = vpop.f32.mrb[0].mxu0
  %v6153 = vadd.f32 0.0, %v6152
  %6154 = vmatprep.mubr.f32.mxu0 0.0
  %6155 = vmatmul.mubr.f32.gmra.mrb[0].mxu0 %v6010
  %v6156 = vpop.f32.mrb[0].mxu0
  %v6157 = vadd.f32 0.0, %v6156
  %v6158 = vpop.f32.mrb[0].mxu0
  %v6159 = vadd.f32 0.0, %v6158
  %6160 = vmatprep.mubr.f32.mxu0 0.0
  %6161 = vmatmul.mubr.f32.gmra.mrb[0].mxu0 %v6013
  %v6162 = vpop.f32.mrb[0].mxu0
  %v6163 = vadd.f32 0.0, %v6162
  %v6164 = vpop.f32.mrb[0].mxu0
  %v6165 = vadd.f32 0.0, %v6164
  %6166 = vmatprep.mubr.f32.mxu0 0.0
  %6167 = vmatmul.mubr.f32.gmra.mrb[0].mxu0 %v6016
  %v6168 = vpop.f32.mrb[0].mxu0
  %v6169 = vadd.f32 0.0, %v6168
  %v6170 = vpop.f32.mrb[0].mxu0
  %v6171 = vadd.f32 0.0, %v6170
  %6172 = vmatprep.mubr.f32.mxu0 0.0
  %6173 = vmatmul.mubr.f32.gmra.mrb[0].mxu0 %v6019
  %v6174 = vpop.f32.mrb[0].mxu0
  %v6175 = vadd.f32 0.0, %v6174
  %v6176 = vpop.f32.mrb[0].mxu0
  %v6177 = vadd.f32 0.0, %v6176
  %6178 = vmatprep.mubr.f32.mxu0 0.0
  %6179 = vmatmul.mubr.f32.gmra.mrb[0].mxu0 %v6022
  %v6180 = vpop.f32.mrb[0].mxu0
  %v6181 = vadd.f32 0.0, %v6180
  %v6182 = vpop.f32.mrb[0].mxu0
  %v6183 = vadd.f32 0.0, %v6182
  %6184 = vdwg.mxu0
  %s6185 = scalar_lea.vmem %s75, 512
  %v6186 = vld [vmem:[%s6185] sm:$0xff]
  %v6187 = vld [vmem:[%s6185 + $0x8] sm:$0xff]
  %v6188 = vld [vmem:[%s6185 + $0x10] sm:$0xff]
  %v6189 = vld [vmem:[%s6185 + $0x18] sm:$0xff]
  %v6190 = vld [vmem:[%s6185 + $0x20] sm:$0xff]
  %v6191 = vld [vmem:[%s6185 + $0x28] sm:$0xff]
  %v6192 = vld [vmem:[%s6185 + $0x30] sm:$0xff]
  %v6193 = vld [vmem:[%s6185 + $0x38] sm:$0xff]
  %v6194 = vld [vmem:[%s6185 + $0x40] sm:$0xff]
  %v6195 = vld [vmem:[%s6185 + $0x48] sm:$0xff]
  %v6196 = vld [vmem:[%s6185 + $0x50] sm:$0xff]
  %v6197 = vld [vmem:[%s6185 + $0x58] sm:$0xff]
  %v6198 = vld [vmem:[%s6185 + $0x60] sm:$0xff]
  %v6199 = vld [vmem:[%s6185 + $0x68] sm:$0xff]
  %v6200 = vld [vmem:[%s6185 + $0x70] sm:$0xff]
  %v6201 = vld [vmem:[%s6185 + $0x78] sm:$0xff]
  %v6202 = vld [vmem:[%s6185 + $0x80] sm:$0xff]
  %v6203 = vld [vmem:[%s6185 + $0x88] sm:$0xff]
  %v6204 = vld [vmem:[%s6185 + $0x90] sm:$0xff]
  %v6205 = vld [vmem:[%s6185 + $0x98] sm:$0xff]
  %v6206 = vld [vmem:[%s6185 + $0xa0] sm:$0xff]
  %v6207 = vld [vmem:[%s6185 + $0xa8] sm:$0xff]
  %v6208 = vld [vmem:[%s6185 + $0xb0] sm:$0xff]
  %v6209 = vld [vmem:[%s6185 + $0xb8] sm:$0xff]
  %v6210 = vld [vmem:[%s6185 + $0xc0] sm:$0xff]
  %v6211 = vld [vmem:[%s6185 + $0xc8] sm:$0xff]
  %v6212 = vld [vmem:[%s6185 + $0xd0] sm:$0xff]
  %v6213 = vld [vmem:[%s6185 + $0xd8] sm:$0xff]
  %v6214 = vld [vmem:[%s6185 + $0xe0] sm:$0xff]
  %v6215 = vld [vmem:[%s6185 + $0xe8] sm:$0xff]
  %v6216 = vld [vmem:[%s6185 + $0xf0] sm:$0xff]
  %v6217 = vld [vmem:[%s6185 + $0xf8] sm:$0xff]
  %v6218 = vld [vmem:[%s6185 + $0x100] sm:$0xff]
  %v6219 = vld [vmem:[%s6185 + $0x108] sm:$0xff]
  %v6220 = vld [vmem:[%s6185 + $0x110] sm:$0xff]
  %v6221 = vld [vmem:[%s6185 + $0x118] sm:$0xff]
  %v6222 = vld [vmem:[%s6185 + $0x120] sm:$0xff]
  %v6223 = vld [vmem:[%s6185 + $0x128] sm:$0xff]
  %v6224 = vld [vmem:[%s6185 + $0x130] sm:$0xff]
  %v6225 = vld [vmem:[%s6185 + $0x138] sm:$0xff]
  %v6226 = vld [vmem:[%s6185 + $0x140] sm:$0xff]
  %v6227 = vld [vmem:[%s6185 + $0x148] sm:$0xff]
  %v6228 = vld [vmem:[%s6185 + $0x150] sm:$0xff]
  %v6229 = vld [vmem:[%s6185 + $0x158] sm:$0xff]
  %v6230 = vld [vmem:[%s6185 + $0x160] sm:$0xff]
  %v6231 = vld [vmem:[%s6185 + $0x168] sm:$0xff]
  %v6232 = vld [vmem:[%s6185 + $0x170] sm:$0xff]
  %v6233 = vld [vmem:[%s6185 + $0x178] sm:$0xff]
  %v6234 = vld [vmem:[%s6185 + $0x180] sm:$0xff]
  %v6235 = vld [vmem:[%s6185 + $0x188] sm:$0xff]
  %v6236 = vld [vmem:[%s6185 + $0x190] sm:$0xff]
  %v6237 = vld [vmem:[%s6185 + $0x198] sm:$0xff]
  %v6238 = vld [vmem:[%s6185 + $0x1a0] sm:$0xff]
  %v6239 = vld [vmem:[%s6185 + $0x1a8] sm:$0xff]
  %v6240 = vld [vmem:[%s6185 + $0x1b0] sm:$0xff]
  %v6241 = vld [vmem:[%s6185 + $0x1b8] sm:$0xff]
  %v6242 = vld [vmem:[%s6185 + $0x1c0] sm:$0xff]
  %v6243 = vld [vmem:[%s6185 + $0x1c8] sm:$0xff]
  %v6244 = vld [vmem:[%s6185 + $0x1d0] sm:$0xff]
  %v6245 = vld [vmem:[%s6185 + $0x1d8] sm:$0xff]
  %v6246 = vld [vmem:[%s6185 + $0x1e0] sm:$0xff]
  %v6247 = vld [vmem:[%s6185 + $0x1e8] sm:$0xff]
  %v6248 = vld [vmem:[%s6185 + $0x1f0] sm:$0xff]
  %v6249 = vld [vmem:[%s6185 + $0x1f8] sm:$0xff]
  %6250 = vmatprep.subr.mxu0 %v6187
  %6251 = vmatpush1.msra.mxu0 %v6186
  %6252 = vmatprep.subr.mxu0 %v6189
  %6253 = vmatpush1.msra.mxu0 %v6188
  %6254 = vmatprep.subr.mxu0 %v6191
  %6255 = vmatpush1.msra.mxu0 %v6190
  %6256 = vmatprep.subr.mxu0 %v6193
  %6257 = vmatpush1.msra.mxu0 %v6192
  %6258 = vmatprep.subr.mxu0 %v6195
  %6259 = vmatpush1.msra.mxu0 %v6194
  %6260 = vmatprep.subr.mxu0 %v6197
  %6261 = vmatpush1.msra.mxu0 %v6196
  %6262 = vmatprep.subr.mxu0 %v6199
  %6263 = vmatpush1.msra.mxu0 %v6198
  %6264 = vmatprep.subr.mxu0 %v6201
  %6265 = vmatpush1.msra.mxu0 %v6200
  %6266 = vmatprep.subr.mxu0 %v6203
  %6267 = vmatpush1.msra.mxu0 %v6202
  %6268 = vmatprep.subr.mxu0 %v6205
  %6269 = vmatpush1.msra.mxu0 %v6204
  %6270 = vmatprep.subr.mxu0 %v6207
  %6271 = vmatpush1.msra.mxu0 %v6206
  %6272 = vmatprep.subr.mxu0 %v6209
  %6273 = vmatpush1.msra.mxu0 %v6208
  %6274 = vmatprep.subr.mxu0 %v6211
  %6275 = vmatpush1.msra.mxu0 %v6210
  %6276 = vmatprep.subr.mxu0 %v6213
  %6277 = vmatpush1.msra.mxu0 %v6212
  %6278 = vmatprep.subr.mxu0 %v6215
  %6279 = vmatpush1.msra.mxu0 %v6214
  %6280 = vmatprep.subr.mxu0 %v6217
  %6281 = vmatpush1.msra.mxu0 %v6216
  %6282 = vmatprep.subr.mxu0 %v6219
  %6283 = vmatpush1.msra.mxu0 %v6218
  %6284 = vmatprep.subr.mxu0 %v6221
  %6285 = vmatpush1.msra.mxu0 %v6220
  %6286 = vmatprep.subr.mxu0 %v6223
  %6287 = vmatpush1.msra.mxu0 %v6222
  %6288 = vmatprep.subr.mxu0 %v6225
  %6289 = vmatpush1.msra.mxu0 %v6224
  %6290 = vmatprep.subr.mxu0 %v6227
  %6291 = vmatpush1.msra.mxu0 %v6226
  %6292 = vmatprep.subr.mxu0 %v6229
  %6293 = vmatpush1.msra.mxu0 %v6228
  %6294 = vmatprep.subr.mxu0 %v6231
  %6295 = vmatpush1.msra.mxu0 %v6230
  %6296 = vmatprep.subr.mxu0 %v6233
  %6297 = vmatpush1.msra.mxu0 %v6232
  %6298 = vmatprep.subr.mxu0 %v6235
  %6299 = vmatpush1.msra.mxu0 %v6234
  %6300 = vmatprep.subr.mxu0 %v6237
  %6301 = vmatpush1.msra.mxu0 %v6236
  %6302 = vmatprep.subr.mxu0 %v6239
  %6303 = vmatpush1.msra.mxu0 %v6238
  %6304 = vmatprep.subr.mxu0 %v6241
  %6305 = vmatpush1.msra.mxu0 %v6240
  %6306 = vmatprep.subr.mxu0 %v6243
  %6307 = vmatpush1.msra.mxu0 %v6242
  %6308 = vmatprep.subr.mxu0 %v6245
  %6309 = vmatpush1.msra.mxu0 %v6244
  %6310 = vmatprep.subr.mxu0 %v6247
  %6311 = vmatpush1.msra.mxu0 %v6246
  %6312 = vmatprep.subr.mxu0 %v6249
  %6313 = vmatpush1.msra.mxu0 %v6248
  %6314 = vmatprep.mubr.f32.mxu0 %v6093
  %6315 = vmatmul.mubr.f32.gmra.mrb[0].mxu0 %v6091
  %v6316 = vpop.f32.mrb[0].mxu0
  %v6317 = vadd.f32 0.0, %v6316
  %v6318 = vpop.f32.mrb[0].mxu0
  %v6319 = vadd.f32 0.0, %v6318
  %6320 = vmatprep.mubr.f32.mxu0 %v6099
  %6321 = vmatmul.mubr.f32.gmra.mrb[0].mxu0 %v6097
  %v6322 = vpop.f32.mrb[0].mxu0
  %v6323 = vadd.f32 0.0, %v6322
  %v6324 = vpop.f32.mrb[0].mxu0
  %v6325 = vadd.f32 0.0, %v6324
  %6326 = vmatprep.mubr.f32.mxu0 %v6105
  %6327 = vmatmul.mubr.f32.gmra.mrb[0].mxu0 %v6103
  %v6328 = vpop.f32.mrb[0].mxu0
  %v6329 = vadd.f32 0.0, %v6328
  %v6330 = vpop.f32.mrb[0].mxu0
  %v6331 = vadd.f32 0.0, %v6330
  %6332 = vmatprep.mubr.f32.mxu0 %v6111
  %6333 = vmatmul.mubr.f32.gmra.mrb[0].mxu0 %v6109
  %v6334 = vpop.f32.mrb[0].mxu0
  %v6335 = vadd.f32 0.0, %v6334
  %v6336 = vpop.f32.mrb[0].mxu0
  %v6337 = vadd.f32 0.0, %v6336
  %6338 = vmatprep.mubr.f32.mxu0 %v6117
  %6339 = vmatmul.mubr.f32.gmra.mrb[0].mxu0 %v6115
  %v6340 = vpop.f32.mrb[0].mxu0
  %v6341 = vadd.f32 0.0, %v6340
  %v6342 = vpop.f32.mrb[0].mxu0
  %v6343 = vadd.f32 0.0, %v6342
  %6344 = vmatprep.mubr.f32.mxu0 %v6123
  %6345 = vmatmul.mubr.f32.gmra.mrb[0].mxu0 %v6121
  %v6346 = vpop.f32.mrb[0].mxu0
  %v6347 = vadd.f32 0.0, %v6346
  %v6348 = vpop.f32.mrb[0].mxu0
  %v6349 = vadd.f32 0.0, %v6348
  %6350 = vmatprep.mubr.f32.mxu0 %v6129
  %6351 = vmatmul.mubr.f32.gmra.mrb[0].mxu0 %v6127
  %v6352 = vpop.f32.mrb[0].mxu0
  %v6353 = vadd.f32 0.0, %v6352
  %v6354 = vpop.f32.mrb[0].mxu0
  %v6355 = vadd.f32 0.0, %v6354
  %6356 = vmatprep.mubr.f32.mxu0 %v6135
  %6357 = vmatmul.mubr.f32.gmra.mrb[0].mxu0 %v6133
  %v6358 = vpop.f32.mrb[0].mxu0
  %v6359 = vadd.f32 0.0, %v6358
  %v6360 = vpop.f32.mrb[0].mxu0
  %v6361 = vadd.f32 0.0, %v6360
  %6362 = vmatprep.mubr.f32.mxu0 %v6141
  %6363 = vmatmul.mubr.f32.gmra.mrb[0].mxu0 %v6139
  %v6364 = vpop.f32.mrb[0].mxu0
  %v6365 = vadd.f32 0.0, %v6364
  %v6366 = vpop.f32.mrb[0].mxu0
  %v6367 = vadd.f32 0.0, %v6366
  %6368 = vmatprep.mubr.f32.mxu0 %v6147
  %6369 = vmatmul.mubr.f32.gmra.mrb[0].mxu0 %v6145
  %v6370 = vpop.f32.mrb[0].mxu0
  %v6371 = vadd.f32 0.0, %v6370
  %v6372 = vpop.f32.mrb[0].mxu0
  %v6373 = vadd.f32 0.0, %v6372
  %6374 = vmatprep.mubr.f32.mxu0 %v6153
  %6375 = vmatmul.mubr.f32.gmra.mrb[0].mxu0 %v6151
  %v6376 = vpop.f32.mrb[0].mxu0
  %v6377 = vadd.f32 0.0, %v6376
  %v6378 = vpop.f32.mrb[0].mxu0
  %v6379 = vadd.f32 0.0, %v6378
  %6380 = vmatprep.mubr.f32.mxu0 %v6159
  %6381 = vmatmul.mubr.f32.gmra.mrb[0].mxu0 %v6157
  %v6382 = vpop.f32.mrb[0].mxu0
  %v6383 = vadd.f32 0.0, %v6382
  %v6384 = vpop.f32.mrb[0].mxu0
  %v6385 = vadd.f32 0.0, %v6384
  %6386 = vmatprep.mubr.f32.mxu0 %v6165
  %6387 = vmatmul.mubr.f32.gmra.mrb[0].mxu0 %v6163
  %v6388 = vpop.f32.mrb[0].mxu0
  %v6389 = vadd.f32 0.0, %v6388
  %v6390 = vpop.f32.mrb[0].mxu0
  %v6391 = vadd.f32 0.0, %v6390
  %6392 = vmatprep.mubr.f32.mxu0 %v6171
  %6393 = vmatmul.mubr.f32.gmra.mrb[0].mxu0 %v6169
  %v6394 = vpop.f32.mrb[0].mxu0
  %v6395 = vadd.f32 0.0, %v6394
  %v6396 = vpop.f32.mrb[0].mxu0
  %v6397 = vadd.f32 0.0, %v6396
  %6398 = vmatprep.mubr.f32.mxu0 %v6177
  %6399 = vmatmul.mubr.f32.gmra.mrb[0].mxu0 %v6175
  %v6400 = vpop.f32.mrb[0].mxu0
  %v6401 = vadd.f32 0.0, %v6400
  %v6402 = vpop.f32.mrb[0].mxu0
  %v6403 = vadd.f32 0.0, %v6402
  %6404 = vmatprep.mubr.f32.mxu0 %v6183
  %6405 = vmatmul.mubr.f32.gmra.mrb[0].mxu0 %v6181
  %v6406 = vpop.f32.mrb[0].mxu0
  %v6407 = vadd.f32 0.0, %v6406
  %v6408 = vpop.f32.mrb[0].mxu0
  %v6409 = vadd.f32 0.0, %v6408
  %6410 = vdwg.mxu0
  %6411 = vmatprep.subr.mxu0 %v5896
  %6412 = vmatpush1.msra.mxu0 %v5895
  %6413 = vmatprep.subr.mxu0 %v5898
  %6414 = vmatpush1.msra.mxu0 %v5897
  %6415 = vmatprep.subr.mxu0 %v5900
  %6416 = vmatpush1.msra.mxu0 %v5899
  %6417 = vmatprep.subr.mxu0 %v5902
  %6418 = vmatpush1.msra.mxu0 %v5901
  %6419 = vmatprep.subr.mxu0 %v5904
  %6420 = vmatpush1.msra.mxu0 %v5903
  %6421 = vmatprep.subr.mxu0 %v5906
  %6422 = vmatpush1.msra.mxu0 %v5905
  %6423 = vmatprep.subr.mxu0 %v5908
  %6424 = vmatpush1.msra.mxu0 %v5907
  %6425 = vmatprep.subr.mxu0 %v5910
  %6426 = vmatpush1.msra.mxu0 %v5909
  %6427 = vmatprep.subr.mxu0 %v5912
  %6428 = vmatpush1.msra.mxu0 %v5911
  %6429 = vmatprep.subr.mxu0 %v5914
  %6430 = vmatpush1.msra.mxu0 %v5913
  %6431 = vmatprep.subr.mxu0 %v5916
  %6432 = vmatpush1.msra.mxu0 %v5915
  %6433 = vmatprep.subr.mxu0 %v5918
  %6434 = vmatpush1.msra.mxu0 %v5917
  %6435 = vmatprep.subr.mxu0 %v5920
  %6436 = vmatpush1.msra.mxu0 %v5919
  %6437 = vmatprep.subr.mxu0 %v5922
  %6438 = vmatpush1.msra.mxu0 %v5921
  %6439 = vmatprep.subr.mxu0 %v5924
  %6440 = vmatpush1.msra.mxu0 %v5923
  %6441 = vmatprep.subr.mxu0 %v5926
  %6442 = vmatpush1.msra.mxu0 %v5925
  %6443 = vmatprep.subr.mxu0 %v5928
  %6444 = vmatpush1.msra.mxu0 %v5927
  %6445 = vmatprep.subr.mxu0 %v5930
  %6446 = vmatpush1.msra.mxu0 %v5929
  %6447 = vmatprep.subr.mxu0 %v5932
  %6448 = vmatpush1.msra.mxu0 %v5931
  %6449 = vmatprep.subr.mxu0 %v5934
  %6450 = vmatpush1.msra.mxu0 %v5933
  %6451 = vmatprep.subr.mxu0 %v5936
  %6452 = vmatpush1.msra.mxu0 %v5935
  %6453 = vmatprep.subr.mxu0 %v5938
  %6454 = vmatpush1.msra.mxu0 %v5937
  %6455 = vmatprep.subr.mxu0 %v5940
  %6456 = vmatpush1.msra.mxu0 %v5939
  %6457 = vmatprep.subr.mxu0 %v5942
  %6458 = vmatpush1.msra.mxu0 %v5941
  %6459 = vmatprep.subr.mxu0 %v5944
  %6460 = vmatpush1.msra.mxu0 %v5943
  %6461 = vmatprep.subr.mxu0 %v5946
  %6462 = vmatpush1.msra.mxu0 %v5945
  %6463 = vmatprep.subr.mxu0 %v5948
  %6464 = vmatpush1.msra.mxu0 %v5947
  %6465 = vmatprep.subr.mxu0 %v5950
  %6466 = vmatpush1.msra.mxu0 %v5949
  %6467 = vmatprep.subr.mxu0 %v5952
  %6468 = vmatpush1.msra.mxu0 %v5951
  %6469 = vmatprep.subr.mxu0 %v5954
  %6470 = vmatpush1.msra.mxu0 %v5953
  %6471 = vmatprep.subr.mxu0 %v5956
  %6472 = vmatpush1.msra.mxu0 %v5955
  %6473 = vmatprep.subr.mxu0 %v5958
  %6474 = vmatpush1.msra.mxu0 %v5957
  %6475 = vmatprep.mubr.f32.mxu0 %v5803
  %6476 = vmatmul.mubr.f32.gmra.mrb[0].mxu0 %v5801
  %v6477 = vpop.f32.mrb[0].mxu0
  %v6478 = vadd.f32 %v6317, %v6477
  %v6479 = vpop.f32.mrb[0].mxu0
  %v6480 = vadd.f32 %v6319, %v6479
  %6481 = vmatprep.mubr.f32.mxu0 %v5809
  %6482 = vmatmul.mubr.f32.gmra.mrb[0].mxu0 %v5807
  %v6483 = vpop.f32.mrb[0].mxu0
  %v6484 = vadd.f32 %v6323, %v6483
  %v6485 = vpop.f32.mrb[0].mxu0
  %v6486 = vadd.f32 %v6325, %v6485
  %6487 = vmatprep.mubr.f32.mxu0 %v5815
  %6488 = vmatmul.mubr.f32.gmra.mrb[0].mxu0 %v5813
  %v6489 = vpop.f32.mrb[0].mxu0
  %v6490 = vadd.f32 %v6329, %v6489
  %v6491 = vpop.f32.mrb[0].mxu0
  %v6492 = vadd.f32 %v6331, %v6491
  %6493 = vmatprep.mubr.f32.mxu0 %v5821
  %6494 = vmatmul.mubr.f32.gmra.mrb[0].mxu0 %v5819
  %v6495 = vpop.f32.mrb[0].mxu0
  %v6496 = vadd.f32 %v6335, %v6495
  %v6497 = vpop.f32.mrb[0].mxu0
  %v6498 = vadd.f32 %v6337, %v6497
  %6499 = vmatprep.mubr.f32.mxu0 %v5827
  %6500 = vmatmul.mubr.f32.gmra.mrb[0].mxu0 %v5825
  %v6501 = vpop.f32.mrb[0].mxu0
  %v6502 = vadd.f32 %v6341, %v6501
  %v6503 = vpop.f32.mrb[0].mxu0
  %v6504 = vadd.f32 %v6343, %v6503
  %6505 = vmatprep.mubr.f32.mxu0 %v5833
  %6506 = vmatmul.mubr.f32.gmra.mrb[0].mxu0 %v5831
  %v6507 = vpop.f32.mrb[0].mxu0
  %v6508 = vadd.f32 %v6347, %v6507
  %v6509 = vpop.f32.mrb[0].mxu0
  %v6510 = vadd.f32 %v6349, %v6509
  %6511 = vmatprep.mubr.f32.mxu0 %v5839
  %6512 = vmatmul.mubr.f32.gmra.mrb[0].mxu0 %v5837
  %v6513 = vpop.f32.mrb[0].mxu0
  %v6514 = vadd.f32 %v6353, %v6513
  %v6515 = vpop.f32.mrb[0].mxu0
  %v6516 = vadd.f32 %v6355, %v6515
  %6517 = vmatprep.mubr.f32.mxu0 %v5845
  %6518 = vmatmul.mubr.f32.gmra.mrb[0].mxu0 %v5843
  %v6519 = vpop.f32.mrb[0].mxu0
  %v6520 = vadd.f32 %v6359, %v6519
  %v6521 = vpop.f32.mrb[0].mxu0
  %v6522 = vadd.f32 %v6361, %v6521
  %6523 = vmatprep.mubr.f32.mxu0 %v5851
  %6524 = vmatmul.mubr.f32.gmra.mrb[0].mxu0 %v5849
  %v6525 = vpop.f32.mrb[0].mxu0
  %v6526 = vadd.f32 %v6365, %v6525
  %v6527 = vpop.f32.mrb[0].mxu0
  %v6528 = vadd.f32 %v6367, %v6527
  %6529 = vmatprep.mubr.f32.mxu0 %v5857
  %6530 = vmatmul.mubr.f32.gmra.mrb[0].mxu0 %v5855
  %v6531 = vpop.f32.mrb[0].mxu0
  %v6532 = vadd.f32 %v6371, %v6531
  %v6533 = vpop.f32.mrb[0].mxu0
  %v6534 = vadd.f32 %v6373, %v6533
  %6535 = vmatprep.mubr.f32.mxu0 %v5863
  %6536 = vmatmul.mubr.f32.gmra.mrb[0].mxu0 %v5861
  %v6537 = vpop.f32.mrb[0].mxu0
  %v6538 = vadd.f32 %v6377, %v6537
  %v6539 = vpop.f32.mrb[0].mxu0
  %v6540 = vadd.f32 %v6379, %v6539
  %6541 = vmatprep.mubr.f32.mxu0 %v5869
  %6542 = vmatmul.mubr.f32.gmra.mrb[0].mxu0 %v5867
  %v6543 = vpop.f32.mrb[0].mxu0
  %v6544 = vadd.f32 %v6383, %v6543
  %v6545 = vpop.f32.mrb[0].mxu0
  %v6546 = vadd.f32 %v6385, %v6545
  %6547 = vmatprep.mubr.f32.mxu0 %v5875
  %6548 = vmatmul.mubr.f32.gmra.mrb[0].mxu0 %v5873
  %v6549 = vpop.f32.mrb[0].mxu0
  %v6550 = vadd.f32 %v6389, %v6549
  %v6551 = vpop.f32.mrb[0].mxu0
  %v6552 = vadd.f32 %v6391, %v6551
  %6553 = vmatprep.mubr.f32.mxu0 %v5881
  %6554 = vmatmul.mubr.f32.gmra.mrb[0].mxu0 %v5879
  %v6555 = vpop.f32.mrb[0].mxu0
  %v6556 = vadd.f32 %v6395, %v6555
  %v6557 = vpop.f32.mrb[0].mxu0
  %v6558 = vadd.f32 %v6397, %v6557
  %6559 = vmatprep.mubr.f32.mxu0 %v5887
  %6560 = vmatmul.mubr.f32.gmra.mrb[0].mxu0 %v5885
  %v6561 = vpop.f32.mrb[0].mxu0
  %v6562 = vadd.f32 %v6401, %v6561
  %v6563 = vpop.f32.mrb[0].mxu0
  %v6564 = vadd.f32 %v6403, %v6563
  %6565 = vmatprep.mubr.f32.mxu0 %v5893
  %6566 = vmatmul.mubr.f32.gmra.mrb[0].mxu0 %v5891
  %v6567 = vpop.f32.mrb[0].mxu0
  %v6568 = vadd.f32 %v6407, %v6567
  %v6569 = vpop.f32.mrb[0].mxu0
  %v6570 = vadd.f32 %v6409, %v6569
  %6571 = vdwg.mxu0
  %s6572 = scalar_lea.vmem %s73, 256
  %v6573 = vld [vmem:[%s6572] sm:$0xff]
  %v6574 = vld [vmem:[%s6572 + $0x8] sm:$0xff]
  %v6575 = vld [vmem:[%s6572 + $0x10] sm:$0xff]
  %v6576 = vld [vmem:[%s6572 + $0x18] sm:$0xff]
  %v6577 = vld [vmem:[%s6572 + $0x20] sm:$0xff]
  %v6578 = vld [vmem:[%s6572 + $0x28] sm:$0xff]
  %v6579 = vld [vmem:[%s6572 + $0x30] sm:$0xff]
  %v6580 = vld [vmem:[%s6572 + $0x38] sm:$0xff]
  %v6581 = vld [vmem:[%s6572 + $0x40] sm:$0xff]
  %v6582 = vld [vmem:[%s6572 + $0x48] sm:$0xff]
  %v6583 = vld [vmem:[%s6572 + $0x50] sm:$0xff]
  %v6584 = vld [vmem:[%s6572 + $0x58] sm:$0xff]
  %v6585 = vld [vmem:[%s6572 + $0x60] sm:$0xff]
  %v6586 = vld [vmem:[%s6572 + $0x68] sm:$0xff]
  %v6587 = vld [vmem:[%s6572 + $0x70] sm:$0xff]
  %v6588 = vld [vmem:[%s6572 + $0x78] sm:$0xff]
  %v6590 = vsel %vm1520, %v6573, 0
  %v6593 = vsel %vm1520, %v6574, 0
  %v6596 = vsel %vm1520, %v6575, 0
  %v6599 = vsel %vm1520, %v6576, 0
  %v6602 = vsel %vm1520, %v6577, 0
  %v6605 = vsel %vm1520, %v6578, 0
  %v6608 = vsel %vm1520, %v6579, 0
  %v6611 = vsel %vm1520, %v6580, 0
  %v6614 = vsel %vm1520, %v6581, 0
  %v6617 = vsel %vm1520, %v6582, 0
  %v6620 = vsel %vm1520, %v6583, 0
  %v6623 = vsel %vm1520, %v6584, 0
  %v6626 = vsel %vm1520, %v6585, 0
  %v6629 = vsel %vm1520, %v6586, 0
  %v6632 = vsel %vm1520, %v6587, 0
  %v6635 = vsel %vm1520, %v6588, 0
  %6637 = vmatprep.subr.mxu0 %v5655
  %6638 = vmatpush1.msra.mxu0 %v5654
  %6639 = vmatprep.subr.mxu0 %v5657
  %6640 = vmatpush1.msra.mxu0 %v5656
  %6641 = vmatprep.subr.mxu0 %v5659
  %6642 = vmatpush1.msra.mxu0 %v5658
  %6643 = vmatprep.subr.mxu0 %v5661
  %6644 = vmatpush1.msra.mxu0 %v5660
  %6645 = vmatprep.subr.mxu0 %v5663
  %6646 = vmatpush1.msra.mxu0 %v5662
  %6647 = vmatprep.subr.mxu0 %v5665
  %6648 = vmatpush1.msra.mxu0 %v5664
  %6649 = vmatprep.subr.mxu0 %v5667
  %6650 = vmatpush1.msra.mxu0 %v5666
  %6651 = vmatprep.subr.mxu0 %v5669
  %6652 = vmatpush1.msra.mxu0 %v5668
  %6653 = vmatprep.subr.mxu0 0.0
  %6654 = vmatpush1.msra.mxu0 0.0
  %6655 = vmatprep.subr.mxu0 0.0
  %6656 = vmatpush1.msra.mxu0 0.0
  %6657 = vmatprep.subr.mxu0 0.0
  %6658 = vmatpush1.msra.mxu0 0.0
  %6659 = vmatprep.subr.mxu0 0.0
  %6660 = vmatpush1.msra.mxu0 0.0
  %6661 = vmatprep.subr.mxu0 0.0
  %6662 = vmatpush1.msra.mxu0 0.0
  %6663 = vmatprep.subr.mxu0 0.0
  %6664 = vmatpush1.msra.mxu0 0.0
  %6665 = vmatprep.subr.mxu0 0.0
  %6666 = vmatpush1.msra.mxu0 0.0
  %6667 = vmatprep.subr.mxu0 0.0
  %6668 = vmatpush1.msra.mxu0 0.0
  %6669 = vmatprep.subr.mxu0 0.0
  %6670 = vmatpush1.msra.mxu0 0.0
  %6671 = vmatprep.subr.mxu0 0.0
  %6672 = vmatpush1.msra.mxu0 0.0
  %6673 = vmatprep.subr.mxu0 0.0
  %6674 = vmatpush1.msra.mxu0 0.0
  %6675 = vmatprep.subr.mxu0 0.0
  %6676 = vmatpush1.msra.mxu0 0.0
  %6677 = vmatprep.subr.mxu0 0.0
  %6678 = vmatpush1.msra.mxu0 0.0
  %6679 = vmatprep.subr.mxu0 0.0
  %6680 = vmatpush1.msra.mxu0 0.0
  %6681 = vmatprep.subr.mxu0 0.0
  %6682 = vmatpush1.msra.mxu0 0.0
  %6683 = vmatprep.subr.mxu0 0.0
  %6684 = vmatpush1.msra.mxu0 0.0
  %6685 = vmatprep.subr.mxu0 0.0
  %6686 = vmatpush1.msra.mxu0 0.0
  %6687 = vmatprep.subr.mxu0 0.0
  %6688 = vmatpush1.msra.mxu0 0.0
  %6689 = vmatprep.subr.mxu0 0.0
  %6690 = vmatpush1.msra.mxu0 0.0
  %6691 = vmatprep.subr.mxu0 0.0
  %6692 = vmatpush1.msra.mxu0 0.0
  %6693 = vmatprep.subr.mxu0 0.0
  %6694 = vmatpush1.msra.mxu0 0.0
  %6695 = vmatprep.subr.mxu0 0.0
  %6696 = vmatpush1.msra.mxu0 0.0
  %6697 = vmatprep.subr.mxu0 0.0
  %6698 = vmatpush1.msra.mxu0 0.0
  %6699 = vmatprep.subr.mxu0 0.0
  %6700 = vmatpush1.msra.mxu0 0.0
  %6701 = vmatprep.mubr.f32.mxu0 0.0
  %6702 = vmatmul.mubr.f32.gmra.mrb[0].mxu0 %v6590
  %v6703 = vpop.f32.mrb[0].mxu0
  %v6704 = vadd.f32 0.0, %v6703
  %v6705 = vpop.f32.mrb[0].mxu0
  %v6706 = vadd.f32 0.0, %v6705
  %6707 = vmatprep.mubr.f32.mxu0 0.0
  %6708 = vmatmul.mubr.f32.gmra.mrb[0].mxu0 %v6593
  %v6709 = vpop.f32.mrb[0].mxu0
  %v6710 = vadd.f32 0.0, %v6709
  %v6711 = vpop.f32.mrb[0].mxu0
  %v6712 = vadd.f32 0.0, %v6711
  %6713 = vmatprep.mubr.f32.mxu0 0.0
  %6714 = vmatmul.mubr.f32.gmra.mrb[0].mxu0 %v6596
  %v6715 = vpop.f32.mrb[0].mxu0
  %v6716 = vadd.f32 0.0, %v6715
  %v6717 = vpop.f32.mrb[0].mxu0
  %v6718 = vadd.f32 0.0, %v6717
  %6719 = vmatprep.mubr.f32.mxu0 0.0
  %6720 = vmatmul.mubr.f32.gmra.mrb[0].mxu0 %v6599
  %v6721 = vpop.f32.mrb[0].mxu0
  %v6722 = vadd.f32 0.0, %v6721
  %v6723 = vpop.f32.mrb[0].mxu0
  %v6724 = vadd.f32 0.0, %v6723
  %6725 = vmatprep.mubr.f32.mxu0 0.0
  %6726 = vmatmul.mubr.f32.gmra.mrb[0].mxu0 %v6602
  %v6727 = vpop.f32.mrb[0].mxu0
  %v6728 = vadd.f32 0.0, %v6727
  %v6729 = vpop.f32.mrb[0].mxu0
  %v6730 = vadd.f32 0.0, %v6729
  %6731 = vmatprep.mubr.f32.mxu0 0.0
  %6732 = vmatmul.mubr.f32.gmra.mrb[0].mxu0 %v6605
  %v6733 = vpop.f32.mrb[0].mxu0
  %v6734 = vadd.f32 0.0, %v6733
  %v6735 = vpop.f32.mrb[0].mxu0
  %v6736 = vadd.f32 0.0, %v6735
  %6737 = vmatprep.mubr.f32.mxu0 0.0
  %6738 = vmatmul.mubr.f32.gmra.mrb[0].mxu0 %v6608
  %v6739 = vpop.f32.mrb[0].mxu0
  %v6740 = vadd.f32 0.0, %v6739
  %v6741 = vpop.f32.mrb[0].mxu0
  %v6742 = vadd.f32 0.0, %v6741
  %6743 = vmatprep.mubr.f32.mxu0 0.0
  %6744 = vmatmul.mubr.f32.gmra.mrb[0].mxu0 %v6611
  %v6745 = vpop.f32.mrb[0].mxu0
  %v6746 = vadd.f32 0.0, %v6745
  %v6747 = vpop.f32.mrb[0].mxu0
  %v6748 = vadd.f32 0.0, %v6747
  %6749 = vmatprep.mubr.f32.mxu0 0.0
  %6750 = vmatmul.mubr.f32.gmra.mrb[0].mxu0 %v6614
  %v6751 = vpop.f32.mrb[0].mxu0
  %v6752 = vadd.f32 0.0, %v6751
  %v6753 = vpop.f32.mrb[0].mxu0
  %v6754 = vadd.f32 0.0, %v6753
  %6755 = vmatprep.mubr.f32.mxu0 0.0
  %6756 = vmatmul.mubr.f32.gmra.mrb[0].mxu0 %v6617
  %v6757 = vpop.f32.mrb[0].mxu0
  %v6758 = vadd.f32 0.0, %v6757
  %v6759 = vpop.f32.mrb[0].mxu0
  %v6760 = vadd.f32 0.0, %v6759
  %6761 = vmatprep.mubr.f32.mxu0 0.0
  %6762 = vmatmul.mubr.f32.gmra.mrb[0].mxu0 %v6620
  %v6763 = vpop.f32.mrb[0].mxu0
  %v6764 = vadd.f32 0.0, %v6763
  %v6765 = vpop.f32.mrb[0].mxu0
  %v6766 = vadd.f32 0.0, %v6765
  %6767 = vmatprep.mubr.f32.mxu0 0.0
  %6768 = vmatmul.mubr.f32.gmra.mrb[0].mxu0 %v6623
  %v6769 = vpop.f32.mrb[0].mxu0
  %v6770 = vadd.f32 0.0, %v6769
  %v6771 = vpop.f32.mrb[0].mxu0
  %v6772 = vadd.f32 0.0, %v6771
  %6773 = vmatprep.mubr.f32.mxu0 0.0
  %6774 = vmatmul.mubr.f32.gmra.mrb[0].mxu0 %v6626
  %v6775 = vpop.f32.mrb[0].mxu0
  %v6776 = vadd.f32 0.0, %v6775
  %v6777 = vpop.f32.mrb[0].mxu0
  %v6778 = vadd.f32 0.0, %v6777
  %6779 = vmatprep.mubr.f32.mxu0 0.0
  %6780 = vmatmul.mubr.f32.gmra.mrb[0].mxu0 %v6629
  %v6781 = vpop.f32.mrb[0].mxu0
  %v6782 = vadd.f32 0.0, %v6781
  %v6783 = vpop.f32.mrb[0].mxu0
  %v6784 = vadd.f32 0.0, %v6783
  %6785 = vmatprep.mubr.f32.mxu0 0.0
  %6786 = vmatmul.mubr.f32.gmra.mrb[0].mxu0 %v6632
  %v6787 = vpop.f32.mrb[0].mxu0
  %v6788 = vadd.f32 0.0, %v6787
  %v6789 = vpop.f32.mrb[0].mxu0
  %v6790 = vadd.f32 0.0, %v6789
  %6791 = vmatprep.mubr.f32.mxu0 0.0
  %6792 = vmatmul.mubr.f32.gmra.mrb[0].mxu0 %v6635
  %v6793 = vpop.f32.mrb[0].mxu0
  %v6794 = vadd.f32 0.0, %v6793
  %v6795 = vpop.f32.mrb[0].mxu0
  %v6796 = vadd.f32 0.0, %v6795
  %6797 = vdwg.mxu0
  %s6798 = scalar_lea.vmem %s75, 1024
  %v6799 = vld [vmem:[%s6798] sm:$0xff]
  %v6800 = vld [vmem:[%s6798 + $0x8] sm:$0xff]
  %v6801 = vld [vmem:[%s6798 + $0x10] sm:$0xff]
  %v6802 = vld [vmem:[%s6798 + $0x18] sm:$0xff]
  %v6803 = vld [vmem:[%s6798 + $0x20] sm:$0xff]
  %v6804 = vld [vmem:[%s6798 + $0x28] sm:$0xff]
  %v6805 = vld [vmem:[%s6798 + $0x30] sm:$0xff]
  %v6806 = vld [vmem:[%s6798 + $0x38] sm:$0xff]
  %v6807 = vld [vmem:[%s6798 + $0x40] sm:$0xff]
  %v6808 = vld [vmem:[%s6798 + $0x48] sm:$0xff]
  %v6809 = vld [vmem:[%s6798 + $0x50] sm:$0xff]
  %v6810 = vld [vmem:[%s6798 + $0x58] sm:$0xff]
  %v6811 = vld [vmem:[%s6798 + $0x60] sm:$0xff]
  %v6812 = vld [vmem:[%s6798 + $0x68] sm:$0xff]
  %v6813 = vld [vmem:[%s6798 + $0x70] sm:$0xff]
  %v6814 = vld [vmem:[%s6798 + $0x78] sm:$0xff]
  %v6815 = vld [vmem:[%s6798 + $0x80] sm:$0xff]
  %v6816 = vld [vmem:[%s6798 + $0x88] sm:$0xff]
  %v6817 = vld [vmem:[%s6798 + $0x90] sm:$0xff]
  %v6818 = vld [vmem:[%s6798 + $0x98] sm:$0xff]
  %v6819 = vld [vmem:[%s6798 + $0xa0] sm:$0xff]
  %v6820 = vld [vmem:[%s6798 + $0xa8] sm:$0xff]
  %v6821 = vld [vmem:[%s6798 + $0xb0] sm:$0xff]
  %v6822 = vld [vmem:[%s6798 + $0xb8] sm:$0xff]
  %v6823 = vld [vmem:[%s6798 + $0xc0] sm:$0xff]
  %v6824 = vld [vmem:[%s6798 + $0xc8] sm:$0xff]
  %v6825 = vld [vmem:[%s6798 + $0xd0] sm:$0xff]
  %v6826 = vld [vmem:[%s6798 + $0xd8] sm:$0xff]
  %v6827 = vld [vmem:[%s6798 + $0xe0] sm:$0xff]
  %v6828 = vld [vmem:[%s6798 + $0xe8] sm:$0xff]
  %v6829 = vld [vmem:[%s6798 + $0xf0] sm:$0xff]
  %v6830 = vld [vmem:[%s6798 + $0xf8] sm:$0xff]
  %v6831 = vld [vmem:[%s6798 + $0x100] sm:$0xff]
  %v6832 = vld [vmem:[%s6798 + $0x108] sm:$0xff]
  %v6833 = vld [vmem:[%s6798 + $0x110] sm:$0xff]
  %v6834 = vld [vmem:[%s6798 + $0x118] sm:$0xff]
  %v6835 = vld [vmem:[%s6798 + $0x120] sm:$0xff]
  %v6836 = vld [vmem:[%s6798 + $0x128] sm:$0xff]
  %v6837 = vld [vmem:[%s6798 + $0x130] sm:$0xff]
  %v6838 = vld [vmem:[%s6798 + $0x138] sm:$0xff]
  %v6839 = vld [vmem:[%s6798 + $0x140] sm:$0xff]
  %v6840 = vld [vmem:[%s6798 + $0x148] sm:$0xff]
  %v6841 = vld [vmem:[%s6798 + $0x150] sm:$0xff]
  %v6842 = vld [vmem:[%s6798 + $0x158] sm:$0xff]
  %v6843 = vld [vmem:[%s6798 + $0x160] sm:$0xff]
  %v6844 = vld [vmem:[%s6798 + $0x168] sm:$0xff]
  %v6845 = vld [vmem:[%s6798 + $0x170] sm:$0xff]
  %v6846 = vld [vmem:[%s6798 + $0x178] sm:$0xff]
  %v6847 = vld [vmem:[%s6798 + $0x180] sm:$0xff]
  %v6848 = vld [vmem:[%s6798 + $0x188] sm:$0xff]
  %v6849 = vld [vmem:[%s6798 + $0x190] sm:$0xff]
  %v6850 = vld [vmem:[%s6798 + $0x198] sm:$0xff]
  %v6851 = vld [vmem:[%s6798 + $0x1a0] sm:$0xff]
  %v6852 = vld [vmem:[%s6798 + $0x1a8] sm:$0xff]
  %v6853 = vld [vmem:[%s6798 + $0x1b0] sm:$0xff]
  %v6854 = vld [vmem:[%s6798 + $0x1b8] sm:$0xff]
  %v6855 = vld [vmem:[%s6798 + $0x1c0] sm:$0xff]
  %v6856 = vld [vmem:[%s6798 + $0x1c8] sm:$0xff]
  %v6857 = vld [vmem:[%s6798 + $0x1d0] sm:$0xff]
  %v6858 = vld [vmem:[%s6798 + $0x1d8] sm:$0xff]
  %v6859 = vld [vmem:[%s6798 + $0x1e0] sm:$0xff]
  %v6860 = vld [vmem:[%s6798 + $0x1e8] sm:$0xff]
  %v6861 = vld [vmem:[%s6798 + $0x1f0] sm:$0xff]
  %v6862 = vld [vmem:[%s6798 + $0x1f8] sm:$0xff]
  %6863 = vmatprep.subr.mxu0 %v6800
  %6864 = vmatpush1.msra.mxu0 %v6799
  %6865 = vmatprep.subr.mxu0 %v6802
  %6866 = vmatpush1.msra.mxu0 %v6801
  %6867 = vmatprep.subr.mxu0 %v6804
  %6868 = vmatpush1.msra.mxu0 %v6803
  %6869 = vmatprep.subr.mxu0 %v6806
  %6870 = vmatpush1.msra.mxu0 %v6805
  %6871 = vmatprep.subr.mxu0 %v6808
  %6872 = vmatpush1.msra.mxu0 %v6807
  %6873 = vmatprep.subr.mxu0 %v6810
  %6874 = vmatpush1.msra.mxu0 %v6809
  %6875 = vmatprep.subr.mxu0 %v6812
  %6876 = vmatpush1.msra.mxu0 %v6811
  %6877 = vmatprep.subr.mxu0 %v6814
  %6878 = vmatpush1.msra.mxu0 %v6813
  %6879 = vmatprep.subr.mxu0 %v6816
  %6880 = vmatpush1.msra.mxu0 %v6815
  %6881 = vmatprep.subr.mxu0 %v6818
  %6882 = vmatpush1.msra.mxu0 %v6817
  %6883 = vmatprep.subr.mxu0 %v6820
  %6884 = vmatpush1.msra.mxu0 %v6819
  %6885 = vmatprep.subr.mxu0 %v6822
  %6886 = vmatpush1.msra.mxu0 %v6821
  %6887 = vmatprep.subr.mxu0 %v6824
  %6888 = vmatpush1.msra.mxu0 %v6823
  %6889 = vmatprep.subr.mxu0 %v6826
  %6890 = vmatpush1.msra.mxu0 %v6825
  %6891 = vmatprep.subr.mxu0 %v6828
  %6892 = vmatpush1.msra.mxu0 %v6827
  %6893 = vmatprep.subr.mxu0 %v6830
  %6894 = vmatpush1.msra.mxu0 %v6829
  %6895 = vmatprep.subr.mxu0 %v6832
  %6896 = vmatpush1.msra.mxu0 %v6831
  %6897 = vmatprep.subr.mxu0 %v6834
  %6898 = vmatpush1.msra.mxu0 %v6833
  %6899 = vmatprep.subr.mxu0 %v6836
  %6900 = vmatpush1.msra.mxu0 %v6835
  %6901 = vmatprep.subr.mxu0 %v6838
  %6902 = vmatpush1.msra.mxu0 %v6837
  %6903 = vmatprep.subr.mxu0 %v6840
  %6904 = vmatpush1.msra.mxu0 %v6839
  %6905 = vmatprep.subr.mxu0 %v6842
  %6906 = vmatpush1.msra.mxu0 %v6841
  %6907 = vmatprep.subr.mxu0 %v6844
  %6908 = vmatpush1.msra.mxu0 %v6843
  %6909 = vmatprep.subr.mxu0 %v6846
  %6910 = vmatpush1.msra.mxu0 %v6845
  %6911 = vmatprep.subr.mxu0 %v6848
  %6912 = vmatpush1.msra.mxu0 %v6847
  %6913 = vmatprep.subr.mxu0 %v6850
  %6914 = vmatpush1.msra.mxu0 %v6849
  %6915 = vmatprep.subr.mxu0 %v6852
  %6916 = vmatpush1.msra.mxu0 %v6851
  %6917 = vmatprep.subr.mxu0 %v6854
  %6918 = vmatpush1.msra.mxu0 %v6853
  %6919 = vmatprep.subr.mxu0 %v6856
  %6920 = vmatpush1.msra.mxu0 %v6855
  %6921 = vmatprep.subr.mxu0 %v6858
  %6922 = vmatpush1.msra.mxu0 %v6857
  %6923 = vmatprep.subr.mxu0 %v6860
  %6924 = vmatpush1.msra.mxu0 %v6859
  %6925 = vmatprep.subr.mxu0 %v6862
  %6926 = vmatpush1.msra.mxu0 %v6861
  %6927 = vmatprep.mubr.f32.mxu0 %v6706
  %6928 = vmatmul.mubr.f32.gmra.mrb[0].mxu0 %v6704
  %v6929 = vpop.f32.mrb[0].mxu0
  %v6930 = vadd.f32 0.0, %v6929
  %v6931 = vpop.f32.mrb[0].mxu0
  %v6932 = vadd.f32 0.0, %v6931
  %6933 = vmatprep.mubr.f32.mxu0 %v6712
  %6934 = vmatmul.mubr.f32.gmra.mrb[0].mxu0 %v6710
  %v6935 = vpop.f32.mrb[0].mxu0
  %v6936 = vadd.f32 0.0, %v6935
  %v6937 = vpop.f32.mrb[0].mxu0
  %v6938 = vadd.f32 0.0, %v6937
  %6939 = vmatprep.mubr.f32.mxu0 %v6718
  %6940 = vmatmul.mubr.f32.gmra.mrb[0].mxu0 %v6716
  %v6941 = vpop.f32.mrb[0].mxu0
  %v6942 = vadd.f32 0.0, %v6941
  %v6943 = vpop.f32.mrb[0].mxu0
  %v6944 = vadd.f32 0.0, %v6943
  %6945 = vmatprep.mubr.f32.mxu0 %v6724
  %6946 = vmatmul.mubr.f32.gmra.mrb[0].mxu0 %v6722
  %v6947 = vpop.f32.mrb[0].mxu0
  %v6948 = vadd.f32 0.0, %v6947
  %v6949 = vpop.f32.mrb[0].mxu0
  %v6950 = vadd.f32 0.0, %v6949
  %6951 = vmatprep.mubr.f32.mxu0 %v6730
  %6952 = vmatmul.mubr.f32.gmra.mrb[0].mxu0 %v6728
  %v6953 = vpop.f32.mrb[0].mxu0
  %v6954 = vadd.f32 0.0, %v6953
  %v6955 = vpop.f32.mrb[0].mxu0
  %v6956 = vadd.f32 0.0, %v6955
  %6957 = vmatprep.mubr.f32.mxu0 %v6736
  %6958 = vmatmul.mubr.f32.gmra.mrb[0].mxu0 %v6734
  %v6959 = vpop.f32.mrb[0].mxu0
  %v6960 = vadd.f32 0.0, %v6959
  %v6961 = vpop.f32.mrb[0].mxu0
  %v6962 = vadd.f32 0.0, %v6961
  %6963 = vmatprep.mubr.f32.mxu0 %v6742
  %6964 = vmatmul.mubr.f32.gmra.mrb[0].mxu0 %v6740
  %v6965 = vpop.f32.mrb[0].mxu0
  %v6966 = vadd.f32 0.0, %v6965
  %v6967 = vpop.f32.mrb[0].mxu0
  %v6968 = vadd.f32 0.0, %v6967
  %6969 = vmatprep.mubr.f32.mxu0 %v6748
  %6970 = vmatmul.mubr.f32.gmra.mrb[0].mxu0 %v6746
  %v6971 = vpop.f32.mrb[0].mxu0
  %v6972 = vadd.f32 0.0, %v6971
  %v6973 = vpop.f32.mrb[0].mxu0
  %v6974 = vadd.f32 0.0, %v6973
  %6975 = vmatprep.mubr.f32.mxu0 %v6754
  %6976 = vmatmul.mubr.f32.gmra.mrb[0].mxu0 %v6752
  %v6977 = vpop.f32.mrb[0].mxu0
  %v6978 = vadd.f32 0.0, %v6977
  %v6979 = vpop.f32.mrb[0].mxu0
  %v6980 = vadd.f32 0.0, %v6979
  %6981 = vmatprep.mubr.f32.mxu0 %v6760
  %6982 = vmatmul.mubr.f32.gmra.mrb[0].mxu0 %v6758
  %v6983 = vpop.f32.mrb[0].mxu0
  %v6984 = vadd.f32 0.0, %v6983
  %v6985 = vpop.f32.mrb[0].mxu0
  %v6986 = vadd.f32 0.0, %v6985
  %6987 = vmatprep.mubr.f32.mxu0 %v6766
  %6988 = vmatmul.mubr.f32.gmra.mrb[0].mxu0 %v6764
  %v6989 = vpop.f32.mrb[0].mxu0
  %v6990 = vadd.f32 0.0, %v6989
  %v6991 = vpop.f32.mrb[0].mxu0
  %v6992 = vadd.f32 0.0, %v6991
  %6993 = vmatprep.mubr.f32.mxu0 %v6772
  %6994 = vmatmul.mubr.f32.gmra.mrb[0].mxu0 %v6770
  %v6995 = vpop.f32.mrb[0].mxu0
  %v6996 = vadd.f32 0.0, %v6995
  %v6997 = vpop.f32.mrb[0].mxu0
  %v6998 = vadd.f32 0.0, %v6997
  %6999 = vmatprep.mubr.f32.mxu0 %v6778
  %7000 = vmatmul.mubr.f32.gmra.mrb[0].mxu0 %v6776
  %v7001 = vpop.f32.mrb[0].mxu0
  %v7002 = vadd.f32 0.0, %v7001
  %v7003 = vpop.f32.mrb[0].mxu0
  %v7004 = vadd.f32 0.0, %v7003
  %7005 = vmatprep.mubr.f32.mxu0 %v6784
  %7006 = vmatmul.mubr.f32.gmra.mrb[0].mxu0 %v6782
  %v7007 = vpop.f32.mrb[0].mxu0
  %v7008 = vadd.f32 0.0, %v7007
  %v7009 = vpop.f32.mrb[0].mxu0
  %v7010 = vadd.f32 0.0, %v7009
  %7011 = vmatprep.mubr.f32.mxu0 %v6790
  %7012 = vmatmul.mubr.f32.gmra.mrb[0].mxu0 %v6788
  %v7013 = vpop.f32.mrb[0].mxu0
  %v7014 = vadd.f32 0.0, %v7013
  %v7015 = vpop.f32.mrb[0].mxu0
  %v7016 = vadd.f32 0.0, %v7015
  %7017 = vmatprep.mubr.f32.mxu0 %v6796
  %7018 = vmatmul.mubr.f32.gmra.mrb[0].mxu0 %v6794
  %v7019 = vpop.f32.mrb[0].mxu0
  %v7020 = vadd.f32 0.0, %v7019
  %v7021 = vpop.f32.mrb[0].mxu0
  %v7022 = vadd.f32 0.0, %v7021
  %7023 = vdwg.mxu0
  %v7024 = vadd.f32 %v6478, %v6930
  %v7025 = vadd.f32 %v6480, %v6932
  %v7026 = vadd.f32 %v6484, %v6936
  %v7027 = vadd.f32 %v6486, %v6938
  %v7028 = vadd.f32 %v6490, %v6942
  %v7029 = vadd.f32 %v6492, %v6944
  %v7030 = vadd.f32 %v6496, %v6948
  %v7031 = vadd.f32 %v6498, %v6950
  %v7032 = vadd.f32 %v6502, %v6954
  %v7033 = vadd.f32 %v6504, %v6956
  %v7034 = vadd.f32 %v6508, %v6960
  %v7035 = vadd.f32 %v6510, %v6962
  %v7036 = vadd.f32 %v6514, %v6966
  %v7037 = vadd.f32 %v6516, %v6968
  %v7038 = vadd.f32 %v6520, %v6972
  %v7039 = vadd.f32 %v6522, %v6974
  %v7040 = vadd.f32 %v6526, %v6978
  %v7041 = vadd.f32 %v6528, %v6980
  %v7042 = vadd.f32 %v6532, %v6984
  %v7043 = vadd.f32 %v6534, %v6986
  %v7044 = vadd.f32 %v6538, %v6990
  %v7045 = vadd.f32 %v6540, %v6992
  %v7046 = vadd.f32 %v6544, %v6996
  %v7047 = vadd.f32 %v6546, %v6998
  %v7048 = vadd.f32 %v6550, %v7002
  %v7049 = vadd.f32 %v6552, %v7004
  %v7050 = vadd.f32 %v6556, %v7008
  %v7051 = vadd.f32 %v6558, %v7010
  %v7052 = vadd.f32 %v6562, %v7014
  %v7053 = vadd.f32 %v6564, %v7016
  %v7054 = vadd.f32 %v6568, %v7020
  %v7055 = vadd.f32 %v6570, %v7022
  %v7056 = vld [vmem:[%s77] sm:$0x3]
  %v7058 = vlaneseq
  %v7059 = vshrl.u32 %v7058, 7
  %v7060 = vsub.s32 0, %v7059
  %v7061 = vrot.slane %v7056, %v7060
  %v7062 = vlaneseq
  %v7063 = vshrl.u32 %v7062, 7
  %v7064 = vsub.s32 1, %v7063
  %v7065 = vrot.slane %v7056, %v7064
  %v7068 = vadd.f32 %v7024, %v7061
  %v7069 = vadd.f32 %v7025, %v7065
  %v7070 = vadd.f32 %v7026, %v7061
  %v7071 = vadd.f32 %v7027, %v7065
  %v7072 = vadd.f32 %v7028, %v7061
  %v7073 = vadd.f32 %v7029, %v7065
  %v7074 = vadd.f32 %v7030, %v7061
  %v7075 = vadd.f32 %v7031, %v7065
  %v7076 = vadd.f32 %v7032, %v7061
  %v7077 = vadd.f32 %v7033, %v7065
  %v7078 = vadd.f32 %v7034, %v7061
  %v7079 = vadd.f32 %v7035, %v7065
  %v7080 = vadd.f32 %v7036, %v7061
  %v7081 = vadd.f32 %v7037, %v7065
  %v7082 = vadd.f32 %v7038, %v7061
  %v7083 = vadd.f32 %v7039, %v7065
  %v7084 = vadd.f32 %v7040, %v7061
  %v7085 = vadd.f32 %v7041, %v7065
  %v7086 = vadd.f32 %v7042, %v7061
  %v7087 = vadd.f32 %v7043, %v7065
  %v7088 = vadd.f32 %v7044, %v7061
  %v7089 = vadd.f32 %v7045, %v7065
  %v7090 = vadd.f32 %v7046, %v7061
  %v7091 = vadd.f32 %v7047, %v7065
  %v7092 = vadd.f32 %v7048, %v7061
  %v7093 = vadd.f32 %v7049, %v7065
  %v7094 = vadd.f32 %v7050, %v7061
  %v7095 = vadd.f32 %v7051, %v7065
  %v7096 = vadd.f32 %v7052, %v7061
  %v7097 = vadd.f32 %v7053, %v7065
  %v7098 = vadd.f32 %v7054, %v7061
  %v7099 = vadd.f32 %v7055, %v7065
  %v7100 = vtanh.pop %v7068
  %v7101 = vtanh.pop %v7069
  %v7102 = vtanh.pop %v7070
  %v7103 = vtanh.pop %v7071
  %v7104 = vtanh.pop %v7072
  %v7105 = vtanh.pop %v7073
  %v7106 = vtanh.pop %v7074
  %v7107 = vtanh.pop %v7075
  %v7108 = vtanh.pop %v7076
  %v7109 = vtanh.pop %v7077
  %v7110 = vtanh.pop %v7078
  %v7111 = vtanh.pop %v7079
  %v7112 = vtanh.pop %v7080
  %v7113 = vtanh.pop %v7081
  %v7114 = vtanh.pop %v7082
  %v7115 = vtanh.pop %v7083
  %v7116 = vtanh.pop %v7084
  %v7117 = vtanh.pop %v7085
  %v7118 = vtanh.pop %v7086
  %v7119 = vtanh.pop %v7087
  %v7120 = vtanh.pop %v7088
  %v7121 = vtanh.pop %v7089
  %v7122 = vtanh.pop %v7090
  %v7123 = vtanh.pop %v7091
  %v7124 = vtanh.pop %v7092
  %v7125 = vtanh.pop %v7093
  %v7126 = vtanh.pop %v7094
  %v7127 = vtanh.pop %v7095
  %v7128 = vtanh.pop %v7096
  %v7129 = vtanh.pop %v7097
  %v7130 = vtanh.pop %v7098
  %v7131 = vtanh.pop %v7099
  %7132 = vst [vmem:[%s79] sm:$0xff] %v7100
  %7133 = vst.msk [vmem:[%s79 + $0x8] sm:$0xff] %vm1520, %v7101
  %7134 = vst [vmem:[%s79 + $0x10] sm:$0xff] %v7102
  %7135 = vst.msk [vmem:[%s79 + $0x18] sm:$0xff] %vm1520, %v7103
  %7136 = vst [vmem:[%s79 + $0x20] sm:$0xff] %v7104
  %7137 = vst.msk [vmem:[%s79 + $0x28] sm:$0xff] %vm1520, %v7105
  %7138 = vst [vmem:[%s79 + $0x30] sm:$0xff] %v7106
  %7139 = vst.msk [vmem:[%s79 + $0x38] sm:$0xff] %vm1520, %v7107
  %7140 = vst [vmem:[%s79 + $0x40] sm:$0xff] %v7108
  %7141 = vst.msk [vmem:[%s79 + $0x48] sm:$0xff] %vm1520, %v7109
  %7142 = vst [vmem:[%s79 + $0x50] sm:$0xff] %v7110
  %7143 = vst.msk [vmem:[%s79 + $0x58] sm:$0xff] %vm1520, %v7111
  %7144 = vst [vmem:[%s79 + $0x60] sm:$0xff] %v7112
  %7145 = vst.msk [vmem:[%s79 + $0x68] sm:$0xff] %vm1520, %v7113
  %7146 = vst [vmem:[%s79 + $0x70] sm:$0xff] %v7114
  %7147 = vst.msk [vmem:[%s79 + $0x78] sm:$0xff] %vm1520, %v7115
  %7148 = vst [vmem:[%s79 + $0x80] sm:$0xff] %v7116
  %7149 = vst.msk [vmem:[%s79 + $0x88] sm:$0xff] %vm1520, %v7117
  %7150 = vst [vmem:[%s79 + $0x90] sm:$0xff] %v7118
  %7151 = vst.msk [vmem:[%s79 + $0x98] sm:$0xff] %vm1520, %v7119
  %7152 = vst [vmem:[%s79 + $0xa0] sm:$0xff] %v7120
  %7153 = vst.msk [vmem:[%s79 + $0xa8] sm:$0xff] %vm1520, %v7121
  %7154 = vst [vmem:[%s79 + $0xb0] sm:$0xff] %v7122
  %7155 = vst.msk [vmem:[%s79 + $0xb8] sm:$0xff] %vm1520, %v7123
  %7156 = vst [vmem:[%s79 + $0xc0] sm:$0xff] %v7124
  %7157 = vst.msk [vmem:[%s79 + $0xc8] sm:$0xff] %vm1520, %v7125
  %7158 = vst [vmem:[%s79 + $0xd0] sm:$0xff] %v7126
  %7159 = vst.msk [vmem:[%s79 + $0xd8] sm:$0xff] %vm1520, %v7127
  %7160 = vst [vmem:[%s79 + $0xe0] sm:$0xff] %v7128
  %7161 = vst.msk [vmem:[%s79 + $0xe8] sm:$0xff] %vm1520, %v7129
  %7162 = vst [vmem:[%s79 + $0xf0] sm:$0xff] %v7130
  %7163 = vst.msk [vmem:[%s79 + $0xf8] sm:$0xff] %vm1520, %v7131
  // Predicated region
  $region158: #{generator_forward.1} parent=0 // pred_check
    _
  $region159: #{generator_forward.1} parent=0 // pred_check_branch
    %7165 = sbr.rel (0) target = $region161
  $region160: #{generator_forward.1} parent=0 // pred_region
    _
  $region161: #{generator_forward.1} parent=0 // pred_fallthru
    _
  // Predicated region
  $region162: #{generator_forward.1} parent=0 // pred_check
    _
  $region163: #{generator_forward.1} parent=0 // pred_check_branch
    %7167 = sbr.rel (0) target = $region165
  $region164: #{generator_forward.1} parent=0 // pred_region
    _
  $region165: #{generator_forward.1} parent=0 // pred_fallthru
    _

</llo_original>
